<compile_context>
chip_gen: v6e
topology: v6e:2x2x1
jax: 0.10.0
libtpu: 0.0.40
codegen_flags: <defaults>
</compile_context>

<pallas_src>
import jax
import jax.numpy as jnp
from jax.experimental import pallas as pl
from jax.experimental.pallas import tpu as pltpu


# ----------------------------- config ---------------------------------------
SUBGROUP_SIZES = [32, 32]        # sum = 64  (dense2 output width)
SUBSPACE_SIZES = [4, 6]          # sum = 10  (latent_dim)
LATENT_DIM = sum(SUBSPACE_SIZES)
NUM_SAMPLING = 1
CONV_CHANNELS = [(1, 32), (32, 32), (32, 64), (64, 64)]
KSIZE, STRIDE, PAD = 4, 2, 1


# ------------------------- Pallas kernels -----------------------------------
def _matmul_bias_relu_kernel(x_ref, w_ref, b_ref, o_ref):
    """relu(x @ w + b) on one (tm, K) x (K, N) tile. bf16 operands, f32 acc."""
    y = jnp.dot(x_ref[...], w_ref[...], preferred_element_type=jnp.float32)
    o_ref[...] = jnp.maximum(y + b_ref[...], 0.0).astype(o_ref.dtype)


def pallas_conv_matmul(x, w, b, out_dtype=jnp.bfloat16):
    """y = relu(x @ w + b); x:(M,K) bf16, w:(K,N) bf16, b:(1,N) f32."""
    M, K = x.shape
    Kw, N = w.shape
    assert K == Kw
    # Big tiles amortize per-step overhead; >=2 parallel steps when M allows
    # so v7x can shard across its two TensorCores.
    tm = M // 2 if M >= 512 else M
    assert M % tm == 0 and tm % 8 == 0
    return pl.pallas_call(
        _matmul_bias_relu_kernel,
        out_shape=jax.ShapeDtypeStruct((M, N), out_dtype),
        grid=(M // tm,),
        in_specs=[
            pl.BlockSpec((tm, K), lambda i: (i, 0)),
            pl.BlockSpec((K, N), lambda i: (0, 0)),   # constant index -> resident
            pl.BlockSpec((1, N), lambda i: (0, 0)),
        ],
        out_specs=pl.BlockSpec((tm, N), lambda i: (i, 0)),
        compiler_params=pltpu.CompilerParams(dimension_semantics=("parallel",)),
    )(x, w, b)


def _head_kernel(p4_ref, eps_ref, w4_ref, b4_ref, w1_ref, b1_ref,
                 w2_ref, b2_ref, wh_ref, bh_ref, wo_ref, bo_ref,
                 gf_ref, z_ref, mu_ref, lv_ref):
    """conv4+ReLU -> dense1+ReLU -> dense2+Sigmoid -> fused subgroup heads -> reparam."""
    f32 = jnp.float32
    B = p4_ref.shape[0]
    Kp, C4 = w4_ref.shape                  # 1024, 64
    n_pos = p4_ref.shape[1] // Kp          # 16 (= 4x4 output positions)
    n_h1 = w1_ref.shape[1]                 # 256

    # conv4 fused with dense1:  dense1(flat) = sum_p relu(patch_p @ W4 + b4) @ W1_p
    # (W1 rows were permuted at init so rows [p*C4:(p+1)*C4] match position p.)
    h1 = jnp.zeros((B, n_h1), f32)
    for p in range(n_pos):                 # unrolled at trace time (16 steps)
        xp = p4_ref[:, p * Kp:(p + 1) * Kp]                    # (B, 1024) bf16
        y = jnp.dot(xp, w4_ref[...], preferred_element_type=f32)
        y = jnp.maximum(y + b4_ref[...], 0.0).astype(jnp.bfloat16)
        h1 = h1 + jnp.dot(y, w1_ref[p * C4:(p + 1) * C4, :],
                          preferred_element_type=f32)
    # dense1 bias + ReLU
    h1 = jnp.maximum(h1 + b1_ref[...], 0.0)
    # dense2 (256 -> 64) + Sigmoid (f32 transcendental)
    gf = jnp.dot(h1.astype(jnp.bfloat16), w2_ref[...], preferred_element_type=f32)
    gf = jax.nn.sigmoid(gf + b2_ref[...])
    gf_ref[...] = gf
    # fused to_means / to_logvar layer 1 (block-diagonal 64 -> 512) + ReLU
    hh = jnp.dot(gf.astype(jnp.bfloat16), wh_ref[...], preferred_element_type=f32)
    hh = jnp.maximum(hh + bh_ref[...], 0.0)
    # fused layer 2 (block-diagonal 512 -> 2*latent_dim): [mu | logvar]
    out = jnp.dot(hh.astype(jnp.bfloat16), wo_ref[...], preferred_element_type=f32)
    out = out + bo_ref[...]
    d = LATENT_DIM
    mu = out[:, :d]
    lv = out[:, d:2 * d]
    mu_ref[...] = mu
    lv_ref[...] = lv
    # reparameterization: z = mu + exp(0.5 * logvar) * eps   (f32 exp)
    z_ref[...] = mu + jnp.exp(0.5 * lv) * eps_ref[...]


def pallas_head(p4, eps, hp):
    """One fused kernel for conv4/dense1/dense2/subgroup-heads/reparam."""
    B = p4.shape[0]
    gsum = sum(SUBGROUP_SIZES)
    args = (p4, eps, hp["w4"], hp["b4"], hp["w1"], hp["b1"], hp["w2"], hp["b2"],
            hp["wh"], hp["bh"], hp["wo"], hp["bo"])
    in_specs = [pl.BlockSpec(a.shape, lambda i: (0, 0)) for a in args]
    out_shapes = (
        jax.ShapeDtypeStruct((B, gsum), jnp.float32),        # group_feats
        jax.ShapeDtypeStruct((B, LATENT_DIM), jnp.float32),  # z
        jax.ShapeDtypeStruct((B, LATENT_DIM), jnp.float32),  # mu
        jax.ShapeDtypeStruct((B, LATENT_DIM), jnp.float32),  # logvar
    )
    out_specs = (
        pl.BlockSpec((B, gsum), lambda i: (0, 0)),
        pl.BlockSpec((B, LATENT_DIM), lambda i: (0, 0)),
        pl.BlockSpec((B, LATENT_DIM), lambda i: (0, 0)),
        pl.BlockSpec((B, LATENT_DIM), lambda i: (0, 0)),
    )
    return pl.pallas_call(
        _head_kernel,
        out_shape=out_shapes,
        grid=(1,),
        in_specs=in_specs,
        out_specs=out_specs,
    )(*args)


# ------------------------------ glue ----------------------------------------
def im2col_nhwc(x, k=KSIZE, s=STRIDE, p=PAD):
    """NHWC -> (B, Ho, Wo, k*k*C) patches, column order (kh, kw, C), C fastest."""
    B, H, W, C = x.shape
    xp = jnp.pad(x, ((0, 0), (p, p), (p, p), (0, 0)))
    Ho = (H + 2 * p - k) // s + 1
    Wo = (W + 2 * p - k) // s + 1
    taps = []
    for i in range(k):
        for j in range(k):
            taps.append(
                xp[:, i: i + (Ho - 1) * s + 1: s, j: j + (Wo - 1) * s + 1: s, :]
            )  # (B, Ho, Wo, C)
    patches = jnp.concatenate(taps, axis=-1)        # lane-dense channels-last
    return patches, Ho, Wo


def init_params(key):
    """Deterministic synthetic parameters (shapes match the nn.Module),
    pre-laid-out for the NHWC / fused-head kernels."""
    def nrm(k, shape, scale=0.05):
        return scale * jax.random.normal(k, shape, dtype=jnp.float32)

    keys = iter(jax.random.split(key, 64))
    params = {"convs": []}

    # --- conv weights: PyTorch OIHW -> (kh*kw*cin, cout) matching NHWC patches
    conv_mats = []
    for cin, cout in CONV_CHANNELS:
        w = nrm(next(keys), (cout, cin, KSIZE, KSIZE))           # OIHW
        b = nrm(next(keys), (cout,))
        wmat = jnp.transpose(w, (2, 3, 1, 0)).reshape(KSIZE * KSIZE * cin, cout)
        conv_mats.append((wmat.astype(jnp.bfloat16), b.reshape(1, cout)))
    params["convs"] = conv_mats[:-1]                 # conv1..conv3 standalone
    w4, b4 = conv_mats[-1]                           # conv4 fused into the head

    # --- dense1: permute rows so NHWC flatten == PyTorch NCHW flatten ---------
    w1 = nrm(next(keys), (1024, 256))                            # (in, out)
    b1 = nrm(next(keys), (256,))
    Hf, Wf, Cf = 4, 4, CONV_CHANNELS[-1][1]                      # final 4x4x64
    oh = jnp.arange(Hf).reshape(Hf, 1, 1)
    ow = jnp.arange(Wf).reshape(1, Wf, 1)
    cc = jnp.arange(Cf).reshape(1, 1, Cf)
    torch_row = (cc * (Hf * Wf) + oh * Wf + ow).reshape(-1)      # NHWC pos -> NCHW row
    w1 = w1[torch_row, :]

    w2 = nrm(next(keys), (256, sum(SUBGROUP_SIZES)))
    b2 = nrm(next(keys), (sum(SUBGROUP_SIZES),))

    # --- fused block-diagonal subgroup heads ---------------------------------
    h_half = sum(4 * g for g in SUBGROUP_SIZES)                  # 256
    d = LATENT_DIM
    wh = jnp.zeros((sum(SUBGROUP_SIZES), 2 * h_half), jnp.float32)
    bh = jnp.zeros((2 * h_half,), jnp.float32)
    wo = jnp.zeros((2 * h_half, 2 * d), jnp.float32)
    bo = jnp.zeros((2 * d,), jnp.float32)
    r, hoff, coff = 0, 0, 0
    for g, s in zip(SUBGROUP_SIZES, SUBSPACE_SIZES):
        h4 = 4 * g
        m1w, m1b = nrm(next(keys), (g, h4)), nrm(next(keys), (h4,))
        m2w, m2b = nrm(next(keys), (h4, s)), nrm(next(keys), (s,))
        v1w, v1b = nrm(next(keys), (g, h4)), nrm(next(keys), (h4,))
        v2w, v2b = nrm(next(keys), (h4, s)), nrm(next(keys), (s,))
        wh = wh.at[r:r + g, hoff:hoff + h4].set(m1w)
        bh = bh.at[hoff:hoff + h4].set(m1b)
        wh = wh.at[r:r + g, h_half + hoff:h_half + hoff + h4].set(v1w)
        bh = bh.at[h_half + hoff:h_half + hoff + h4].set(v1b)
        wo = wo.at[hoff:hoff + h4, coff:coff + s].set(m2w)
        bo = bo.at[coff:coff + s].set(m2b)
        wo = wo.at[h_half + hoff:h_half + hoff + h4, d + coff:d + coff + s].set(v2w)
        bo = bo.at[d + coff:d + coff + s].set(v2b)
        r, hoff, coff = r + g, hoff + h4, coff + s

    params["head"] = dict(
        w4=w4, b4=b4,
        w1=w1.astype(jnp.bfloat16), b1=b1.reshape(1, -1),
        w2=w2.astype(jnp.bfloat16), b2=b2.reshape(1, -1),
        wh=wh.astype(jnp.bfloat16), bh=bh.reshape(1, -1),
        wo=wo.astype(jnp.bfloat16), bo=bo.reshape(1, -1),
    )
    return params


def encoder_forward(x, params, eps):
    """Returns (z, mu, logvar, group_feats) as in the PyTorch module."""
    # NCHW input -> NHWC once; stay NHWC for the whole conv path (bf16 acts).
    h = jnp.transpose(x, (0, 2, 3, 1)).astype(jnp.bfloat16)
    B = h.shape[0]
    for wmat, b in params["convs"]:                   # conv1..conv3
        cout = wmat.shape[1]
        patches, Ho, Wo = im2col_nhwc(h)              # (B,Ho,Wo,k*k*Cin)
        kkc = patches.shape[-1]
        y = pallas_conv_matmul(patches.reshape(B * Ho * Wo, kkc), wmat, b)
        h = y.reshape(B, Ho, Wo, cout)                # NHWC, no transpose

    # conv4 patches feed straight into the fused head kernel (conv4 + dense1 +
    # dense2 + subgroup heads + reparam in ONE pallas_call).
    patches, Ho, Wo = im2col_nhwc(h)                  # (B,4,4,1024)
    p4 = patches.reshape(B, Ho * Wo * patches.shape[-1])
    gf, z, mu, logvar = pallas_head(p4, eps, params["head"])
    return z, mu, logvar, gf


# ------------------------------ main -----------------------------------------
if __name__ == "__main__":
    key = jax.random.PRNGKey(0)
    k_params, k_input, k_eps = jax.random.split(key, 3)

    params = init_params(k_params)
    # SmallNORB-style input; 64x64 is forced by the hard-coded Linear(1024, 256).
    x = jax.random.normal(k_input, (2, 1, 64, 64), dtype=jnp.float32)
    # torch.randn_like(logvar) equivalent, drawn deterministically on host.
    eps = jax.random.normal(k_eps, (2, LATENT_DIM), dtype=jnp.float32)

    fwd = jax.jit(encoder_forward)
    z, mu, logvar, group_feats = fwd(x, params, eps)
    jax.block_until_ready((z, mu, logvar, group_feats))

    assert z.shape == (2, LATENT_DIM)
    assert mu.shape == (2, LATENT_DIM)
    assert logvar.shape == (2, LATENT_DIM)
    assert group_feats.shape == (2, sum(SUBGROUP_SIZES))
    print("KERNEL_OK")
</pallas_src>

<mosaic_0001>
module attributes {stable_mosaic.version = 11 : i64} {
  func.func @_matmul_bias_relu_kernel(%arg0: i32, %arg1: memref<1024x16xbf16, #tpu.memory_space<vmem>>, %arg2: memref<16x32xbf16, #tpu.memory_space<vmem>>, %arg3: memref<1x32xf32, #tpu.memory_space<vmem>>, %arg4: memref<1024x32xbf16, #tpu.memory_space<vmem>>) attributes {dimension_semantics = [#tpu.dimension_semantics<parallel>], iteration_bounds = array<i64: 2>, scalar_prefetch = 0 : i64, scratch_operands = 0 : i64, tpu.core_type = #tpu.core_type<tc>, window_params = [{transform_indices = @transform_0, window_bounds = array<i64: 1024, 16>}, {pipeline_mode = #tpu.pipeline_mode<synchronous>, transform_indices = @transform_1, window_bounds = array<i64: 16, 32>}, {pipeline_mode = #tpu.pipeline_mode<synchronous>, transform_indices = @transform_2, window_bounds = array<i64: 1, 32>}, {transform_indices = @transform_3, window_bounds = array<i64: 1024, 32>}]} {
    %c0 = arith.constant 0 : index
    %c0_0 = arith.constant 0 : index
    %0 = vector.load %arg1[%c0, %c0_0] : memref<1024x16xbf16, #tpu.memory_space<vmem>>, vector<1024x16xbf16>
    %c0_1 = arith.constant 0 : index
    %c0_2 = arith.constant 0 : index
    %1 = vector.load %arg2[%c0_1, %c0_2] : memref<16x32xbf16, #tpu.memory_space<vmem>>, vector<16x32xbf16>
    %cst = arith.constant dense<0.000000e+00> : vector<1024x32xf32>
    %2 = tpu.matmul %0, %1, %cst {dimension_numbers = #tpu.dot_dimension_numbers<[1], [0], [0], [1], [0, 0, 1, 1], [], []>} : vector<1024x16xbf16>, vector<16x32xbf16>, vector<1024x32xf32> -> vector<1024x32xf32>
    %c0_3 = arith.constant 0 : index
    %c0_4 = arith.constant 0 : index
    %3 = vector.load %arg3[%c0_3, %c0_4] : memref<1x32xf32, #tpu.memory_space<vmem>>, vector<1x32xf32>
    %4 = vector.broadcast %3 : vector<1x32xf32> to vector<1024x32xf32>
    %5 = arith.addf %2, %4 : vector<1024x32xf32>
    %cst_5 = arith.constant 0.000000e+00 : f32
    %6 = vector.broadcast %cst_5 : f32 to vector<1024x32xf32>
    %7 = arith.maximumf %5, %6 : vector<1024x32xf32>
    %8 = arith.truncf %7 : vector<1024x32xf32> to vector<1024x32xbf16>
    %c0_6 = arith.constant 0 : index
    %c0_7 = arith.constant 0 : index
    %9 = vector.load %arg4[%c0_6, %c0_7] : memref<1024x32xbf16, #tpu.memory_space<vmem>>, vector<1024x32xbf16>
    tpu.vector_store %arg4[%c0_6, %c0_7], %8 {strides = array<i32>} : memref<1024x32xbf16, #tpu.memory_space<vmem>>, vector<1024x32xbf16>,
    return
  }
  func.func @transform_0(%arg0: i32) -> (i32, i32) {
    %c0_i32 = arith.constant 0 : i32
    %c0_i32_0 = arith.constant 0 : i32
    return %arg0, %c0_i32 : i32, i32
  }
  func.func @transform_1(%arg0: i32) -> (i32, i32) {
    %c0_i32 = arith.constant 0 : i32
    %c0_i32_0 = arith.constant 0 : i32
    %c0_i32_1 = arith.constant 0 : i32
    return %c0_i32, %c0_i32_0 : i32, i32
  }
  func.func @transform_2(%arg0: i32) -> (i32, i32) {
    %c0_i32 = arith.constant 0 : i32
    %c0_i32_0 = arith.constant 0 : i32
    %c0_i32_1 = arith.constant 0 : i32
    return %c0_i32, %c0_i32_0 : i32, i32
  }
  func.func @transform_3(%arg0: i32) -> (i32, i32) {
    %c0_i32 = arith.constant 0 : i32
    %c0_i32_0 = arith.constant 0 : i32
    return %arg0, %c0_i32 : i32, i32
  }
}

module attributes {stable_mosaic.version = 11 : i64} {
  func.func @_matmul_bias_relu_kernel(%arg0: i32, %arg1: memref<256x512xbf16, #tpu.memory_space<vmem>>, %arg2: memref<512x32xbf16, #tpu.memory_space<vmem>>, %arg3: memref<1x32xf32, #tpu.memory_space<vmem>>, %arg4: memref<256x32xbf16, #tpu.memory_space<vmem>>) attributes {dimension_semantics = [#tpu.dimension_semantics<parallel>], iteration_bounds = array<i64: 2>, scalar_prefetch = 0 : i64, scratch_operands = 0 : i64, tpu.core_type = #tpu.core_type<tc>, window_params = [{transform_indices = @transform_0, window_bounds = array<i64: 256, 512>}, {pipeline_mode = #tpu.pipeline_mode<synchronous>, transform_indices = @transform_1, window_bounds = array<i64: 512, 32>}, {pipeline_mode = #tpu.pipeline_mode<synchronous>, transform_indices = @transform_2, window_bounds = array<i64: 1, 32>}, {transform_indices = @transform_3, window_bounds = array<i64: 256, 32>}]} {
    %c0 = arith.constant 0 : index
    %c0_0 = arith.constant 0 : index
    %0 = vector.load %arg1[%c0, %c0_0] : memref<256x512xbf16, #tpu.memory_space<vmem>>, vector<256x512xbf16>
    %c0_1 = arith.constant 0 : index
    %c0_2 = arith.constant 0 : index
    %1 = vector.load %arg2[%c0_1, %c0_2] : memref<512x32xbf16, #tpu.memory_space<vmem>>, vector<512x32xbf16>
    %cst = arith.constant dense<0.000000e+00> : vector<256x32xf32>
    %2 = tpu.matmul %0, %1, %cst {dimension_numbers = #tpu.dot_dimension_numbers<[1], [0], [0], [1], [0, 0, 1, 1], [], []>} : vector<256x512xbf16>, vector<512x32xbf16>, vector<256x32xf32> -> vector<256x32xf32>
    %c0_3 = arith.constant 0 : index
    %c0_4 = arith.constant 0 : index
    %3 = vector.load %arg3[%c0_3, %c0_4] : memref<1x32xf32, #tpu.memory_space<vmem>>, vector<1x32xf32>
    %4 = vector.broadcast %3 : vector<1x32xf32> to vector<256x32xf32>
    %5 = arith.addf %2, %4 : vector<256x32xf32>
    %cst_5 = arith.constant 0.000000e+00 : f32
    %6 = vector.broadcast %cst_5 : f32 to vector<256x32xf32>
    %7 = arith.maximumf %5, %6 : vector<256x32xf32>
    %8 = arith.truncf %7 : vector<256x32xf32> to vector<256x32xbf16>
    %c0_6 = arith.constant 0 : index
    %c0_7 = arith.constant 0 : index
    %9 = vector.load %arg4[%c0_6, %c0_7] : memref<256x32xbf16, #tpu.memory_space<vmem>>, vector<256x32xbf16>
    tpu.vector_store %arg4[%c0_6, %c0_7], %8 {strides = array<i32>} : memref<256x32xbf16, #tpu.memory_space<vmem>>, vector<256x32xbf16>,
    return
  }
  func.func @transform_0(%arg0: i32) -> (i32, i32) {
    %c0_i32 = arith.constant 0 : i32
    %c0_i32_0 = arith.constant 0 : i32
    return %arg0, %c0_i32 : i32, i32
  }
  func.func @transform_1(%arg0: i32) -> (i32, i32) {
    %c0_i32 = arith.constant 0 : i32
    %c0_i32_0 = arith.constant 0 : i32
    %c0_i32_1 = arith.constant 0 : i32
    return %c0_i32, %c0_i32_0 : i32, i32
  }
  func.func @transform_2(%arg0: i32) -> (i32, i32) {
    %c0_i32 = arith.constant 0 : i32
    %c0_i32_0 = arith.constant 0 : i32
    %c0_i32_1 = arith.constant 0 : i32
    return %c0_i32, %c0_i32_0 : i32, i32
  }
  func.func @transform_3(%arg0: i32) -> (i32, i32) {
    %c0_i32 = arith.constant 0 : i32
    %c0_i32_0 = arith.constant 0 : i32
    return %arg0, %c0_i32 : i32, i32
  }
}

module attributes {stable_mosaic.version = 11 : i64} {
  func.func @_matmul_bias_relu_kernel(%arg0: i32, %arg1: memref<128x512xbf16, #tpu.memory_space<vmem>>, %arg2: memref<512x64xbf16, #tpu.memory_space<vmem>>, %arg3: memref<1x64xf32, #tpu.memory_space<vmem>>, %arg4: memref<128x64xbf16, #tpu.memory_space<vmem>>) attributes {dimension_semantics = [#tpu.dimension_semantics<parallel>], iteration_bounds = array<i64: 1>, scalar_prefetch = 0 : i64, scratch_operands = 0 : i64, tpu.core_type = #tpu.core_type<tc>, window_params = [{transform_indices = @transform_0, window_bounds = array<i64: 128, 512>}, {pipeline_mode = #tpu.pipeline_mode<synchronous>, transform_indices = @transform_1, window_bounds = array<i64: 512, 64>}, {pipeline_mode = #tpu.pipeline_mode<synchronous>, transform_indices = @transform_2, window_bounds = array<i64: 1, 64>}, {transform_indices = @transform_3, window_bounds = array<i64: 128, 64>}]} {
    %c0 = arith.constant 0 : index
    %c0_0 = arith.constant 0 : index
    %0 = vector.load %arg1[%c0, %c0_0] : memref<128x512xbf16, #tpu.memory_space<vmem>>, vector<128x512xbf16>
    %c0_1 = arith.constant 0 : index
    %c0_2 = arith.constant 0 : index
    %1 = vector.load %arg2[%c0_1, %c0_2] : memref<512x64xbf16, #tpu.memory_space<vmem>>, vector<512x64xbf16>
    %cst = arith.constant dense<0.000000e+00> : vector<128x64xf32>
    %2 = tpu.matmul %0, %1, %cst {dimension_numbers = #tpu.dot_dimension_numbers<[1], [0], [0], [1], [0, 0, 1, 1], [], []>} : vector<128x512xbf16>, vector<512x64xbf16>, vector<128x64xf32> -> vector<128x64xf32>
    %c0_3 = arith.constant 0 : index
    %c0_4 = arith.constant 0 : index
    %3 = vector.load %arg3[%c0_3, %c0_4] : memref<1x64xf32, #tpu.memory_space<vmem>>, vector<1x64xf32>
    %4 = vector.broadcast %3 : vector<1x64xf32> to vector<128x64xf32>
    %5 = arith.addf %2, %4 : vector<128x64xf32>
    %cst_5 = arith.constant 0.000000e+00 : f32
    %6 = vector.broadcast %cst_5 : f32 to vector<128x64xf32>
    %7 = arith.maximumf %5, %6 : vector<128x64xf32>
    %8 = arith.truncf %7 : vector<128x64xf32> to vector<128x64xbf16>
    %c0_6 = arith.constant 0 : index
    %c0_7 = arith.constant 0 : index
    %9 = vector.load %arg4[%c0_6, %c0_7] : memref<128x64xbf16, #tpu.memory_space<vmem>>, vector<128x64xbf16>
    tpu.vector_store %arg4[%c0_6, %c0_7], %8 {strides = array<i32>} : memref<128x64xbf16, #tpu.memory_space<vmem>>, vector<128x64xbf16>,
    return
  }
  func.func @transform_0(%arg0: i32) -> (i32, i32) {
    %c0_i32 = arith.constant 0 : i32
    %c0_i32_0 = arith.constant 0 : i32
    return %arg0, %c0_i32 : i32, i32
  }
  func.func @transform_1(%arg0: i32) -> (i32, i32) {
    %c0_i32 = arith.constant 0 : i32
    %c0_i32_0 = arith.constant 0 : i32
    %c0_i32_1 = arith.constant 0 : i32
    return %c0_i32, %c0_i32_0 : i32, i32
  }
  func.func @transform_2(%arg0: i32) -> (i32, i32) {
    %c0_i32 = arith.constant 0 : i32
    %c0_i32_0 = arith.constant 0 : i32
    %c0_i32_1 = arith.constant 0 : i32
    return %c0_i32, %c0_i32_0 : i32, i32
  }
  func.func @transform_3(%arg0: i32) -> (i32, i32) {
    %c0_i32 = arith.constant 0 : i32
    %c0_i32_0 = arith.constant 0 : i32
    return %arg0, %c0_i32 : i32, i32
  }
}

module attributes {stable_mosaic.version = 11 : i64} {
  func.func @_head_kernel(%arg0: i32, %arg1: memref<2x16384xbf16, #tpu.memory_space<vmem>>, %arg2: memref<2x10xf32, #tpu.memory_space<vmem>>, %arg3: memref<1024x64xbf16, #tpu.memory_space<vmem>>, %arg4: memref<1x64xf32, #tpu.memory_space<vmem>>, %arg5: memref<1024x256xbf16, #tpu.memory_space<vmem>>, %arg6: memref<1x256xf32, #tpu.memory_space<vmem>>, %arg7: memref<256x64xbf16, #tpu.memory_space<vmem>>, %arg8: memref<1x64xf32, #tpu.memory_space<vmem>>, %arg9: memref<64x512xbf16, #tpu.memory_space<vmem>>, %arg10: memref<1x512xf32, #tpu.memory_space<vmem>>, %arg11: memref<512x20xbf16, #tpu.memory_space<vmem>>, %arg12: memref<1x20xf32, #tpu.memory_space<vmem>>, %arg13: memref<2x64xf32, #tpu.memory_space<vmem>>, %arg14: memref<2x10xf32, #tpu.memory_space<vmem>>, %arg15: memref<2x10xf32, #tpu.memory_space<vmem>>, %arg16: memref<2x10xf32, #tpu.memory_space<vmem>>) attributes {dimension_semantics = [#tpu.dimension_semantics<arbitrary>], iteration_bounds = array<i64: 1>, scalar_prefetch = 0 : i64, scratch_operands = 0 : i64, tpu.core_type = #tpu.core_type<tc>, window_params = [{pipeline_mode = #tpu.pipeline_mode<synchronous>, transform_indices = @transform_0, window_bounds = array<i64: 2, 16384>}, {pipeline_mode = #tpu.pipeline_mode<synchronous>, transform_indices = @transform_1, window_bounds = array<i64: 2, 10>}, {pipeline_mode = #tpu.pipeline_mode<synchronous>, transform_indices = @transform_2, window_bounds = array<i64: 1024, 64>}, {pipeline_mode = #tpu.pipeline_mode<synchronous>, transform_indices = @transform_3, window_bounds = array<i64: 1, 64>}, {pipeline_mode = #tpu.pipeline_mode<synchronous>, transform_indices = @transform_4, window_bounds = array<i64: 1024, 256>}, {pipeline_mode = #tpu.pipeline_mode<synchronous>, transform_indices = @transform_5, window_bounds = array<i64: 1, 256>}, {pipeline_mode = #tpu.pipeline_mode<synchronous>, transform_indices = @transform_6, window_bounds = array<i64: 256, 64>}, {pipeline_mode = #tpu.pipeline_mode<synchronous>, transform_indices = @transform_7, window_bounds = array<i64: 1, 64>}, {pipeline_mode = #tpu.pipeline_mode<synchronous>, transform_indices = @transform_8, window_bounds = array<i64: 64, 512>}, {pipeline_mode = #tpu.pipeline_mode<synchronous>, transform_indices = @transform_9, window_bounds = array<i64: 1, 512>}, {pipeline_mode = #tpu.pipeline_mode<synchronous>, transform_indices = @transform_10, window_bounds = array<i64: 512, 20>}, {pipeline_mode = #tpu.pipeline_mode<synchronous>, transform_indices = @transform_11, window_bounds = array<i64: 1, 20>}, {pipeline_mode = #tpu.pipeline_mode<synchronous>, transform_indices = @transform_12, window_bounds = array<i64: 2, 64>}, {pipeline_mode = #tpu.pipeline_mode<synchronous>, transform_indices = @transform_13, window_bounds = array<i64: 2, 10>}, {pipeline_mode = #tpu.pipeline_mode<synchronous>, transform_indices = @transform_14, window_bounds = array<i64: 2, 10>}, {pipeline_mode = #tpu.pipeline_mode<synchronous>, transform_indices = @transform_15, window_bounds = array<i64: 2, 10>}]} {
    %cst = arith.constant 0.000000e+00 : f32
    %0 = vector.broadcast %cst : f32 to vector<2x256xf32>
    %c0 = arith.constant 0 : index
    %c0_0 = arith.constant 0 : index
    %1 = vector.load %arg1[%c0, %c0_0] : memref<2x16384xbf16, #tpu.memory_space<vmem>>, vector<2x1024xbf16>
    %c0_1 = arith.constant 0 : index
    %c0_2 = arith.constant 0 : index
    %2 = vector.load %arg3[%c0_1, %c0_2] : memref<1024x64xbf16, #tpu.memory_space<vmem>>, vector<1024x64xbf16>
    %cst_3 = arith.constant dense<0.000000e+00> : vector<2x64xf32>
    %3 = tpu.matmul %1, %2, %cst_3 {dimension_numbers = #tpu.dot_dimension_numbers<[1], [0], [0], [1], [0, 0, 1, 1], [], []>} : vector<2x1024xbf16>, vector<1024x64xbf16>, vector<2x64xf32> -> vector<2x64xf32>
    %c0_4 = arith.constant 0 : index
    %c0_5 = arith.constant 0 : index
    %4 = vector.load %arg4[%c0_4, %c0_5] : memref<1x64xf32, #tpu.memory_space<vmem>>, vector<1x64xf32>
    %5 = vector.broadcast %4 : vector<1x64xf32> to vector<2x64xf32>
    %6 = arith.addf %3, %5 : vector<2x64xf32>
    %cst_6 = arith.constant 0.000000e+00 : f32
    %7 = vector.broadcast %cst_6 : f32 to vector<2x64xf32>
    %8 = arith.maximumf %6, %7 : vector<2x64xf32>
    %9 = arith.truncf %8 : vector<2x64xf32> to vector<2x64xbf16>
    %c0_7 = arith.constant 0 : index
    %c0_8 = arith.constant 0 : index
    %10 = vector.load %arg5[%c0_7, %c0_8] : memref<1024x256xbf16, #tpu.memory_space<vmem>>, vector<64x256xbf16>
    %cst_9 = arith.constant dense<0.000000e+00> : vector<2x256xf32>
    %11 = tpu.matmul %9, %10, %cst_9 {dimension_numbers = #tpu.dot_dimension_numbers<[1], [0], [0], [1], [0, 0, 1, 1], [], []>} : vector<2x64xbf16>, vector<64x256xbf16>, vector<2x256xf32> -> vector<2x256xf32>
    %12 = arith.addf %0, %11 : vector<2x256xf32>
    %c0_10 = arith.constant 0 : index
    %c1024 = arith.constant 1024 : index
    %13 = vector.load %arg1[%c0_10, %c1024] : memref<2x16384xbf16, #tpu.memory_space<vmem>>, vector<2x1024xbf16>
    %c0_11 = arith.constant 0 : index
    %c0_12 = arith.constant 0 : index
    %14 = vector.load %arg3[%c0_11, %c0_12] : memref<1024x64xbf16, #tpu.memory_space<vmem>>, vector<1024x64xbf16>
    %cst_13 = arith.constant dense<0.000000e+00> : vector<2x64xf32>
    %15 = tpu.matmul %13, %14, %cst_13 {dimension_numbers = #tpu.dot_dimension_numbers<[1], [0], [0], [1], [0, 0, 1, 1], [], []>} : vector<2x1024xbf16>, vector<1024x64xbf16>, vector<2x64xf32> -> vector<2x64xf32>
    %c0_14 = arith.constant 0 : index
    %c0_15 = arith.constant 0 : index
    %16 = vector.load %arg4[%c0_14, %c0_15] : memref<1x64xf32, #tpu.memory_space<vmem>>, vector<1x64xf32>
    %17 = vector.broadcast %16 : vector<1x64xf32> to vector<2x64xf32>
    %18 = arith.addf %15, %17 : vector<2x64xf32>
    %cst_16 = arith.constant 0.000000e+00 : f32
    %19 = vector.broadcast %cst_16 : f32 to vector<2x64xf32>
    %20 = arith.maximumf %18, %19 : vector<2x64xf32>
    %21 = arith.truncf %20 : vector<2x64xf32> to vector<2x64xbf16>
    %c64 = arith.constant 64 : index
    %c0_17 = arith.constant 0 : index
    %22 = vector.load %arg5[%c64, %c0_17] : memref<1024x256xbf16, #tpu.memory_space<vmem>>, vector<64x256xbf16>
    %cst_18 = arith.constant dense<0.000000e+00> : vector<2x256xf32>
    %23 = tpu.matmul %21, %22, %cst_18 {dimension_numbers = #tpu.dot_dimension_numbers<[1], [0], [0], [1], [0, 0, 1, 1], [], []>} : vector<2x64xbf16>, vector<64x256xbf16>, vector<2x256xf32> -> vector<2x256xf32>
    %24 = arith.addf %12, %23 : vector<2x256xf32>
    %c0_19 = arith.constant 0 : index
    %c2048 = arith.constant 2048 : index
    %25 = vector.load %arg1[%c0_19, %c2048] : memref<2x16384xbf16, #tpu.memory_space<vmem>>, vector<2x1024xbf16>
    %c0_20 = arith.constant 0 : index
    %c0_21 = arith.constant 0 : index
    %26 = vector.load %arg3[%c0_20, %c0_21] : memref<1024x64xbf16, #tpu.memory_space<vmem>>, vector<1024x64xbf16>
    %cst_22 = arith.constant dense<0.000000e+00> : vector<2x64xf32>
    %27 = tpu.matmul %25, %26, %cst_22 {dimension_numbers = #tpu.dot_dimension_numbers<[1], [0], [0], [1], [0, 0, 1, 1], [], []>} : vector<2x1024xbf16>, vector<1024x64xbf16>, vector<2x64xf32> -> vector<2x64xf32>
    %c0_23 = arith.constant 0 : index
    %c0_24 = arith.constant 0 : index
    %28 = vector.load %arg4[%c0_23, %c0_24] : memref<1x64xf32, #tpu.memory_space<vmem>>, vector<1x64xf32>
    %29 = vector.broadcast %28 : vector<1x64xf32> to vector<2x64xf32>
    %30 = arith.addf %27, %29 : vector<2x64xf32>
    %cst_25 = arith.constant 0.000000e+00 : f32
    %31 = vector.broadcast %cst_25 : f32 to vector<2x64xf32>
    %32 = arith.maximumf %30, %31 : vector<2x64xf32>
    %33 = arith.truncf %32 : vector<2x64xf32> to vector<2x64xbf16>
    %c128 = arith.constant 128 : index
    %c0_26 = arith.constant 0 : index
    %34 = vector.load %arg5[%c128, %c0_26] : memref<1024x256xbf16, #tpu.memory_space<vmem>>, vector<64x256xbf16>
    %cst_27 = arith.constant dense<0.000000e+00> : vector<2x256xf32>
    %35 = tpu.matmul %33, %34, %cst_27 {dimension_numbers = #tpu.dot_dimension_numbers<[1], [0], [0], [1], [0, 0, 1, 1], [], []>} : vector<2x64xbf16>, vector<64x256xbf16>, vector<2x256xf32> -> vector<2x256xf32>
    %36 = arith.addf %24, %35 : vector<2x256xf32>
    %c0_28 = arith.constant 0 : index
    %c3072 = arith.constant 3072 : index
    %37 = vector.load %arg1[%c0_28, %c3072] : memref<2x16384xbf16, #tpu.memory_space<vmem>>, vector<2x1024xbf16>
    %c0_29 = arith.constant 0 : index
    %c0_30 = arith.constant 0 : index
    %38 = vector.load %arg3[%c0_29, %c0_30] : memref<1024x64xbf16, #tpu.memory_space<vmem>>, vector<1024x64xbf16>
    %cst_31 = arith.constant dense<0.000000e+00> : vector<2x64xf32>
    %39 = tpu.matmul %37, %38, %cst_31 {dimension_numbers = #tpu.dot_dimension_numbers<[1], [0], [0], [1], [0, 0, 1, 1], [], []>} : vector<2x1024xbf16>, vector<1024x64xbf16>, vector<2x64xf32> -> vector<2x64xf32>
    %c0_32 = arith.constant 0 : index
    %c0_33 = arith.constant 0 : index
    %40 = vector.load %arg4[%c0_32, %c0_33] : memref<1x64xf32, #tpu.memory_space<vmem>>, vector<1x64xf32>
    %41 = vector.broadcast %40 : vector<1x64xf32> to vector<2x64xf32>
    %42 = arith.addf %39, %41 : vector<2x64xf32>
    %cst_34 = arith.constant 0.000000e+00 : f32
    %43 = vector.broadcast %cst_34 : f32 to vector<2x64xf32>
    %44 = arith.maximumf %42, %43 : vector<2x64xf32>
    %45 = arith.truncf %44 : vector<2x64xf32> to vector<2x64xbf16>
    %c192 = arith.constant 192 : index
    %c0_35 = arith.constant 0 : index
    %46 = vector.load %arg5[%c192, %c0_35] : memref<1024x256xbf16, #tpu.memory_space<vmem>>, vector<64x256xbf16>
    %cst_36 = arith.constant dense<0.000000e+00> : vector<2x256xf32>
    %47 = tpu.matmul %45, %46, %cst_36 {dimension_numbers = #tpu.dot_dimension_numbers<[1], [0], [0], [1], [0, 0, 1, 1], [], []>} : vector<2x64xbf16>, vector<64x256xbf16>, vector<2x256xf32> -> vector<2x256xf32>
    %48 = arith.addf %36, %47 : vector<2x256xf32>
    %c0_37 = arith.constant 0 : index
    %c4096 = arith.constant 4096 : index
    %49 = vector.load %arg1[%c0_37, %c4096] : memref<2x16384xbf16, #tpu.memory_space<vmem>>, vector<2x1024xbf16>
    %c0_38 = arith.constant 0 : index
    %c0_39 = arith.constant 0 : index
    %50 = vector.load %arg3[%c0_38, %c0_39] : memref<1024x64xbf16, #tpu.memory_space<vmem>>, vector<1024x64xbf16>
    %cst_40 = arith.constant dense<0.000000e+00> : vector<2x64xf32>
    %51 = tpu.matmul %49, %50, %cst_40 {dimension_numbers = #tpu.dot_dimension_numbers<[1], [0], [0], [1], [0, 0, 1, 1], [], []>} : vector<2x1024xbf16>, vector<1024x64xbf16>, vector<2x64xf32> -> vector<2x64xf32>
    %c0_41 = arith.constant 0 : index
    %c0_42 = arith.constant 0 : index
    %52 = vector.load %arg4[%c0_41, %c0_42] : memref<1x64xf32, #tpu.memory_space<vmem>>, vector<1x64xf32>
    %53 = vector.broadcast %52 : vector<1x64xf32> to vector<2x64xf32>
    %54 = arith.addf %51, %53 : vector<2x64xf32>
    %cst_43 = arith.constant 0.000000e+00 : f32
    %55 = vector.broadcast %cst_43 : f32 to vector<2x64xf32>
    %56 = arith.maximumf %54, %55 : vector<2x64xf32>
    %57 = arith.truncf %56 : vector<2x64xf32> to vector<2x64xbf16>
    %c256 = arith.constant 256 : index
    %c0_44 = arith.constant 0 : index
    %58 = vector.load %arg5[%c256, %c0_44] : memref<1024x256xbf16, #tpu.memory_space<vmem>>, vector<64x256xbf16>
    %cst_45 = arith.constant dense<0.000000e+00> : vector<2x256xf32>
    %59 = tpu.matmul %57, %58, %cst_45 {dimension_numbers = #tpu.dot_dimension_numbers<[1], [0], [0], [1], [0, 0, 1, 1], [], []>} : vector<2x64xbf16>, vector<64x256xbf16>, vector<2x256xf32> -> vector<2x256xf32>
    %60 = arith.addf %48, %59 : vector<2x256xf32>
    %c0_46 = arith.constant 0 : index
    %c5120 = arith.constant 5120 : index
    %61 = vector.load %arg1[%c0_46, %c5120] : memref<2x16384xbf16, #tpu.memory_space<vmem>>, vector<2x1024xbf16>
    %c0_47 = arith.constant 0 : index
    %c0_48 = arith.constant 0 : index
    %62 = vector.load %arg3[%c0_47, %c0_48] : memref<1024x64xbf16, #tpu.memory_space<vmem>>, vector<1024x64xbf16>
    %cst_49 = arith.constant dense<0.000000e+00> : vector<2x64xf32>
    %63 = tpu.matmul %61, %62, %cst_49 {dimension_numbers = #tpu.dot_dimension_numbers<[1], [0], [0], [1], [0, 0, 1, 1], [], []>} : vector<2x1024xbf16>, vector<1024x64xbf16>, vector<2x64xf32> -> vector<2x64xf32>
    %c0_50 = arith.constant 0 : index
    %c0_51 = arith.constant 0 : index
    %64 = vector.load %arg4[%c0_50, %c0_51] : memref<1x64xf32, #tpu.memory_space<vmem>>, vector<1x64xf32>
    %65 = vector.broadcast %64 : vector<1x64xf32> to vector<2x64xf32>
    %66 = arith.addf %63, %65 : vector<2x64xf32>
    %cst_52 = arith.constant 0.000000e+00 : f32
    %67 = vector.broadcast %cst_52 : f32 to vector<2x64xf32>
    %68 = arith.maximumf %66, %67 : vector<2x64xf32>
    %69 = arith.truncf %68 : vector<2x64xf32> to vector<2x64xbf16>
    %c320 = arith.constant 320 : index
    %c0_53 = arith.constant 0 : index
    %70 = vector.load %arg5[%c320, %c0_53] : memref<1024x256xbf16, #tpu.memory_space<vmem>>, vector<64x256xbf16>
    %cst_54 = arith.constant dense<0.000000e+00> : vector<2x256xf32>
    %71 = tpu.matmul %69, %70, %cst_54 {dimension_numbers = #tpu.dot_dimension_numbers<[1], [0], [0], [1], [0, 0, 1, 1], [], []>} : vector<2x64xbf16>, vector<64x256xbf16>, vector<2x256xf32> -> vector<2x256xf32>
    %72 = arith.addf %60, %71 : vector<2x256xf32>
    %c0_55 = arith.constant 0 : index
    %c6144 = arith.constant 6144 : index
    %73 = vector.load %arg1[%c0_55, %c6144] : memref<2x16384xbf16, #tpu.memory_space<vmem>>, vector<2x1024xbf16>
    %c0_56 = arith.constant 0 : index
    %c0_57 = arith.constant 0 : index
    %74 = vector.load %arg3[%c0_56, %c0_57] : memref<1024x64xbf16, #tpu.memory_space<vmem>>, vector<1024x64xbf16>
    %cst_58 = arith.constant dense<0.000000e+00> : vector<2x64xf32>
    %75 = tpu.matmul %73, %74, %cst_58 {dimension_numbers = #tpu.dot_dimension_numbers<[1], [0], [0], [1], [0, 0, 1, 1], [], []>} : vector<2x1024xbf16>, vector<1024x64xbf16>, vector<2x64xf32> -> vector<2x64xf32>
    %c0_59 = arith.constant 0 : index
    %c0_60 = arith.constant 0 : index
    %76 = vector.load %arg4[%c0_59, %c0_60] : memref<1x64xf32, #tpu.memory_space<vmem>>, vector<1x64xf32>
    %77 = vector.broadcast %76 : vector<1x64xf32> to vector<2x64xf32>
    %78 = arith.addf %75, %77 : vector<2x64xf32>
    %cst_61 = arith.constant 0.000000e+00 : f32
    %79 = vector.broadcast %cst_61 : f32 to vector<2x64xf32>
    %80 = arith.maximumf %78, %79 : vector<2x64xf32>
    %81 = arith.truncf %80 : vector<2x64xf32> to vector<2x64xbf16>
    %c384 = arith.constant 384 : index
    %c0_62 = arith.constant 0 : index
    %82 = vector.load %arg5[%c384, %c0_62] : memref<1024x256xbf16, #tpu.memory_space<vmem>>, vector<64x256xbf16>
    %cst_63 = arith.constant dense<0.000000e+00> : vector<2x256xf32>
    %83 = tpu.matmul %81, %82, %cst_63 {dimension_numbers = #tpu.dot_dimension_numbers<[1], [0], [0], [1], [0, 0, 1, 1], [], []>} : vector<2x64xbf16>, vector<64x256xbf16>, vector<2x256xf32> -> vector<2x256xf32>
    %84 = arith.addf %72, %83 : vector<2x256xf32>
    %c0_64 = arith.constant 0 : index
    %c7168 = arith.constant 7168 : index
    %85 = vector.load %arg1[%c0_64, %c7168] : memref<2x16384xbf16, #tpu.memory_space<vmem>>, vector<2x1024xbf16>
    %c0_65 = arith.constant 0 : index
    %c0_66 = arith.constant 0 : index
    %86 = vector.load %arg3[%c0_65, %c0_66] : memref<1024x64xbf16, #tpu.memory_space<vmem>>, vector<1024x64xbf16>
    %cst_67 = arith.constant dense<0.000000e+00> : vector<2x64xf32>
    %87 = tpu.matmul %85, %86, %cst_67 {dimension_numbers = #tpu.dot_dimension_numbers<[1], [0], [0], [1], [0, 0, 1, 1], [], []>} : vector<2x1024xbf16>, vector<1024x64xbf16>, vector<2x64xf32> -> vector<2x64xf32>
    %c0_68 = arith.constant 0 : index
    %c0_69 = arith.constant 0 : index
    %88 = vector.load %arg4[%c0_68, %c0_69] : memref<1x64xf32, #tpu.memory_space<vmem>>, vector<1x64xf32>
    %89 = vector.broadcast %88 : vector<1x64xf32> to vector<2x64xf32>
    %90 = arith.addf %87, %89 : vector<2x64xf32>
    %cst_70 = arith.constant 0.000000e+00 : f32
    %91 = vector.broadcast %cst_70 : f32 to vector<2x64xf32>
    %92 = arith.maximumf %90, %91 : vector<2x64xf32>
    %93 = arith.truncf %92 : vector<2x64xf32> to vector<2x64xbf16>
    %c448 = arith.constant 448 : index
    %c0_71 = arith.constant 0 : index
    %94 = vector.load %arg5[%c448, %c0_71] : memref<1024x256xbf16, #tpu.memory_space<vmem>>, vector<64x256xbf16>
    %cst_72 = arith.constant dense<0.000000e+00> : vector<2x256xf32>
    %95 = tpu.matmul %93, %94, %cst_72 {dimension_numbers = #tpu.dot_dimension_numbers<[1], [0], [0], [1], [0, 0, 1, 1], [], []>} : vector<2x64xbf16>, vector<64x256xbf16>, vector<2x256xf32> -> vector<2x256xf32>
    %96 = arith.addf %84, %95 : vector<2x256xf32>
    %c0_73 = arith.constant 0 : index
    %c8192 = arith.constant 8192 : index
    %97 = vector.load %arg1[%c0_73, %c8192] : memref<2x16384xbf16, #tpu.memory_space<vmem>>, vector<2x1024xbf16>
    %c0_74 = arith.constant 0 : index
    %c0_75 = arith.constant 0 : index
    %98 = vector.load %arg3[%c0_74, %c0_75] : memref<1024x64xbf16, #tpu.memory_space<vmem>>, vector<1024x64xbf16>
    %cst_76 = arith.constant dense<0.000000e+00> : vector<2x64xf32>
    %99 = tpu.matmul %97, %98, %cst_76 {dimension_numbers = #tpu.dot_dimension_numbers<[1], [0], [0], [1], [0, 0, 1, 1], [], []>} : vector<2x1024xbf16>, vector<1024x64xbf16>, vector<2x64xf32> -> vector<2x64xf32>
    %c0_77 = arith.constant 0 : index
    %c0_78 = arith.constant 0 : index
    %100 = vector.load %arg4[%c0_77, %c0_78] : memref<1x64xf32, #tpu.memory_space<vmem>>, vector<1x64xf32>
    %101 = vector.broadcast %100 : vector<1x64xf32> to vector<2x64xf32>
    %102 = arith.addf %99, %101 : vector<2x64xf32>
    %cst_79 = arith.constant 0.000000e+00 : f32
    %103 = vector.broadcast %cst_79 : f32 to vector<2x64xf32>
    %104 = arith.maximumf %102, %103 : vector<2x64xf32>
    %105 = arith.truncf %104 : vector<2x64xf32> to vector<2x64xbf16>
    %c512 = arith.constant 512 : index
    %c0_80 = arith.constant 0 : index
    %106 = vector.load %arg5[%c512, %c0_80] : memref<1024x256xbf16, #tpu.memory_space<vmem>>, vector<64x256xbf16>
    %cst_81 = arith.constant dense<0.000000e+00> : vector<2x256xf32>
    %107 = tpu.matmul %105, %106, %cst_81 {dimension_numbers = #tpu.dot_dimension_numbers<[1], [0], [0], [1], [0, 0, 1, 1], [], []>} : vector<2x64xbf16>, vector<64x256xbf16>, vector<2x256xf32> -> vector<2x256xf32>
    %108 = arith.addf %96, %107 : vector<2x256xf32>
    %c0_82 = arith.constant 0 : index
    %c9216 = arith.constant 9216 : index
    %109 = vector.load %arg1[%c0_82, %c9216] : memref<2x16384xbf16, #tpu.memory_space<vmem>>, vector<2x1024xbf16>
    %c0_83 = arith.constant 0 : index
    %c0_84 = arith.constant 0 : index
    %110 = vector.load %arg3[%c0_83, %c0_84] : memref<1024x64xbf16, #tpu.memory_space<vmem>>, vector<1024x64xbf16>
    %cst_85 = arith.constant dense<0.000000e+00> : vector<2x64xf32>
    %111 = tpu.matmul %109, %110, %cst_85 {dimension_numbers = #tpu.dot_dimension_numbers<[1], [0], [0], [1], [0, 0, 1, 1], [], []>} : vector<2x1024xbf16>, vector<1024x64xbf16>, vector<2x64xf32> -> vector<2x64xf32>
    %c0_86 = arith.constant 0 : index
    %c0_87 = arith.constant 0 : index
    %112 = vector.load %arg4[%c0_86, %c0_87] : memref<1x64xf32, #tpu.memory_space<vmem>>, vector<1x64xf32>
    %113 = vector.broadcast %112 : vector<1x64xf32> to vector<2x64xf32>
    %114 = arith.addf %111, %113 : vector<2x64xf32>
    %cst_88 = arith.constant 0.000000e+00 : f32
    %115 = vector.broadcast %cst_88 : f32 to vector<2x64xf32>
    %116 = arith.maximumf %114, %115 : vector<2x64xf32>
    %117 = arith.truncf %116 : vector<2x64xf32> to vector<2x64xbf16>
    %c576 = arith.constant 576 : index
    %c0_89 = arith.constant 0 : index
    %118 = vector.load %arg5[%c576, %c0_89] : memref<1024x256xbf16, #tpu.memory_space<vmem>>, vector<64x256xbf16>
    %cst_90 = arith.constant dense<0.000000e+00> : vector<2x256xf32>
    %119 = tpu.matmul %117, %118, %cst_90 {dimension_numbers = #tpu.dot_dimension_numbers<[1], [0], [0], [1], [0, 0, 1, 1], [], []>} : vector<2x64xbf16>, vector<64x256xbf16>, vector<2x256xf32> -> vector<2x256xf32>
    %120 = arith.addf %108, %119 : vector<2x256xf32>
    %c0_91 = arith.constant 0 : index
    %c10240 = arith.constant 10240 : index
    %121 = vector.load %arg1[%c0_91, %c10240] : memref<2x16384xbf16, #tpu.memory_space<vmem>>, vector<2x1024xbf16>
    %c0_92 = arith.constant 0 : index
    %c0_93 = arith.constant 0 : index
    %122 = vector.load %arg3[%c0_92, %c0_93] : memref<1024x64xbf16, #tpu.memory_space<vmem>>, vector<1024x64xbf16>
    %cst_94 = arith.constant dense<0.000000e+00> : vector<2x64xf32>
    %123 = tpu.matmul %121, %122, %cst_94 {dimension_numbers = #tpu.dot_dimension_numbers<[1], [0], [0], [1], [0, 0, 1, 1], [], []>} : vector<2x1024xbf16>, vector<1024x64xbf16>, vector<2x64xf32> -> vector<2x64xf32>
    %c0_95 = arith.constant 0 : index
    %c0_96 = arith.constant 0 : index
    %124 = vector.load %arg4[%c0_95, %c0_96] : memref<1x64xf32, #tpu.memory_space<vmem>>, vector<1x64xf32>
    %125 = vector.broadcast %124 : vector<1x64xf32> to vector<2x64xf32>
    %126 = arith.addf %123, %125 : vector<2x64xf32>
    %cst_97 = arith.constant 0.000000e+00 : f32
    %127 = vector.broadcast %cst_97 : f32 to vector<2x64xf32>
    %128 = arith.maximumf %126, %127 : vector<2x64xf32>
    %129 = arith.truncf %128 : vector<2x64xf32> to vector<2x64xbf16>
    %c640 = arith.constant 640 : index
    %c0_98 = arith.constant 0 : index
    %130 = vector.load %arg5[%c640, %c0_98] : memref<1024x256xbf16, #tpu.memory_space<vmem>>, vector<64x256xbf16>
    %cst_99 = arith.constant dense<0.000000e+00> : vector<2x256xf32>
    %131 = tpu.matmul %129, %130, %cst_99 {dimension_numbers = #tpu.dot_dimension_numbers<[1], [0], [0], [1], [0, 0, 1, 1], [], []>} : vector<2x64xbf16>, vector<64x256xbf16>, vector<2x256xf32> -> vector<2x256xf32>
    %132 = arith.addf %120, %131 : vector<2x256xf32>
    %c0_100 = arith.constant 0 : index
    %c11264 = arith.constant 11264 : index
    %133 = vector.load %arg1[%c0_100, %c11264] : memref<2x16384xbf16, #tpu.memory_space<vmem>>, vector<2x1024xbf16>
    %c0_101 = arith.constant 0 : index
    %c0_102 = arith.constant 0 : index
    %134 = vector.load %arg3[%c0_101, %c0_102] : memref<1024x64xbf16, #tpu.memory_space<vmem>>, vector<1024x64xbf16>
    %cst_103 = arith.constant dense<0.000000e+00> : vector<2x64xf32>
    %135 = tpu.matmul %133, %134, %cst_103 {dimension_numbers = #tpu.dot_dimension_numbers<[1], [0], [0], [1], [0, 0, 1, 1], [], []>} : vector<2x1024xbf16>, vector<1024x64xbf16>, vector<2x64xf32> -> vector<2x64xf32>
    %c0_104 = arith.constant 0 : index
    %c0_105 = arith.constant 0 : index
    %136 = vector.load %arg4[%c0_104, %c0_105] : memref<1x64xf32, #tpu.memory_space<vmem>>, vector<1x64xf32>
    %137 = vector.broadcast %136 : vector<1x64xf32> to vector<2x64xf32>
    %138 = arith.addf %135, %137 : vector<2x64xf32>
    %cst_106 = arith.constant 0.000000e+00 : f32
    %139 = vector.broadcast %cst_106 : f32 to vector<2x64xf32>
    %140 = arith.maximumf %138, %139 : vector<2x64xf32>
    %141 = arith.truncf %140 : vector<2x64xf32> to vector<2x64xbf16>
    %c704 = arith.constant 704 : index
    %c0_107 = arith.constant 0 : index
    %142 = vector.load %arg5[%c704, %c0_107] : memref<1024x256xbf16, #tpu.memory_space<vmem>>, vector<64x256xbf16>
    %cst_108 = arith.constant dense<0.000000e+00> : vector<2x256xf32>
    %143 = tpu.matmul %141, %142, %cst_108 {dimension_numbers = #tpu.dot_dimension_numbers<[1], [0], [0], [1], [0, 0, 1, 1], [], []>} : vector<2x64xbf16>, vector<64x256xbf16>, vector<2x256xf32> -> vector<2x256xf32>
    %144 = arith.addf %132, %143 : vector<2x256xf32>
    %c0_109 = arith.constant 0 : index
    %c12288 = arith.constant 12288 : index
    %145 = vector.load %arg1[%c0_109, %c12288] : memref<2x16384xbf16, #tpu.memory_space<vmem>>, vector<2x1024xbf16>
    %c0_110 = arith.constant 0 : index
    %c0_111 = arith.constant 0 : index
    %146 = vector.load %arg3[%c0_110, %c0_111] : memref<1024x64xbf16, #tpu.memory_space<vmem>>, vector<1024x64xbf16>
    %cst_112 = arith.constant dense<0.000000e+00> : vector<2x64xf32>
    %147 = tpu.matmul %145, %146, %cst_112 {dimension_numbers = #tpu.dot_dimension_numbers<[1], [0], [0], [1], [0, 0, 1, 1], [], []>} : vector<2x1024xbf16>, vector<1024x64xbf16>, vector<2x64xf32> -> vector<2x64xf32>
    %c0_113 = arith.constant 0 : index
    %c0_114 = arith.constant 0 : index
    %148 = vector.load %arg4[%c0_113, %c0_114] : memref<1x64xf32, #tpu.memory_space<vmem>>, vector<1x64xf32>
    %149 = vector.broadcast %148 : vector<1x64xf32> to vector<2x64xf32>
    %150 = arith.addf %147, %149 : vector<2x64xf32>
    %cst_115 = arith.constant 0.000000e+00 : f32
    %151 = vector.broadcast %cst_115 : f32 to vector<2x64xf32>
    %152 = arith.maximumf %150, %151 : vector<2x64xf32>
    %153 = arith.truncf %152 : vector<2x64xf32> to vector<2x64xbf16>
    %c768 = arith.constant 768 : index
    %c0_116 = arith.constant 0 : index
    %154 = vector.load %arg5[%c768, %c0_116] : memref<1024x256xbf16, #tpu.memory_space<vmem>>, vector<64x256xbf16>
    %cst_117 = arith.constant dense<0.000000e+00> : vector<2x256xf32>
    %155 = tpu.matmul %153, %154, %cst_117 {dimension_numbers = #tpu.dot_dimension_numbers<[1], [0], [0], [1], [0, 0, 1, 1], [], []>} : vector<2x64xbf16>, vector<64x256xbf16>, vector<2x256xf32> -> vector<2x256xf32>
    %156 = arith.addf %144, %155 : vector<2x256xf32>
    %c0_118 = arith.constant 0 : index
    %c13312 = arith.constant 13312 : index
    %157 = vector.load %arg1[%c0_118, %c13312] : memref<2x16384xbf16, #tpu.memory_space<vmem>>, vector<2x1024xbf16>
    %c0_119 = arith.constant 0 : index
    %c0_120 = arith.constant 0 : index
    %158 = vector.load %arg3[%c0_119, %c0_120] : memref<1024x64xbf16, #tpu.memory_space<vmem>>, vector<1024x64xbf16>
    %cst_121 = arith.constant dense<0.000000e+00> : vector<2x64xf32>
    %159 = tpu.matmul %157, %158, %cst_121 {dimension_numbers = #tpu.dot_dimension_numbers<[1], [0], [0], [1], [0, 0, 1, 1], [], []>} : vector<2x1024xbf16>, vector<1024x64xbf16>, vector<2x64xf32> -> vector<2x64xf32>
    %c0_122 = arith.constant 0 : index
    %c0_123 = arith.constant 0 : index
    %160 = vector.load %arg4[%c0_122, %c0_123] : memref<1x64xf32, #tpu.memory_space<vmem>>, vector<1x64xf32>
    %161 = vector.broadcast %160 : vector<1x64xf32> to vector<2x64xf32>
    %162 = arith.addf %159, %161 : vector<2x64xf32>
    %cst_124 = arith.constant 0.000000e+00 : f32
    %163 = vector.broadcast %cst_124 : f32 to vector<2x64xf32>
    %164 = arith.maximumf %162, %163 : vector<2x64xf32>
    %165 = arith.truncf %164 : vector<2x64xf32> to vector<2x64xbf16>
    %c832 = arith.constant 832 : index
    %c0_125 = arith.constant 0 : index
    %166 = vector.load %arg5[%c832, %c0_125] : memref<1024x256xbf16, #tpu.memory_space<vmem>>, vector<64x256xbf16>
    %cst_126 = arith.constant dense<0.000000e+00> : vector<2x256xf32>
    %167 = tpu.matmul %165, %166, %cst_126 {dimension_numbers = #tpu.dot_dimension_numbers<[1], [0], [0], [1], [0, 0, 1, 1], [], []>} : vector<2x64xbf16>, vector<64x256xbf16>, vector<2x256xf32> -> vector<2x256xf32>
    %168 = arith.addf %156, %167 : vector<2x256xf32>
    %c0_127 = arith.constant 0 : index
    %c14336 = arith.constant 14336 : index
    %169 = vector.load %arg1[%c0_127, %c14336] : memref<2x16384xbf16, #tpu.memory_space<vmem>>, vector<2x1024xbf16>
    %c0_128 = arith.constant 0 : index
    %c0_129 = arith.constant 0 : index
    %170 = vector.load %arg3[%c0_128, %c0_129] : memref<1024x64xbf16, #tpu.memory_space<vmem>>, vector<1024x64xbf16>
    %cst_130 = arith.constant dense<0.000000e+00> : vector<2x64xf32>
    %171 = tpu.matmul %169, %170, %cst_130 {dimension_numbers = #tpu.dot_dimension_numbers<[1], [0], [0], [1], [0, 0, 1, 1], [], []>} : vector<2x1024xbf16>, vector<1024x64xbf16>, vector<2x64xf32> -> vector<2x64xf32>
    %c0_131 = arith.constant 0 : index
    %c0_132 = arith.constant 0 : index
    %172 = vector.load %arg4[%c0_131, %c0_132] : memref<1x64xf32, #tpu.memory_space<vmem>>, vector<1x64xf32>
    %173 = vector.broadcast %172 : vector<1x64xf32> to vector<2x64xf32>
    %174 = arith.addf %171, %173 : vector<2x64xf32>
    %cst_133 = arith.constant 0.000000e+00 : f32
    %175 = vector.broadcast %cst_133 : f32 to vector<2x64xf32>
    %176 = arith.maximumf %174, %175 : vector<2x64xf32>
    %177 = arith.truncf %176 : vector<2x64xf32> to vector<2x64xbf16>
    %c896 = arith.constant 896 : index
    %c0_134 = arith.constant 0 : index
    %178 = vector.load %arg5[%c896, %c0_134] : memref<1024x256xbf16, #tpu.memory_space<vmem>>, vector<64x256xbf16>
    %cst_135 = arith.constant dense<0.000000e+00> : vector<2x256xf32>
    %179 = tpu.matmul %177, %178, %cst_135 {dimension_numbers = #tpu.dot_dimension_numbers<[1], [0], [0], [1], [0, 0, 1, 1], [], []>} : vector<2x64xbf16>, vector<64x256xbf16>, vector<2x256xf32> -> vector<2x256xf32>
    %180 = arith.addf %168, %179 : vector<2x256xf32>
    %c0_136 = arith.constant 0 : index
    %c15360 = arith.constant 15360 : index
    %181 = vector.load %arg1[%c0_136, %c15360] : memref<2x16384xbf16, #tpu.memory_space<vmem>>, vector<2x1024xbf16>
    %c0_137 = arith.constant 0 : index
    %c0_138 = arith.constant 0 : index
    %182 = vector.load %arg3[%c0_137, %c0_138] : memref<1024x64xbf16, #tpu.memory_space<vmem>>, vector<1024x64xbf16>
    %cst_139 = arith.constant dense<0.000000e+00> : vector<2x64xf32>
    %183 = tpu.matmul %181, %182, %cst_139 {dimension_numbers = #tpu.dot_dimension_numbers<[1], [0], [0], [1], [0, 0, 1, 1], [], []>} : vector<2x1024xbf16>, vector<1024x64xbf16>, vector<2x64xf32> -> vector<2x64xf32>
    %c0_140 = arith.constant 0 : index
    %c0_141 = arith.constant 0 : index
    %184 = vector.load %arg4[%c0_140, %c0_141] : memref<1x64xf32, #tpu.memory_space<vmem>>, vector<1x64xf32>
    %185 = vector.broadcast %184 : vector<1x64xf32> to vector<2x64xf32>
    %186 = arith.addf %183, %185 : vector<2x64xf32>
    %cst_142 = arith.constant 0.000000e+00 : f32
    %187 = vector.broadcast %cst_142 : f32 to vector<2x64xf32>
    %188 = arith.maximumf %186, %187 : vector<2x64xf32>
    %189 = arith.truncf %188 : vector<2x64xf32> to vector<2x64xbf16>
    %c960 = arith.constant 960 : index
    %c0_143 = arith.constant 0 : index
    %190 = vector.load %arg5[%c960, %c0_143] : memref<1024x256xbf16, #tpu.memory_space<vmem>>, vector<64x256xbf16>
    %cst_144 = arith.constant dense<0.000000e+00> : vector<2x256xf32>
    %191 = tpu.matmul %189, %190, %cst_144 {dimension_numbers = #tpu.dot_dimension_numbers<[1], [0], [0], [1], [0, 0, 1, 1], [], []>} : vector<2x64xbf16>, vector<64x256xbf16>, vector<2x256xf32> -> vector<2x256xf32>
    %192 = arith.addf %180, %191 : vector<2x256xf32>
    %c0_145 = arith.constant 0 : index
    %c0_146 = arith.constant 0 : index
    %193 = vector.load %arg6[%c0_145, %c0_146] : memref<1x256xf32, #tpu.memory_space<vmem>>, vector<1x256xf32>
    %194 = vector.broadcast %193 : vector<1x256xf32> to vector<2x256xf32>
    %195 = arith.addf %192, %194 : vector<2x256xf32>
    %cst_147 = arith.constant 0.000000e+00 : f32
    %196 = vector.broadcast %cst_147 : f32 to vector<2x256xf32>
    %197 = arith.maximumf %195, %196 : vector<2x256xf32>
    %198 = arith.truncf %197 : vector<2x256xf32> to vector<2x256xbf16>
    %c0_148 = arith.constant 0 : index
    %c0_149 = arith.constant 0 : index
    %199 = vector.load %arg7[%c0_148, %c0_149] : memref<256x64xbf16, #tpu.memory_space<vmem>>, vector<256x64xbf16>
    %cst_150 = arith.constant dense<0.000000e+00> : vector<2x64xf32>
    %200 = tpu.matmul %198, %199, %cst_150 {dimension_numbers = #tpu.dot_dimension_numbers<[1], [0], [0], [1], [0, 0, 1, 1], [], []>} : vector<2x256xbf16>, vector<256x64xbf16>, vector<2x64xf32> -> vector<2x64xf32>
    %c0_151 = arith.constant 0 : index
    %c0_152 = arith.constant 0 : index
    %201 = vector.load %arg8[%c0_151, %c0_152] : memref<1x64xf32, #tpu.memory_space<vmem>>, vector<1x64xf32>
    %202 = vector.broadcast %201 : vector<1x64xf32> to vector<2x64xf32>
    %203 = arith.addf %200, %202 : vector<2x64xf32>
    %204 = arith.negf %203 : vector<2x64xf32>
    %205 = math.exp %204 : vector<2x64xf32>
    %cst_153 = arith.constant 1.000000e+00 : f32
    %206 = vector.broadcast %cst_153 : f32 to vector<2x64xf32>
    %207 = arith.addf %206, %205 : vector<2x64xf32>
    %208 = arith.divf %206, %207 : vector<2x64xf32>
    %c0_154 = arith.constant 0 : index
    %c0_155 = arith.constant 0 : index
    %209 = vector.load %arg13[%c0_154, %c0_155] : memref<2x64xf32, #tpu.memory_space<vmem>>, vector<2x64xf32>
    tpu.vector_store %arg13[%c0_154, %c0_155], %208 {strides = array<i32>} : memref<2x64xf32, #tpu.memory_space<vmem>>, vector<2x64xf32>,
    %210 = arith.truncf %208 : vector<2x64xf32> to vector<2x64xbf16>
    %c0_156 = arith.constant 0 : index
    %c0_157 = arith.constant 0 : index
    %211 = vector.load %arg9[%c0_156, %c0_157] : memref<64x512xbf16, #tpu.memory_space<vmem>>, vector<64x512xbf16>
    %cst_158 = arith.constant dense<0.000000e+00> : vector<2x512xf32>
    %212 = tpu.matmul %210, %211, %cst_158 {dimension_numbers = #tpu.dot_dimension_numbers<[1], [0], [0], [1], [0, 0, 1, 1], [], []>} : vector<2x64xbf16>, vector<64x512xbf16>, vector<2x512xf32> -> vector<2x512xf32>
    %c0_159 = arith.constant 0 : index
    %c0_160 = arith.constant 0 : index
    %213 = vector.load %arg10[%c0_159, %c0_160] : memref<1x512xf32, #tpu.memory_space<vmem>>, vector<1x512xf32>
    %214 = vector.broadcast %213 : vector<1x512xf32> to vector<2x512xf32>
    %215 = arith.addf %212, %214 : vector<2x512xf32>
    %cst_161 = arith.constant 0.000000e+00 : f32
    %216 = vector.broadcast %cst_161 : f32 to vector<2x512xf32>
    %217 = arith.maximumf %215, %216 : vector<2x512xf32>
    %218 = arith.truncf %217 : vector<2x512xf32> to vector<2x512xbf16>
    %c0_162 = arith.constant 0 : index
    %c0_163 = arith.constant 0 : index
    %219 = vector.load %arg11[%c0_162, %c0_163] : memref<512x20xbf16, #tpu.memory_space<vmem>>, vector<512x20xbf16>
    %cst_164 = arith.constant dense<0.000000e+00> : vector<2x20xf32>
    %220 = tpu.matmul %218, %219, %cst_164 {dimension_numbers = #tpu.dot_dimension_numbers<[1], [0], [0], [1], [0, 0, 1, 1], [], []>} : vector<2x512xbf16>, vector<512x20xbf16>, vector<2x20xf32> -> vector<2x20xf32>
    %c0_165 = arith.constant 0 : index
    %c0_166 = arith.constant 0 : index
    %221 = vector.load %arg12[%c0_165, %c0_166] : memref<1x20xf32, #tpu.memory_space<vmem>>, vector<1x20xf32>
    %222 = vector.broadcast %221 : vector<1x20xf32> to vector<2x20xf32>
    %223 = arith.addf %220, %222 : vector<2x20xf32>
    %224 = vector.extract_strided_slice %223 {offsets = [0, 0], sizes = [2, 10], strides = [1, 1]} : vector<2x20xf32> to vector<2x10xf32>
    %225 = vector.extract_strided_slice %223 {offsets = [0, 10], sizes = [2, 10], strides = [1, 1]} : vector<2x20xf32> to vector<2x10xf32>
    %c0_167 = arith.constant 0 : index
    %c0_168 = arith.constant 0 : index
    %226 = vector.load %arg15[%c0_167, %c0_168] : memref<2x10xf32, #tpu.memory_space<vmem>>, vector<2x10xf32>
    tpu.vector_store %arg15[%c0_167, %c0_168], %224 {strides = array<i32>} : memref<2x10xf32, #tpu.memory_space<vmem>>, vector<2x10xf32>,
    %c0_169 = arith.constant 0 : index
    %c0_170 = arith.constant 0 : index
    %227 = vector.load %arg16[%c0_169, %c0_170] : memref<2x10xf32, #tpu.memory_space<vmem>>, vector<2x10xf32>
    tpu.vector_store %arg16[%c0_169, %c0_170], %225 {strides = array<i32>} : memref<2x10xf32, #tpu.memory_space<vmem>>, vector<2x10xf32>,
    %cst_171 = arith.constant 5.000000e-01 : f32
    %228 = vector.broadcast %cst_171 : f32 to vector<2x10xf32>
    %229 = arith.mulf %228, %225 : vector<2x10xf32>
    %230 = math.exp %229 : vector<2x10xf32>
    %c0_172 = arith.constant 0 : index
    %c0_173 = arith.constant 0 : index
    %231 = vector.load %arg2[%c0_172, %c0_173] : memref<2x10xf32, #tpu.memory_space<vmem>>, vector<2x10xf32>
    %232 = arith.mulf %230, %231 : vector<2x10xf32>
    %233 = arith.addf %224, %232 : vector<2x10xf32>
    %c0_174 = arith.constant 0 : index
    %c0_175 = arith.constant 0 : index
    %234 = vector.load %arg14[%c0_174, %c0_175] : memref<2x10xf32, #tpu.memory_space<vmem>>, vector<2x10xf32>
    tpu.vector_store %arg14[%c0_174, %c0_175], %233 {strides = array<i32>} : memref<2x10xf32, #tpu.memory_space<vmem>>, vector<2x10xf32>,
    return
  }
  func.func @transform_0(%arg0: i32) -> (i32, i32) {
    %c0_i32 = arith.constant 0 : i32
    %c0_i32_0 = arith.constant 0 : i32
    %c0_i32_1 = arith.constant 0 : i32
    return %c0_i32, %c0_i32_0 : i32, i32
  }
  func.func @transform_1(%arg0: i32) -> (i32, i32) {
    %c0_i32 = arith.constant 0 : i32
    %c0_i32_0 = arith.constant 0 : i32
    %c0_i32_1 = arith.constant 0 : i32
    return %c0_i32, %c0_i32_0 : i32, i32
  }
  func.func @transform_2(%arg0: i32) -> (i32, i32) {
    %c0_i32 = arith.constant 0 : i32
    %c0_i32_0 = arith.constant 0 : i32
    %c0_i32_1 = arith.constant 0 : i32
    return %c0_i32, %c0_i32_0 : i32, i32
  }
  func.func @transform_3(%arg0: i32) -> (i32, i32) {
    %c0_i32 = arith.constant 0 : i32
    %c0_i32_0 = arith.constant 0 : i32
    %c0_i32_1 = arith.constant 0 : i32
    return %c0_i32, %c0_i32_0 : i32, i32
  }
  func.func @transform_4(%arg0: i32) -> (i32, i32) {
    %c0_i32 = arith.constant 0 : i32
    %c0_i32_0 = arith.constant 0 : i32
    %c0_i32_1 = arith.constant 0 : i32
    return %c0_i32, %c0_i32_0 : i32, i32
  }
  func.func @transform_5(%arg0: i32) -> (i32, i32) {
    %c0_i32 = arith.constant 0 : i32
    %c0_i32_0 = arith.constant 0 : i32
    %c0_i32_1 = arith.constant 0 : i32
    return %c0_i32, %c0_i32_0 : i32, i32
  }
  func.func @transform_6(%arg0: i32) -> (i32, i32) {
    %c0_i32 = arith.constant 0 : i32
    %c0_i32_0 = arith.constant 0 : i32
    %c0_i32_1 = arith.constant 0 : i32
    return %c0_i32, %c0_i32_0 : i32, i32
  }
  func.func @transform_7(%arg0: i32) -> (i32, i32) {
    %c0_i32 = arith.constant 0 : i32
    %c0_i32_0 = arith.constant 0 : i32
    %c0_i32_1 = arith.constant 0 : i32
    return %c0_i32, %c0_i32_0 : i32, i32
  }
  func.func @transform_8(%arg0: i32) -> (i32, i32) {
    %c0_i32 = arith.constant 0 : i32
    %c0_i32_0 = arith.constant 0 : i32
    %c0_i32_1 = arith.constant 0 : i32
    return %c0_i32, %c0_i32_0 : i32, i32
  }
  func.func @transform_9(%arg0: i32) -> (i32, i32) {
    %c0_i32 = arith.constant 0 : i32
    %c0_i32_0 = arith.constant 0 : i32
    %c0_i32_1 = arith.constant 0 : i32
    return %c0_i32, %c0_i32_0 : i32, i32
  }
  func.func @transform_10(%arg0: i32) -> (i32, i32) {
    %c0_i32 = arith.constant 0 : i32
    %c0_i32_0 = arith.constant 0 : i32
    %c0_i32_1 = arith.constant 0 : i32
    return %c0_i32, %c0_i32_0 : i32, i32
  }
  func.func @transform_11(%arg0: i32) -> (i32, i32) {
    %c0_i32 = arith.constant 0 : i32
    %c0_i32_0 = arith.constant 0 : i32
    %c0_i32_1 = arith.constant 0 : i32
    return %c0_i32, %c0_i32_0 : i32, i32
  }
  func.func @transform_12(%arg0: i32) -> (i32, i32) {
    %c0_i32 = arith.constant 0 : i32
    %c0_i32_0 = arith.constant 0 : i32
    %c0_i32_1 = arith.constant 0 : i32
    return %c0_i32, %c0_i32_0 : i32, i32
  }
  func.func @transform_13(%arg0: i32) -> (i32, i32) {
    %c0_i32 = arith.constant 0 : i32
    %c0_i32_0 = arith.constant 0 : i32
    %c0_i32_1 = arith.constant 0 : i32
    return %c0_i32, %c0_i32_0 : i32, i32
  }
  func.func @transform_14(%arg0: i32) -> (i32, i32) {
    %c0_i32 = arith.constant 0 : i32
    %c0_i32_0 = arith.constant 0 : i32
    %c0_i32_1 = arith.constant 0 : i32
    return %c0_i32, %c0_i32_0 : i32, i32
  }
  func.func @transform_15(%arg0: i32) -> (i32, i32) {
    %c0_i32 = arith.constant 0 : i32
    %c0_i32_0 = arith.constant 0 : i32
    %c0_i32_1 = arith.constant 0 : i32
    return %c0_i32, %c0_i32_0 : i32, i32
  }
}

</mosaic_0001>

<llo_original>
// kernel: encoder_forward.4
$region0: #{encoder_forward.4}
  #allocation0 [shape = 'u32[]', space=smem, size = 0x4, offset = 0x4, fixed_abs, tag = 'smem constant byte address 0x4 - core index']
  #allocation1 [shape = 'u32[144,128]{1,0:T(1,128)}', space=vmem, size = 0x12000, scoped, tag = 'internal scratch']
  %s0 = inlined_call_operand.vmem [shape: bf16[2048,16], index: 0, kind: input, shape index: {}]
  %s1 = inlined_call_operand.vmem [shape: bf16[16,32], index: 1, kind: input, shape index: {}]
  %s2 = inlined_call_operand.vmem [shape: f32[1,32], index: 2, kind: input, shape index: {}]
  %s3 = inlined_call_operand.vmem [shape: bf16[2048,32], index: 3, kind: output, shape index: {}]
  %s4 = sld [smem:[#allocation0]]
  $region45: #{encoder_forward.4} parent=0
    _
  %s6 = ssub.s32 1, %s4
  %s7 = scalar_select 0, %s6, %s4
  loop: start=0, step=1, limit=4
  $region2: #{encoder_forward.4} parent=0 // loop_pre_header
    _
  $region3: #{encoder_forward.4} parent=0 // loop_header
    %s9 = sphi 0, %s13
    %p10 = scmp.ge.s32.totalorder %s9, 4
    %s19 = sphi 0, %s21
    %s22 = sphi 0, %s19
    %s23 = sphi 0, %s22
    %s39 = sphi 0, %s23
    %s43 = sphi 0, %s43
    %s45 = sphi 0, %s43
    %s46 = sphi 0, %s45
    %s60 = sphi 0, %s46
    %s64 = sphi 0, %s64
    %s66 = sphi 0, %s64
    %s67 = sphi 0, %s66
    %s81 = sphi 0, %s67
    %s87 = sphi 0, %s89
    %s90 = sphi 0, %s87
    %s91 = sphi 0, %s90
    %s107 = sphi 0, %s91
  $region4: #{encoder_forward.4} parent=0 // loop_header_branch
    %12 = sbr.rel (%p10) target = $region8
  $region5: #{encoder_forward.4} parent=0 // loop_body
    %s14 = ssub.s32 %s9, 1
    %s15 = ssub.s32 %s9, 2
    %s16 = sadd.s32 %s9, 1
    %s17 = ssub.s32 %s9, %s16
    %p18 = scmp.eq.s32.totalorder %s17, 0
    %s20 = sadd.s32 %s19, 1
    %s21 = scalar_select %p18, %s19, %s20
    %p24 = pneg %p18
    %p25 = scmp.eq.s32.totalorder %s9, 1
    %p26 = por %p24, %p25
    %p27 = scmp.ne.s32.totalorder %s19, %s22
    %p28 = scmp.eq.s32.totalorder %s9, 0
    %p29 = por %p27, %p28
    %p30 = scmp.ne.s32.totalorder %s19, %s22
    %p31 = scmp.eq.s32.totalorder %s14, 1
    %p32 = por %p30, %p31
    %p33 = scmp.ne.s32.totalorder %s22, %s23
    %p34 = scmp.eq.s32.totalorder %s14, 0
    %p35 = por %p33, %p34
    %p36 = scmp.ne.s32.totalorder %s22, %s23
    %p37 = scmp.eq.s32.totalorder %s15, 1
    %p38 = por %p36, %p37
    %p40 = scmp.ne.s32.totalorder %s23, %s39
    %p41 = scmp.eq.s32.totalorder %s15, 0
    %p42 = por %p40, %p41
    %s44 = sadd.s32 %s43, 1
    %p47 = scmp.eq.s32.totalorder %s9, 1
    %p48 = scmp.ne.s32.totalorder %s43, %s45
    %p49 = scmp.eq.s32.totalorder %s9, 0
    %p50 = por %p48, %p49
    %p51 = scmp.ne.s32.totalorder %s43, %s45
    %p52 = scmp.eq.s32.totalorder %s14, 1
    %p53 = por %p51, %p52
    %p54 = scmp.ne.s32.totalorder %s45, %s46
    %p55 = scmp.eq.s32.totalorder %s14, 0
    %p56 = por %p54, %p55
    %p57 = scmp.ne.s32.totalorder %s45, %s46
    %p58 = scmp.eq.s32.totalorder %s15, 1
    %p59 = por %p57, %p58
    %p61 = scmp.ne.s32.totalorder %s46, %s60
    %p62 = scmp.eq.s32.totalorder %s15, 0
    %p63 = por %p61, %p62
    %s65 = sadd.s32 %s64, 1
    %p68 = scmp.eq.s32.totalorder %s9, 1
    %p69 = scmp.ne.s32.totalorder %s64, %s66
    %p70 = scmp.eq.s32.totalorder %s9, 0
    %p71 = por %p69, %p70
    %p72 = scmp.ne.s32.totalorder %s64, %s66
    %p73 = scmp.eq.s32.totalorder %s14, 1
    %p74 = por %p72, %p73
    %p75 = scmp.ne.s32.totalorder %s66, %s67
    %p76 = scmp.eq.s32.totalorder %s14, 0
    %p77 = por %p75, %p76
    %p78 = scmp.ne.s32.totalorder %s66, %s67
    %p79 = scmp.eq.s32.totalorder %s15, 1
    %p80 = por %p78, %p79
    %p82 = scmp.ne.s32.totalorder %s67, %s81
    %p83 = scmp.eq.s32.totalorder %s15, 0
    %p84 = por %p82, %p83
    %s85 = ssub.s32 %s9, %s16
    %p86 = scmp.eq.s32.totalorder %s85, 0
    %s88 = sadd.s32 %s87, 1
    %s89 = scalar_select %p86, %s87, %s88
    %p92 = pneg %p86
    %p93 = scmp.eq.s32.totalorder %s9, 1
    %p94 = por %p92, %p93
    %p95 = scmp.ne.s32.totalorder %s87, %s90
    %p96 = scmp.eq.s32.totalorder %s9, 0
    %p97 = por %p95, %p96
    %p98 = scmp.ne.s32.totalorder %s87, %s90
    %p99 = scmp.eq.s32.totalorder %s14, 1
    %p100 = por %p98, %p99
    %p101 = scmp.ne.s32.totalorder %s90, %s91
    %p102 = scmp.eq.s32.totalorder %s14, 0
    %p103 = por %p101, %p102
    %p104 = scmp.ne.s32.totalorder %s90, %s91
    %p105 = scmp.eq.s32.totalorder %s15, 1
    %p106 = por %p104, %p105
    %p108 = scmp.ne.s32.totalorder %s91, %s107
    %p109 = scmp.eq.s32.totalorder %s15, 0
    %p110 = por %p108, %p109
    %p111 = scmp.le.s32.totalorder 1, %s9
    %p112 = scmp.lt.s32.totalorder %s9, 3
    %p113 = pnand %p111, %p112
    %p114 = pneg %p113
    // Predicated region
    $region9: #{encoder_forward.4} parent=5 // pred_check
      _
    $region10: #{encoder_forward.4} parent=5 // pred_check_branch
      %116 = sbr.rel (%p113) target = $region12
    $region11: #{encoder_forward.4} parent=5 // pred_region
      %s117 = ssub.s32 %s9, 1
      // Predicated region
      $region13: #{encoder_forward.4} parent=11 // pred_check
        %p118 = pneg %p56
      $region14: #{encoder_forward.4} parent=11 // pred_check_branch
        %120 = sbr.rel (%p118) target = $region16
      $region15: #{encoder_forward.4} parent=11 // pred_region
        _
      $region16: #{encoder_forward.4} parent=11 // pred_fallthru
        _
      // Predicated region
      $region17: #{encoder_forward.4} parent=11 // pred_check
        %p121 = pneg %p77
      $region18: #{encoder_forward.4} parent=11 // pred_check_branch
        %123 = sbr.rel (%p121) target = $region20
      $region19: #{encoder_forward.4} parent=11 // pred_region
        _
      $region20: #{encoder_forward.4} parent=11 // pred_fallthru
        _
    $region12: #{encoder_forward.4} parent=5 // pred_fallthru
      _
    %p124 = scmp.lt.s32.totalorder %s9, 2
    // Predicated region
    $region21: #{encoder_forward.4} parent=5 // pred_check
      %p125 = pneg %p124
    $region22: #{encoder_forward.4} parent=5 // pred_check_branch
      %127 = sbr.rel (%p125) target = $region24
    $region23: #{encoder_forward.4} parent=5 // pred_region
      // Predicated region
      $region25: #{encoder_forward.4} parent=23 // pred_check
        %p128 = pneg %p29
      $region26: #{encoder_forward.4} parent=23 // pred_check_branch
        %130 = sbr.rel (%p128) target = $region28
      $region27: #{encoder_forward.4} parent=23 // pred_region
        %s131 = smul.u32 128, %s9
        %p132 = scmp.lt.s32.totalorder %s131, 255
        %s133 = scalar_select %p132, %s131, 255
        %s134 = smul.addr %s133, 4
        %s135 = scalar_lea.vmem %s0, %s134
        %s136 = smul.u32 128, %s9
      $region28: #{encoder_forward.4} parent=23 // pred_fallthru
        _
    $region24: #{encoder_forward.4} parent=5 // pred_fallthru
      _
    %p137 = scmp.le.s32.totalorder 1, %s9
    %p138 = scmp.lt.s32.totalorder %s9, 3
    %p139 = pnand %p137, %p138
    %p140 = pneg %p139
    // Predicated region
    $region29: #{encoder_forward.4} parent=5 // pred_check
      _
    $region30: #{encoder_forward.4} parent=5 // pred_check_branch
      %142 = sbr.rel (%p139) target = $region32
    $region31: #{encoder_forward.4} parent=5 // pred_region
      %s143 = ssub.s32 %s9, 1
      %s144 = smul.u32 128, %s14
      %p145 = scmp.lt.s32.totalorder %s144, 255
      %s146 = scalar_select %p145, %s144, 255
      %s147 = smul.addr %s146, 4
      %s148 = scalar_lea.vmem %s0, %s147
      %p149 = pneg %p35
      %p150 = pneg %p32
      %p151 = pneg %p56
      %p152 = pneg %p53
      %p153 = pneg %p77
      %p154 = pneg %p74
      %p155 = pneg %p103
      %p156 = pneg %p100
      %s157 = smul.u32 128, %s14
      %p158 = scmp.lt.s32.totalorder %s157, 255
      %s159 = scalar_select %p158, %s157, 255
      %s160 = smul.addr %s159, 4
      %s161 = scalar_lea.vmem %s3, %s160
      %s162 = smul.u32 128, %s14
      %p163 = scmp.lt.s32.totalorder %s162, 255
      %s164 = scalar_select %p163, %s162, 255
      %s165 = smul.addr %s164, 4
      %s166 = scalar_lea.vmem %s0, %s165
      %s167 = smul.u32 128, %s14
      %s168 = smul.u32 128, %s14
      %p169 = scmp.lt.s32.totalorder %s168, 255
      %s170 = scalar_select %p169, %s168, 255
      %s171 = smul.addr %s170, 4
      %s172 = scalar_lea.vmem %s3, %s171
      %s173 = smul.u32 128, %s14
      %v175 = vld [vmem:[%s166] sm:$0xf]
      %v176 = vld [vmem:[%s166 + $0x4] sm:$0xf]
      %v177 = vld [vmem:[%s166 + $0x8] sm:$0xf]
      %v178 = vld [vmem:[%s166 + $0xc] sm:$0xf]
      %v179 = vld [vmem:[%s166 + $0x10] sm:$0xf]
      %v180 = vld [vmem:[%s166 + $0x14] sm:$0xf]
      %v181 = vld [vmem:[%s166 + $0x18] sm:$0xf]
      %v182 = vld [vmem:[%s166 + $0x1c] sm:$0xf]
      %v183 = vld [vmem:[%s166 + $0x20] sm:$0xf]
      %v184 = vld [vmem:[%s166 + $0x24] sm:$0xf]
      %v185 = vld [vmem:[%s166 + $0x28] sm:$0xf]
      %v186 = vld [vmem:[%s166 + $0x2c] sm:$0xf]
      %v187 = vld [vmem:[%s166 + $0x30] sm:$0xf]
      %v188 = vld [vmem:[%s166 + $0x34] sm:$0xf]
      %v189 = vld [vmem:[%s166 + $0x38] sm:$0xf]
      %v190 = vld [vmem:[%s166 + $0x3c] sm:$0xf]
      %v191 = vld [vmem:[%s166 + $0x40] sm:$0xf]
      %v192 = vld [vmem:[%s166 + $0x44] sm:$0xf]
      %v193 = vld [vmem:[%s166 + $0x48] sm:$0xf]
      %v194 = vld [vmem:[%s166 + $0x4c] sm:$0xf]
      %v195 = vld [vmem:[%s166 + $0x50] sm:$0xf]
      %v196 = vld [vmem:[%s166 + $0x54] sm:$0xf]
      %v197 = vld [vmem:[%s166 + $0x58] sm:$0xf]
      %v198 = vld [vmem:[%s166 + $0x5c] sm:$0xf]
      %v199 = vld [vmem:[%s166 + $0x60] sm:$0xf]
      %v200 = vld [vmem:[%s166 + $0x64] sm:$0xf]
      %v201 = vld [vmem:[%s166 + $0x68] sm:$0xf]
      %v202 = vld [vmem:[%s166 + $0x6c] sm:$0xf]
      %v203 = vld [vmem:[%s166 + $0x70] sm:$0xf]
      %v204 = vld [vmem:[%s166 + $0x74] sm:$0xf]
      %v205 = vld [vmem:[%s166 + $0x78] sm:$0xf]
      %v206 = vld [vmem:[%s166 + $0x7c] sm:$0xf]
      %v207 = vld [vmem:[%s166 + $0x80] sm:$0xf]
      %v208 = vld [vmem:[%s166 + $0x84] sm:$0xf]
      %v209 = vld [vmem:[%s166 + $0x88] sm:$0xf]
      %v210 = vld [vmem:[%s166 + $0x8c] sm:$0xf]
      %v211 = vld [vmem:[%s166 + $0x90] sm:$0xf]
      %v212 = vld [vmem:[%s166 + $0x94] sm:$0xf]
      %v213 = vld [vmem:[%s166 + $0x98] sm:$0xf]
      %v214 = vld [vmem:[%s166 + $0x9c] sm:$0xf]
      %v215 = vld [vmem:[%s166 + $0xa0] sm:$0xf]
      %v216 = vld [vmem:[%s166 + $0xa4] sm:$0xf]
      %v217 = vld [vmem:[%s166 + $0xa8] sm:$0xf]
      %v218 = vld [vmem:[%s166 + $0xac] sm:$0xf]
      %v219 = vld [vmem:[%s166 + $0xb0] sm:$0xf]
      %v220 = vld [vmem:[%s166 + $0xb4] sm:$0xf]
      %v221 = vld [vmem:[%s166 + $0xb8] sm:$0xf]
      %v222 = vld [vmem:[%s166 + $0xbc] sm:$0xf]
      %v223 = vld [vmem:[%s166 + $0xc0] sm:$0xf]
      %v224 = vld [vmem:[%s166 + $0xc4] sm:$0xf]
      %v225 = vld [vmem:[%s166 + $0xc8] sm:$0xf]
      %v226 = vld [vmem:[%s166 + $0xcc] sm:$0xf]
      %v227 = vld [vmem:[%s166 + $0xd0] sm:$0xf]
      %v228 = vld [vmem:[%s166 + $0xd4] sm:$0xf]
      %v229 = vld [vmem:[%s166 + $0xd8] sm:$0xf]
      %v230 = vld [vmem:[%s166 + $0xdc] sm:$0xf]
      %v231 = vld [vmem:[%s166 + $0xe0] sm:$0xf]
      %v232 = vld [vmem:[%s166 + $0xe4] sm:$0xf]
      %v233 = vld [vmem:[%s166 + $0xe8] sm:$0xf]
      %v234 = vld [vmem:[%s166 + $0xec] sm:$0xf]
      %v235 = vld [vmem:[%s166 + $0xf0] sm:$0xf]
      %v236 = vld [vmem:[%s166 + $0xf4] sm:$0xf]
      %v237 = vld [vmem:[%s166 + $0xf8] sm:$0xf]
      %v238 = vld [vmem:[%s166 + $0xfc] sm:$0xf]
      %v239 = vld [vmem:[%s166 + $0x100] sm:$0xf]
      %v240 = vld [vmem:[%s166 + $0x104] sm:$0xf]
      %v241 = vld [vmem:[%s166 + $0x108] sm:$0xf]
      %v242 = vld [vmem:[%s166 + $0x10c] sm:$0xf]
      %v243 = vld [vmem:[%s166 + $0x110] sm:$0xf]
      %v244 = vld [vmem:[%s166 + $0x114] sm:$0xf]
      %v245 = vld [vmem:[%s166 + $0x118] sm:$0xf]
      %v246 = vld [vmem:[%s166 + $0x11c] sm:$0xf]
      %v247 = vld [vmem:[%s166 + $0x120] sm:$0xf]
      %v248 = vld [vmem:[%s166 + $0x124] sm:$0xf]
      %v249 = vld [vmem:[%s166 + $0x128] sm:$0xf]
      %v250 = vld [vmem:[%s166 + $0x12c] sm:$0xf]
      %v251 = vld [vmem:[%s166 + $0x130] sm:$0xf]
      %v252 = vld [vmem:[%s166 + $0x134] sm:$0xf]
      %v253 = vld [vmem:[%s166 + $0x138] sm:$0xf]
      %v254 = vld [vmem:[%s166 + $0x13c] sm:$0xf]
      %v255 = vld [vmem:[%s166 + $0x140] sm:$0xf]
      %v256 = vld [vmem:[%s166 + $0x144] sm:$0xf]
      %v257 = vld [vmem:[%s166 + $0x148] sm:$0xf]
      %v258 = vld [vmem:[%s166 + $0x14c] sm:$0xf]
      %v259 = vld [vmem:[%s166 + $0x150] sm:$0xf]
      %v260 = vld [vmem:[%s166 + $0x154] sm:$0xf]
      %v261 = vld [vmem:[%s166 + $0x158] sm:$0xf]
      %v262 = vld [vmem:[%s166 + $0x15c] sm:$0xf]
      %v263 = vld [vmem:[%s166 + $0x160] sm:$0xf]
      %v264 = vld [vmem:[%s166 + $0x164] sm:$0xf]
      %v265 = vld [vmem:[%s166 + $0x168] sm:$0xf]
      %v266 = vld [vmem:[%s166 + $0x16c] sm:$0xf]
      %v267 = vld [vmem:[%s166 + $0x170] sm:$0xf]
      %v268 = vld [vmem:[%s166 + $0x174] sm:$0xf]
      %v269 = vld [vmem:[%s166 + $0x178] sm:$0xf]
      %v270 = vld [vmem:[%s166 + $0x17c] sm:$0xf]
      %v271 = vld [vmem:[%s166 + $0x180] sm:$0xf]
      %v272 = vld [vmem:[%s166 + $0x184] sm:$0xf]
      %v273 = vld [vmem:[%s166 + $0x188] sm:$0xf]
      %v274 = vld [vmem:[%s166 + $0x18c] sm:$0xf]
      %v275 = vld [vmem:[%s166 + $0x190] sm:$0xf]
      %v276 = vld [vmem:[%s166 + $0x194] sm:$0xf]
      %v277 = vld [vmem:[%s166 + $0x198] sm:$0xf]
      %v278 = vld [vmem:[%s166 + $0x19c] sm:$0xf]
      %v279 = vld [vmem:[%s166 + $0x1a0] sm:$0xf]
      %v280 = vld [vmem:[%s166 + $0x1a4] sm:$0xf]
      %v281 = vld [vmem:[%s166 + $0x1a8] sm:$0xf]
      %v282 = vld [vmem:[%s166 + $0x1ac] sm:$0xf]
      %v283 = vld [vmem:[%s166 + $0x1b0] sm:$0xf]
      %v284 = vld [vmem:[%s166 + $0x1b4] sm:$0xf]
      %v285 = vld [vmem:[%s166 + $0x1b8] sm:$0xf]
      %v286 = vld [vmem:[%s166 + $0x1bc] sm:$0xf]
      %v287 = vld [vmem:[%s166 + $0x1c0] sm:$0xf]
      %v288 = vld [vmem:[%s166 + $0x1c4] sm:$0xf]
      %v289 = vld [vmem:[%s166 + $0x1c8] sm:$0xf]
      %v290 = vld [vmem:[%s166 + $0x1cc] sm:$0xf]
      %v291 = vld [vmem:[%s166 + $0x1d0] sm:$0xf]
      %v292 = vld [vmem:[%s166 + $0x1d4] sm:$0xf]
      %v293 = vld [vmem:[%s166 + $0x1d8] sm:$0xf]
      %v294 = vld [vmem:[%s166 + $0x1dc] sm:$0xf]
      %v295 = vld [vmem:[%s166 + $0x1e0] sm:$0xf]
      %v296 = vld [vmem:[%s166 + $0x1e4] sm:$0xf]
      %v297 = vld [vmem:[%s166 + $0x1e8] sm:$0xf]
      %v298 = vld [vmem:[%s166 + $0x1ec] sm:$0xf]
      %v299 = vld [vmem:[%s166 + $0x1f0] sm:$0xf]
      %v300 = vld [vmem:[%s166 + $0x1f4] sm:$0xf]
      %v301 = vld [vmem:[%s166 + $0x1f8] sm:$0xf]
      %v302 = vld [vmem:[%s166 + $0x1fc] sm:$0xf]
      %v303 = vld [vmem:[%s1] sm:$0xf]
      %v304 = vld [vmem:[%s1 + $0x4] sm:$0xf]
      %v305 = vld [vmem:[%s2] sm:$0x1]
      %v307 = vlaneseq
      %v308 = vshrl.u32 %v307, 7
      %v309 = vsub.s32 0, %v308
      %v310 = vrot.slane %v305, %v309
      %v440 = vunpack.c.l.b16 %v175
      %v441 = vunpack.c.l.b16 %v176
      %v442 = vunpack.c.l.b16 %v177
      %v443 = vunpack.c.l.b16 %v178
      %v444 = vunpack.c.l.b16 %v179
      %v445 = vunpack.c.l.b16 %v180
      %v446 = vunpack.c.l.b16 %v181
      %v447 = vunpack.c.l.b16 %v182
      %v448 = vunpack.c.l.b16 %v183
      %v449 = vunpack.c.l.b16 %v184
      %v450 = vunpack.c.l.b16 %v185
      %v451 = vunpack.c.l.b16 %v186
      %v452 = vunpack.c.l.b16 %v187
      %v453 = vunpack.c.l.b16 %v188
      %v454 = vunpack.c.l.b16 %v189
      %v455 = vunpack.c.l.b16 %v190
      %v456 = vunpack.c.l.b16 %v191
      %v457 = vunpack.c.l.b16 %v192
      %v458 = vunpack.c.l.b16 %v193
      %v459 = vunpack.c.l.b16 %v194
      %v460 = vunpack.c.l.b16 %v195
      %v461 = vunpack.c.l.b16 %v196
      %v462 = vunpack.c.l.b16 %v197
      %v463 = vunpack.c.l.b16 %v198
      %v464 = vunpack.c.l.b16 %v199
      %v465 = vunpack.c.l.b16 %v200
      %v466 = vunpack.c.l.b16 %v201
      %v467 = vunpack.c.l.b16 %v202
      %v468 = vunpack.c.l.b16 %v203
      %v469 = vunpack.c.l.b16 %v204
      %v470 = vunpack.c.l.b16 %v205
      %v471 = vunpack.c.l.b16 %v206
      %v472 = vunpack.c.l.b16 %v207
      %v473 = vunpack.c.l.b16 %v208
      %v474 = vunpack.c.l.b16 %v209
      %v475 = vunpack.c.l.b16 %v210
      %v476 = vunpack.c.l.b16 %v211
      %v477 = vunpack.c.l.b16 %v212
      %v478 = vunpack.c.l.b16 %v213
      %v479 = vunpack.c.l.b16 %v214
      %v480 = vunpack.c.l.b16 %v215
      %v481 = vunpack.c.l.b16 %v216
      %v482 = vunpack.c.l.b16 %v217
      %v483 = vunpack.c.l.b16 %v218
      %v484 = vunpack.c.l.b16 %v219
      %v485 = vunpack.c.l.b16 %v220
      %v486 = vunpack.c.l.b16 %v221
      %v487 = vunpack.c.l.b16 %v222
      %v488 = vunpack.c.l.b16 %v223
      %v489 = vunpack.c.l.b16 %v224
      %v490 = vunpack.c.l.b16 %v225
      %v491 = vunpack.c.l.b16 %v226
      %v492 = vunpack.c.l.b16 %v227
      %v493 = vunpack.c.l.b16 %v228
      %v494 = vunpack.c.l.b16 %v229
      %v495 = vunpack.c.l.b16 %v230
      %v496 = vunpack.c.l.b16 %v231
      %v497 = vunpack.c.l.b16 %v232
      %v498 = vunpack.c.l.b16 %v233
      %v499 = vunpack.c.l.b16 %v234
      %v500 = vunpack.c.l.b16 %v235
      %v501 = vunpack.c.l.b16 %v236
      %v502 = vunpack.c.l.b16 %v237
      %v503 = vunpack.c.l.b16 %v238
      %v504 = vunpack.c.l.b16 %v239
      %v505 = vunpack.c.l.b16 %v240
      %v506 = vunpack.c.l.b16 %v241
      %v507 = vunpack.c.l.b16 %v242
      %v508 = vunpack.c.l.b16 %v243
      %v509 = vunpack.c.l.b16 %v244
      %v510 = vunpack.c.l.b16 %v245
      %v511 = vunpack.c.l.b16 %v246
      %v512 = vunpack.c.l.b16 %v247
      %v513 = vunpack.c.l.b16 %v248
      %v514 = vunpack.c.l.b16 %v249
      %v515 = vunpack.c.l.b16 %v250
      %v516 = vunpack.c.l.b16 %v251
      %v517 = vunpack.c.l.b16 %v252
      %v518 = vunpack.c.l.b16 %v253
      %v519 = vunpack.c.l.b16 %v254
      %v520 = vunpack.c.l.b16 %v255
      %v521 = vunpack.c.l.b16 %v256
      %v522 = vunpack.c.l.b16 %v257
      %v523 = vunpack.c.l.b16 %v258
      %v524 = vunpack.c.l.b16 %v259
      %v525 = vunpack.c.l.b16 %v260
      %v526 = vunpack.c.l.b16 %v261
      %v527 = vunpack.c.l.b16 %v262
      %v528 = vunpack.c.l.b16 %v263
      %v529 = vunpack.c.l.b16 %v264
      %v530 = vunpack.c.l.b16 %v265
      %v531 = vunpack.c.l.b16 %v266
      %v532 = vunpack.c.l.b16 %v267
      %v533 = vunpack.c.l.b16 %v268
      %v534 = vunpack.c.l.b16 %v269
      %v535 = vunpack.c.l.b16 %v270
      %v536 = vunpack.c.l.b16 %v271
      %v537 = vunpack.c.l.b16 %v272
      %v538 = vunpack.c.l.b16 %v273
      %v539 = vunpack.c.l.b16 %v274
      %v540 = vunpack.c.l.b16 %v275
      %v541 = vunpack.c.l.b16 %v276
      %v542 = vunpack.c.l.b16 %v277
      %v543 = vunpack.c.l.b16 %v278
      %v544 = vunpack.c.l.b16 %v279
      %v545 = vunpack.c.l.b16 %v280
      %v546 = vunpack.c.l.b16 %v281
      %v547 = vunpack.c.l.b16 %v282
      %v548 = vunpack.c.l.b16 %v283
      %v549 = vunpack.c.l.b16 %v284
      %v550 = vunpack.c.l.b16 %v285
      %v551 = vunpack.c.l.b16 %v286
      %v552 = vunpack.c.l.b16 %v287
      %v553 = vunpack.c.l.b16 %v288
      %v554 = vunpack.c.l.b16 %v289
      %v555 = vunpack.c.l.b16 %v290
      %v556 = vunpack.c.l.b16 %v291
      %v557 = vunpack.c.l.b16 %v292
      %v558 = vunpack.c.l.b16 %v293
      %v559 = vunpack.c.l.b16 %v294
      %v560 = vunpack.c.l.b16 %v295
      %v561 = vunpack.c.l.b16 %v296
      %v562 = vunpack.c.l.b16 %v297
      %v563 = vunpack.c.l.b16 %v298
      %v564 = vunpack.c.l.b16 %v299
      %v565 = vunpack.c.l.b16 %v300
      %v566 = vunpack.c.l.b16 %v301
      %v567 = vunpack.c.l.b16 %v302
      %v568 = vpack.c.b16 %v441, %v440
      %v569 = vpack.c.b16 %v443, %v442
      %v570 = vpack.c.b16 %v445, %v444
      %v571 = vpack.c.b16 %v447, %v446
      %v572 = vpack.c.b16 %v449, %v448
      %v573 = vpack.c.b16 %v451, %v450
      %v574 = vpack.c.b16 %v453, %v452
      %v575 = vpack.c.b16 %v455, %v454
      %v576 = vpack.c.b16 %v457, %v456
      %v577 = vpack.c.b16 %v459, %v458
      %v578 = vpack.c.b16 %v461, %v460
      %v579 = vpack.c.b16 %v463, %v462
      %v580 = vpack.c.b16 %v465, %v464
      %v581 = vpack.c.b16 %v467, %v466
      %v582 = vpack.c.b16 %v469, %v468
      %v583 = vpack.c.b16 %v471, %v470
      %v584 = vpack.c.b16 %v473, %v472
      %v585 = vpack.c.b16 %v475, %v474
      %v586 = vpack.c.b16 %v477, %v476
      %v587 = vpack.c.b16 %v479, %v478
      %v588 = vpack.c.b16 %v481, %v480
      %v589 = vpack.c.b16 %v483, %v482
      %v590 = vpack.c.b16 %v485, %v484
      %v591 = vpack.c.b16 %v487, %v486
      %v592 = vpack.c.b16 %v489, %v488
      %v593 = vpack.c.b16 %v491, %v490
      %v594 = vpack.c.b16 %v493, %v492
      %v595 = vpack.c.b16 %v495, %v494
      %v596 = vpack.c.b16 %v497, %v496
      %v597 = vpack.c.b16 %v499, %v498
      %v598 = vpack.c.b16 %v501, %v500
      %v599 = vpack.c.b16 %v503, %v502
      %v600 = vpack.c.b16 %v505, %v504
      %v601 = vpack.c.b16 %v507, %v506
      %v602 = vpack.c.b16 %v509, %v508
      %v603 = vpack.c.b16 %v511, %v510
      %v604 = vpack.c.b16 %v513, %v512
      %v605 = vpack.c.b16 %v515, %v514
      %v606 = vpack.c.b16 %v517, %v516
      %v607 = vpack.c.b16 %v519, %v518
      %v608 = vpack.c.b16 %v521, %v520
      %v609 = vpack.c.b16 %v523, %v522
      %v610 = vpack.c.b16 %v525, %v524
      %v611 = vpack.c.b16 %v527, %v526
      %v612 = vpack.c.b16 %v529, %v528
      %v613 = vpack.c.b16 %v531, %v530
      %v614 = vpack.c.b16 %v533, %v532
      %v615 = vpack.c.b16 %v535, %v534
      %v616 = vpack.c.b16 %v537, %v536
      %v617 = vpack.c.b16 %v539, %v538
      %v618 = vpack.c.b16 %v541, %v540
      %v619 = vpack.c.b16 %v543, %v542
      %v620 = vpack.c.b16 %v545, %v544
      %v621 = vpack.c.b16 %v547, %v546
      %v622 = vpack.c.b16 %v549, %v548
      %v623 = vpack.c.b16 %v551, %v550
      %v624 = vpack.c.b16 %v553, %v552
      %v625 = vpack.c.b16 %v555, %v554
      %v626 = vpack.c.b16 %v557, %v556
      %v627 = vpack.c.b16 %v559, %v558
      %v628 = vpack.c.b16 %v561, %v560
      %v629 = vpack.c.b16 %v563, %v562
      %v630 = vpack.c.b16 %v565, %v564
      %v631 = vpack.c.b16 %v567, %v566
      %v634 = vunpack.c.l.b16 %v303
      %v635 = vunpack.c.l.b16 %v304
      %v636 = vpack.c.b16 %v635, %v634
      %vm638 = vcmask 130048
      %v640 = vsel %vm638, %v568, 0
      %v643 = vsel %vm638, %v569, 0
      %v646 = vsel %vm638, %v570, 0
      %v649 = vsel %vm638, %v571, 0
      %v652 = vsel %vm638, %v572, 0
      %v655 = vsel %vm638, %v573, 0
      %v658 = vsel %vm638, %v574, 0
      %v661 = vsel %vm638, %v575, 0
      %v664 = vsel %vm638, %v576, 0
      %v667 = vsel %vm638, %v577, 0
      %v670 = vsel %vm638, %v578, 0
      %v673 = vsel %vm638, %v579, 0
      %v676 = vsel %vm638, %v580, 0
      %v679 = vsel %vm638, %v581, 0
      %v682 = vsel %vm638, %v582, 0
      %v685 = vsel %vm638, %v583, 0
      %v688 = vsel %vm638, %v584, 0
      %v691 = vsel %vm638, %v585, 0
      %v694 = vsel %vm638, %v586, 0
      %v697 = vsel %vm638, %v587, 0
      %v700 = vsel %vm638, %v588, 0
      %v703 = vsel %vm638, %v589, 0
      %v706 = vsel %vm638, %v590, 0
      %v709 = vsel %vm638, %v591, 0
      %v712 = vsel %vm638, %v592, 0
      %v715 = vsel %vm638, %v593, 0
      %v718 = vsel %vm638, %v594, 0
      %v721 = vsel %vm638, %v595, 0
      %v724 = vsel %vm638, %v596, 0
      %v727 = vsel %vm638, %v597, 0
      %v730 = vsel %vm638, %v598, 0
      %v733 = vsel %vm638, %v599, 0
      %v736 = vsel %vm638, %v600, 0
      %v739 = vsel %vm638, %v601, 0
      %v742 = vsel %vm638, %v602, 0
      %v745 = vsel %vm638, %v603, 0
      %v748 = vsel %vm638, %v604, 0
      %v751 = vsel %vm638, %v605, 0
      %v754 = vsel %vm638, %v606, 0
      %v757 = vsel %vm638, %v607, 0
      %v760 = vsel %vm638, %v608, 0
      %v763 = vsel %vm638, %v609, 0
      %v766 = vsel %vm638, %v610, 0
      %v769 = vsel %vm638, %v611, 0
      %v772 = vsel %vm638, %v612, 0
      %v775 = vsel %vm638, %v613, 0
      %v778 = vsel %vm638, %v614, 0
      %v781 = vsel %vm638, %v615, 0
      %v784 = vsel %vm638, %v616, 0
      %v787 = vsel %vm638, %v617, 0
      %v790 = vsel %vm638, %v618, 0
      %v793 = vsel %vm638, %v619, 0
      %v796 = vsel %vm638, %v620, 0
      %v799 = vsel %vm638, %v621, 0
      %v802 = vsel %vm638, %v622, 0
      %v805 = vsel %vm638, %v623, 0
      %v808 = vsel %vm638, %v624, 0
      %v811 = vsel %vm638, %v625, 0
      %v814 = vsel %vm638, %v626, 0
      %v817 = vsel %vm638, %v627, 0
      %v820 = vsel %vm638, %v628, 0
      %v823 = vsel %vm638, %v629, 0
      %v826 = vsel %vm638, %v630, 0
      %v829 = vsel %vm638, %v631, 0
      %831 = vmatprep.subr.bf16.mxu0 0
      %832 = vmatpush1.bf16.msra.mxu0 0
      %833 = vmatprep.subr.bf16.mxu0 0
      %834 = vmatpush1.bf16.msra.mxu0 0
      %835 = vmatprep.subr.bf16.mxu0 0
      %836 = vmatpush1.bf16.msra.mxu0 0
      %837 = vmatprep.subr.bf16.mxu0 0
      %838 = vmatpush1.bf16.msra.mxu0 0
      %839 = vmatprep.subr.bf16.mxu0 0
      %840 = vmatpush1.bf16.msra.mxu0 0
      %841 = vmatprep.subr.bf16.mxu0 0
      %842 = vmatpush1.bf16.msra.mxu0 0
      %843 = vmatprep.subr.bf16.mxu0 0
      %844 = vmatpush1.bf16.msra.mxu0 0
      %845 = vmatprep.subr.bf16.mxu0 0
      %846 = vmatpush1.bf16.msra.mxu0 %v636
      %847 = vmatprep.subr.bf16.mxu0 0
      %848 = vmatpush2.bf16.msra.mxu0 0
      %849 = vmatprep.subr.bf16.mxu0 0
      %850 = vmatpush2.bf16.msra.mxu0 0
      %851 = vmatprep.subr.bf16.mxu0 0
      %852 = vmatpush2.bf16.msra.mxu0 0
      %853 = vmatprep.subr.bf16.mxu0 0
      %854 = vmatpush2.bf16.msra.mxu0 0
      %855 = vmatprep.subr.bf16.mxu0 0
      %856 = vmatpush2.bf16.msra.mxu0 0
      %857 = vmatprep.subr.bf16.mxu0 0
      %858 = vmatpush2.bf16.msra.mxu0 0
      %859 = vmatprep.subr.bf16.mxu0 0
      %860 = vmatpush2.bf16.msra.mxu0 0
      %861 = vmatprep.subr.bf16.mxu0 0
      %862 = vmatpush2.bf16.msra.mxu0 0
      %863 = vmatprep.mubr.bf16.mxu0 0
      %864 = vmatmul.mubr.bf16.gmra.mxu0 %v640
      %v865 = vpop.f32.mrf.mxu0
      %v866 = vadd.f32 %v310, %v865
      %v867 = vpop.f32.mrf.mxu0
      %v868 = vpop.f32.mrf.mxu0
      %v869 = vadd.f32 %v310, %v868
      %v870 = vpop.f32.mrf.mxu0
      %871 = vmatprep.mubr.bf16.mxu0 0
      %872 = vmatmul.mubr.bf16.gmra.mxu0 %v643
      %v873 = vpop.f32.mrf.mxu0
      %v874 = vadd.f32 %v310, %v873
      %v875 = vpop.f32.mrf.mxu0
      %v876 = vpop.f32.mrf.mxu0
      %v877 = vadd.f32 %v310, %v876
      %v878 = vpop.f32.mrf.mxu0
      %879 = vmatprep.mubr.bf16.mxu0 0
      %880 = vmatmul.mubr.bf16.gmra.mxu0 %v646
      %v881 = vpop.f32.mrf.mxu0
      %v882 = vadd.f32 %v310, %v881
      %v883 = vpop.f32.mrf.mxu0
      %v884 = vpop.f32.mrf.mxu0
      %v885 = vadd.f32 %v310, %v884
      %v886 = vpop.f32.mrf.mxu0
      %887 = vmatprep.mubr.bf16.mxu0 0
      %888 = vmatmul.mubr.bf16.gmra.mxu0 %v649
      %v889 = vpop.f32.mrf.mxu0
      %v890 = vadd.f32 %v310, %v889
      %v891 = vpop.f32.mrf.mxu0
      %v892 = vpop.f32.mrf.mxu0
      %v893 = vadd.f32 %v310, %v892
      %v894 = vpop.f32.mrf.mxu0
      %895 = vmatprep.mubr.bf16.mxu0 0
      %896 = vmatmul.mubr.bf16.gmra.mxu0 %v652
      %v897 = vpop.f32.mrf.mxu0
      %v898 = vadd.f32 %v310, %v897
      %v899 = vpop.f32.mrf.mxu0
      %v900 = vpop.f32.mrf.mxu0
      %v901 = vadd.f32 %v310, %v900
      %v902 = vpop.f32.mrf.mxu0
      %903 = vmatprep.mubr.bf16.mxu0 0
      %904 = vmatmul.mubr.bf16.gmra.mxu0 %v655
      %v905 = vpop.f32.mrf.mxu0
      %v906 = vadd.f32 %v310, %v905
      %v907 = vpop.f32.mrf.mxu0
      %v908 = vpop.f32.mrf.mxu0
      %v909 = vadd.f32 %v310, %v908
      %v910 = vpop.f32.mrf.mxu0
      %911 = vmatprep.mubr.bf16.mxu0 0
      %912 = vmatmul.mubr.bf16.gmra.mxu0 %v658
      %v913 = vpop.f32.mrf.mxu0
      %v914 = vadd.f32 %v310, %v913
      %v915 = vpop.f32.mrf.mxu0
      %v916 = vpop.f32.mrf.mxu0
      %v917 = vadd.f32 %v310, %v916
      %v918 = vpop.f32.mrf.mxu0
      %919 = vmatprep.mubr.bf16.mxu0 0
      %920 = vmatmul.mubr.bf16.gmra.mxu0 %v661
      %v921 = vpop.f32.mrf.mxu0
      %v922 = vadd.f32 %v310, %v921
      %v923 = vpop.f32.mrf.mxu0
      %v924 = vpop.f32.mrf.mxu0
      %v925 = vadd.f32 %v310, %v924
      %v926 = vpop.f32.mrf.mxu0
      %927 = vmatprep.mubr.bf16.mxu0 0
      %928 = vmatmul.mubr.bf16.gmra.mxu0 %v664
      %v929 = vpop.f32.mrf.mxu0
      %v930 = vadd.f32 %v310, %v929
      %v931 = vpop.f32.mrf.mxu0
      %v932 = vpop.f32.mrf.mxu0
      %v933 = vadd.f32 %v310, %v932
      %v934 = vpop.f32.mrf.mxu0
      %935 = vmatprep.mubr.bf16.mxu0 0
      %936 = vmatmul.mubr.bf16.gmra.mxu0 %v667
      %v937 = vpop.f32.mrf.mxu0
      %v938 = vadd.f32 %v310, %v937
      %v939 = vpop.f32.mrf.mxu0
      %v940 = vpop.f32.mrf.mxu0
      %v941 = vadd.f32 %v310, %v940
      %v942 = vpop.f32.mrf.mxu0
      %943 = vmatprep.mubr.bf16.mxu0 0
      %944 = vmatmul.mubr.bf16.gmra.mxu0 %v670
      %v945 = vpop.f32.mrf.mxu0
      %v946 = vadd.f32 %v310, %v945
      %v947 = vpop.f32.mrf.mxu0
      %v948 = vpop.f32.mrf.mxu0
      %v949 = vadd.f32 %v310, %v948
      %v950 = vpop.f32.mrf.mxu0
      %951 = vmatprep.mubr.bf16.mxu0 0
      %952 = vmatmul.mubr.bf16.gmra.mxu0 %v673
      %v953 = vpop.f32.mrf.mxu0
      %v954 = vadd.f32 %v310, %v953
      %v955 = vpop.f32.mrf.mxu0
      %v956 = vpop.f32.mrf.mxu0
      %v957 = vadd.f32 %v310, %v956
      %v958 = vpop.f32.mrf.mxu0
      %959 = vmatprep.mubr.bf16.mxu0 0
      %960 = vmatmul.mubr.bf16.gmra.mxu0 %v676
      %v961 = vpop.f32.mrf.mxu0
      %v962 = vadd.f32 %v310, %v961
      %v963 = vpop.f32.mrf.mxu0
      %v964 = vpop.f32.mrf.mxu0
      %v965 = vadd.f32 %v310, %v964
      %v966 = vpop.f32.mrf.mxu0
      %967 = vmatprep.mubr.bf16.mxu0 0
      %968 = vmatmul.mubr.bf16.gmra.mxu0 %v679
      %v969 = vpop.f32.mrf.mxu0
      %v970 = vadd.f32 %v310, %v969
      %v971 = vpop.f32.mrf.mxu0
      %v972 = vpop.f32.mrf.mxu0
      %v973 = vadd.f32 %v310, %v972
      %v974 = vpop.f32.mrf.mxu0
      %975 = vmatprep.mubr.bf16.mxu0 0
      %976 = vmatmul.mubr.bf16.gmra.mxu0 %v682
      %v977 = vpop.f32.mrf.mxu0
      %v978 = vadd.f32 %v310, %v977
      %v979 = vpop.f32.mrf.mxu0
      %v980 = vpop.f32.mrf.mxu0
      %v981 = vadd.f32 %v310, %v980
      %v982 = vpop.f32.mrf.mxu0
      %983 = vmatprep.mubr.bf16.mxu0 0
      %984 = vmatmul.mubr.bf16.gmra.mxu0 %v685
      %v985 = vpop.f32.mrf.mxu0
      %v986 = vadd.f32 %v310, %v985
      %v987 = vpop.f32.mrf.mxu0
      %v988 = vpop.f32.mrf.mxu0
      %v989 = vadd.f32 %v310, %v988
      %v990 = vpop.f32.mrf.mxu0
      %991 = vmatprep.mubr.bf16.mxu0 0
      %992 = vmatmul.mubr.bf16.gmra.mxu0 %v688
      %v993 = vpop.f32.mrf.mxu0
      %v994 = vadd.f32 %v310, %v993
      %v995 = vpop.f32.mrf.mxu0
      %v996 = vpop.f32.mrf.mxu0
      %v997 = vadd.f32 %v310, %v996
      %v998 = vpop.f32.mrf.mxu0
      %999 = vmatprep.mubr.bf16.mxu0 0
      %1000 = vmatmul.mubr.bf16.gmra.mxu0 %v691
      %v1001 = vpop.f32.mrf.mxu0
      %v1002 = vadd.f32 %v310, %v1001
      %v1003 = vpop.f32.mrf.mxu0
      %v1004 = vpop.f32.mrf.mxu0
      %v1005 = vadd.f32 %v310, %v1004
      %v1006 = vpop.f32.mrf.mxu0
      %1007 = vmatprep.mubr.bf16.mxu0 0
      %1008 = vmatmul.mubr.bf16.gmra.mxu0 %v694
      %v1009 = vpop.f32.mrf.mxu0
      %v1010 = vadd.f32 %v310, %v1009
      %v1011 = vpop.f32.mrf.mxu0
      %v1012 = vpop.f32.mrf.mxu0
      %v1013 = vadd.f32 %v310, %v1012
      %v1014 = vpop.f32.mrf.mxu0
      %1015 = vmatprep.mubr.bf16.mxu0 0
      %1016 = vmatmul.mubr.bf16.gmra.mxu0 %v697
      %v1017 = vpop.f32.mrf.mxu0
      %v1018 = vadd.f32 %v310, %v1017
      %v1019 = vpop.f32.mrf.mxu0
      %v1020 = vpop.f32.mrf.mxu0
      %v1021 = vadd.f32 %v310, %v1020
      %v1022 = vpop.f32.mrf.mxu0
      %1023 = vmatprep.mubr.bf16.mxu0 0
      %1024 = vmatmul.mubr.bf16.gmra.mxu0 %v700
      %v1025 = vpop.f32.mrf.mxu0
      %v1026 = vadd.f32 %v310, %v1025
      %v1027 = vpop.f32.mrf.mxu0
      %v1028 = vpop.f32.mrf.mxu0
      %v1029 = vadd.f32 %v310, %v1028
      %v1030 = vpop.f32.mrf.mxu0
      %1031 = vmatprep.mubr.bf16.mxu0 0
      %1032 = vmatmul.mubr.bf16.gmra.mxu0 %v703
      %v1033 = vpop.f32.mrf.mxu0
      %v1034 = vadd.f32 %v310, %v1033
      %v1035 = vpop.f32.mrf.mxu0
      %v1036 = vpop.f32.mrf.mxu0
      %v1037 = vadd.f32 %v310, %v1036
      %v1038 = vpop.f32.mrf.mxu0
      %1039 = vmatprep.mubr.bf16.mxu0 0
      %1040 = vmatmul.mubr.bf16.gmra.mxu0 %v706
      %v1041 = vpop.f32.mrf.mxu0
      %v1042 = vadd.f32 %v310, %v1041
      %v1043 = vpop.f32.mrf.mxu0
      %v1044 = vpop.f32.mrf.mxu0
      %v1045 = vadd.f32 %v310, %v1044
      %v1046 = vpop.f32.mrf.mxu0
      %1047 = vmatprep.mubr.bf16.mxu0 0
      %1048 = vmatmul.mubr.bf16.gmra.mxu0 %v709
      %v1049 = vpop.f32.mrf.mxu0
      %v1050 = vadd.f32 %v310, %v1049
      %v1051 = vpop.f32.mrf.mxu0
      %v1052 = vpop.f32.mrf.mxu0
      %v1053 = vadd.f32 %v310, %v1052
      %v1054 = vpop.f32.mrf.mxu0
      %1055 = vmatprep.mubr.bf16.mxu0 0
      %1056 = vmatmul.mubr.bf16.gmra.mxu0 %v712
      %v1057 = vpop.f32.mrf.mxu0
      %v1058 = vadd.f32 %v310, %v1057
      %v1059 = vpop.f32.mrf.mxu0
      %v1060 = vpop.f32.mrf.mxu0
      %v1061 = vadd.f32 %v310, %v1060
      %v1062 = vpop.f32.mrf.mxu0
      %1063 = vmatprep.mubr.bf16.mxu0 0
      %1064 = vmatmul.mubr.bf16.gmra.mxu0 %v715
      %v1065 = vpop.f32.mrf.mxu0
      %v1066 = vadd.f32 %v310, %v1065
      %v1067 = vpop.f32.mrf.mxu0
      %v1068 = vpop.f32.mrf.mxu0
      %v1069 = vadd.f32 %v310, %v1068
      %v1070 = vpop.f32.mrf.mxu0
      %1071 = vmatprep.mubr.bf16.mxu0 0
      %1072 = vmatmul.mubr.bf16.gmra.mxu0 %v718
      %v1073 = vpop.f32.mrf.mxu0
      %v1074 = vadd.f32 %v310, %v1073
      %v1075 = vpop.f32.mrf.mxu0
      %v1076 = vpop.f32.mrf.mxu0
      %v1077 = vadd.f32 %v310, %v1076
      %v1078 = vpop.f32.mrf.mxu0
      %1079 = vmatprep.mubr.bf16.mxu0 0
      %1080 = vmatmul.mubr.bf16.gmra.mxu0 %v721
      %v1081 = vpop.f32.mrf.mxu0
      %v1082 = vadd.f32 %v310, %v1081
      %v1083 = vpop.f32.mrf.mxu0
      %v1084 = vpop.f32.mrf.mxu0
      %v1085 = vadd.f32 %v310, %v1084
      %v1086 = vpop.f32.mrf.mxu0
      %1087 = vmatprep.mubr.bf16.mxu0 0
      %1088 = vmatmul.mubr.bf16.gmra.mxu0 %v724
      %v1089 = vpop.f32.mrf.mxu0
      %v1090 = vadd.f32 %v310, %v1089
      %v1091 = vpop.f32.mrf.mxu0
      %v1092 = vpop.f32.mrf.mxu0
      %v1093 = vadd.f32 %v310, %v1092
      %v1094 = vpop.f32.mrf.mxu0
      %1095 = vmatprep.mubr.bf16.mxu0 0
      %1096 = vmatmul.mubr.bf16.gmra.mxu0 %v727
      %v1097 = vpop.f32.mrf.mxu0
      %v1098 = vadd.f32 %v310, %v1097
      %v1099 = vpop.f32.mrf.mxu0
      %v1100 = vpop.f32.mrf.mxu0
      %v1101 = vadd.f32 %v310, %v1100
      %v1102 = vpop.f32.mrf.mxu0
      %1103 = vmatprep.mubr.bf16.mxu0 0
      %1104 = vmatmul.mubr.bf16.gmra.mxu0 %v730
      %v1105 = vpop.f32.mrf.mxu0
      %v1106 = vadd.f32 %v310, %v1105
      %v1107 = vpop.f32.mrf.mxu0
      %v1108 = vpop.f32.mrf.mxu0
      %v1109 = vadd.f32 %v310, %v1108
      %v1110 = vpop.f32.mrf.mxu0
      %1111 = vmatprep.mubr.bf16.mxu0 0
      %1112 = vmatmul.mubr.bf16.gmra.mxu0 %v733
      %v1113 = vpop.f32.mrf.mxu0
      %v1114 = vadd.f32 %v310, %v1113
      %v1115 = vpop.f32.mrf.mxu0
      %v1116 = vpop.f32.mrf.mxu0
      %v1117 = vadd.f32 %v310, %v1116
      %v1118 = vpop.f32.mrf.mxu0
      %1119 = vmatprep.mubr.bf16.mxu0 0
      %1120 = vmatmul.mubr.bf16.gmra.mxu0 %v736
      %v1121 = vpop.f32.mrf.mxu0
      %v1122 = vadd.f32 %v310, %v1121
      %v1123 = vpop.f32.mrf.mxu0
      %v1124 = vpop.f32.mrf.mxu0
      %v1125 = vadd.f32 %v310, %v1124
      %v1126 = vpop.f32.mrf.mxu0
      %1127 = vmatprep.mubr.bf16.mxu0 0
      %1128 = vmatmul.mubr.bf16.gmra.mxu0 %v739
      %v1129 = vpop.f32.mrf.mxu0
      %v1130 = vadd.f32 %v310, %v1129
      %v1131 = vpop.f32.mrf.mxu0
      %v1132 = vpop.f32.mrf.mxu0
      %v1133 = vadd.f32 %v310, %v1132
      %v1134 = vpop.f32.mrf.mxu0
      %1135 = vmatprep.mubr.bf16.mxu0 0
      %1136 = vmatmul.mubr.bf16.gmra.mxu0 %v742
      %v1137 = vpop.f32.mrf.mxu0
      %v1138 = vadd.f32 %v310, %v1137
      %v1139 = vpop.f32.mrf.mxu0
      %v1140 = vpop.f32.mrf.mxu0
      %v1141 = vadd.f32 %v310, %v1140
      %v1142 = vpop.f32.mrf.mxu0
      %1143 = vmatprep.mubr.bf16.mxu0 0
      %1144 = vmatmul.mubr.bf16.gmra.mxu0 %v745
      %v1145 = vpop.f32.mrf.mxu0
      %v1146 = vadd.f32 %v310, %v1145
      %v1147 = vpop.f32.mrf.mxu0
      %v1148 = vpop.f32.mrf.mxu0
      %v1149 = vadd.f32 %v310, %v1148
      %v1150 = vpop.f32.mrf.mxu0
      %1151 = vmatprep.mubr.bf16.mxu0 0
      %1152 = vmatmul.mubr.bf16.gmra.mxu0 %v748
      %v1153 = vpop.f32.mrf.mxu0
      %v1154 = vadd.f32 %v310, %v1153
      %v1155 = vpop.f32.mrf.mxu0
      %v1156 = vpop.f32.mrf.mxu0
      %v1157 = vadd.f32 %v310, %v1156
      %v1158 = vpop.f32.mrf.mxu0
      %1159 = vmatprep.mubr.bf16.mxu0 0
      %1160 = vmatmul.mubr.bf16.gmra.mxu0 %v751
      %v1161 = vpop.f32.mrf.mxu0
      %v1162 = vadd.f32 %v310, %v1161
      %v1163 = vpop.f32.mrf.mxu0
      %v1164 = vpop.f32.mrf.mxu0
      %v1165 = vadd.f32 %v310, %v1164
      %v1166 = vpop.f32.mrf.mxu0
      %1167 = vmatprep.mubr.bf16.mxu0 0
      %1168 = vmatmul.mubr.bf16.gmra.mxu0 %v754
      %v1169 = vpop.f32.mrf.mxu0
      %v1170 = vadd.f32 %v310, %v1169
      %v1171 = vpop.f32.mrf.mxu0
      %v1172 = vpop.f32.mrf.mxu0
      %v1173 = vadd.f32 %v310, %v1172
      %v1174 = vpop.f32.mrf.mxu0
      %1175 = vmatprep.mubr.bf16.mxu0 0
      %1176 = vmatmul.mubr.bf16.gmra.mxu0 %v757
      %v1177 = vpop.f32.mrf.mxu0
      %v1178 = vadd.f32 %v310, %v1177
      %v1179 = vpop.f32.mrf.mxu0
      %v1180 = vpop.f32.mrf.mxu0
      %v1181 = vadd.f32 %v310, %v1180
      %v1182 = vpop.f32.mrf.mxu0
      %1183 = vmatprep.mubr.bf16.mxu0 0
      %1184 = vmatmul.mubr.bf16.gmra.mxu0 %v760
      %v1185 = vpop.f32.mrf.mxu0
      %v1186 = vadd.f32 %v310, %v1185
      %v1187 = vpop.f32.mrf.mxu0
      %v1188 = vpop.f32.mrf.mxu0
      %v1189 = vadd.f32 %v310, %v1188
      %v1190 = vpop.f32.mrf.mxu0
      %1191 = vmatprep.mubr.bf16.mxu0 0
      %1192 = vmatmul.mubr.bf16.gmra.mxu0 %v763
      %v1193 = vpop.f32.mrf.mxu0
      %v1194 = vadd.f32 %v310, %v1193
      %v1195 = vpop.f32.mrf.mxu0
      %v1196 = vpop.f32.mrf.mxu0
      %v1197 = vadd.f32 %v310, %v1196
      %v1198 = vpop.f32.mrf.mxu0
      %1199 = vmatprep.mubr.bf16.mxu0 0
      %1200 = vmatmul.mubr.bf16.gmra.mxu0 %v766
      %v1201 = vpop.f32.mrf.mxu0
      %v1202 = vadd.f32 %v310, %v1201
      %v1203 = vpop.f32.mrf.mxu0
      %v1204 = vpop.f32.mrf.mxu0
      %v1205 = vadd.f32 %v310, %v1204
      %v1206 = vpop.f32.mrf.mxu0
      %1207 = vmatprep.mubr.bf16.mxu0 0
      %1208 = vmatmul.mubr.bf16.gmra.mxu0 %v769
      %v1209 = vpop.f32.mrf.mxu0
      %v1210 = vadd.f32 %v310, %v1209
      %v1211 = vpop.f32.mrf.mxu0
      %v1212 = vpop.f32.mrf.mxu0
      %v1213 = vadd.f32 %v310, %v1212
      %v1214 = vpop.f32.mrf.mxu0
      %1215 = vmatprep.mubr.bf16.mxu0 0
      %1216 = vmatmul.mubr.bf16.gmra.mxu0 %v772
      %v1217 = vpop.f32.mrf.mxu0
      %v1218 = vadd.f32 %v310, %v1217
      %v1219 = vpop.f32.mrf.mxu0
      %v1220 = vpop.f32.mrf.mxu0
      %v1221 = vadd.f32 %v310, %v1220
      %v1222 = vpop.f32.mrf.mxu0
      %1223 = vmatprep.mubr.bf16.mxu0 0
      %1224 = vmatmul.mubr.bf16.gmra.mxu0 %v775
      %v1225 = vpop.f32.mrf.mxu0
      %v1226 = vadd.f32 %v310, %v1225
      %v1227 = vpop.f32.mrf.mxu0
      %v1228 = vpop.f32.mrf.mxu0
      %v1229 = vadd.f32 %v310, %v1228
      %v1230 = vpop.f32.mrf.mxu0
      %1231 = vmatprep.mubr.bf16.mxu0 0
      %1232 = vmatmul.mubr.bf16.gmra.mxu0 %v778
      %v1233 = vpop.f32.mrf.mxu0
      %v1234 = vadd.f32 %v310, %v1233
      %v1235 = vpop.f32.mrf.mxu0
      %v1236 = vpop.f32.mrf.mxu0
      %v1237 = vadd.f32 %v310, %v1236
      %v1238 = vpop.f32.mrf.mxu0
      %1239 = vmatprep.mubr.bf16.mxu0 0
      %1240 = vmatmul.mubr.bf16.gmra.mxu0 %v781
      %v1241 = vpop.f32.mrf.mxu0
      %v1242 = vadd.f32 %v310, %v1241
      %v1243 = vpop.f32.mrf.mxu0
      %v1244 = vpop.f32.mrf.mxu0
      %v1245 = vadd.f32 %v310, %v1244
      %v1246 = vpop.f32.mrf.mxu0
      %1247 = vmatprep.mubr.bf16.mxu0 0
      %1248 = vmatmul.mubr.bf16.gmra.mxu0 %v784
      %v1249 = vpop.f32.mrf.mxu0
      %v1250 = vadd.f32 %v310, %v1249
      %v1251 = vpop.f32.mrf.mxu0
      %v1252 = vpop.f32.mrf.mxu0
      %v1253 = vadd.f32 %v310, %v1252
      %v1254 = vpop.f32.mrf.mxu0
      %1255 = vmatprep.mubr.bf16.mxu0 0
      %1256 = vmatmul.mubr.bf16.gmra.mxu0 %v787
      %v1257 = vpop.f32.mrf.mxu0
      %v1258 = vadd.f32 %v310, %v1257
      %v1259 = vpop.f32.mrf.mxu0
      %v1260 = vpop.f32.mrf.mxu0
      %v1261 = vadd.f32 %v310, %v1260
      %v1262 = vpop.f32.mrf.mxu0
      %1263 = vmatprep.mubr.bf16.mxu0 0
      %1264 = vmatmul.mubr.bf16.gmra.mxu0 %v790
      %v1265 = vpop.f32.mrf.mxu0
      %v1266 = vadd.f32 %v310, %v1265
      %v1267 = vpop.f32.mrf.mxu0
      %v1268 = vpop.f32.mrf.mxu0
      %v1269 = vadd.f32 %v310, %v1268
      %v1270 = vpop.f32.mrf.mxu0
      %1271 = vmatprep.mubr.bf16.mxu0 0
      %1272 = vmatmul.mubr.bf16.gmra.mxu0 %v793
      %v1273 = vpop.f32.mrf.mxu0
      %v1274 = vadd.f32 %v310, %v1273
      %v1275 = vpop.f32.mrf.mxu0
      %v1276 = vpop.f32.mrf.mxu0
      %v1277 = vadd.f32 %v310, %v1276
      %v1278 = vpop.f32.mrf.mxu0
      %1279 = vmatprep.mubr.bf16.mxu0 0
      %1280 = vmatmul.mubr.bf16.gmra.mxu0 %v796
      %v1281 = vpop.f32.mrf.mxu0
      %v1282 = vadd.f32 %v310, %v1281
      %v1283 = vpop.f32.mrf.mxu0
      %v1284 = vpop.f32.mrf.mxu0
      %v1285 = vadd.f32 %v310, %v1284
      %v1286 = vpop.f32.mrf.mxu0
      %1287 = vmatprep.mubr.bf16.mxu0 0
      %1288 = vmatmul.mubr.bf16.gmra.mxu0 %v799
      %v1289 = vpop.f32.mrf.mxu0
      %v1290 = vadd.f32 %v310, %v1289
      %v1291 = vpop.f32.mrf.mxu0
      %v1292 = vpop.f32.mrf.mxu0
      %v1293 = vadd.f32 %v310, %v1292
      %v1294 = vpop.f32.mrf.mxu0
      %1295 = vmatprep.mubr.bf16.mxu0 0
      %1296 = vmatmul.mubr.bf16.gmra.mxu0 %v802
      %v1297 = vpop.f32.mrf.mxu0
      %v1298 = vadd.f32 %v310, %v1297
      %v1299 = vpop.f32.mrf.mxu0
      %v1300 = vpop.f32.mrf.mxu0
      %v1301 = vadd.f32 %v310, %v1300
      %v1302 = vpop.f32.mrf.mxu0
      %1303 = vmatprep.mubr.bf16.mxu0 0
      %1304 = vmatmul.mubr.bf16.gmra.mxu0 %v805
      %v1305 = vpop.f32.mrf.mxu0
      %v1306 = vadd.f32 %v310, %v1305
      %v1307 = vpop.f32.mrf.mxu0
      %v1308 = vpop.f32.mrf.mxu0
      %v1309 = vadd.f32 %v310, %v1308
      %v1310 = vpop.f32.mrf.mxu0
      %1311 = vmatprep.mubr.bf16.mxu0 0
      %1312 = vmatmul.mubr.bf16.gmra.mxu0 %v808
      %v1313 = vpop.f32.mrf.mxu0
      %v1314 = vadd.f32 %v310, %v1313
      %v1315 = vpop.f32.mrf.mxu0
      %v1316 = vpop.f32.mrf.mxu0
      %v1317 = vadd.f32 %v310, %v1316
      %v1318 = vpop.f32.mrf.mxu0
      %1319 = vmatprep.mubr.bf16.mxu0 0
      %1320 = vmatmul.mubr.bf16.gmra.mxu0 %v811
      %v1321 = vpop.f32.mrf.mxu0
      %v1322 = vadd.f32 %v310, %v1321
      %v1323 = vpop.f32.mrf.mxu0
      %v1324 = vpop.f32.mrf.mxu0
      %v1325 = vadd.f32 %v310, %v1324
      %v1326 = vpop.f32.mrf.mxu0
      %1327 = vmatprep.mubr.bf16.mxu0 0
      %1328 = vmatmul.mubr.bf16.gmra.mxu0 %v814
      %v1329 = vpop.f32.mrf.mxu0
      %v1330 = vadd.f32 %v310, %v1329
      %v1331 = vpop.f32.mrf.mxu0
      %v1332 = vpop.f32.mrf.mxu0
      %v1333 = vadd.f32 %v310, %v1332
      %v1334 = vpop.f32.mrf.mxu0
      %1335 = vmatprep.mubr.bf16.mxu0 0
      %1336 = vmatmul.mubr.bf16.gmra.mxu0 %v817
      %v1337 = vpop.f32.mrf.mxu0
      %v1338 = vadd.f32 %v310, %v1337
      %v1339 = vpop.f32.mrf.mxu0
      %v1340 = vpop.f32.mrf.mxu0
      %v1341 = vadd.f32 %v310, %v1340
      %v1342 = vpop.f32.mrf.mxu0
      %1343 = vmatprep.mubr.bf16.mxu0 0
      %1344 = vmatmul.mubr.bf16.gmra.mxu0 %v820
      %v1345 = vpop.f32.mrf.mxu0
      %v1346 = vadd.f32 %v310, %v1345
      %v1347 = vpop.f32.mrf.mxu0
      %v1348 = vpop.f32.mrf.mxu0
      %v1349 = vadd.f32 %v310, %v1348
      %v1350 = vpop.f32.mrf.mxu0
      %1351 = vmatprep.mubr.bf16.mxu0 0
      %1352 = vmatmul.mubr.bf16.gmra.mxu0 %v823
      %v1353 = vpop.f32.mrf.mxu0
      %v1354 = vadd.f32 %v310, %v1353
      %v1355 = vpop.f32.mrf.mxu0
      %v1356 = vpop.f32.mrf.mxu0
      %v1357 = vadd.f32 %v310, %v1356
      %v1358 = vpop.f32.mrf.mxu0
      %1359 = vmatprep.mubr.bf16.mxu0 0
      %1360 = vmatmul.mubr.bf16.gmra.mxu0 %v826
      %v1361 = vpop.f32.mrf.mxu0
      %v1362 = vadd.f32 %v310, %v1361
      %v1363 = vpop.f32.mrf.mxu0
      %v1364 = vpop.f32.mrf.mxu0
      %v1365 = vadd.f32 %v310, %v1364
      %v1366 = vpop.f32.mrf.mxu0
      %1367 = vmatprep.mubr.bf16.mxu0 0
      %1368 = vmatmul.mubr.bf16.gmra.mxu0 %v829
      %v1369 = vpop.f32.mrf.mxu0
      %v1370 = vadd.f32 %v310, %v1369
      %v1371 = vpop.f32.mrf.mxu0
      %v1372 = vpop.f32.mrf.mxu0
      %v1373 = vadd.f32 %v310, %v1372
      %v1374 = vpop.f32.mrf.mxu0
      %1375 = vdwg.mxu0
      %v1376 = vmax.f32 %v866, 0.0
      %v1377 = vmax.f32 %v869, 0.0
      %v1378 = vmax.f32 %v874, 0.0
      %v1379 = vmax.f32 %v877, 0.0
      %v1380 = vmax.f32 %v882, 0.0
      %v1381 = vmax.f32 %v885, 0.0
      %v1382 = vmax.f32 %v890, 0.0
      %v1383 = vmax.f32 %v893, 0.0
      %v1384 = vmax.f32 %v898, 0.0
      %v1385 = vmax.f32 %v901, 0.0
      %v1386 = vmax.f32 %v906, 0.0
      %v1387 = vmax.f32 %v909, 0.0
      %v1388 = vmax.f32 %v914, 0.0
      %v1389 = vmax.f32 %v917, 0.0
      %v1390 = vmax.f32 %v922, 0.0
      %v1391 = vmax.f32 %v925, 0.0
      %v1392 = vmax.f32 %v930, 0.0
      %v1393 = vmax.f32 %v933, 0.0
      %v1394 = vmax.f32 %v938, 0.0
      %v1395 = vmax.f32 %v941, 0.0
      %v1396 = vmax.f32 %v946, 0.0
      %v1397 = vmax.f32 %v949, 0.0
      %v1398 = vmax.f32 %v954, 0.0
      %v1399 = vmax.f32 %v957, 0.0
      %v1400 = vmax.f32 %v962, 0.0
      %v1401 = vmax.f32 %v965, 0.0
      %v1402 = vmax.f32 %v970, 0.0
      %v1403 = vmax.f32 %v973, 0.0
      %v1404 = vmax.f32 %v978, 0.0
      %v1405 = vmax.f32 %v981, 0.0
      %v1406 = vmax.f32 %v986, 0.0
      %v1407 = vmax.f32 %v989, 0.0
      %v1408 = vmax.f32 %v994, 0.0
      %v1409 = vmax.f32 %v997, 0.0
      %v1410 = vmax.f32 %v1002, 0.0
      %v1411 = vmax.f32 %v1005, 0.0
      %v1412 = vmax.f32 %v1010, 0.0
      %v1413 = vmax.f32 %v1013, 0.0
      %v1414 = vmax.f32 %v1018, 0.0
      %v1415 = vmax.f32 %v1021, 0.0
      %v1416 = vmax.f32 %v1026, 0.0
      %v1417 = vmax.f32 %v1029, 0.0
      %v1418 = vmax.f32 %v1034, 0.0
      %v1419 = vmax.f32 %v1037, 0.0
      %v1420 = vmax.f32 %v1042, 0.0
      %v1421 = vmax.f32 %v1045, 0.0
      %v1422 = vmax.f32 %v1050, 0.0
      %v1423 = vmax.f32 %v1053, 0.0
      %v1424 = vmax.f32 %v1058, 0.0
      %v1425 = vmax.f32 %v1061, 0.0
      %v1426 = vmax.f32 %v1066, 0.0
      %v1427 = vmax.f32 %v1069, 0.0
      %v1428 = vmax.f32 %v1074, 0.0
      %v1429 = vmax.f32 %v1077, 0.0
      %v1430 = vmax.f32 %v1082, 0.0
      %v1431 = vmax.f32 %v1085, 0.0
      %v1432 = vmax.f32 %v1090, 0.0
      %v1433 = vmax.f32 %v1093, 0.0
      %v1434 = vmax.f32 %v1098, 0.0
      %v1435 = vmax.f32 %v1101, 0.0
      %v1436 = vmax.f32 %v1106, 0.0
      %v1437 = vmax.f32 %v1109, 0.0
      %v1438 = vmax.f32 %v1114, 0.0
      %v1439 = vmax.f32 %v1117, 0.0
      %v1440 = vmax.f32 %v1122, 0.0
      %v1441 = vmax.f32 %v1125, 0.0
      %v1442 = vmax.f32 %v1130, 0.0
      %v1443 = vmax.f32 %v1133, 0.0
      %v1444 = vmax.f32 %v1138, 0.0
      %v1445 = vmax.f32 %v1141, 0.0
      %v1446 = vmax.f32 %v1146, 0.0
      %v1447 = vmax.f32 %v1149, 0.0
      %v1448 = vmax.f32 %v1154, 0.0
      %v1449 = vmax.f32 %v1157, 0.0
      %v1450 = vmax.f32 %v1162, 0.0
      %v1451 = vmax.f32 %v1165, 0.0
      %v1452 = vmax.f32 %v1170, 0.0
      %v1453 = vmax.f32 %v1173, 0.0
      %v1454 = vmax.f32 %v1178, 0.0
      %v1455 = vmax.f32 %v1181, 0.0
      %v1456 = vmax.f32 %v1186, 0.0
      %v1457 = vmax.f32 %v1189, 0.0
      %v1458 = vmax.f32 %v1194, 0.0
      %v1459 = vmax.f32 %v1197, 0.0
      %v1460 = vmax.f32 %v1202, 0.0
      %v1461 = vmax.f32 %v1205, 0.0
      %v1462 = vmax.f32 %v1210, 0.0
      %v1463 = vmax.f32 %v1213, 0.0
      %v1464 = vmax.f32 %v1218, 0.0
      %v1465 = vmax.f32 %v1221, 0.0
      %v1466 = vmax.f32 %v1226, 0.0
      %v1467 = vmax.f32 %v1229, 0.0
      %v1468 = vmax.f32 %v1234, 0.0
      %v1469 = vmax.f32 %v1237, 0.0
      %v1470 = vmax.f32 %v1242, 0.0
      %v1471 = vmax.f32 %v1245, 0.0
      %v1472 = vmax.f32 %v1250, 0.0
      %v1473 = vmax.f32 %v1253, 0.0
      %v1474 = vmax.f32 %v1258, 0.0
      %v1475 = vmax.f32 %v1261, 0.0
      %v1476 = vmax.f32 %v1266, 0.0
      %v1477 = vmax.f32 %v1269, 0.0
      %v1478 = vmax.f32 %v1274, 0.0
      %v1479 = vmax.f32 %v1277, 0.0
      %v1480 = vmax.f32 %v1282, 0.0
      %v1481 = vmax.f32 %v1285, 0.0
      %v1482 = vmax.f32 %v1290, 0.0
      %v1483 = vmax.f32 %v1293, 0.0
      %v1484 = vmax.f32 %v1298, 0.0
      %v1485 = vmax.f32 %v1301, 0.0
      %v1486 = vmax.f32 %v1306, 0.0
      %v1487 = vmax.f32 %v1309, 0.0
      %v1488 = vmax.f32 %v1314, 0.0
      %v1489 = vmax.f32 %v1317, 0.0
      %v1490 = vmax.f32 %v1322, 0.0
      %v1491 = vmax.f32 %v1325, 0.0
      %v1492 = vmax.f32 %v1330, 0.0
      %v1493 = vmax.f32 %v1333, 0.0
      %v1494 = vmax.f32 %v1338, 0.0
      %v1495 = vmax.f32 %v1341, 0.0
      %v1496 = vmax.f32 %v1346, 0.0
      %v1497 = vmax.f32 %v1349, 0.0
      %v1498 = vmax.f32 %v1354, 0.0
      %v1499 = vmax.f32 %v1357, 0.0
      %v1500 = vmax.f32 %v1362, 0.0
      %v1501 = vmax.f32 %v1365, 0.0
      %v1502 = vmax.f32 %v1370, 0.0
      %v1503 = vmax.f32 %v1373, 0.0
      %v1504 = vpack.c.bf16 %v1377, %v1376
      %v1505 = vpack.c.bf16 %v1379, %v1378
      %v1506 = vpack.c.bf16 %v1381, %v1380
      %v1507 = vpack.c.bf16 %v1383, %v1382
      %v1508 = vpack.c.bf16 %v1385, %v1384
      %v1509 = vpack.c.bf16 %v1387, %v1386
      %v1510 = vpack.c.bf16 %v1389, %v1388
      %v1511 = vpack.c.bf16 %v1391, %v1390
      %v1512 = vpack.c.bf16 %v1393, %v1392
      %v1513 = vpack.c.bf16 %v1395, %v1394
      %v1514 = vpack.c.bf16 %v1397, %v1396
      %v1515 = vpack.c.bf16 %v1399, %v1398
      %v1516 = vpack.c.bf16 %v1401, %v1400
      %v1517 = vpack.c.bf16 %v1403, %v1402
      %v1518 = vpack.c.bf16 %v1405, %v1404
      %v1519 = vpack.c.bf16 %v1407, %v1406
      %v1520 = vpack.c.bf16 %v1409, %v1408
      %v1521 = vpack.c.bf16 %v1411, %v1410
      %v1522 = vpack.c.bf16 %v1413, %v1412
      %v1523 = vpack.c.bf16 %v1415, %v1414
      %v1524 = vpack.c.bf16 %v1417, %v1416
      %v1525 = vpack.c.bf16 %v1419, %v1418
      %v1526 = vpack.c.bf16 %v1421, %v1420
      %v1527 = vpack.c.bf16 %v1423, %v1422
      %v1528 = vpack.c.bf16 %v1425, %v1424
      %v1529 = vpack.c.bf16 %v1427, %v1426
      %v1530 = vpack.c.bf16 %v1429, %v1428
      %v1531 = vpack.c.bf16 %v1431, %v1430
      %v1532 = vpack.c.bf16 %v1433, %v1432
      %v1533 = vpack.c.bf16 %v1435, %v1434
      %v1534 = vpack.c.bf16 %v1437, %v1436
      %v1535 = vpack.c.bf16 %v1439, %v1438
      %v1536 = vpack.c.bf16 %v1441, %v1440
      %v1537 = vpack.c.bf16 %v1443, %v1442
      %v1538 = vpack.c.bf16 %v1445, %v1444
      %v1539 = vpack.c.bf16 %v1447, %v1446
      %v1540 = vpack.c.bf16 %v1449, %v1448
      %v1541 = vpack.c.bf16 %v1451, %v1450
      %v1542 = vpack.c.bf16 %v1453, %v1452
      %v1543 = vpack.c.bf16 %v1455, %v1454
      %v1544 = vpack.c.bf16 %v1457, %v1456
      %v1545 = vpack.c.bf16 %v1459, %v1458
      %v1546 = vpack.c.bf16 %v1461, %v1460
      %v1547 = vpack.c.bf16 %v1463, %v1462
      %v1548 = vpack.c.bf16 %v1465, %v1464
      %v1549 = vpack.c.bf16 %v1467, %v1466
      %v1550 = vpack.c.bf16 %v1469, %v1468
      %v1551 = vpack.c.bf16 %v1471, %v1470
      %v1552 = vpack.c.bf16 %v1473, %v1472
      %v1553 = vpack.c.bf16 %v1475, %v1474
      %v1554 = vpack.c.bf16 %v1477, %v1476
      %v1555 = vpack.c.bf16 %v1479, %v1478
      %v1556 = vpack.c.bf16 %v1481, %v1480
      %v1557 = vpack.c.bf16 %v1483, %v1482
      %v1558 = vpack.c.bf16 %v1485, %v1484
      %v1559 = vpack.c.bf16 %v1487, %v1486
      %v1560 = vpack.c.bf16 %v1489, %v1488
      %v1561 = vpack.c.bf16 %v1491, %v1490
      %v1562 = vpack.c.bf16 %v1493, %v1492
      %v1563 = vpack.c.bf16 %v1495, %v1494
      %v1564 = vpack.c.bf16 %v1497, %v1496
      %v1565 = vpack.c.bf16 %v1499, %v1498
      %v1566 = vpack.c.bf16 %v1501, %v1500
      %v1567 = vpack.c.bf16 %v1503, %v1502
      %v1632 = vunpack.c.l.b16 %v1504
      %v1633 = vunpack.c.h.b16 %v1504
      %v1634 = vunpack.c.l.b16 %v1505
      %v1635 = vunpack.c.h.b16 %v1505
      %v1636 = vunpack.c.l.b16 %v1506
      %v1637 = vunpack.c.h.b16 %v1506
      %v1638 = vunpack.c.l.b16 %v1507
      %v1639 = vunpack.c.h.b16 %v1507
      %v1640 = vunpack.c.l.b16 %v1508
      %v1641 = vunpack.c.h.b16 %v1508
      %v1642 = vunpack.c.l.b16 %v1509
      %v1643 = vunpack.c.h.b16 %v1509
      %v1644 = vunpack.c.l.b16 %v1510
      %v1645 = vunpack.c.h.b16 %v1510
      %v1646 = vunpack.c.l.b16 %v1511
      %v1647 = vunpack.c.h.b16 %v1511
      %v1648 = vunpack.c.l.b16 %v1512
      %v1649 = vunpack.c.h.b16 %v1512
      %v1650 = vunpack.c.l.b16 %v1513
      %v1651 = vunpack.c.h.b16 %v1513
      %v1652 = vunpack.c.l.b16 %v1514
      %v1653 = vunpack.c.h.b16 %v1514
      %v1654 = vunpack.c.l.b16 %v1515
      %v1655 = vunpack.c.h.b16 %v1515
      %v1656 = vunpack.c.l.b16 %v1516
      %v1657 = vunpack.c.h.b16 %v1516
      %v1658 = vunpack.c.l.b16 %v1517
      %v1659 = vunpack.c.h.b16 %v1517
      %v1660 = vunpack.c.l.b16 %v1518
      %v1661 = vunpack.c.h.b16 %v1518
      %v1662 = vunpack.c.l.b16 %v1519
      %v1663 = vunpack.c.h.b16 %v1519
      %v1664 = vunpack.c.l.b16 %v1520
      %v1665 = vunpack.c.h.b16 %v1520
      %v1666 = vunpack.c.l.b16 %v1521
      %v1667 = vunpack.c.h.b16 %v1521
      %v1668 = vunpack.c.l.b16 %v1522
      %v1669 = vunpack.c.h.b16 %v1522
      %v1670 = vunpack.c.l.b16 %v1523
      %v1671 = vunpack.c.h.b16 %v1523
      %v1672 = vunpack.c.l.b16 %v1524
      %v1673 = vunpack.c.h.b16 %v1524
      %v1674 = vunpack.c.l.b16 %v1525
      %v1675 = vunpack.c.h.b16 %v1525
      %v1676 = vunpack.c.l.b16 %v1526
      %v1677 = vunpack.c.h.b16 %v1526
      %v1678 = vunpack.c.l.b16 %v1527
      %v1679 = vunpack.c.h.b16 %v1527
      %v1680 = vunpack.c.l.b16 %v1528
      %v1681 = vunpack.c.h.b16 %v1528
      %v1682 = vunpack.c.l.b16 %v1529
      %v1683 = vunpack.c.h.b16 %v1529
      %v1684 = vunpack.c.l.b16 %v1530
      %v1685 = vunpack.c.h.b16 %v1530
      %v1686 = vunpack.c.l.b16 %v1531
      %v1687 = vunpack.c.h.b16 %v1531
      %v1688 = vunpack.c.l.b16 %v1532
      %v1689 = vunpack.c.h.b16 %v1532
      %v1690 = vunpack.c.l.b16 %v1533
      %v1691 = vunpack.c.h.b16 %v1533
      %v1692 = vunpack.c.l.b16 %v1534
      %v1693 = vunpack.c.h.b16 %v1534
      %v1694 = vunpack.c.l.b16 %v1535
      %v1695 = vunpack.c.h.b16 %v1535
      %v1696 = vunpack.c.l.b16 %v1536
      %v1697 = vunpack.c.h.b16 %v1536
      %v1698 = vunpack.c.l.b16 %v1537
      %v1699 = vunpack.c.h.b16 %v1537
      %v1700 = vunpack.c.l.b16 %v1538
      %v1701 = vunpack.c.h.b16 %v1538
      %v1702 = vunpack.c.l.b16 %v1539
      %v1703 = vunpack.c.h.b16 %v1539
      %v1704 = vunpack.c.l.b16 %v1540
      %v1705 = vunpack.c.h.b16 %v1540
      %v1706 = vunpack.c.l.b16 %v1541
      %v1707 = vunpack.c.h.b16 %v1541
      %v1708 = vunpack.c.l.b16 %v1542
      %v1709 = vunpack.c.h.b16 %v1542
      %v1710 = vunpack.c.l.b16 %v1543
      %v1711 = vunpack.c.h.b16 %v1543
      %v1712 = vunpack.c.l.b16 %v1544
      %v1713 = vunpack.c.h.b16 %v1544
      %v1714 = vunpack.c.l.b16 %v1545
      %v1715 = vunpack.c.h.b16 %v1545
      %v1716 = vunpack.c.l.b16 %v1546
      %v1717 = vunpack.c.h.b16 %v1546
      %v1718 = vunpack.c.l.b16 %v1547
      %v1719 = vunpack.c.h.b16 %v1547
      %v1720 = vunpack.c.l.b16 %v1548
      %v1721 = vunpack.c.h.b16 %v1548
      %v1722 = vunpack.c.l.b16 %v1549
      %v1723 = vunpack.c.h.b16 %v1549
      %v1724 = vunpack.c.l.b16 %v1550
      %v1725 = vunpack.c.h.b16 %v1550
      %v1726 = vunpack.c.l.b16 %v1551
      %v1727 = vunpack.c.h.b16 %v1551
      %v1728 = vunpack.c.l.b16 %v1552
      %v1729 = vunpack.c.h.b16 %v1552
      %v1730 = vunpack.c.l.b16 %v1553
      %v1731 = vunpack.c.h.b16 %v1553
      %v1732 = vunpack.c.l.b16 %v1554
      %v1733 = vunpack.c.h.b16 %v1554
      %v1734 = vunpack.c.l.b16 %v1555
      %v1735 = vunpack.c.h.b16 %v1555
      %v1736 = vunpack.c.l.b16 %v1556
      %v1737 = vunpack.c.h.b16 %v1556
      %v1738 = vunpack.c.l.b16 %v1557
      %v1739 = vunpack.c.h.b16 %v1557
      %v1740 = vunpack.c.l.b16 %v1558
      %v1741 = vunpack.c.h.b16 %v1558
      %v1742 = vunpack.c.l.b16 %v1559
      %v1743 = vunpack.c.h.b16 %v1559
      %v1744 = vunpack.c.l.b16 %v1560
      %v1745 = vunpack.c.h.b16 %v1560
      %v1746 = vunpack.c.l.b16 %v1561
      %v1747 = vunpack.c.h.b16 %v1561
      %v1748 = vunpack.c.l.b16 %v1562
      %v1749 = vunpack.c.h.b16 %v1562
      %v1750 = vunpack.c.l.b16 %v1563
      %v1751 = vunpack.c.h.b16 %v1563
      %v1752 = vunpack.c.l.b16 %v1564
      %v1753 = vunpack.c.h.b16 %v1564
      %v1754 = vunpack.c.l.b16 %v1565
      %v1755 = vunpack.c.h.b16 %v1565
      %v1756 = vunpack.c.l.b16 %v1566
      %v1757 = vunpack.c.h.b16 %v1566
      %v1758 = vunpack.c.l.b16 %v1567
      %v1759 = vunpack.c.h.b16 %v1567
      %v1760 = vpack.c.b16 %v1632, %v1632
      %v1761 = vpack.c.b16 %v1633, %v1633
      %v1762 = vpack.c.b16 %v1634, %v1634
      %v1763 = vpack.c.b16 %v1635, %v1635
      %v1764 = vpack.c.b16 %v1636, %v1636
      %v1765 = vpack.c.b16 %v1637, %v1637
      %v1766 = vpack.c.b16 %v1638, %v1638
      %v1767 = vpack.c.b16 %v1639, %v1639
      %v1768 = vpack.c.b16 %v1640, %v1640
      %v1769 = vpack.c.b16 %v1641, %v1641
      %v1770 = vpack.c.b16 %v1642, %v1642
      %v1771 = vpack.c.b16 %v1643, %v1643
      %v1772 = vpack.c.b16 %v1644, %v1644
      %v1773 = vpack.c.b16 %v1645, %v1645
      %v1774 = vpack.c.b16 %v1646, %v1646
      %v1775 = vpack.c.b16 %v1647, %v1647
      %v1776 = vpack.c.b16 %v1648, %v1648
      %v1777 = vpack.c.b16 %v1649, %v1649
      %v1778 = vpack.c.b16 %v1650, %v1650
      %v1779 = vpack.c.b16 %v1651, %v1651
      %v1780 = vpack.c.b16 %v1652, %v1652
      %v1781 = vpack.c.b16 %v1653, %v1653
      %v1782 = vpack.c.b16 %v1654, %v1654
      %v1783 = vpack.c.b16 %v1655, %v1655
      %v1784 = vpack.c.b16 %v1656, %v1656
      %v1785 = vpack.c.b16 %v1657, %v1657
      %v1786 = vpack.c.b16 %v1658, %v1658
      %v1787 = vpack.c.b16 %v1659, %v1659
      %v1788 = vpack.c.b16 %v1660, %v1660
      %v1789 = vpack.c.b16 %v1661, %v1661
      %v1790 = vpack.c.b16 %v1662, %v1662
      %v1791 = vpack.c.b16 %v1663, %v1663
      %v1792 = vpack.c.b16 %v1664, %v1664
      %v1793 = vpack.c.b16 %v1665, %v1665
      %v1794 = vpack.c.b16 %v1666, %v1666
      %v1795 = vpack.c.b16 %v1667, %v1667
      %v1796 = vpack.c.b16 %v1668, %v1668
      %v1797 = vpack.c.b16 %v1669, %v1669
      %v1798 = vpack.c.b16 %v1670, %v1670
      %v1799 = vpack.c.b16 %v1671, %v1671
      %v1800 = vpack.c.b16 %v1672, %v1672
      %v1801 = vpack.c.b16 %v1673, %v1673
      %v1802 = vpack.c.b16 %v1674, %v1674
      %v1803 = vpack.c.b16 %v1675, %v1675
      %v1804 = vpack.c.b16 %v1676, %v1676
      %v1805 = vpack.c.b16 %v1677, %v1677
      %v1806 = vpack.c.b16 %v1678, %v1678
      %v1807 = vpack.c.b16 %v1679, %v1679
      %v1808 = vpack.c.b16 %v1680, %v1680
      %v1809 = vpack.c.b16 %v1681, %v1681
      %v1810 = vpack.c.b16 %v1682, %v1682
      %v1811 = vpack.c.b16 %v1683, %v1683
      %v1812 = vpack.c.b16 %v1684, %v1684
      %v1813 = vpack.c.b16 %v1685, %v1685
      %v1814 = vpack.c.b16 %v1686, %v1686
      %v1815 = vpack.c.b16 %v1687, %v1687
      %v1816 = vpack.c.b16 %v1688, %v1688
      %v1817 = vpack.c.b16 %v1689, %v1689
      %v1818 = vpack.c.b16 %v1690, %v1690
      %v1819 = vpack.c.b16 %v1691, %v1691
      %v1820 = vpack.c.b16 %v1692, %v1692
      %v1821 = vpack.c.b16 %v1693, %v1693
      %v1822 = vpack.c.b16 %v1694, %v1694
      %v1823 = vpack.c.b16 %v1695, %v1695
      %v1824 = vpack.c.b16 %v1696, %v1696
      %v1825 = vpack.c.b16 %v1697, %v1697
      %v1826 = vpack.c.b16 %v1698, %v1698
      %v1827 = vpack.c.b16 %v1699, %v1699
      %v1828 = vpack.c.b16 %v1700, %v1700
      %v1829 = vpack.c.b16 %v1701, %v1701
      %v1830 = vpack.c.b16 %v1702, %v1702
      %v1831 = vpack.c.b16 %v1703, %v1703
      %v1832 = vpack.c.b16 %v1704, %v1704
      %v1833 = vpack.c.b16 %v1705, %v1705
      %v1834 = vpack.c.b16 %v1706, %v1706
      %v1835 = vpack.c.b16 %v1707, %v1707
      %v1836 = vpack.c.b16 %v1708, %v1708
      %v1837 = vpack.c.b16 %v1709, %v1709
      %v1838 = vpack.c.b16 %v1710, %v1710
      %v1839 = vpack.c.b16 %v1711, %v1711
      %v1840 = vpack.c.b16 %v1712, %v1712
      %v1841 = vpack.c.b16 %v1713, %v1713
      %v1842 = vpack.c.b16 %v1714, %v1714
      %v1843 = vpack.c.b16 %v1715, %v1715
      %v1844 = vpack.c.b16 %v1716, %v1716
      %v1845 = vpack.c.b16 %v1717, %v1717
      %v1846 = vpack.c.b16 %v1718, %v1718
      %v1847 = vpack.c.b16 %v1719, %v1719
      %v1848 = vpack.c.b16 %v1720, %v1720
      %v1849 = vpack.c.b16 %v1721, %v1721
      %v1850 = vpack.c.b16 %v1722, %v1722
      %v1851 = vpack.c.b16 %v1723, %v1723
      %v1852 = vpack.c.b16 %v1724, %v1724
      %v1853 = vpack.c.b16 %v1725, %v1725
      %v1854 = vpack.c.b16 %v1726, %v1726
      %v1855 = vpack.c.b16 %v1727, %v1727
      %v1856 = vpack.c.b16 %v1728, %v1728
      %v1857 = vpack.c.b16 %v1729, %v1729
      %v1858 = vpack.c.b16 %v1730, %v1730
      %v1859 = vpack.c.b16 %v1731, %v1731
      %v1860 = vpack.c.b16 %v1732, %v1732
      %v1861 = vpack.c.b16 %v1733, %v1733
      %v1862 = vpack.c.b16 %v1734, %v1734
      %v1863 = vpack.c.b16 %v1735, %v1735
      %v1864 = vpack.c.b16 %v1736, %v1736
      %v1865 = vpack.c.b16 %v1737, %v1737
      %v1866 = vpack.c.b16 %v1738, %v1738
      %v1867 = vpack.c.b16 %v1739, %v1739
      %v1868 = vpack.c.b16 %v1740, %v1740
      %v1869 = vpack.c.b16 %v1741, %v1741
      %v1870 = vpack.c.b16 %v1742, %v1742
      %v1871 = vpack.c.b16 %v1743, %v1743
      %v1872 = vpack.c.b16 %v1744, %v1744
      %v1873 = vpack.c.b16 %v1745, %v1745
      %v1874 = vpack.c.b16 %v1746, %v1746
      %v1875 = vpack.c.b16 %v1747, %v1747
      %v1876 = vpack.c.b16 %v1748, %v1748
      %v1877 = vpack.c.b16 %v1749, %v1749
      %v1878 = vpack.c.b16 %v1750, %v1750
      %v1879 = vpack.c.b16 %v1751, %v1751
      %v1880 = vpack.c.b16 %v1752, %v1752
      %v1881 = vpack.c.b16 %v1753, %v1753
      %v1882 = vpack.c.b16 %v1754, %v1754
      %v1883 = vpack.c.b16 %v1755, %v1755
      %v1884 = vpack.c.b16 %v1756, %v1756
      %v1885 = vpack.c.b16 %v1757, %v1757
      %v1886 = vpack.c.b16 %v1758, %v1758
      %v1887 = vpack.c.b16 %v1759, %v1759
      %vm2016 = vcmask 257024
      %2017 = vst.msk [vmem:[%s172] sm:$0xf] %vm2016, %v1760
      %2018 = vst.msk [vmem:[%s172 + $0x4] sm:$0xf] %vm2016, %v1761
      %2019 = vst.msk [vmem:[%s172 + $0x8] sm:$0xf] %vm2016, %v1762
      %2020 = vst.msk [vmem:[%s172 + $0xc] sm:$0xf] %vm2016, %v1763
      %2021 = vst.msk [vmem:[%s172 + $0x10] sm:$0xf] %vm2016, %v1764
      %2022 = vst.msk [vmem:[%s172 + $0x14] sm:$0xf] %vm2016, %v1765
      %2023 = vst.msk [vmem:[%s172 + $0x18] sm:$0xf] %vm2016, %v1766
      %2024 = vst.msk [vmem:[%s172 + $0x1c] sm:$0xf] %vm2016, %v1767
      %2025 = vst.msk [vmem:[%s172 + $0x20] sm:$0xf] %vm2016, %v1768
      %2026 = vst.msk [vmem:[%s172 + $0x24] sm:$0xf] %vm2016, %v1769
      %2027 = vst.msk [vmem:[%s172 + $0x28] sm:$0xf] %vm2016, %v1770
      %2028 = vst.msk [vmem:[%s172 + $0x2c] sm:$0xf] %vm2016, %v1771
      %2029 = vst.msk [vmem:[%s172 + $0x30] sm:$0xf] %vm2016, %v1772
      %2030 = vst.msk [vmem:[%s172 + $0x34] sm:$0xf] %vm2016, %v1773
      %2031 = vst.msk [vmem:[%s172 + $0x38] sm:$0xf] %vm2016, %v1774
      %2032 = vst.msk [vmem:[%s172 + $0x3c] sm:$0xf] %vm2016, %v1775
      %2033 = vst.msk [vmem:[%s172 + $0x40] sm:$0xf] %vm2016, %v1776
      %2034 = vst.msk [vmem:[%s172 + $0x44] sm:$0xf] %vm2016, %v1777
      %2035 = vst.msk [vmem:[%s172 + $0x48] sm:$0xf] %vm2016, %v1778
      %2036 = vst.msk [vmem:[%s172 + $0x4c] sm:$0xf] %vm2016, %v1779
      %2037 = vst.msk [vmem:[%s172 + $0x50] sm:$0xf] %vm2016, %v1780
      %2038 = vst.msk [vmem:[%s172 + $0x54] sm:$0xf] %vm2016, %v1781
      %2039 = vst.msk [vmem:[%s172 + $0x58] sm:$0xf] %vm2016, %v1782
      %2040 = vst.msk [vmem:[%s172 + $0x5c] sm:$0xf] %vm2016, %v1783
      %2041 = vst.msk [vmem:[%s172 + $0x60] sm:$0xf] %vm2016, %v1784
      %2042 = vst.msk [vmem:[%s172 + $0x64] sm:$0xf] %vm2016, %v1785
      %2043 = vst.msk [vmem:[%s172 + $0x68] sm:$0xf] %vm2016, %v1786
      %2044 = vst.msk [vmem:[%s172 + $0x6c] sm:$0xf] %vm2016, %v1787
      %2045 = vst.msk [vmem:[%s172 + $0x70] sm:$0xf] %vm2016, %v1788
      %2046 = vst.msk [vmem:[%s172 + $0x74] sm:$0xf] %vm2016, %v1789
      %2047 = vst.msk [vmem:[%s172 + $0x78] sm:$0xf] %vm2016, %v1790
      %2048 = vst.msk [vmem:[%s172 + $0x7c] sm:$0xf] %vm2016, %v1791
      %2049 = vst.msk [vmem:[%s172 + $0x80] sm:$0xf] %vm2016, %v1792
      %2050 = vst.msk [vmem:[%s172 + $0x84] sm:$0xf] %vm2016, %v1793
      %2051 = vst.msk [vmem:[%s172 + $0x88] sm:$0xf] %vm2016, %v1794
      %2052 = vst.msk [vmem:[%s172 + $0x8c] sm:$0xf] %vm2016, %v1795
      %2053 = vst.msk [vmem:[%s172 + $0x90] sm:$0xf] %vm2016, %v1796
      %2054 = vst.msk [vmem:[%s172 + $0x94] sm:$0xf] %vm2016, %v1797
      %2055 = vst.msk [vmem:[%s172 + $0x98] sm:$0xf] %vm2016, %v1798
      %2056 = vst.msk [vmem:[%s172 + $0x9c] sm:$0xf] %vm2016, %v1799
      %2057 = vst.msk [vmem:[%s172 + $0xa0] sm:$0xf] %vm2016, %v1800
      %2058 = vst.msk [vmem:[%s172 + $0xa4] sm:$0xf] %vm2016, %v1801
      %2059 = vst.msk [vmem:[%s172 + $0xa8] sm:$0xf] %vm2016, %v1802
      %2060 = vst.msk [vmem:[%s172 + $0xac] sm:$0xf] %vm2016, %v1803
      %2061 = vst.msk [vmem:[%s172 + $0xb0] sm:$0xf] %vm2016, %v1804
      %2062 = vst.msk [vmem:[%s172 + $0xb4] sm:$0xf] %vm2016, %v1805
      %2063 = vst.msk [vmem:[%s172 + $0xb8] sm:$0xf] %vm2016, %v1806
      %2064 = vst.msk [vmem:[%s172 + $0xbc] sm:$0xf] %vm2016, %v1807
      %2065 = vst.msk [vmem:[%s172 + $0xc0] sm:$0xf] %vm2016, %v1808
      %2066 = vst.msk [vmem:[%s172 + $0xc4] sm:$0xf] %vm2016, %v1809
      %2067 = vst.msk [vmem:[%s172 + $0xc8] sm:$0xf] %vm2016, %v1810
      %2068 = vst.msk [vmem:[%s172 + $0xcc] sm:$0xf] %vm2016, %v1811
      %2069 = vst.msk [vmem:[%s172 + $0xd0] sm:$0xf] %vm2016, %v1812
      %2070 = vst.msk [vmem:[%s172 + $0xd4] sm:$0xf] %vm2016, %v1813
      %2071 = vst.msk [vmem:[%s172 + $0xd8] sm:$0xf] %vm2016, %v1814
      %2072 = vst.msk [vmem:[%s172 + $0xdc] sm:$0xf] %vm2016, %v1815
      %2073 = vst.msk [vmem:[%s172 + $0xe0] sm:$0xf] %vm2016, %v1816
      %2074 = vst.msk [vmem:[%s172 + $0xe4] sm:$0xf] %vm2016, %v1817
      %2075 = vst.msk [vmem:[%s172 + $0xe8] sm:$0xf] %vm2016, %v1818
      %2076 = vst.msk [vmem:[%s172 + $0xec] sm:$0xf] %vm2016, %v1819
      %2077 = vst.msk [vmem:[%s172 + $0xf0] sm:$0xf] %vm2016, %v1820
      %2078 = vst.msk [vmem:[%s172 + $0xf4] sm:$0xf] %vm2016, %v1821
      %2079 = vst.msk [vmem:[%s172 + $0xf8] sm:$0xf] %vm2016, %v1822
      %2080 = vst.msk [vmem:[%s172 + $0xfc] sm:$0xf] %vm2016, %v1823
      %2081 = vst.msk [vmem:[%s172 + $0x100] sm:$0xf] %vm2016, %v1824
      %2082 = vst.msk [vmem:[%s172 + $0x104] sm:$0xf] %vm2016, %v1825
      %2083 = vst.msk [vmem:[%s172 + $0x108] sm:$0xf] %vm2016, %v1826
      %2084 = vst.msk [vmem:[%s172 + $0x10c] sm:$0xf] %vm2016, %v1827
      %2085 = vst.msk [vmem:[%s172 + $0x110] sm:$0xf] %vm2016, %v1828
      %2086 = vst.msk [vmem:[%s172 + $0x114] sm:$0xf] %vm2016, %v1829
      %2087 = vst.msk [vmem:[%s172 + $0x118] sm:$0xf] %vm2016, %v1830
      %2088 = vst.msk [vmem:[%s172 + $0x11c] sm:$0xf] %vm2016, %v1831
      %2089 = vst.msk [vmem:[%s172 + $0x120] sm:$0xf] %vm2016, %v1832
      %2090 = vst.msk [vmem:[%s172 + $0x124] sm:$0xf] %vm2016, %v1833
      %2091 = vst.msk [vmem:[%s172 + $0x128] sm:$0xf] %vm2016, %v1834
      %2092 = vst.msk [vmem:[%s172 + $0x12c] sm:$0xf] %vm2016, %v1835
      %2093 = vst.msk [vmem:[%s172 + $0x130] sm:$0xf] %vm2016, %v1836
      %2094 = vst.msk [vmem:[%s172 + $0x134] sm:$0xf] %vm2016, %v1837
      %2095 = vst.msk [vmem:[%s172 + $0x138] sm:$0xf] %vm2016, %v1838
      %2096 = vst.msk [vmem:[%s172 + $0x13c] sm:$0xf] %vm2016, %v1839
      %2097 = vst.msk [vmem:[%s172 + $0x140] sm:$0xf] %vm2016, %v1840
      %2098 = vst.msk [vmem:[%s172 + $0x144] sm:$0xf] %vm2016, %v1841
      %2099 = vst.msk [vmem:[%s172 + $0x148] sm:$0xf] %vm2016, %v1842
      %2100 = vst.msk [vmem:[%s172 + $0x14c] sm:$0xf] %vm2016, %v1843
      %2101 = vst.msk [vmem:[%s172 + $0x150] sm:$0xf] %vm2016, %v1844
      %2102 = vst.msk [vmem:[%s172 + $0x154] sm:$0xf] %vm2016, %v1845
      %2103 = vst.msk [vmem:[%s172 + $0x158] sm:$0xf] %vm2016, %v1846
      %2104 = vst.msk [vmem:[%s172 + $0x15c] sm:$0xf] %vm2016, %v1847
      %2105 = vst.msk [vmem:[%s172 + $0x160] sm:$0xf] %vm2016, %v1848
      %2106 = vst.msk [vmem:[%s172 + $0x164] sm:$0xf] %vm2016, %v1849
      %2107 = vst.msk [vmem:[%s172 + $0x168] sm:$0xf] %vm2016, %v1850
      %2108 = vst.msk [vmem:[%s172 + $0x16c] sm:$0xf] %vm2016, %v1851
      %2109 = vst.msk [vmem:[%s172 + $0x170] sm:$0xf] %vm2016, %v1852
      %2110 = vst.msk [vmem:[%s172 + $0x174] sm:$0xf] %vm2016, %v1853
      %2111 = vst.msk [vmem:[%s172 + $0x178] sm:$0xf] %vm2016, %v1854
      %2112 = vst.msk [vmem:[%s172 + $0x17c] sm:$0xf] %vm2016, %v1855
      %2113 = vst.msk [vmem:[%s172 + $0x180] sm:$0xf] %vm2016, %v1856
      %2114 = vst.msk [vmem:[%s172 + $0x184] sm:$0xf] %vm2016, %v1857
      %2115 = vst.msk [vmem:[%s172 + $0x188] sm:$0xf] %vm2016, %v1858
      %2116 = vst.msk [vmem:[%s172 + $0x18c] sm:$0xf] %vm2016, %v1859
      %2117 = vst.msk [vmem:[%s172 + $0x190] sm:$0xf] %vm2016, %v1860
      %2118 = vst.msk [vmem:[%s172 + $0x194] sm:$0xf] %vm2016, %v1861
      %2119 = vst.msk [vmem:[%s172 + $0x198] sm:$0xf] %vm2016, %v1862
      %2120 = vst.msk [vmem:[%s172 + $0x19c] sm:$0xf] %vm2016, %v1863
      %2121 = vst.msk [vmem:[%s172 + $0x1a0] sm:$0xf] %vm2016, %v1864
      %2122 = vst.msk [vmem:[%s172 + $0x1a4] sm:$0xf] %vm2016, %v1865
      %2123 = vst.msk [vmem:[%s172 + $0x1a8] sm:$0xf] %vm2016, %v1866
      %2124 = vst.msk [vmem:[%s172 + $0x1ac] sm:$0xf] %vm2016, %v1867
      %2125 = vst.msk [vmem:[%s172 + $0x1b0] sm:$0xf] %vm2016, %v1868
      %2126 = vst.msk [vmem:[%s172 + $0x1b4] sm:$0xf] %vm2016, %v1869
      %2127 = vst.msk [vmem:[%s172 + $0x1b8] sm:$0xf] %vm2016, %v1870
      %2128 = vst.msk [vmem:[%s172 + $0x1bc] sm:$0xf] %vm2016, %v1871
      %2129 = vst.msk [vmem:[%s172 + $0x1c0] sm:$0xf] %vm2016, %v1872
      %2130 = vst.msk [vmem:[%s172 + $0x1c4] sm:$0xf] %vm2016, %v1873
      %2131 = vst.msk [vmem:[%s172 + $0x1c8] sm:$0xf] %vm2016, %v1874
      %2132 = vst.msk [vmem:[%s172 + $0x1cc] sm:$0xf] %vm2016, %v1875
      %2133 = vst.msk [vmem:[%s172 + $0x1d0] sm:$0xf] %vm2016, %v1876
      %2134 = vst.msk [vmem:[%s172 + $0x1d4] sm:$0xf] %vm2016, %v1877
      %2135 = vst.msk [vmem:[%s172 + $0x1d8] sm:$0xf] %vm2016, %v1878
      %2136 = vst.msk [vmem:[%s172 + $0x1dc] sm:$0xf] %vm2016, %v1879
      %2137 = vst.msk [vmem:[%s172 + $0x1e0] sm:$0xf] %vm2016, %v1880
      %2138 = vst.msk [vmem:[%s172 + $0x1e4] sm:$0xf] %vm2016, %v1881
      %2139 = vst.msk [vmem:[%s172 + $0x1e8] sm:$0xf] %vm2016, %v1882
      %2140 = vst.msk [vmem:[%s172 + $0x1ec] sm:$0xf] %vm2016, %v1883
      %2141 = vst.msk [vmem:[%s172 + $0x1f0] sm:$0xf] %vm2016, %v1884
      %2142 = vst.msk [vmem:[%s172 + $0x1f4] sm:$0xf] %vm2016, %v1885
      %2143 = vst.msk [vmem:[%s172 + $0x1f8] sm:$0xf] %vm2016, %v1886
      %2144 = vst.msk [vmem:[%s172 + $0x1fc] sm:$0xf] %vm2016, %v1887
      %s2145 = smul.u32 128, %s14
      %p2146 = scmp.lt.s32.totalorder %s2145, 255
      %s2147 = scalar_select %p2146, %s2145, 255
      %s2148 = smul.addr %s2147, 4
      %s2149 = scalar_lea.vmem %s3, %s2148
      // Predicated region
      $region33: #{encoder_forward.4} parent=31 // pred_check
        %p2150 = pneg %p100
      $region34: #{encoder_forward.4} parent=31 // pred_check_branch
        %2152 = sbr.rel (%p2150) target = $region36
      $region35: #{encoder_forward.4} parent=31 // pred_region
        %s2153 = smul.u32 128, %s14
      $region36: #{encoder_forward.4} parent=31 // pred_fallthru
        _
    $region32: #{encoder_forward.4} parent=5 // pred_fallthru
      _
    %p2154 = scmp.le.s32.totalorder 2, %s9
    // Predicated region
    $region37: #{encoder_forward.4} parent=5 // pred_check
      %p2155 = pneg %p2154
    $region38: #{encoder_forward.4} parent=5 // pred_check_branch
      %2157 = sbr.rel (%p2155) target = $region40
    $region39: #{encoder_forward.4} parent=5 // pred_region
      %s2158 = ssub.s32 %s9, 2
      // Predicated region
      $region41: #{encoder_forward.4} parent=39 // pred_check
        %p2159 = pneg %p106
      $region42: #{encoder_forward.4} parent=39 // pred_check_branch
        %2161 = sbr.rel (%p2159) target = $region44
      $region43: #{encoder_forward.4} parent=39 // pred_region
        %s2162 = smul.u32 128, %s15
        %p2163 = scmp.lt.s32.totalorder %s2162, 255
        %s2164 = scalar_select %p2163, %s2162, 255
        %s2165 = smul.addr %s2164, 4
        %s2166 = scalar_lea.vmem %s3, %s2165
      $region44: #{encoder_forward.4} parent=39 // pred_fallthru
        _
    $region40: #{encoder_forward.4} parent=5 // pred_fallthru
      _
  $region6: #{encoder_forward.4} parent=0 // loop_footer
    %s13 = sadd.s32 1, %s9
  $region7: #{encoder_forward.4} parent=0 // loop_footer_branch
    %8 = sbr.rel target = $region3
  $region8: #{encoder_forward.4} parent=0 // loop_exit
    _

// kernel: encoder_forward.5
$region0: #{encoder_forward.5}
  #allocation0 [shape = 'u32[]', space=smem, size = 0x4, offset = 0x4, fixed_abs, tag = 'smem constant byte address 0x4 - core index']
  #allocation1 [shape = 'u32[144,128]{1,0:T(1,128)}', space=vmem, size = 0x12000, scoped, tag = 'internal scratch']
  %s0 = inlined_call_operand.vmem [shape: bf16[512,512], index: 0, kind: input, shape index: {}]
  %s1 = inlined_call_operand.vmem [shape: bf16[512,32], index: 1, kind: input, shape index: {}]
  %s2 = inlined_call_operand.vmem [shape: f32[1,32], index: 2, kind: input, shape index: {}]
  %s3 = inlined_call_operand.vmem [shape: bf16[512,32], index: 3, kind: output, shape index: {}]
  %s4 = sld [smem:[#allocation0]]
  $region45: #{encoder_forward.5} parent=0
    _
  %s6 = ssub.s32 1, %s4
  %s7 = scalar_select 0, %s6, %s4
  loop: start=0, step=1, limit=4
  $region2: #{encoder_forward.5} parent=0 // loop_pre_header
    _
  $region3: #{encoder_forward.5} parent=0 // loop_header
    %s9 = sphi 0, %s13
    %p10 = scmp.ge.s32.totalorder %s9, 4
    %s19 = sphi 0, %s21
    %s22 = sphi 0, %s19
    %s23 = sphi 0, %s22
    %s39 = sphi 0, %s23
    %s43 = sphi 0, %s43
    %s45 = sphi 0, %s43
    %s46 = sphi 0, %s45
    %s60 = sphi 0, %s46
    %s64 = sphi 0, %s64
    %s66 = sphi 0, %s64
    %s67 = sphi 0, %s66
    %s81 = sphi 0, %s67
    %s87 = sphi 0, %s89
    %s90 = sphi 0, %s87
    %s91 = sphi 0, %s90
    %s107 = sphi 0, %s91
  $region4: #{encoder_forward.5} parent=0 // loop_header_branch
    %12 = sbr.rel (%p10) target = $region8
  $region5: #{encoder_forward.5} parent=0 // loop_body
    %s14 = ssub.s32 %s9, 1
    %s15 = ssub.s32 %s9, 2
    %s16 = sadd.s32 %s9, 1
    %s17 = ssub.s32 %s9, %s16
    %p18 = scmp.eq.s32.totalorder %s17, 0
    %s20 = sadd.s32 %s19, 1
    %s21 = scalar_select %p18, %s19, %s20
    %p24 = pneg %p18
    %p25 = scmp.eq.s32.totalorder %s9, 1
    %p26 = por %p24, %p25
    %p27 = scmp.ne.s32.totalorder %s19, %s22
    %p28 = scmp.eq.s32.totalorder %s9, 0
    %p29 = por %p27, %p28
    %p30 = scmp.ne.s32.totalorder %s19, %s22
    %p31 = scmp.eq.s32.totalorder %s14, 1
    %p32 = por %p30, %p31
    %p33 = scmp.ne.s32.totalorder %s22, %s23
    %p34 = scmp.eq.s32.totalorder %s14, 0
    %p35 = por %p33, %p34
    %p36 = scmp.ne.s32.totalorder %s22, %s23
    %p37 = scmp.eq.s32.totalorder %s15, 1
    %p38 = por %p36, %p37
    %p40 = scmp.ne.s32.totalorder %s23, %s39
    %p41 = scmp.eq.s32.totalorder %s15, 0
    %p42 = por %p40, %p41
    %s44 = sadd.s32 %s43, 1
    %p47 = scmp.eq.s32.totalorder %s9, 1
    %p48 = scmp.ne.s32.totalorder %s43, %s45
    %p49 = scmp.eq.s32.totalorder %s9, 0
    %p50 = por %p48, %p49
    %p51 = scmp.ne.s32.totalorder %s43, %s45
    %p52 = scmp.eq.s32.totalorder %s14, 1
    %p53 = por %p51, %p52
    %p54 = scmp.ne.s32.totalorder %s45, %s46
    %p55 = scmp.eq.s32.totalorder %s14, 0
    %p56 = por %p54, %p55
    %p57 = scmp.ne.s32.totalorder %s45, %s46
    %p58 = scmp.eq.s32.totalorder %s15, 1
    %p59 = por %p57, %p58
    %p61 = scmp.ne.s32.totalorder %s46, %s60
    %p62 = scmp.eq.s32.totalorder %s15, 0
    %p63 = por %p61, %p62
    %s65 = sadd.s32 %s64, 1
    %p68 = scmp.eq.s32.totalorder %s9, 1
    %p69 = scmp.ne.s32.totalorder %s64, %s66
    %p70 = scmp.eq.s32.totalorder %s9, 0
    %p71 = por %p69, %p70
    %p72 = scmp.ne.s32.totalorder %s64, %s66
    %p73 = scmp.eq.s32.totalorder %s14, 1
    %p74 = por %p72, %p73
    %p75 = scmp.ne.s32.totalorder %s66, %s67
    %p76 = scmp.eq.s32.totalorder %s14, 0
    %p77 = por %p75, %p76
    %p78 = scmp.ne.s32.totalorder %s66, %s67
    %p79 = scmp.eq.s32.totalorder %s15, 1
    %p80 = por %p78, %p79
    %p82 = scmp.ne.s32.totalorder %s67, %s81
    %p83 = scmp.eq.s32.totalorder %s15, 0
    %p84 = por %p82, %p83
    %s85 = ssub.s32 %s9, %s16
    %p86 = scmp.eq.s32.totalorder %s85, 0
    %s88 = sadd.s32 %s87, 1
    %s89 = scalar_select %p86, %s87, %s88
    %p92 = pneg %p86
    %p93 = scmp.eq.s32.totalorder %s9, 1
    %p94 = por %p92, %p93
    %p95 = scmp.ne.s32.totalorder %s87, %s90
    %p96 = scmp.eq.s32.totalorder %s9, 0
    %p97 = por %p95, %p96
    %p98 = scmp.ne.s32.totalorder %s87, %s90
    %p99 = scmp.eq.s32.totalorder %s14, 1
    %p100 = por %p98, %p99
    %p101 = scmp.ne.s32.totalorder %s90, %s91
    %p102 = scmp.eq.s32.totalorder %s14, 0
    %p103 = por %p101, %p102
    %p104 = scmp.ne.s32.totalorder %s90, %s91
    %p105 = scmp.eq.s32.totalorder %s15, 1
    %p106 = por %p104, %p105
    %p108 = scmp.ne.s32.totalorder %s91, %s107
    %p109 = scmp.eq.s32.totalorder %s15, 0
    %p110 = por %p108, %p109
    %p111 = scmp.le.s32.totalorder 1, %s9
    %p112 = scmp.lt.s32.totalorder %s9, 3
    %p113 = pnand %p111, %p112
    %p114 = pneg %p113
    // Predicated region
    $region9: #{encoder_forward.5} parent=5 // pred_check
      _
    $region10: #{encoder_forward.5} parent=5 // pred_check_branch
      %116 = sbr.rel (%p113) target = $region12
    $region11: #{encoder_forward.5} parent=5 // pred_region
      %s117 = ssub.s32 %s9, 1
      // Predicated region
      $region13: #{encoder_forward.5} parent=11 // pred_check
        %p118 = pneg %p56
      $region14: #{encoder_forward.5} parent=11 // pred_check_branch
        %120 = sbr.rel (%p118) target = $region16
      $region15: #{encoder_forward.5} parent=11 // pred_region
        _
      $region16: #{encoder_forward.5} parent=11 // pred_fallthru
        _
      // Predicated region
      $region17: #{encoder_forward.5} parent=11 // pred_check
        %p121 = pneg %p77
      $region18: #{encoder_forward.5} parent=11 // pred_check_branch
        %123 = sbr.rel (%p121) target = $region20
      $region19: #{encoder_forward.5} parent=11 // pred_region
        _
      $region20: #{encoder_forward.5} parent=11 // pred_fallthru
        _
    $region12: #{encoder_forward.5} parent=5 // pred_fallthru
      _
    %p124 = scmp.lt.s32.totalorder %s9, 2
    // Predicated region
    $region21: #{encoder_forward.5} parent=5 // pred_check
      %p125 = pneg %p124
    $region22: #{encoder_forward.5} parent=5 // pred_check_branch
      %127 = sbr.rel (%p125) target = $region24
    $region23: #{encoder_forward.5} parent=5 // pred_region
      // Predicated region
      $region25: #{encoder_forward.5} parent=23 // pred_check
        %p128 = pneg %p29
      $region26: #{encoder_forward.5} parent=23 // pred_check_branch
        %130 = sbr.rel (%p128) target = $region28
      $region27: #{encoder_forward.5} parent=23 // pred_region
        %s131 = smul.u32 32, %s9
        %p132 = scmp.lt.s32.totalorder %s131, 63
        %s133 = scalar_select %p132, %s131, 63
        %s134 = smul.addr %s133, 4
        %s135 = smul.addr %s134, 4
        %s136 = scalar_lea.vmem %s0, %s135
        %s137 = smul.u32 32, %s9
      $region28: #{encoder_forward.5} parent=23 // pred_fallthru
        _
    $region24: #{encoder_forward.5} parent=5 // pred_fallthru
      _
    %p138 = scmp.le.s32.totalorder 1, %s9
    %p139 = scmp.lt.s32.totalorder %s9, 3
    %p140 = pnand %p138, %p139
    %p141 = pneg %p140
    // Predicated region
    $region29: #{encoder_forward.5} parent=5 // pred_check
      _
    $region30: #{encoder_forward.5} parent=5 // pred_check_branch
      %143 = sbr.rel (%p140) target = $region32
    $region31: #{encoder_forward.5} parent=5 // pred_region
      %s144 = ssub.s32 %s9, 1
      %s145 = smul.u32 32, %s14
      %p146 = scmp.lt.s32.totalorder %s145, 63
      %s147 = scalar_select %p146, %s145, 63
      %s148 = smul.addr %s147, 4
      %s149 = smul.addr %s148, 4
      %s150 = scalar_lea.vmem %s0, %s149
      %p151 = pneg %p35
      %p152 = pneg %p32
      %p153 = pneg %p56
      %p154 = pneg %p53
      %p155 = pneg %p77
      %p156 = pneg %p74
      %p157 = pneg %p103
      %p158 = pneg %p100
      %s159 = smul.u32 32, %s14
      %p160 = scmp.lt.s32.totalorder %s159, 63
      %s161 = scalar_select %p160, %s159, 63
      %s162 = smul.addr %s161, 4
      %s163 = scalar_lea.vmem %s3, %s162
      %s164 = smul.u32 32, %s14
      %p165 = scmp.lt.s32.totalorder %s164, 63
      %s166 = scalar_select %p165, %s164, 63
      %s167 = smul.addr %s166, 4
      %s168 = smul.addr %s167, 4
      %s169 = scalar_lea.vmem %s0, %s168
      %s170 = smul.u32 32, %s14
      %s171 = smul.u32 32, %s14
      %p172 = scmp.lt.s32.totalorder %s171, 63
      %s173 = scalar_select %p172, %s171, 63
      %s174 = smul.addr %s173, 4
      %s175 = scalar_lea.vmem %s3, %s174
      %s176 = smul.u32 32, %s14
      %v178 = vld [vmem:[%s169] sm:$0xff]
      %v179 = vld [vmem:[%s169 + $0x8] sm:$0xff]
      %v180 = vld [vmem:[%s169 + $0x10] sm:$0xff]
      %v181 = vld [vmem:[%s169 + $0x18] sm:$0xff]
      %v182 = vld [vmem:[%s169 + $0x20] sm:$0xff]
      %v183 = vld [vmem:[%s169 + $0x28] sm:$0xff]
      %v184 = vld [vmem:[%s169 + $0x30] sm:$0xff]
      %v185 = vld [vmem:[%s169 + $0x38] sm:$0xff]
      %v186 = vld [vmem:[%s169 + $0x40] sm:$0xff]
      %v187 = vld [vmem:[%s169 + $0x48] sm:$0xff]
      %v188 = vld [vmem:[%s169 + $0x50] sm:$0xff]
      %v189 = vld [vmem:[%s169 + $0x58] sm:$0xff]
      %v190 = vld [vmem:[%s169 + $0x60] sm:$0xff]
      %v191 = vld [vmem:[%s169 + $0x68] sm:$0xff]
      %v192 = vld [vmem:[%s169 + $0x70] sm:$0xff]
      %v193 = vld [vmem:[%s169 + $0x78] sm:$0xff]
      %v194 = vld [vmem:[%s169 + $0x80] sm:$0xff]
      %v195 = vld [vmem:[%s169 + $0x88] sm:$0xff]
      %v196 = vld [vmem:[%s169 + $0x90] sm:$0xff]
      %v197 = vld [vmem:[%s169 + $0x98] sm:$0xff]
      %v198 = vld [vmem:[%s169 + $0xa0] sm:$0xff]
      %v199 = vld [vmem:[%s169 + $0xa8] sm:$0xff]
      %v200 = vld [vmem:[%s169 + $0xb0] sm:$0xff]
      %v201 = vld [vmem:[%s169 + $0xb8] sm:$0xff]
      %v202 = vld [vmem:[%s169 + $0xc0] sm:$0xff]
      %v203 = vld [vmem:[%s169 + $0xc8] sm:$0xff]
      %v204 = vld [vmem:[%s169 + $0xd0] sm:$0xff]
      %v205 = vld [vmem:[%s169 + $0xd8] sm:$0xff]
      %v206 = vld [vmem:[%s169 + $0xe0] sm:$0xff]
      %v207 = vld [vmem:[%s169 + $0xe8] sm:$0xff]
      %v208 = vld [vmem:[%s169 + $0xf0] sm:$0xff]
      %v209 = vld [vmem:[%s169 + $0xf8] sm:$0xff]
      %v210 = vld [vmem:[%s169 + $0x100] sm:$0xff]
      %v211 = vld [vmem:[%s169 + $0x108] sm:$0xff]
      %v212 = vld [vmem:[%s169 + $0x110] sm:$0xff]
      %v213 = vld [vmem:[%s169 + $0x118] sm:$0xff]
      %v214 = vld [vmem:[%s169 + $0x120] sm:$0xff]
      %v215 = vld [vmem:[%s169 + $0x128] sm:$0xff]
      %v216 = vld [vmem:[%s169 + $0x130] sm:$0xff]
      %v217 = vld [vmem:[%s169 + $0x138] sm:$0xff]
      %v218 = vld [vmem:[%s169 + $0x140] sm:$0xff]
      %v219 = vld [vmem:[%s169 + $0x148] sm:$0xff]
      %v220 = vld [vmem:[%s169 + $0x150] sm:$0xff]
      %v221 = vld [vmem:[%s169 + $0x158] sm:$0xff]
      %v222 = vld [vmem:[%s169 + $0x160] sm:$0xff]
      %v223 = vld [vmem:[%s169 + $0x168] sm:$0xff]
      %v224 = vld [vmem:[%s169 + $0x170] sm:$0xff]
      %v225 = vld [vmem:[%s169 + $0x178] sm:$0xff]
      %v226 = vld [vmem:[%s169 + $0x180] sm:$0xff]
      %v227 = vld [vmem:[%s169 + $0x188] sm:$0xff]
      %v228 = vld [vmem:[%s169 + $0x190] sm:$0xff]
      %v229 = vld [vmem:[%s169 + $0x198] sm:$0xff]
      %v230 = vld [vmem:[%s169 + $0x1a0] sm:$0xff]
      %v231 = vld [vmem:[%s169 + $0x1a8] sm:$0xff]
      %v232 = vld [vmem:[%s169 + $0x1b0] sm:$0xff]
      %v233 = vld [vmem:[%s169 + $0x1b8] sm:$0xff]
      %v234 = vld [vmem:[%s169 + $0x1c0] sm:$0xff]
      %v235 = vld [vmem:[%s169 + $0x1c8] sm:$0xff]
      %v236 = vld [vmem:[%s169 + $0x1d0] sm:$0xff]
      %v237 = vld [vmem:[%s169 + $0x1d8] sm:$0xff]
      %v238 = vld [vmem:[%s169 + $0x1e0] sm:$0xff]
      %v239 = vld [vmem:[%s169 + $0x1e8] sm:$0xff]
      %v240 = vld [vmem:[%s169 + $0x1f0] sm:$0xff]
      %v241 = vld [vmem:[%s169 + $0x1f8] sm:$0xff]
      %v242 = vld [vmem:[%s1] sm:$0xf]
      %v243 = vld [vmem:[%s1 + $0x4] sm:$0xf]
      %v244 = vld [vmem:[%s1 + $0x8] sm:$0xf]
      %v245 = vld [vmem:[%s1 + $0xc] sm:$0xf]
      %v246 = vld [vmem:[%s1 + $0x10] sm:$0xf]
      %v247 = vld [vmem:[%s1 + $0x14] sm:$0xf]
      %v248 = vld [vmem:[%s1 + $0x18] sm:$0xf]
      %v249 = vld [vmem:[%s1 + $0x1c] sm:$0xf]
      %v250 = vld [vmem:[%s1 + $0x20] sm:$0xf]
      %v251 = vld [vmem:[%s1 + $0x24] sm:$0xf]
      %v252 = vld [vmem:[%s1 + $0x28] sm:$0xf]
      %v253 = vld [vmem:[%s1 + $0x2c] sm:$0xf]
      %v254 = vld [vmem:[%s1 + $0x30] sm:$0xf]
      %v255 = vld [vmem:[%s1 + $0x34] sm:$0xf]
      %v256 = vld [vmem:[%s1 + $0x38] sm:$0xf]
      %v257 = vld [vmem:[%s1 + $0x3c] sm:$0xf]
      %v258 = vld [vmem:[%s1 + $0x40] sm:$0xf]
      %v259 = vld [vmem:[%s1 + $0x44] sm:$0xf]
      %v260 = vld [vmem:[%s1 + $0x48] sm:$0xf]
      %v261 = vld [vmem:[%s1 + $0x4c] sm:$0xf]
      %v262 = vld [vmem:[%s1 + $0x50] sm:$0xf]
      %v263 = vld [vmem:[%s1 + $0x54] sm:$0xf]
      %v264 = vld [vmem:[%s1 + $0x58] sm:$0xf]
      %v265 = vld [vmem:[%s1 + $0x5c] sm:$0xf]
      %v266 = vld [vmem:[%s1 + $0x60] sm:$0xf]
      %v267 = vld [vmem:[%s1 + $0x64] sm:$0xf]
      %v268 = vld [vmem:[%s1 + $0x68] sm:$0xf]
      %v269 = vld [vmem:[%s1 + $0x6c] sm:$0xf]
      %v270 = vld [vmem:[%s1 + $0x70] sm:$0xf]
      %v271 = vld [vmem:[%s1 + $0x74] sm:$0xf]
      %v272 = vld [vmem:[%s1 + $0x78] sm:$0xf]
      %v273 = vld [vmem:[%s1 + $0x7c] sm:$0xf]
      %v274 = vld [vmem:[%s1 + $0x80] sm:$0xf]
      %v275 = vld [vmem:[%s1 + $0x84] sm:$0xf]
      %v276 = vld [vmem:[%s1 + $0x88] sm:$0xf]
      %v277 = vld [vmem:[%s1 + $0x8c] sm:$0xf]
      %v278 = vld [vmem:[%s1 + $0x90] sm:$0xf]
      %v279 = vld [vmem:[%s1 + $0x94] sm:$0xf]
      %v280 = vld [vmem:[%s1 + $0x98] sm:$0xf]
      %v281 = vld [vmem:[%s1 + $0x9c] sm:$0xf]
      %v282 = vld [vmem:[%s1 + $0xa0] sm:$0xf]
      %v283 = vld [vmem:[%s1 + $0xa4] sm:$0xf]
      %v284 = vld [vmem:[%s1 + $0xa8] sm:$0xf]
      %v285 = vld [vmem:[%s1 + $0xac] sm:$0xf]
      %v286 = vld [vmem:[%s1 + $0xb0] sm:$0xf]
      %v287 = vld [vmem:[%s1 + $0xb4] sm:$0xf]
      %v288 = vld [vmem:[%s1 + $0xb8] sm:$0xf]
      %v289 = vld [vmem:[%s1 + $0xbc] sm:$0xf]
      %v290 = vld [vmem:[%s1 + $0xc0] sm:$0xf]
      %v291 = vld [vmem:[%s1 + $0xc4] sm:$0xf]
      %v292 = vld [vmem:[%s1 + $0xc8] sm:$0xf]
      %v293 = vld [vmem:[%s1 + $0xcc] sm:$0xf]
      %v294 = vld [vmem:[%s1 + $0xd0] sm:$0xf]
      %v295 = vld [vmem:[%s1 + $0xd4] sm:$0xf]
      %v296 = vld [vmem:[%s1 + $0xd8] sm:$0xf]
      %v297 = vld [vmem:[%s1 + $0xdc] sm:$0xf]
      %v298 = vld [vmem:[%s1 + $0xe0] sm:$0xf]
      %v299 = vld [vmem:[%s1 + $0xe4] sm:$0xf]
      %v300 = vld [vmem:[%s1 + $0xe8] sm:$0xf]
      %v301 = vld [vmem:[%s1 + $0xec] sm:$0xf]
      %v302 = vld [vmem:[%s1 + $0xf0] sm:$0xf]
      %v303 = vld [vmem:[%s1 + $0xf4] sm:$0xf]
      %v304 = vld [vmem:[%s1 + $0xf8] sm:$0xf]
      %v305 = vld [vmem:[%s1 + $0xfc] sm:$0xf]
      %v306 = vld [vmem:[%s2] sm:$0x1]
      %v308 = vlaneseq
      %v309 = vshrl.u32 %v308, 7
      %v310 = vsub.s32 0, %v309
      %v311 = vrot.slane %v306, %v310
      %v377 = vunpack.c.l.b16 %v178
      %v378 = vunpack.c.h.b16 %v178
      %v379 = vunpack.c.l.b16 %v179
      %v380 = vunpack.c.h.b16 %v179
      %v381 = vunpack.c.l.b16 %v180
      %v382 = vunpack.c.h.b16 %v180
      %v383 = vunpack.c.l.b16 %v181
      %v384 = vunpack.c.h.b16 %v181
      %v385 = vunpack.c.l.b16 %v182
      %v386 = vunpack.c.h.b16 %v182
      %v387 = vunpack.c.l.b16 %v183
      %v388 = vunpack.c.h.b16 %v183
      %v389 = vunpack.c.l.b16 %v184
      %v390 = vunpack.c.h.b16 %v184
      %v391 = vunpack.c.l.b16 %v185
      %v392 = vunpack.c.h.b16 %v185
      %v393 = vunpack.c.l.b16 %v186
      %v394 = vunpack.c.h.b16 %v186
      %v395 = vunpack.c.l.b16 %v187
      %v396 = vunpack.c.h.b16 %v187
      %v397 = vunpack.c.l.b16 %v188
      %v398 = vunpack.c.h.b16 %v188
      %v399 = vunpack.c.l.b16 %v189
      %v400 = vunpack.c.h.b16 %v189
      %v401 = vunpack.c.l.b16 %v190
      %v402 = vunpack.c.h.b16 %v190
      %v403 = vunpack.c.l.b16 %v191
      %v404 = vunpack.c.h.b16 %v191
      %v405 = vunpack.c.l.b16 %v192
      %v406 = vunpack.c.h.b16 %v192
      %v407 = vunpack.c.l.b16 %v193
      %v408 = vunpack.c.h.b16 %v193
      %v409 = vunpack.c.l.b16 %v194
      %v410 = vunpack.c.h.b16 %v194
      %v411 = vunpack.c.l.b16 %v195
      %v412 = vunpack.c.h.b16 %v195
      %v413 = vunpack.c.l.b16 %v196
      %v414 = vunpack.c.h.b16 %v196
      %v415 = vunpack.c.l.b16 %v197
      %v416 = vunpack.c.h.b16 %v197
      %v417 = vunpack.c.l.b16 %v198
      %v418 = vunpack.c.h.b16 %v198
      %v419 = vunpack.c.l.b16 %v199
      %v420 = vunpack.c.h.b16 %v199
      %v421 = vunpack.c.l.b16 %v200
      %v422 = vunpack.c.h.b16 %v200
      %v423 = vunpack.c.l.b16 %v201
      %v424 = vunpack.c.h.b16 %v201
      %v425 = vunpack.c.l.b16 %v202
      %v426 = vunpack.c.h.b16 %v202
      %v427 = vunpack.c.l.b16 %v203
      %v428 = vunpack.c.h.b16 %v203
      %v429 = vunpack.c.l.b16 %v204
      %v430 = vunpack.c.h.b16 %v204
      %v431 = vunpack.c.l.b16 %v205
      %v432 = vunpack.c.h.b16 %v205
      %v433 = vunpack.c.l.b16 %v206
      %v434 = vunpack.c.h.b16 %v206
      %v435 = vunpack.c.l.b16 %v207
      %v436 = vunpack.c.h.b16 %v207
      %v437 = vunpack.c.l.b16 %v208
      %v438 = vunpack.c.h.b16 %v208
      %v439 = vunpack.c.l.b16 %v209
      %v440 = vunpack.c.h.b16 %v209
      %v441 = vunpack.c.l.b16 %v210
      %v442 = vunpack.c.h.b16 %v210
      %v443 = vunpack.c.l.b16 %v211
      %v444 = vunpack.c.h.b16 %v211
      %v445 = vunpack.c.l.b16 %v212
      %v446 = vunpack.c.h.b16 %v212
      %v447 = vunpack.c.l.b16 %v213
      %v448 = vunpack.c.h.b16 %v213
      %v449 = vunpack.c.l.b16 %v214
      %v450 = vunpack.c.h.b16 %v214
      %v451 = vunpack.c.l.b16 %v215
      %v452 = vunpack.c.h.b16 %v215
      %v453 = vunpack.c.l.b16 %v216
      %v454 = vunpack.c.h.b16 %v216
      %v455 = vunpack.c.l.b16 %v217
      %v456 = vunpack.c.h.b16 %v217
      %v457 = vunpack.c.l.b16 %v218
      %v458 = vunpack.c.h.b16 %v218
      %v459 = vunpack.c.l.b16 %v219
      %v460 = vunpack.c.h.b16 %v219
      %v461 = vunpack.c.l.b16 %v220
      %v462 = vunpack.c.h.b16 %v220
      %v463 = vunpack.c.l.b16 %v221
      %v464 = vunpack.c.h.b16 %v221
      %v465 = vunpack.c.l.b16 %v222
      %v466 = vunpack.c.h.b16 %v222
      %v467 = vunpack.c.l.b16 %v223
      %v468 = vunpack.c.h.b16 %v223
      %v469 = vunpack.c.l.b16 %v224
      %v470 = vunpack.c.h.b16 %v224
      %v471 = vunpack.c.l.b16 %v225
      %v472 = vunpack.c.h.b16 %v225
      %v473 = vunpack.c.l.b16 %v226
      %v474 = vunpack.c.h.b16 %v226
      %v475 = vunpack.c.l.b16 %v227
      %v476 = vunpack.c.h.b16 %v227
      %v477 = vunpack.c.l.b16 %v228
      %v478 = vunpack.c.h.b16 %v228
      %v479 = vunpack.c.l.b16 %v229
      %v480 = vunpack.c.h.b16 %v229
      %v481 = vunpack.c.l.b16 %v230
      %v482 = vunpack.c.h.b16 %v230
      %v483 = vunpack.c.l.b16 %v231
      %v484 = vunpack.c.h.b16 %v231
      %v485 = vunpack.c.l.b16 %v232
      %v486 = vunpack.c.h.b16 %v232
      %v487 = vunpack.c.l.b16 %v233
      %v488 = vunpack.c.h.b16 %v233
      %v489 = vunpack.c.l.b16 %v234
      %v490 = vunpack.c.h.b16 %v234
      %v491 = vunpack.c.l.b16 %v235
      %v492 = vunpack.c.h.b16 %v235
      %v493 = vunpack.c.l.b16 %v236
      %v494 = vunpack.c.h.b16 %v236
      %v495 = vunpack.c.l.b16 %v237
      %v496 = vunpack.c.h.b16 %v237
      %v497 = vunpack.c.l.b16 %v238
      %v498 = vunpack.c.h.b16 %v238
      %v499 = vunpack.c.l.b16 %v239
      %v500 = vunpack.c.h.b16 %v239
      %v501 = vunpack.c.l.b16 %v240
      %v502 = vunpack.c.h.b16 %v240
      %v503 = vunpack.c.l.b16 %v241
      %v504 = vunpack.c.h.b16 %v241
      %v505 = vpack.c.b16 %v381, %v377
      %v506 = vpack.c.b16 %v382, %v378
      %v507 = vpack.c.b16 %v383, %v379
      %v508 = vpack.c.b16 %v384, %v380
      %v509 = vpack.c.b16 %v389, %v385
      %v510 = vpack.c.b16 %v390, %v386
      %v511 = vpack.c.b16 %v391, %v387
      %v512 = vpack.c.b16 %v392, %v388
      %v513 = vpack.c.b16 %v397, %v393
      %v514 = vpack.c.b16 %v398, %v394
      %v515 = vpack.c.b16 %v399, %v395
      %v516 = vpack.c.b16 %v400, %v396
      %v517 = vpack.c.b16 %v405, %v401
      %v518 = vpack.c.b16 %v406, %v402
      %v519 = vpack.c.b16 %v407, %v403
      %v520 = vpack.c.b16 %v408, %v404
      %v521 = vpack.c.b16 %v413, %v409
      %v522 = vpack.c.b16 %v414, %v410
      %v523 = vpack.c.b16 %v415, %v411
      %v524 = vpack.c.b16 %v416, %v412
      %v525 = vpack.c.b16 %v421, %v417
      %v526 = vpack.c.b16 %v422, %v418
      %v527 = vpack.c.b16 %v423, %v419
      %v528 = vpack.c.b16 %v424, %v420
      %v529 = vpack.c.b16 %v429, %v425
      %v530 = vpack.c.b16 %v430, %v426
      %v531 = vpack.c.b16 %v431, %v427
      %v532 = vpack.c.b16 %v432, %v428
      %v533 = vpack.c.b16 %v437, %v433
      %v534 = vpack.c.b16 %v438, %v434
      %v535 = vpack.c.b16 %v439, %v435
      %v536 = vpack.c.b16 %v440, %v436
      %v537 = vpack.c.b16 %v445, %v441
      %v538 = vpack.c.b16 %v446, %v442
      %v539 = vpack.c.b16 %v447, %v443
      %v540 = vpack.c.b16 %v448, %v444
      %v541 = vpack.c.b16 %v453, %v449
      %v542 = vpack.c.b16 %v454, %v450
      %v543 = vpack.c.b16 %v455, %v451
      %v544 = vpack.c.b16 %v456, %v452
      %v545 = vpack.c.b16 %v461, %v457
      %v546 = vpack.c.b16 %v462, %v458
      %v547 = vpack.c.b16 %v463, %v459
      %v548 = vpack.c.b16 %v464, %v460
      %v549 = vpack.c.b16 %v469, %v465
      %v550 = vpack.c.b16 %v470, %v466
      %v551 = vpack.c.b16 %v471, %v467
      %v552 = vpack.c.b16 %v472, %v468
      %v553 = vpack.c.b16 %v477, %v473
      %v554 = vpack.c.b16 %v478, %v474
      %v555 = vpack.c.b16 %v479, %v475
      %v556 = vpack.c.b16 %v480, %v476
      %v557 = vpack.c.b16 %v485, %v481
      %v558 = vpack.c.b16 %v486, %v482
      %v559 = vpack.c.b16 %v487, %v483
      %v560 = vpack.c.b16 %v488, %v484
      %v561 = vpack.c.b16 %v493, %v489
      %v562 = vpack.c.b16 %v494, %v490
      %v563 = vpack.c.b16 %v495, %v491
      %v564 = vpack.c.b16 %v496, %v492
      %v565 = vpack.c.b16 %v501, %v497
      %v566 = vpack.c.b16 %v502, %v498
      %v567 = vpack.c.b16 %v503, %v499
      %v568 = vpack.c.b16 %v504, %v500
      %v697 = vunpack.c.l.b16 %v242
      %v698 = vunpack.c.l.b16 %v243
      %v699 = vunpack.c.l.b16 %v244
      %v700 = vunpack.c.l.b16 %v245
      %v701 = vunpack.c.l.b16 %v246
      %v702 = vunpack.c.l.b16 %v247
      %v703 = vunpack.c.l.b16 %v248
      %v704 = vunpack.c.l.b16 %v249
      %v705 = vunpack.c.l.b16 %v250
      %v706 = vunpack.c.l.b16 %v251
      %v707 = vunpack.c.l.b16 %v252
      %v708 = vunpack.c.l.b16 %v253
      %v709 = vunpack.c.l.b16 %v254
      %v710 = vunpack.c.l.b16 %v255
      %v711 = vunpack.c.l.b16 %v256
      %v712 = vunpack.c.l.b16 %v257
      %v713 = vunpack.c.l.b16 %v258
      %v714 = vunpack.c.l.b16 %v259
      %v715 = vunpack.c.l.b16 %v260
      %v716 = vunpack.c.l.b16 %v261
      %v717 = vunpack.c.l.b16 %v262
      %v718 = vunpack.c.l.b16 %v263
      %v719 = vunpack.c.l.b16 %v264
      %v720 = vunpack.c.l.b16 %v265
      %v721 = vunpack.c.l.b16 %v266
      %v722 = vunpack.c.l.b16 %v267
      %v723 = vunpack.c.l.b16 %v268
      %v724 = vunpack.c.l.b16 %v269
      %v725 = vunpack.c.l.b16 %v270
      %v726 = vunpack.c.l.b16 %v271
      %v727 = vunpack.c.l.b16 %v272
      %v728 = vunpack.c.l.b16 %v273
      %v729 = vunpack.c.l.b16 %v274
      %v730 = vunpack.c.l.b16 %v275
      %v731 = vunpack.c.l.b16 %v276
      %v732 = vunpack.c.l.b16 %v277
      %v733 = vunpack.c.l.b16 %v278
      %v734 = vunpack.c.l.b16 %v279
      %v735 = vunpack.c.l.b16 %v280
      %v736 = vunpack.c.l.b16 %v281
      %v737 = vunpack.c.l.b16 %v282
      %v738 = vunpack.c.l.b16 %v283
      %v739 = vunpack.c.l.b16 %v284
      %v740 = vunpack.c.l.b16 %v285
      %v741 = vunpack.c.l.b16 %v286
      %v742 = vunpack.c.l.b16 %v287
      %v743 = vunpack.c.l.b16 %v288
      %v744 = vunpack.c.l.b16 %v289
      %v745 = vunpack.c.l.b16 %v290
      %v746 = vunpack.c.l.b16 %v291
      %v747 = vunpack.c.l.b16 %v292
      %v748 = vunpack.c.l.b16 %v293
      %v749 = vunpack.c.l.b16 %v294
      %v750 = vunpack.c.l.b16 %v295
      %v751 = vunpack.c.l.b16 %v296
      %v752 = vunpack.c.l.b16 %v297
      %v753 = vunpack.c.l.b16 %v298
      %v754 = vunpack.c.l.b16 %v299
      %v755 = vunpack.c.l.b16 %v300
      %v756 = vunpack.c.l.b16 %v301
      %v757 = vunpack.c.l.b16 %v302
      %v758 = vunpack.c.l.b16 %v303
      %v759 = vunpack.c.l.b16 %v304
      %v760 = vunpack.c.l.b16 %v305
      %v761 = vpack.c.b16 %v698, %v697
      %v762 = vpack.c.b16 %v700, %v699
      %v763 = vpack.c.b16 %v702, %v701
      %v764 = vpack.c.b16 %v704, %v703
      %v765 = vpack.c.b16 %v706, %v705
      %v766 = vpack.c.b16 %v708, %v707
      %v767 = vpack.c.b16 %v710, %v709
      %v768 = vpack.c.b16 %v712, %v711
      %v769 = vpack.c.b16 %v714, %v713
      %v770 = vpack.c.b16 %v716, %v715
      %v771 = vpack.c.b16 %v718, %v717
      %v772 = vpack.c.b16 %v720, %v719
      %v773 = vpack.c.b16 %v722, %v721
      %v774 = vpack.c.b16 %v724, %v723
      %v775 = vpack.c.b16 %v726, %v725
      %v776 = vpack.c.b16 %v728, %v727
      %v777 = vpack.c.b16 %v730, %v729
      %v778 = vpack.c.b16 %v732, %v731
      %v779 = vpack.c.b16 %v734, %v733
      %v780 = vpack.c.b16 %v736, %v735
      %v781 = vpack.c.b16 %v738, %v737
      %v782 = vpack.c.b16 %v740, %v739
      %v783 = vpack.c.b16 %v742, %v741
      %v784 = vpack.c.b16 %v744, %v743
      %v785 = vpack.c.b16 %v746, %v745
      %v786 = vpack.c.b16 %v748, %v747
      %v787 = vpack.c.b16 %v750, %v749
      %v788 = vpack.c.b16 %v752, %v751
      %v789 = vpack.c.b16 %v754, %v753
      %v790 = vpack.c.b16 %v756, %v755
      %v791 = vpack.c.b16 %v758, %v757
      %v792 = vpack.c.b16 %v760, %v759
      %825 = vmatprep.subr.bf16.mxu0 0
      %826 = vmatpush1.bf16.msra.mxu0 %v768
      %827 = vmatprep.subr.bf16.mxu0 0
      %828 = vmatpush1.bf16.msra.mxu0 %v767
      %829 = vmatprep.subr.bf16.mxu0 0
      %830 = vmatpush1.bf16.msra.mxu0 %v766
      %831 = vmatprep.subr.bf16.mxu0 0
      %832 = vmatpush1.bf16.msra.mxu0 %v765
      %833 = vmatprep.subr.bf16.mxu0 0
      %834 = vmatpush1.bf16.msra.mxu0 %v764
      %835 = vmatprep.subr.bf16.mxu0 0
      %836 = vmatpush1.bf16.msra.mxu0 %v763
      %837 = vmatprep.subr.bf16.mxu0 0
      %838 = vmatpush1.bf16.msra.mxu0 %v762
      %839 = vmatprep.subr.bf16.mxu0 0
      %840 = vmatpush1.bf16.msra.mxu0 %v761
      %841 = vmatprep.subr.bf16.mxu0 0
      %842 = vmatpush2.bf16.msra.mxu0 %v776
      %843 = vmatprep.subr.bf16.mxu0 0
      %844 = vmatpush2.bf16.msra.mxu0 %v775
      %845 = vmatprep.subr.bf16.mxu0 0
      %846 = vmatpush2.bf16.msra.mxu0 %v774
      %847 = vmatprep.subr.bf16.mxu0 0
      %848 = vmatpush2.bf16.msra.mxu0 %v773
      %849 = vmatprep.subr.bf16.mxu0 0
      %850 = vmatpush2.bf16.msra.mxu0 %v772
      %851 = vmatprep.subr.bf16.mxu0 0
      %852 = vmatpush2.bf16.msra.mxu0 %v771
      %853 = vmatprep.subr.bf16.mxu0 0
      %854 = vmatpush2.bf16.msra.mxu0 %v770
      %855 = vmatprep.subr.bf16.mxu0 0
      %856 = vmatpush2.bf16.msra.mxu0 %v769
      %857 = vmatprep.mubr.bf16.mxu0 %v506
      %858 = vmatmul.mubr.bf16.gmra.mxu0 %v505
      %v859 = vpop.f32.mrf.mxu0
      %v860 = vadd.f32 %v311, %v859
      %v861 = vpop.f32.mrf.mxu0
      %v862 = vpop.f32.mrf.mxu0
      %v863 = vadd.f32 %v311, %v862
      %v864 = vpop.f32.mrf.mxu0
      %865 = vmatprep.mubr.bf16.mxu0 %v510
      %866 = vmatmul.mubr.bf16.gmra.mxu0 %v509
      %v867 = vpop.f32.mrf.mxu0
      %v868 = vadd.f32 %v311, %v867
      %v869 = vpop.f32.mrf.mxu0
      %v870 = vpop.f32.mrf.mxu0
      %v871 = vadd.f32 %v311, %v870
      %v872 = vpop.f32.mrf.mxu0
      %873 = vmatprep.mubr.bf16.mxu0 %v514
      %874 = vmatmul.mubr.bf16.gmra.mxu0 %v513
      %v875 = vpop.f32.mrf.mxu0
      %v876 = vadd.f32 %v311, %v875
      %v877 = vpop.f32.mrf.mxu0
      %v878 = vpop.f32.mrf.mxu0
      %v879 = vadd.f32 %v311, %v878
      %v880 = vpop.f32.mrf.mxu0
      %881 = vmatprep.mubr.bf16.mxu0 %v518
      %882 = vmatmul.mubr.bf16.gmra.mxu0 %v517
      %v883 = vpop.f32.mrf.mxu0
      %v884 = vadd.f32 %v311, %v883
      %v885 = vpop.f32.mrf.mxu0
      %v886 = vpop.f32.mrf.mxu0
      %v887 = vadd.f32 %v311, %v886
      %v888 = vpop.f32.mrf.mxu0
      %889 = vmatprep.mubr.bf16.mxu0 %v522
      %890 = vmatmul.mubr.bf16.gmra.mxu0 %v521
      %v891 = vpop.f32.mrf.mxu0
      %v892 = vadd.f32 %v311, %v891
      %v893 = vpop.f32.mrf.mxu0
      %v894 = vpop.f32.mrf.mxu0
      %v895 = vadd.f32 %v311, %v894
      %v896 = vpop.f32.mrf.mxu0
      %897 = vmatprep.mubr.bf16.mxu0 %v526
      %898 = vmatmul.mubr.bf16.gmra.mxu0 %v525
      %v899 = vpop.f32.mrf.mxu0
      %v900 = vadd.f32 %v311, %v899
      %v901 = vpop.f32.mrf.mxu0
      %v902 = vpop.f32.mrf.mxu0
      %v903 = vadd.f32 %v311, %v902
      %v904 = vpop.f32.mrf.mxu0
      %905 = vmatprep.mubr.bf16.mxu0 %v530
      %906 = vmatmul.mubr.bf16.gmra.mxu0 %v529
      %v907 = vpop.f32.mrf.mxu0
      %v908 = vadd.f32 %v311, %v907
      %v909 = vpop.f32.mrf.mxu0
      %v910 = vpop.f32.mrf.mxu0
      %v911 = vadd.f32 %v311, %v910
      %v912 = vpop.f32.mrf.mxu0
      %913 = vmatprep.mubr.bf16.mxu0 %v534
      %914 = vmatmul.mubr.bf16.gmra.mxu0 %v533
      %v915 = vpop.f32.mrf.mxu0
      %v916 = vadd.f32 %v311, %v915
      %v917 = vpop.f32.mrf.mxu0
      %v918 = vpop.f32.mrf.mxu0
      %v919 = vadd.f32 %v311, %v918
      %v920 = vpop.f32.mrf.mxu0
      %921 = vmatprep.mubr.bf16.mxu0 %v538
      %922 = vmatmul.mubr.bf16.gmra.mxu0 %v537
      %v923 = vpop.f32.mrf.mxu0
      %v924 = vadd.f32 %v311, %v923
      %v925 = vpop.f32.mrf.mxu0
      %v926 = vpop.f32.mrf.mxu0
      %v927 = vadd.f32 %v311, %v926
      %v928 = vpop.f32.mrf.mxu0
      %929 = vmatprep.mubr.bf16.mxu0 %v542
      %930 = vmatmul.mubr.bf16.gmra.mxu0 %v541
      %v931 = vpop.f32.mrf.mxu0
      %v932 = vadd.f32 %v311, %v931
      %v933 = vpop.f32.mrf.mxu0
      %v934 = vpop.f32.mrf.mxu0
      %v935 = vadd.f32 %v311, %v934
      %v936 = vpop.f32.mrf.mxu0
      %937 = vmatprep.mubr.bf16.mxu0 %v546
      %938 = vmatmul.mubr.bf16.gmra.mxu0 %v545
      %v939 = vpop.f32.mrf.mxu0
      %v940 = vadd.f32 %v311, %v939
      %v941 = vpop.f32.mrf.mxu0
      %v942 = vpop.f32.mrf.mxu0
      %v943 = vadd.f32 %v311, %v942
      %v944 = vpop.f32.mrf.mxu0
      %945 = vmatprep.mubr.bf16.mxu0 %v550
      %946 = vmatmul.mubr.bf16.gmra.mxu0 %v549
      %v947 = vpop.f32.mrf.mxu0
      %v948 = vadd.f32 %v311, %v947
      %v949 = vpop.f32.mrf.mxu0
      %v950 = vpop.f32.mrf.mxu0
      %v951 = vadd.f32 %v311, %v950
      %v952 = vpop.f32.mrf.mxu0
      %953 = vmatprep.mubr.bf16.mxu0 %v554
      %954 = vmatmul.mubr.bf16.gmra.mxu0 %v553
      %v955 = vpop.f32.mrf.mxu0
      %v956 = vadd.f32 %v311, %v955
      %v957 = vpop.f32.mrf.mxu0
      %v958 = vpop.f32.mrf.mxu0
      %v959 = vadd.f32 %v311, %v958
      %v960 = vpop.f32.mrf.mxu0
      %961 = vmatprep.mubr.bf16.mxu0 %v558
      %962 = vmatmul.mubr.bf16.gmra.mxu0 %v557
      %v963 = vpop.f32.mrf.mxu0
      %v964 = vadd.f32 %v311, %v963
      %v965 = vpop.f32.mrf.mxu0
      %v966 = vpop.f32.mrf.mxu0
      %v967 = vadd.f32 %v311, %v966
      %v968 = vpop.f32.mrf.mxu0
      %969 = vmatprep.mubr.bf16.mxu0 %v562
      %970 = vmatmul.mubr.bf16.gmra.mxu0 %v561
      %v971 = vpop.f32.mrf.mxu0
      %v972 = vadd.f32 %v311, %v971
      %v973 = vpop.f32.mrf.mxu0
      %v974 = vpop.f32.mrf.mxu0
      %v975 = vadd.f32 %v311, %v974
      %v976 = vpop.f32.mrf.mxu0
      %977 = vmatprep.mubr.bf16.mxu0 %v566
      %978 = vmatmul.mubr.bf16.gmra.mxu0 %v565
      %v979 = vpop.f32.mrf.mxu0
      %v980 = vadd.f32 %v311, %v979
      %v981 = vpop.f32.mrf.mxu0
      %v982 = vpop.f32.mrf.mxu0
      %v983 = vadd.f32 %v311, %v982
      %v984 = vpop.f32.mrf.mxu0
      %985 = vdwg.mxu0
      %986 = vmatprep.subr.bf16.mxu0 0
      %987 = vmatpush1.bf16.msra.mxu0 %v784
      %988 = vmatprep.subr.bf16.mxu0 0
      %989 = vmatpush1.bf16.msra.mxu0 %v783
      %990 = vmatprep.subr.bf16.mxu0 0
      %991 = vmatpush1.bf16.msra.mxu0 %v782
      %992 = vmatprep.subr.bf16.mxu0 0
      %993 = vmatpush1.bf16.msra.mxu0 %v781
      %994 = vmatprep.subr.bf16.mxu0 0
      %995 = vmatpush1.bf16.msra.mxu0 %v780
      %996 = vmatprep.subr.bf16.mxu0 0
      %997 = vmatpush1.bf16.msra.mxu0 %v779
      %998 = vmatprep.subr.bf16.mxu0 0
      %999 = vmatpush1.bf16.msra.mxu0 %v778
      %1000 = vmatprep.subr.bf16.mxu0 0
      %1001 = vmatpush1.bf16.msra.mxu0 %v777
      %1002 = vmatprep.subr.bf16.mxu0 0
      %1003 = vmatpush2.bf16.msra.mxu0 %v792
      %1004 = vmatprep.subr.bf16.mxu0 0
      %1005 = vmatpush2.bf16.msra.mxu0 %v791
      %1006 = vmatprep.subr.bf16.mxu0 0
      %1007 = vmatpush2.bf16.msra.mxu0 %v790
      %1008 = vmatprep.subr.bf16.mxu0 0
      %1009 = vmatpush2.bf16.msra.mxu0 %v789
      %1010 = vmatprep.subr.bf16.mxu0 0
      %1011 = vmatpush2.bf16.msra.mxu0 %v788
      %1012 = vmatprep.subr.bf16.mxu0 0
      %1013 = vmatpush2.bf16.msra.mxu0 %v787
      %1014 = vmatprep.subr.bf16.mxu0 0
      %1015 = vmatpush2.bf16.msra.mxu0 %v786
      %1016 = vmatprep.subr.bf16.mxu0 0
      %1017 = vmatpush2.bf16.msra.mxu0 %v785
      %1018 = vmatprep.mubr.bf16.mxu0 %v508
      %1019 = vmatmul.mubr.bf16.gmra.mxu0 %v507
      %v1020 = vpop.f32.mrf.mxu0
      %v1021 = vadd.f32 %v860, %v1020
      %v1022 = vpop.f32.mrf.mxu0
      %v1023 = vpop.f32.mrf.mxu0
      %v1024 = vadd.f32 %v863, %v1023
      %v1025 = vpop.f32.mrf.mxu0
      %1026 = vmatprep.mubr.bf16.mxu0 %v512
      %1027 = vmatmul.mubr.bf16.gmra.mxu0 %v511
      %v1028 = vpop.f32.mrf.mxu0
      %v1029 = vadd.f32 %v868, %v1028
      %v1030 = vpop.f32.mrf.mxu0
      %v1031 = vpop.f32.mrf.mxu0
      %v1032 = vadd.f32 %v871, %v1031
      %v1033 = vpop.f32.mrf.mxu0
      %1034 = vmatprep.mubr.bf16.mxu0 %v516
      %1035 = vmatmul.mubr.bf16.gmra.mxu0 %v515
      %v1036 = vpop.f32.mrf.mxu0
      %v1037 = vadd.f32 %v876, %v1036
      %v1038 = vpop.f32.mrf.mxu0
      %v1039 = vpop.f32.mrf.mxu0
      %v1040 = vadd.f32 %v879, %v1039
      %v1041 = vpop.f32.mrf.mxu0
      %1042 = vmatprep.mubr.bf16.mxu0 %v520
      %1043 = vmatmul.mubr.bf16.gmra.mxu0 %v519
      %v1044 = vpop.f32.mrf.mxu0
      %v1045 = vadd.f32 %v884, %v1044
      %v1046 = vpop.f32.mrf.mxu0
      %v1047 = vpop.f32.mrf.mxu0
      %v1048 = vadd.f32 %v887, %v1047
      %v1049 = vpop.f32.mrf.mxu0
      %1050 = vmatprep.mubr.bf16.mxu0 %v524
      %1051 = vmatmul.mubr.bf16.gmra.mxu0 %v523
      %v1052 = vpop.f32.mrf.mxu0
      %v1053 = vadd.f32 %v892, %v1052
      %v1054 = vpop.f32.mrf.mxu0
      %v1055 = vpop.f32.mrf.mxu0
      %v1056 = vadd.f32 %v895, %v1055
      %v1057 = vpop.f32.mrf.mxu0
      %1058 = vmatprep.mubr.bf16.mxu0 %v528
      %1059 = vmatmul.mubr.bf16.gmra.mxu0 %v527
      %v1060 = vpop.f32.mrf.mxu0
      %v1061 = vadd.f32 %v900, %v1060
      %v1062 = vpop.f32.mrf.mxu0
      %v1063 = vpop.f32.mrf.mxu0
      %v1064 = vadd.f32 %v903, %v1063
      %v1065 = vpop.f32.mrf.mxu0
      %1066 = vmatprep.mubr.bf16.mxu0 %v532
      %1067 = vmatmul.mubr.bf16.gmra.mxu0 %v531
      %v1068 = vpop.f32.mrf.mxu0
      %v1069 = vadd.f32 %v908, %v1068
      %v1070 = vpop.f32.mrf.mxu0
      %v1071 = vpop.f32.mrf.mxu0
      %v1072 = vadd.f32 %v911, %v1071
      %v1073 = vpop.f32.mrf.mxu0
      %1074 = vmatprep.mubr.bf16.mxu0 %v536
      %1075 = vmatmul.mubr.bf16.gmra.mxu0 %v535
      %v1076 = vpop.f32.mrf.mxu0
      %v1077 = vadd.f32 %v916, %v1076
      %v1078 = vpop.f32.mrf.mxu0
      %v1079 = vpop.f32.mrf.mxu0
      %v1080 = vadd.f32 %v919, %v1079
      %v1081 = vpop.f32.mrf.mxu0
      %1082 = vmatprep.mubr.bf16.mxu0 %v540
      %1083 = vmatmul.mubr.bf16.gmra.mxu0 %v539
      %v1084 = vpop.f32.mrf.mxu0
      %v1085 = vadd.f32 %v924, %v1084
      %v1086 = vpop.f32.mrf.mxu0
      %v1087 = vpop.f32.mrf.mxu0
      %v1088 = vadd.f32 %v927, %v1087
      %v1089 = vpop.f32.mrf.mxu0
      %1090 = vmatprep.mubr.bf16.mxu0 %v544
      %1091 = vmatmul.mubr.bf16.gmra.mxu0 %v543
      %v1092 = vpop.f32.mrf.mxu0
      %v1093 = vadd.f32 %v932, %v1092
      %v1094 = vpop.f32.mrf.mxu0
      %v1095 = vpop.f32.mrf.mxu0
      %v1096 = vadd.f32 %v935, %v1095
      %v1097 = vpop.f32.mrf.mxu0
      %1098 = vmatprep.mubr.bf16.mxu0 %v548
      %1099 = vmatmul.mubr.bf16.gmra.mxu0 %v547
      %v1100 = vpop.f32.mrf.mxu0
      %v1101 = vadd.f32 %v940, %v1100
      %v1102 = vpop.f32.mrf.mxu0
      %v1103 = vpop.f32.mrf.mxu0
      %v1104 = vadd.f32 %v943, %v1103
      %v1105 = vpop.f32.mrf.mxu0
      %1106 = vmatprep.mubr.bf16.mxu0 %v552
      %1107 = vmatmul.mubr.bf16.gmra.mxu0 %v551
      %v1108 = vpop.f32.mrf.mxu0
      %v1109 = vadd.f32 %v948, %v1108
      %v1110 = vpop.f32.mrf.mxu0
      %v1111 = vpop.f32.mrf.mxu0
      %v1112 = vadd.f32 %v951, %v1111
      %v1113 = vpop.f32.mrf.mxu0
      %1114 = vmatprep.mubr.bf16.mxu0 %v556
      %1115 = vmatmul.mubr.bf16.gmra.mxu0 %v555
      %v1116 = vpop.f32.mrf.mxu0
      %v1117 = vadd.f32 %v956, %v1116
      %v1118 = vpop.f32.mrf.mxu0
      %v1119 = vpop.f32.mrf.mxu0
      %v1120 = vadd.f32 %v959, %v1119
      %v1121 = vpop.f32.mrf.mxu0
      %1122 = vmatprep.mubr.bf16.mxu0 %v560
      %1123 = vmatmul.mubr.bf16.gmra.mxu0 %v559
      %v1124 = vpop.f32.mrf.mxu0
      %v1125 = vadd.f32 %v964, %v1124
      %v1126 = vpop.f32.mrf.mxu0
      %v1127 = vpop.f32.mrf.mxu0
      %v1128 = vadd.f32 %v967, %v1127
      %v1129 = vpop.f32.mrf.mxu0
      %1130 = vmatprep.mubr.bf16.mxu0 %v564
      %1131 = vmatmul.mubr.bf16.gmra.mxu0 %v563
      %v1132 = vpop.f32.mrf.mxu0
      %v1133 = vadd.f32 %v972, %v1132
      %v1134 = vpop.f32.mrf.mxu0
      %v1135 = vpop.f32.mrf.mxu0
      %v1136 = vadd.f32 %v975, %v1135
      %v1137 = vpop.f32.mrf.mxu0
      %1138 = vmatprep.mubr.bf16.mxu0 %v568
      %1139 = vmatmul.mubr.bf16.gmra.mxu0 %v567
      %v1140 = vpop.f32.mrf.mxu0
      %v1141 = vadd.f32 %v980, %v1140
      %v1142 = vpop.f32.mrf.mxu0
      %v1143 = vpop.f32.mrf.mxu0
      %v1144 = vadd.f32 %v983, %v1143
      %v1145 = vpop.f32.mrf.mxu0
      %1146 = vdwg.mxu0
      %v1147 = vmax.f32 %v1021, 0.0
      %v1148 = vmax.f32 %v1024, 0.0
      %v1149 = vmax.f32 %v1029, 0.0
      %v1150 = vmax.f32 %v1032, 0.0
      %v1151 = vmax.f32 %v1037, 0.0
      %v1152 = vmax.f32 %v1040, 0.0
      %v1153 = vmax.f32 %v1045, 0.0
      %v1154 = vmax.f32 %v1048, 0.0
      %v1155 = vmax.f32 %v1053, 0.0
      %v1156 = vmax.f32 %v1056, 0.0
      %v1157 = vmax.f32 %v1061, 0.0
      %v1158 = vmax.f32 %v1064, 0.0
      %v1159 = vmax.f32 %v1069, 0.0
      %v1160 = vmax.f32 %v1072, 0.0
      %v1161 = vmax.f32 %v1077, 0.0
      %v1162 = vmax.f32 %v1080, 0.0
      %v1163 = vmax.f32 %v1085, 0.0
      %v1164 = vmax.f32 %v1088, 0.0
      %v1165 = vmax.f32 %v1093, 0.0
      %v1166 = vmax.f32 %v1096, 0.0
      %v1167 = vmax.f32 %v1101, 0.0
      %v1168 = vmax.f32 %v1104, 0.0
      %v1169 = vmax.f32 %v1109, 0.0
      %v1170 = vmax.f32 %v1112, 0.0
      %v1171 = vmax.f32 %v1117, 0.0
      %v1172 = vmax.f32 %v1120, 0.0
      %v1173 = vmax.f32 %v1125, 0.0
      %v1174 = vmax.f32 %v1128, 0.0
      %v1175 = vmax.f32 %v1133, 0.0
      %v1176 = vmax.f32 %v1136, 0.0
      %v1177 = vmax.f32 %v1141, 0.0
      %v1178 = vmax.f32 %v1144, 0.0
      %v1179 = vpack.c.bf16 %v1148, %v1147
      %v1180 = vpack.c.bf16 %v1150, %v1149
      %v1181 = vpack.c.bf16 %v1152, %v1151
      %v1182 = vpack.c.bf16 %v1154, %v1153
      %v1183 = vpack.c.bf16 %v1156, %v1155
      %v1184 = vpack.c.bf16 %v1158, %v1157
      %v1185 = vpack.c.bf16 %v1160, %v1159
      %v1186 = vpack.c.bf16 %v1162, %v1161
      %v1187 = vpack.c.bf16 %v1164, %v1163
      %v1188 = vpack.c.bf16 %v1166, %v1165
      %v1189 = vpack.c.bf16 %v1168, %v1167
      %v1190 = vpack.c.bf16 %v1170, %v1169
      %v1191 = vpack.c.bf16 %v1172, %v1171
      %v1192 = vpack.c.bf16 %v1174, %v1173
      %v1193 = vpack.c.bf16 %v1176, %v1175
      %v1194 = vpack.c.bf16 %v1178, %v1177
      %v1211 = vunpack.c.l.b16 %v1179
      %v1212 = vunpack.c.h.b16 %v1179
      %v1213 = vunpack.c.l.b16 %v1180
      %v1214 = vunpack.c.h.b16 %v1180
      %v1215 = vunpack.c.l.b16 %v1181
      %v1216 = vunpack.c.h.b16 %v1181
      %v1217 = vunpack.c.l.b16 %v1182
      %v1218 = vunpack.c.h.b16 %v1182
      %v1219 = vunpack.c.l.b16 %v1183
      %v1220 = vunpack.c.h.b16 %v1183
      %v1221 = vunpack.c.l.b16 %v1184
      %v1222 = vunpack.c.h.b16 %v1184
      %v1223 = vunpack.c.l.b16 %v1185
      %v1224 = vunpack.c.h.b16 %v1185
      %v1225 = vunpack.c.l.b16 %v1186
      %v1226 = vunpack.c.h.b16 %v1186
      %v1227 = vunpack.c.l.b16 %v1187
      %v1228 = vunpack.c.h.b16 %v1187
      %v1229 = vunpack.c.l.b16 %v1188
      %v1230 = vunpack.c.h.b16 %v1188
      %v1231 = vunpack.c.l.b16 %v1189
      %v1232 = vunpack.c.h.b16 %v1189
      %v1233 = vunpack.c.l.b16 %v1190
      %v1234 = vunpack.c.h.b16 %v1190
      %v1235 = vunpack.c.l.b16 %v1191
      %v1236 = vunpack.c.h.b16 %v1191
      %v1237 = vunpack.c.l.b16 %v1192
      %v1238 = vunpack.c.h.b16 %v1192
      %v1239 = vunpack.c.l.b16 %v1193
      %v1240 = vunpack.c.h.b16 %v1193
      %v1241 = vunpack.c.l.b16 %v1194
      %v1242 = vunpack.c.h.b16 %v1194
      %v1243 = vpack.c.b16 %v1211, %v1211
      %v1244 = vpack.c.b16 %v1212, %v1212
      %v1245 = vpack.c.b16 %v1213, %v1213
      %v1246 = vpack.c.b16 %v1214, %v1214
      %v1247 = vpack.c.b16 %v1215, %v1215
      %v1248 = vpack.c.b16 %v1216, %v1216
      %v1249 = vpack.c.b16 %v1217, %v1217
      %v1250 = vpack.c.b16 %v1218, %v1218
      %v1251 = vpack.c.b16 %v1219, %v1219
      %v1252 = vpack.c.b16 %v1220, %v1220
      %v1253 = vpack.c.b16 %v1221, %v1221
      %v1254 = vpack.c.b16 %v1222, %v1222
      %v1255 = vpack.c.b16 %v1223, %v1223
      %v1256 = vpack.c.b16 %v1224, %v1224
      %v1257 = vpack.c.b16 %v1225, %v1225
      %v1258 = vpack.c.b16 %v1226, %v1226
      %v1259 = vpack.c.b16 %v1227, %v1227
      %v1260 = vpack.c.b16 %v1228, %v1228
      %v1261 = vpack.c.b16 %v1229, %v1229
      %v1262 = vpack.c.b16 %v1230, %v1230
      %v1263 = vpack.c.b16 %v1231, %v1231
      %v1264 = vpack.c.b16 %v1232, %v1232
      %v1265 = vpack.c.b16 %v1233, %v1233
      %v1266 = vpack.c.b16 %v1234, %v1234
      %v1267 = vpack.c.b16 %v1235, %v1235
      %v1268 = vpack.c.b16 %v1236, %v1236
      %v1269 = vpack.c.b16 %v1237, %v1237
      %v1270 = vpack.c.b16 %v1238, %v1238
      %v1271 = vpack.c.b16 %v1239, %v1239
      %v1272 = vpack.c.b16 %v1240, %v1240
      %v1273 = vpack.c.b16 %v1241, %v1241
      %v1274 = vpack.c.b16 %v1242, %v1242
      %vm1307 = vcmask 257024
      %1308 = vst.msk [vmem:[%s175] sm:$0xf] %vm1307, %v1243
      %1309 = vst.msk [vmem:[%s175 + $0x4] sm:$0xf] %vm1307, %v1244
      %1310 = vst.msk [vmem:[%s175 + $0x8] sm:$0xf] %vm1307, %v1245
      %1311 = vst.msk [vmem:[%s175 + $0xc] sm:$0xf] %vm1307, %v1246
      %1312 = vst.msk [vmem:[%s175 + $0x10] sm:$0xf] %vm1307, %v1247
      %1313 = vst.msk [vmem:[%s175 + $0x14] sm:$0xf] %vm1307, %v1248
      %1314 = vst.msk [vmem:[%s175 + $0x18] sm:$0xf] %vm1307, %v1249
      %1315 = vst.msk [vmem:[%s175 + $0x1c] sm:$0xf] %vm1307, %v1250
      %1316 = vst.msk [vmem:[%s175 + $0x20] sm:$0xf] %vm1307, %v1251
      %1317 = vst.msk [vmem:[%s175 + $0x24] sm:$0xf] %vm1307, %v1252
      %1318 = vst.msk [vmem:[%s175 + $0x28] sm:$0xf] %vm1307, %v1253
      %1319 = vst.msk [vmem:[%s175 + $0x2c] sm:$0xf] %vm1307, %v1254
      %1320 = vst.msk [vmem:[%s175 + $0x30] sm:$0xf] %vm1307, %v1255
      %1321 = vst.msk [vmem:[%s175 + $0x34] sm:$0xf] %vm1307, %v1256
      %1322 = vst.msk [vmem:[%s175 + $0x38] sm:$0xf] %vm1307, %v1257
      %1323 = vst.msk [vmem:[%s175 + $0x3c] sm:$0xf] %vm1307, %v1258
      %1324 = vst.msk [vmem:[%s175 + $0x40] sm:$0xf] %vm1307, %v1259
      %1325 = vst.msk [vmem:[%s175 + $0x44] sm:$0xf] %vm1307, %v1260
      %1326 = vst.msk [vmem:[%s175 + $0x48] sm:$0xf] %vm1307, %v1261
      %1327 = vst.msk [vmem:[%s175 + $0x4c] sm:$0xf] %vm1307, %v1262
      %1328 = vst.msk [vmem:[%s175 + $0x50] sm:$0xf] %vm1307, %v1263
      %1329 = vst.msk [vmem:[%s175 + $0x54] sm:$0xf] %vm1307, %v1264
      %1330 = vst.msk [vmem:[%s175 + $0x58] sm:$0xf] %vm1307, %v1265
      %1331 = vst.msk [vmem:[%s175 + $0x5c] sm:$0xf] %vm1307, %v1266
      %1332 = vst.msk [vmem:[%s175 + $0x60] sm:$0xf] %vm1307, %v1267
      %1333 = vst.msk [vmem:[%s175 + $0x64] sm:$0xf] %vm1307, %v1268
      %1334 = vst.msk [vmem:[%s175 + $0x68] sm:$0xf] %vm1307, %v1269
      %1335 = vst.msk [vmem:[%s175 + $0x6c] sm:$0xf] %vm1307, %v1270
      %1336 = vst.msk [vmem:[%s175 + $0x70] sm:$0xf] %vm1307, %v1271
      %1337 = vst.msk [vmem:[%s175 + $0x74] sm:$0xf] %vm1307, %v1272
      %1338 = vst.msk [vmem:[%s175 + $0x78] sm:$0xf] %vm1307, %v1273
      %1339 = vst.msk [vmem:[%s175 + $0x7c] sm:$0xf] %vm1307, %v1274
      %s1340 = smul.u32 32, %s14
      %p1341 = scmp.lt.s32.totalorder %s1340, 63
      %s1342 = scalar_select %p1341, %s1340, 63
      %s1343 = smul.addr %s1342, 4
      %s1344 = scalar_lea.vmem %s3, %s1343
      // Predicated region
      $region33: #{encoder_forward.5} parent=31 // pred_check
        %p1345 = pneg %p100
      $region34: #{encoder_forward.5} parent=31 // pred_check_branch
        %1347 = sbr.rel (%p1345) target = $region36
      $region35: #{encoder_forward.5} parent=31 // pred_region
        %s1348 = smul.u32 32, %s14
      $region36: #{encoder_forward.5} parent=31 // pred_fallthru
        _
    $region32: #{encoder_forward.5} parent=5 // pred_fallthru
      _
    %p1349 = scmp.le.s32.totalorder 2, %s9
    // Predicated region
    $region37: #{encoder_forward.5} parent=5 // pred_check
      %p1350 = pneg %p1349
    $region38: #{encoder_forward.5} parent=5 // pred_check_branch
      %1352 = sbr.rel (%p1350) target = $region40
    $region39: #{encoder_forward.5} parent=5 // pred_region
      %s1353 = ssub.s32 %s9, 2
      // Predicated region
      $region41: #{encoder_forward.5} parent=39 // pred_check
        %p1354 = pneg %p106
      $region42: #{encoder_forward.5} parent=39 // pred_check_branch
        %1356 = sbr.rel (%p1354) target = $region44
      $region43: #{encoder_forward.5} parent=39 // pred_region
        %s1357 = smul.u32 32, %s15
        %p1358 = scmp.lt.s32.totalorder %s1357, 63
        %s1359 = scalar_select %p1358, %s1357, 63
        %s1360 = smul.addr %s1359, 4
        %s1361 = scalar_lea.vmem %s3, %s1360
      $region44: #{encoder_forward.5} parent=39 // pred_fallthru
        _
    $region40: #{encoder_forward.5} parent=5 // pred_fallthru
      _
  $region6: #{encoder_forward.5} parent=0 // loop_footer
    %s13 = sadd.s32 1, %s9
  $region7: #{encoder_forward.5} parent=0 // loop_footer_branch
    %8 = sbr.rel target = $region3
  $region8: #{encoder_forward.5} parent=0 // loop_exit
    _

// kernel: encoder_forward.6
$region0: #{encoder_forward.6}
  #allocation0 [shape = 'u32[]', space=smem, size = 0x4, offset = 0x4, fixed_abs, tag = 'smem constant byte address 0x4 - core index']
  #allocation1 [shape = 'u32[144,128]{1,0:T(1,128)}', space=vmem, size = 0x12000, scoped, tag = 'internal scratch']
  %s0 = inlined_call_operand.vmem [shape: bf16[128,512], index: 0, kind: input, shape index: {}]
  %s1 = inlined_call_operand.vmem [shape: bf16[512,64], index: 1, kind: input, shape index: {}]
  %s2 = inlined_call_operand.vmem [shape: f32[1,64], index: 2, kind: input, shape index: {}]
  %s3 = inlined_call_operand.vmem [shape: bf16[128,64], index: 3, kind: output, shape index: {}]
  %s4 = sld [smem:[#allocation0]]
  $region22: #{encoder_forward.6} parent=0
    _
  %s6 = ssub.s32 1, %s4
  %s7 = scalar_select 0, %s6, %s4
  // Predicated region
  $region2: #{encoder_forward.6} parent=0 // pred_check
    _
  $region3: #{encoder_forward.6} parent=0 // pred_check_branch
    %9 = sbr.rel (0) target = $region5
  $region4: #{encoder_forward.6} parent=0 // pred_region
    _
  $region5: #{encoder_forward.6} parent=0 // pred_fallthru
    _
  // Predicated region
  $region6: #{encoder_forward.6} parent=0 // pred_check
    _
  $region7: #{encoder_forward.6} parent=0 // pred_check_branch
    %11 = sbr.rel (0) target = $region9
  $region8: #{encoder_forward.6} parent=0 // pred_region
    _
  $region9: #{encoder_forward.6} parent=0 // pred_fallthru
    _
  // Predicated region
  $region10: #{encoder_forward.6} parent=0 // pred_check
    _
  $region11: #{encoder_forward.6} parent=0 // pred_check_branch
    %13 = sbr.rel (0) target = $region13
  $region12: #{encoder_forward.6} parent=0 // pred_region
    _
  $region13: #{encoder_forward.6} parent=0 // pred_fallthru
    _
  %v15 = vld [vmem:[%s0] sm:$0xff]
  %v16 = vld [vmem:[%s0 + $0x8] sm:$0xff]
  %v17 = vld [vmem:[%s0 + $0x10] sm:$0xff]
  %v18 = vld [vmem:[%s0 + $0x18] sm:$0xff]
  %v19 = vld [vmem:[%s0 + $0x20] sm:$0xff]
  %v20 = vld [vmem:[%s0 + $0x28] sm:$0xff]
  %v21 = vld [vmem:[%s0 + $0x30] sm:$0xff]
  %v22 = vld [vmem:[%s0 + $0x38] sm:$0xff]
  %v23 = vld [vmem:[%s0 + $0x40] sm:$0xff]
  %v24 = vld [vmem:[%s0 + $0x48] sm:$0xff]
  %v25 = vld [vmem:[%s0 + $0x50] sm:$0xff]
  %v26 = vld [vmem:[%s0 + $0x58] sm:$0xff]
  %v27 = vld [vmem:[%s0 + $0x60] sm:$0xff]
  %v28 = vld [vmem:[%s0 + $0x68] sm:$0xff]
  %v29 = vld [vmem:[%s0 + $0x70] sm:$0xff]
  %v30 = vld [vmem:[%s0 + $0x78] sm:$0xff]
  %v31 = vld [vmem:[%s0 + $0x80] sm:$0xff]
  %v32 = vld [vmem:[%s0 + $0x88] sm:$0xff]
  %v33 = vld [vmem:[%s0 + $0x90] sm:$0xff]
  %v34 = vld [vmem:[%s0 + $0x98] sm:$0xff]
  %v35 = vld [vmem:[%s0 + $0xa0] sm:$0xff]
  %v36 = vld [vmem:[%s0 + $0xa8] sm:$0xff]
  %v37 = vld [vmem:[%s0 + $0xb0] sm:$0xff]
  %v38 = vld [vmem:[%s0 + $0xb8] sm:$0xff]
  %v39 = vld [vmem:[%s0 + $0xc0] sm:$0xff]
  %v40 = vld [vmem:[%s0 + $0xc8] sm:$0xff]
  %v41 = vld [vmem:[%s0 + $0xd0] sm:$0xff]
  %v42 = vld [vmem:[%s0 + $0xd8] sm:$0xff]
  %v43 = vld [vmem:[%s0 + $0xe0] sm:$0xff]
  %v44 = vld [vmem:[%s0 + $0xe8] sm:$0xff]
  %v45 = vld [vmem:[%s0 + $0xf0] sm:$0xff]
  %v46 = vld [vmem:[%s0 + $0xf8] sm:$0xff]
  %v47 = vld [vmem:[%s1] sm:$0xf]
  %v48 = vld [vmem:[%s1 + $0x4] sm:$0xf]
  %v49 = vld [vmem:[%s1 + $0x8] sm:$0xf]
  %v50 = vld [vmem:[%s1 + $0xc] sm:$0xf]
  %v51 = vld [vmem:[%s1 + $0x10] sm:$0xf]
  %v52 = vld [vmem:[%s1 + $0x14] sm:$0xf]
  %v53 = vld [vmem:[%s1 + $0x18] sm:$0xf]
  %v54 = vld [vmem:[%s1 + $0x1c] sm:$0xf]
  %v55 = vld [vmem:[%s1 + $0x20] sm:$0xf]
  %v56 = vld [vmem:[%s1 + $0x24] sm:$0xf]
  %v57 = vld [vmem:[%s1 + $0x28] sm:$0xf]
  %v58 = vld [vmem:[%s1 + $0x2c] sm:$0xf]
  %v59 = vld [vmem:[%s1 + $0x30] sm:$0xf]
  %v60 = vld [vmem:[%s1 + $0x34] sm:$0xf]
  %v61 = vld [vmem:[%s1 + $0x38] sm:$0xf]
  %v62 = vld [vmem:[%s1 + $0x3c] sm:$0xf]
  %v63 = vld [vmem:[%s1 + $0x40] sm:$0xf]
  %v64 = vld [vmem:[%s1 + $0x44] sm:$0xf]
  %v65 = vld [vmem:[%s1 + $0x48] sm:$0xf]
  %v66 = vld [vmem:[%s1 + $0x4c] sm:$0xf]
  %v67 = vld [vmem:[%s1 + $0x50] sm:$0xf]
  %v68 = vld [vmem:[%s1 + $0x54] sm:$0xf]
  %v69 = vld [vmem:[%s1 + $0x58] sm:$0xf]
  %v70 = vld [vmem:[%s1 + $0x5c] sm:$0xf]
  %v71 = vld [vmem:[%s1 + $0x60] sm:$0xf]
  %v72 = vld [vmem:[%s1 + $0x64] sm:$0xf]
  %v73 = vld [vmem:[%s1 + $0x68] sm:$0xf]
  %v74 = vld [vmem:[%s1 + $0x6c] sm:$0xf]
  %v75 = vld [vmem:[%s1 + $0x70] sm:$0xf]
  %v76 = vld [vmem:[%s1 + $0x74] sm:$0xf]
  %v77 = vld [vmem:[%s1 + $0x78] sm:$0xf]
  %v78 = vld [vmem:[%s1 + $0x7c] sm:$0xf]
  %v79 = vld [vmem:[%s1 + $0x80] sm:$0xf]
  %v80 = vld [vmem:[%s1 + $0x84] sm:$0xf]
  %v81 = vld [vmem:[%s1 + $0x88] sm:$0xf]
  %v82 = vld [vmem:[%s1 + $0x8c] sm:$0xf]
  %v83 = vld [vmem:[%s1 + $0x90] sm:$0xf]
  %v84 = vld [vmem:[%s1 + $0x94] sm:$0xf]
  %v85 = vld [vmem:[%s1 + $0x98] sm:$0xf]
  %v86 = vld [vmem:[%s1 + $0x9c] sm:$0xf]
  %v87 = vld [vmem:[%s1 + $0xa0] sm:$0xf]
  %v88 = vld [vmem:[%s1 + $0xa4] sm:$0xf]
  %v89 = vld [vmem:[%s1 + $0xa8] sm:$0xf]
  %v90 = vld [vmem:[%s1 + $0xac] sm:$0xf]
  %v91 = vld [vmem:[%s1 + $0xb0] sm:$0xf]
  %v92 = vld [vmem:[%s1 + $0xb4] sm:$0xf]
  %v93 = vld [vmem:[%s1 + $0xb8] sm:$0xf]
  %v94 = vld [vmem:[%s1 + $0xbc] sm:$0xf]
  %v95 = vld [vmem:[%s1 + $0xc0] sm:$0xf]
  %v96 = vld [vmem:[%s1 + $0xc4] sm:$0xf]
  %v97 = vld [vmem:[%s1 + $0xc8] sm:$0xf]
  %v98 = vld [vmem:[%s1 + $0xcc] sm:$0xf]
  %v99 = vld [vmem:[%s1 + $0xd0] sm:$0xf]
  %v100 = vld [vmem:[%s1 + $0xd4] sm:$0xf]
  %v101 = vld [vmem:[%s1 + $0xd8] sm:$0xf]
  %v102 = vld [vmem:[%s1 + $0xdc] sm:$0xf]
  %v103 = vld [vmem:[%s1 + $0xe0] sm:$0xf]
  %v104 = vld [vmem:[%s1 + $0xe4] sm:$0xf]
  %v105 = vld [vmem:[%s1 + $0xe8] sm:$0xf]
  %v106 = vld [vmem:[%s1 + $0xec] sm:$0xf]
  %v107 = vld [vmem:[%s1 + $0xf0] sm:$0xf]
  %v108 = vld [vmem:[%s1 + $0xf4] sm:$0xf]
  %v109 = vld [vmem:[%s1 + $0xf8] sm:$0xf]
  %v110 = vld [vmem:[%s1 + $0xfc] sm:$0xf]
  %v111 = vld [vmem:[%s2] sm:$0x1]
  %v113 = vlaneseq
  %v114 = vshrl.u32 %v113, 7
  %v115 = vsub.s32 0, %v114
  %v116 = vrot.slane %v111, %v115
  %v150 = vunpack.c.l.b16 %v15
  %v151 = vunpack.c.h.b16 %v15
  %v152 = vunpack.c.l.b16 %v16
  %v153 = vunpack.c.h.b16 %v16
  %v154 = vunpack.c.l.b16 %v17
  %v155 = vunpack.c.h.b16 %v17
  %v156 = vunpack.c.l.b16 %v18
  %v157 = vunpack.c.h.b16 %v18
  %v158 = vunpack.c.l.b16 %v19
  %v159 = vunpack.c.h.b16 %v19
  %v160 = vunpack.c.l.b16 %v20
  %v161 = vunpack.c.h.b16 %v20
  %v162 = vunpack.c.l.b16 %v21
  %v163 = vunpack.c.h.b16 %v21
  %v164 = vunpack.c.l.b16 %v22
  %v165 = vunpack.c.h.b16 %v22
  %v166 = vunpack.c.l.b16 %v23
  %v167 = vunpack.c.h.b16 %v23
  %v168 = vunpack.c.l.b16 %v24
  %v169 = vunpack.c.h.b16 %v24
  %v170 = vunpack.c.l.b16 %v25
  %v171 = vunpack.c.h.b16 %v25
  %v172 = vunpack.c.l.b16 %v26
  %v173 = vunpack.c.h.b16 %v26
  %v174 = vunpack.c.l.b16 %v27
  %v175 = vunpack.c.h.b16 %v27
  %v176 = vunpack.c.l.b16 %v28
  %v177 = vunpack.c.h.b16 %v28
  %v178 = vunpack.c.l.b16 %v29
  %v179 = vunpack.c.h.b16 %v29
  %v180 = vunpack.c.l.b16 %v30
  %v181 = vunpack.c.h.b16 %v30
  %v182 = vunpack.c.l.b16 %v31
  %v183 = vunpack.c.h.b16 %v31
  %v184 = vunpack.c.l.b16 %v32
  %v185 = vunpack.c.h.b16 %v32
  %v186 = vunpack.c.l.b16 %v33
  %v187 = vunpack.c.h.b16 %v33
  %v188 = vunpack.c.l.b16 %v34
  %v189 = vunpack.c.h.b16 %v34
  %v190 = vunpack.c.l.b16 %v35
  %v191 = vunpack.c.h.b16 %v35
  %v192 = vunpack.c.l.b16 %v36
  %v193 = vunpack.c.h.b16 %v36
  %v194 = vunpack.c.l.b16 %v37
  %v195 = vunpack.c.h.b16 %v37
  %v196 = vunpack.c.l.b16 %v38
  %v197 = vunpack.c.h.b16 %v38
  %v198 = vunpack.c.l.b16 %v39
  %v199 = vunpack.c.h.b16 %v39
  %v200 = vunpack.c.l.b16 %v40
  %v201 = vunpack.c.h.b16 %v40
  %v202 = vunpack.c.l.b16 %v41
  %v203 = vunpack.c.h.b16 %v41
  %v204 = vunpack.c.l.b16 %v42
  %v205 = vunpack.c.h.b16 %v42
  %v206 = vunpack.c.l.b16 %v43
  %v207 = vunpack.c.h.b16 %v43
  %v208 = vunpack.c.l.b16 %v44
  %v209 = vunpack.c.h.b16 %v44
  %v210 = vunpack.c.l.b16 %v45
  %v211 = vunpack.c.h.b16 %v45
  %v212 = vunpack.c.l.b16 %v46
  %v213 = vunpack.c.h.b16 %v46
  %v214 = vpack.c.b16 %v154, %v150
  %v215 = vpack.c.b16 %v155, %v151
  %v216 = vpack.c.b16 %v156, %v152
  %v217 = vpack.c.b16 %v157, %v153
  %v218 = vpack.c.b16 %v162, %v158
  %v219 = vpack.c.b16 %v163, %v159
  %v220 = vpack.c.b16 %v164, %v160
  %v221 = vpack.c.b16 %v165, %v161
  %v222 = vpack.c.b16 %v170, %v166
  %v223 = vpack.c.b16 %v171, %v167
  %v224 = vpack.c.b16 %v172, %v168
  %v225 = vpack.c.b16 %v173, %v169
  %v226 = vpack.c.b16 %v178, %v174
  %v227 = vpack.c.b16 %v179, %v175
  %v228 = vpack.c.b16 %v180, %v176
  %v229 = vpack.c.b16 %v181, %v177
  %v230 = vpack.c.b16 %v186, %v182
  %v231 = vpack.c.b16 %v187, %v183
  %v232 = vpack.c.b16 %v188, %v184
  %v233 = vpack.c.b16 %v189, %v185
  %v234 = vpack.c.b16 %v194, %v190
  %v235 = vpack.c.b16 %v195, %v191
  %v236 = vpack.c.b16 %v196, %v192
  %v237 = vpack.c.b16 %v197, %v193
  %v238 = vpack.c.b16 %v202, %v198
  %v239 = vpack.c.b16 %v203, %v199
  %v240 = vpack.c.b16 %v204, %v200
  %v241 = vpack.c.b16 %v205, %v201
  %v242 = vpack.c.b16 %v210, %v206
  %v243 = vpack.c.b16 %v211, %v207
  %v244 = vpack.c.b16 %v212, %v208
  %v245 = vpack.c.b16 %v213, %v209
  %v342 = vunpack.c.l.b16 %v47
  %v343 = vunpack.c.l.b16 %v48
  %v344 = vunpack.c.l.b16 %v49
  %v345 = vunpack.c.l.b16 %v50
  %v346 = vunpack.c.l.b16 %v51
  %v347 = vunpack.c.l.b16 %v52
  %v348 = vunpack.c.l.b16 %v53
  %v349 = vunpack.c.l.b16 %v54
  %v350 = vunpack.c.l.b16 %v55
  %v351 = vunpack.c.l.b16 %v56
  %v352 = vunpack.c.l.b16 %v57
  %v353 = vunpack.c.l.b16 %v58
  %v354 = vunpack.c.l.b16 %v59
  %v355 = vunpack.c.l.b16 %v60
  %v356 = vunpack.c.l.b16 %v61
  %v357 = vunpack.c.l.b16 %v62
  %v358 = vunpack.c.l.b16 %v63
  %v359 = vunpack.c.l.b16 %v64
  %v360 = vunpack.c.l.b16 %v65
  %v361 = vunpack.c.l.b16 %v66
  %v362 = vunpack.c.l.b16 %v67
  %v363 = vunpack.c.l.b16 %v68
  %v364 = vunpack.c.l.b16 %v69
  %v365 = vunpack.c.l.b16 %v70
  %v366 = vunpack.c.l.b16 %v71
  %v367 = vunpack.c.l.b16 %v72
  %v368 = vunpack.c.l.b16 %v73
  %v369 = vunpack.c.l.b16 %v74
  %v370 = vunpack.c.l.b16 %v75
  %v371 = vunpack.c.l.b16 %v76
  %v372 = vunpack.c.l.b16 %v77
  %v373 = vunpack.c.l.b16 %v78
  %v374 = vunpack.c.l.b16 %v79
  %v375 = vunpack.c.l.b16 %v80
  %v376 = vunpack.c.l.b16 %v81
  %v377 = vunpack.c.l.b16 %v82
  %v378 = vunpack.c.l.b16 %v83
  %v379 = vunpack.c.l.b16 %v84
  %v380 = vunpack.c.l.b16 %v85
  %v381 = vunpack.c.l.b16 %v86
  %v382 = vunpack.c.l.b16 %v87
  %v383 = vunpack.c.l.b16 %v88
  %v384 = vunpack.c.l.b16 %v89
  %v385 = vunpack.c.l.b16 %v90
  %v386 = vunpack.c.l.b16 %v91
  %v387 = vunpack.c.l.b16 %v92
  %v388 = vunpack.c.l.b16 %v93
  %v389 = vunpack.c.l.b16 %v94
  %v390 = vunpack.c.l.b16 %v95
  %v391 = vunpack.c.l.b16 %v96
  %v392 = vunpack.c.l.b16 %v97
  %v393 = vunpack.c.l.b16 %v98
  %v394 = vunpack.c.l.b16 %v99
  %v395 = vunpack.c.l.b16 %v100
  %v396 = vunpack.c.l.b16 %v101
  %v397 = vunpack.c.l.b16 %v102
  %v398 = vunpack.c.l.b16 %v103
  %v399 = vunpack.c.l.b16 %v104
  %v400 = vunpack.c.l.b16 %v105
  %v401 = vunpack.c.l.b16 %v106
  %v402 = vunpack.c.l.b16 %v107
  %v403 = vunpack.c.l.b16 %v108
  %v404 = vunpack.c.l.b16 %v109
  %v405 = vunpack.c.l.b16 %v110
  %v406 = vpack.c.b16 %v343, %v342
  %v407 = vpack.c.b16 %v345, %v344
  %v408 = vpack.c.b16 %v347, %v346
  %v409 = vpack.c.b16 %v349, %v348
  %v410 = vpack.c.b16 %v351, %v350
  %v411 = vpack.c.b16 %v353, %v352
  %v412 = vpack.c.b16 %v355, %v354
  %v413 = vpack.c.b16 %v357, %v356
  %v414 = vpack.c.b16 %v359, %v358
  %v415 = vpack.c.b16 %v361, %v360
  %v416 = vpack.c.b16 %v363, %v362
  %v417 = vpack.c.b16 %v365, %v364
  %v418 = vpack.c.b16 %v367, %v366
  %v419 = vpack.c.b16 %v369, %v368
  %v420 = vpack.c.b16 %v371, %v370
  %v421 = vpack.c.b16 %v373, %v372
  %v422 = vpack.c.b16 %v375, %v374
  %v423 = vpack.c.b16 %v377, %v376
  %v424 = vpack.c.b16 %v379, %v378
  %v425 = vpack.c.b16 %v381, %v380
  %v426 = vpack.c.b16 %v383, %v382
  %v427 = vpack.c.b16 %v385, %v384
  %v428 = vpack.c.b16 %v387, %v386
  %v429 = vpack.c.b16 %v389, %v388
  %v430 = vpack.c.b16 %v391, %v390
  %v431 = vpack.c.b16 %v393, %v392
  %v432 = vpack.c.b16 %v395, %v394
  %v433 = vpack.c.b16 %v397, %v396
  %v434 = vpack.c.b16 %v399, %v398
  %v435 = vpack.c.b16 %v401, %v400
  %v436 = vpack.c.b16 %v403, %v402
  %v437 = vpack.c.b16 %v405, %v404
  %470 = vmatprep.subr.bf16.mxu0 0
  %471 = vmatpush1.bf16.msra.mxu0 %v413
  %472 = vmatprep.subr.bf16.mxu0 0
  %473 = vmatpush1.bf16.msra.mxu0 %v412
  %474 = vmatprep.subr.bf16.mxu0 0
  %475 = vmatpush1.bf16.msra.mxu0 %v411
  %476 = vmatprep.subr.bf16.mxu0 0
  %477 = vmatpush1.bf16.msra.mxu0 %v410
  %478 = vmatprep.subr.bf16.mxu0 0
  %479 = vmatpush1.bf16.msra.mxu0 %v409
  %480 = vmatprep.subr.bf16.mxu0 0
  %481 = vmatpush1.bf16.msra.mxu0 %v408
  %482 = vmatprep.subr.bf16.mxu0 0
  %483 = vmatpush1.bf16.msra.mxu0 %v407
  %484 = vmatprep.subr.bf16.mxu0 0
  %485 = vmatpush1.bf16.msra.mxu0 %v406
  %486 = vmatprep.subr.bf16.mxu0 0
  %487 = vmatpush2.bf16.msra.mxu0 %v421
  %488 = vmatprep.subr.bf16.mxu0 0
  %489 = vmatpush2.bf16.msra.mxu0 %v420
  %490 = vmatprep.subr.bf16.mxu0 0
  %491 = vmatpush2.bf16.msra.mxu0 %v419
  %492 = vmatprep.subr.bf16.mxu0 0
  %493 = vmatpush2.bf16.msra.mxu0 %v418
  %494 = vmatprep.subr.bf16.mxu0 0
  %495 = vmatpush2.bf16.msra.mxu0 %v417
  %496 = vmatprep.subr.bf16.mxu0 0
  %497 = vmatpush2.bf16.msra.mxu0 %v416
  %498 = vmatprep.subr.bf16.mxu0 0
  %499 = vmatpush2.bf16.msra.mxu0 %v415
  %500 = vmatprep.subr.bf16.mxu0 0
  %501 = vmatpush2.bf16.msra.mxu0 %v414
  %502 = vmatprep.mubr.bf16.mxu0 %v215
  %503 = vmatmul.mubr.bf16.gmra.mxu0 %v214
  %v504 = vpop.f32.mrf.mxu0
  %v505 = vadd.f32 %v116, %v504
  %v506 = vpop.f32.mrf.mxu0
  %v507 = vpop.f32.mrf.mxu0
  %v508 = vadd.f32 %v116, %v507
  %v509 = vpop.f32.mrf.mxu0
  %510 = vmatprep.mubr.bf16.mxu0 %v219
  %511 = vmatmul.mubr.bf16.gmra.mxu0 %v218
  %v512 = vpop.f32.mrf.mxu0
  %v513 = vadd.f32 %v116, %v512
  %v514 = vpop.f32.mrf.mxu0
  %v515 = vpop.f32.mrf.mxu0
  %v516 = vadd.f32 %v116, %v515
  %v517 = vpop.f32.mrf.mxu0
  %518 = vmatprep.mubr.bf16.mxu0 %v223
  %519 = vmatmul.mubr.bf16.gmra.mxu0 %v222
  %v520 = vpop.f32.mrf.mxu0
  %v521 = vadd.f32 %v116, %v520
  %v522 = vpop.f32.mrf.mxu0
  %v523 = vpop.f32.mrf.mxu0
  %v524 = vadd.f32 %v116, %v523
  %v525 = vpop.f32.mrf.mxu0
  %526 = vmatprep.mubr.bf16.mxu0 %v227
  %527 = vmatmul.mubr.bf16.gmra.mxu0 %v226
  %v528 = vpop.f32.mrf.mxu0
  %v529 = vadd.f32 %v116, %v528
  %v530 = vpop.f32.mrf.mxu0
  %v531 = vpop.f32.mrf.mxu0
  %v532 = vadd.f32 %v116, %v531
  %v533 = vpop.f32.mrf.mxu0
  %534 = vmatprep.mubr.bf16.mxu0 %v231
  %535 = vmatmul.mubr.bf16.gmra.mxu0 %v230
  %v536 = vpop.f32.mrf.mxu0
  %v537 = vadd.f32 %v116, %v536
  %v538 = vpop.f32.mrf.mxu0
  %v539 = vpop.f32.mrf.mxu0
  %v540 = vadd.f32 %v116, %v539
  %v541 = vpop.f32.mrf.mxu0
  %542 = vmatprep.mubr.bf16.mxu0 %v235
  %543 = vmatmul.mubr.bf16.gmra.mxu0 %v234
  %v544 = vpop.f32.mrf.mxu0
  %v545 = vadd.f32 %v116, %v544
  %v546 = vpop.f32.mrf.mxu0
  %v547 = vpop.f32.mrf.mxu0
  %v548 = vadd.f32 %v116, %v547
  %v549 = vpop.f32.mrf.mxu0
  %550 = vmatprep.mubr.bf16.mxu0 %v239
  %551 = vmatmul.mubr.bf16.gmra.mxu0 %v238
  %v552 = vpop.f32.mrf.mxu0
  %v553 = vadd.f32 %v116, %v552
  %v554 = vpop.f32.mrf.mxu0
  %v555 = vpop.f32.mrf.mxu0
  %v556 = vadd.f32 %v116, %v555
  %v557 = vpop.f32.mrf.mxu0
  %558 = vmatprep.mubr.bf16.mxu0 %v243
  %559 = vmatmul.mubr.bf16.gmra.mxu0 %v242
  %v560 = vpop.f32.mrf.mxu0
  %v561 = vadd.f32 %v116, %v560
  %v562 = vpop.f32.mrf.mxu0
  %v563 = vpop.f32.mrf.mxu0
  %v564 = vadd.f32 %v116, %v563
  %v565 = vpop.f32.mrf.mxu0
  %566 = vdwg.mxu0
  %567 = vmatprep.subr.bf16.mxu0 0
  %568 = vmatpush1.bf16.msra.mxu0 %v429
  %569 = vmatprep.subr.bf16.mxu0 0
  %570 = vmatpush1.bf16.msra.mxu0 %v428
  %571 = vmatprep.subr.bf16.mxu0 0
  %572 = vmatpush1.bf16.msra.mxu0 %v427
  %573 = vmatprep.subr.bf16.mxu0 0
  %574 = vmatpush1.bf16.msra.mxu0 %v426
  %575 = vmatprep.subr.bf16.mxu0 0
  %576 = vmatpush1.bf16.msra.mxu0 %v425
  %577 = vmatprep.subr.bf16.mxu0 0
  %578 = vmatpush1.bf16.msra.mxu0 %v424
  %579 = vmatprep.subr.bf16.mxu0 0
  %580 = vmatpush1.bf16.msra.mxu0 %v423
  %581 = vmatprep.subr.bf16.mxu0 0
  %582 = vmatpush1.bf16.msra.mxu0 %v422
  %583 = vmatprep.subr.bf16.mxu0 0
  %584 = vmatpush2.bf16.msra.mxu0 %v437
  %585 = vmatprep.subr.bf16.mxu0 0
  %586 = vmatpush2.bf16.msra.mxu0 %v436
  %587 = vmatprep.subr.bf16.mxu0 0
  %588 = vmatpush2.bf16.msra.mxu0 %v435
  %589 = vmatprep.subr.bf16.mxu0 0
  %590 = vmatpush2.bf16.msra.mxu0 %v434
  %591 = vmatprep.subr.bf16.mxu0 0
  %592 = vmatpush2.bf16.msra.mxu0 %v433
  %593 = vmatprep.subr.bf16.mxu0 0
  %594 = vmatpush2.bf16.msra.mxu0 %v432
  %595 = vmatprep.subr.bf16.mxu0 0
  %596 = vmatpush2.bf16.msra.mxu0 %v431
  %597 = vmatprep.subr.bf16.mxu0 0
  %598 = vmatpush2.bf16.msra.mxu0 %v430
  %599 = vmatprep.mubr.bf16.mxu0 %v217
  %600 = vmatmul.mubr.bf16.gmra.mxu0 %v216
  %v601 = vpop.f32.mrf.mxu0
  %v602 = vadd.f32 %v505, %v601
  %v603 = vpop.f32.mrf.mxu0
  %v604 = vpop.f32.mrf.mxu0
  %v605 = vadd.f32 %v508, %v604
  %v606 = vpop.f32.mrf.mxu0
  %607 = vmatprep.mubr.bf16.mxu0 %v221
  %608 = vmatmul.mubr.bf16.gmra.mxu0 %v220
  %v609 = vpop.f32.mrf.mxu0
  %v610 = vadd.f32 %v513, %v609
  %v611 = vpop.f32.mrf.mxu0
  %v612 = vpop.f32.mrf.mxu0
  %v613 = vadd.f32 %v516, %v612
  %v614 = vpop.f32.mrf.mxu0
  %615 = vmatprep.mubr.bf16.mxu0 %v225
  %616 = vmatmul.mubr.bf16.gmra.mxu0 %v224
  %v617 = vpop.f32.mrf.mxu0
  %v618 = vadd.f32 %v521, %v617
  %v619 = vpop.f32.mrf.mxu0
  %v620 = vpop.f32.mrf.mxu0
  %v621 = vadd.f32 %v524, %v620
  %v622 = vpop.f32.mrf.mxu0
  %623 = vmatprep.mubr.bf16.mxu0 %v229
  %624 = vmatmul.mubr.bf16.gmra.mxu0 %v228
  %v625 = vpop.f32.mrf.mxu0
  %v626 = vadd.f32 %v529, %v625
  %v627 = vpop.f32.mrf.mxu0
  %v628 = vpop.f32.mrf.mxu0
  %v629 = vadd.f32 %v532, %v628
  %v630 = vpop.f32.mrf.mxu0
  %631 = vmatprep.mubr.bf16.mxu0 %v233
  %632 = vmatmul.mubr.bf16.gmra.mxu0 %v232
  %v633 = vpop.f32.mrf.mxu0
  %v634 = vadd.f32 %v537, %v633
  %v635 = vpop.f32.mrf.mxu0
  %v636 = vpop.f32.mrf.mxu0
  %v637 = vadd.f32 %v540, %v636
  %v638 = vpop.f32.mrf.mxu0
  %639 = vmatprep.mubr.bf16.mxu0 %v237
  %640 = vmatmul.mubr.bf16.gmra.mxu0 %v236
  %v641 = vpop.f32.mrf.mxu0
  %v642 = vadd.f32 %v545, %v641
  %v643 = vpop.f32.mrf.mxu0
  %v644 = vpop.f32.mrf.mxu0
  %v645 = vadd.f32 %v548, %v644
  %v646 = vpop.f32.mrf.mxu0
  %647 = vmatprep.mubr.bf16.mxu0 %v241
  %648 = vmatmul.mubr.bf16.gmra.mxu0 %v240
  %v649 = vpop.f32.mrf.mxu0
  %v650 = vadd.f32 %v553, %v649
  %v651 = vpop.f32.mrf.mxu0
  %v652 = vpop.f32.mrf.mxu0
  %v653 = vadd.f32 %v556, %v652
  %v654 = vpop.f32.mrf.mxu0
  %655 = vmatprep.mubr.bf16.mxu0 %v245
  %656 = vmatmul.mubr.bf16.gmra.mxu0 %v244
  %v657 = vpop.f32.mrf.mxu0
  %v658 = vadd.f32 %v561, %v657
  %v659 = vpop.f32.mrf.mxu0
  %v660 = vpop.f32.mrf.mxu0
  %v661 = vadd.f32 %v564, %v660
  %v662 = vpop.f32.mrf.mxu0
  %663 = vdwg.mxu0
  %v664 = vmax.f32 %v602, 0.0
  %v665 = vmax.f32 %v605, 0.0
  %v666 = vmax.f32 %v610, 0.0
  %v667 = vmax.f32 %v613, 0.0
  %v668 = vmax.f32 %v618, 0.0
  %v669 = vmax.f32 %v621, 0.0
  %v670 = vmax.f32 %v626, 0.0
  %v671 = vmax.f32 %v629, 0.0
  %v672 = vmax.f32 %v634, 0.0
  %v673 = vmax.f32 %v637, 0.0
  %v674 = vmax.f32 %v642, 0.0
  %v675 = vmax.f32 %v645, 0.0
  %v676 = vmax.f32 %v650, 0.0
  %v677 = vmax.f32 %v653, 0.0
  %v678 = vmax.f32 %v658, 0.0
  %v679 = vmax.f32 %v661, 0.0
  %v680 = vpack.c.bf16 %v665, %v664
  %v681 = vpack.c.bf16 %v667, %v666
  %v682 = vpack.c.bf16 %v669, %v668
  %v683 = vpack.c.bf16 %v671, %v670
  %v684 = vpack.c.bf16 %v673, %v672
  %v685 = vpack.c.bf16 %v675, %v674
  %v686 = vpack.c.bf16 %v677, %v676
  %v687 = vpack.c.bf16 %v679, %v678
  %v696 = vunpack.c.l.b16 %v680
  %v697 = vunpack.c.h.b16 %v680
  %v698 = vunpack.c.l.b16 %v681
  %v699 = vunpack.c.h.b16 %v681
  %v700 = vunpack.c.l.b16 %v682
  %v701 = vunpack.c.h.b16 %v682
  %v702 = vunpack.c.l.b16 %v683
  %v703 = vunpack.c.h.b16 %v683
  %v704 = vunpack.c.l.b16 %v684
  %v705 = vunpack.c.h.b16 %v684
  %v706 = vunpack.c.l.b16 %v685
  %v707 = vunpack.c.h.b16 %v685
  %v708 = vunpack.c.l.b16 %v686
  %v709 = vunpack.c.h.b16 %v686
  %v710 = vunpack.c.l.b16 %v687
  %v711 = vunpack.c.h.b16 %v687
  %v712 = vpack.c.b16 %v696, %v696
  %v713 = vpack.c.b16 %v697, %v697
  %v714 = vpack.c.b16 %v698, %v698
  %v715 = vpack.c.b16 %v699, %v699
  %v716 = vpack.c.b16 %v700, %v700
  %v717 = vpack.c.b16 %v701, %v701
  %v718 = vpack.c.b16 %v702, %v702
  %v719 = vpack.c.b16 %v703, %v703
  %v720 = vpack.c.b16 %v704, %v704
  %v721 = vpack.c.b16 %v705, %v705
  %v722 = vpack.c.b16 %v706, %v706
  %v723 = vpack.c.b16 %v707, %v707
  %v724 = vpack.c.b16 %v708, %v708
  %v725 = vpack.c.b16 %v709, %v709
  %v726 = vpack.c.b16 %v710, %v710
  %v727 = vpack.c.b16 %v711, %v711
  %vm744 = vcmask 519168
  %745 = vst.msk [vmem:[%s3] sm:$0xf] %vm744, %v712
  %746 = vst.msk [vmem:[%s3 + $0x4] sm:$0xf] %vm744, %v713
  %747 = vst.msk [vmem:[%s3 + $0x8] sm:$0xf] %vm744, %v714
  %748 = vst.msk [vmem:[%s3 + $0xc] sm:$0xf] %vm744, %v715
  %749 = vst.msk [vmem:[%s3 + $0x10] sm:$0xf] %vm744, %v716
  %750 = vst.msk [vmem:[%s3 + $0x14] sm:$0xf] %vm744, %v717
  %751 = vst.msk [vmem:[%s3 + $0x18] sm:$0xf] %vm744, %v718
  %752 = vst.msk [vmem:[%s3 + $0x1c] sm:$0xf] %vm744, %v719
  %753 = vst.msk [vmem:[%s3 + $0x20] sm:$0xf] %vm744, %v720
  %754 = vst.msk [vmem:[%s3 + $0x24] sm:$0xf] %vm744, %v721
  %755 = vst.msk [vmem:[%s3 + $0x28] sm:$0xf] %vm744, %v722
  %756 = vst.msk [vmem:[%s3 + $0x2c] sm:$0xf] %vm744, %v723
  %757 = vst.msk [vmem:[%s3 + $0x30] sm:$0xf] %vm744, %v724
  %758 = vst.msk [vmem:[%s3 + $0x34] sm:$0xf] %vm744, %v725
  %759 = vst.msk [vmem:[%s3 + $0x38] sm:$0xf] %vm744, %v726
  %760 = vst.msk [vmem:[%s3 + $0x3c] sm:$0xf] %vm744, %v727
  // Predicated region
  $region14: #{encoder_forward.6} parent=0 // pred_check
    _
  $region15: #{encoder_forward.6} parent=0 // pred_check_branch
    %762 = sbr.rel (0) target = $region17
  $region16: #{encoder_forward.6} parent=0 // pred_region
    _
  $region17: #{encoder_forward.6} parent=0 // pred_fallthru
    _
  // Predicated region
  $region18: #{encoder_forward.6} parent=0 // pred_check
    _
  $region19: #{encoder_forward.6} parent=0 // pred_check_branch
    %764 = sbr.rel (0) target = $region21
  $region20: #{encoder_forward.6} parent=0 // pred_region
    _
  $region21: #{encoder_forward.6} parent=0 // pred_fallthru
    _

// kernel: encoder_forward.7
$region0: #{encoder_forward.7}
  #allocation0 [shape = 'u32[]', space=smem, size = 0x4, offset = 0x4, fixed_abs, tag = 'smem constant byte address 0x4 - core index']
  #allocation1 [shape = 'u32[144,128]{1,0:T(1,128)}', space=vmem, size = 0x12000, scoped, tag = 'internal scratch']
  %s0 = inlined_call_operand.vmem [shape: bf16[2,16384], index: 0, kind: input, shape index: {}]
  %s1 = inlined_call_operand.vmem [shape: f32[2,10], index: 1, kind: input, shape index: {}]
  %s2 = inlined_call_operand.vmem [shape: bf16[1024,64], index: 2, kind: input, shape index: {}]
  %s3 = inlined_call_operand.vmem [shape: f32[1,64], index: 3, kind: input, shape index: {}]
  %s4 = inlined_call_operand.vmem [shape: bf16[1024,256], index: 4, kind: input, shape index: {}]
  %s5 = inlined_call_operand.vmem [shape: f32[1,256], index: 5, kind: input, shape index: {}]
  %s6 = inlined_call_operand.vmem [shape: bf16[256,64], index: 6, kind: input, shape index: {}]
  %s7 = inlined_call_operand.vmem [shape: f32[1,64], index: 7, kind: input, shape index: {}]
  %s8 = inlined_call_operand.vmem [shape: bf16[64,512], index: 8, kind: input, shape index: {}]
  %s9 = inlined_call_operand.vmem [shape: f32[1,512], index: 9, kind: input, shape index: {}]
  %s10 = inlined_call_operand.vmem [shape: bf16[512,20], index: 10, kind: input, shape index: {}]
  %s11 = inlined_call_operand.vmem [shape: f32[1,20], index: 11, kind: input, shape index: {}]
  %s12 = inlined_call_operand.hbm [shape: f32[2,64], index: 12, kind: output, shape index: {0}]
  %s13 = inlined_call_operand.hbm [shape: f32[2,10], index: 13, kind: output, shape index: {1}]
  %s14 = inlined_call_operand.hbm [shape: f32[2,10], index: 14, kind: output, shape index: {2}]
  %s15 = inlined_call_operand.hbm [shape: f32[2,10], index: 15, kind: output, shape index: {3}]
  %16 = xla_tuple %s12, %s13, %s14, %s15
  %s17 = sld [smem:[#allocation0]]
  $region82: #{encoder_forward.7} parent=0
    _
  %s19 = ssub.s32 1, %s17
  %s20 = scalar_select 0, %s19, %s17
  $region1: #{encoder_forward.7} parent=0
    #allocation2 [shape = 'u8[1024]{0}', space=vmem, size = 0x400, scoped, tag = 'output window, operand 0, single buffered']
    #allocation3 [shape = 's32[1]{0}', space=sflag, size = 0x4, scoped, tag = 'scoped memory for encoder_forward.7']
    #allocation4 [shape = 'u8[1024]{0}', space=vmem, size = 0x400, scoped, tag = 'output window, operand 1, single buffered']
    #allocation5 [shape = 's32[1]{0}', space=sflag, size = 0x4, scoped, tag = 'scoped memory for encoder_forward.7']
    #allocation6 [shape = 'u8[1024]{0}', space=vmem, size = 0x400, scoped, tag = 'output window, operand 2, single buffered']
    #allocation7 [shape = 'u8[1024]{0}', space=vmem, size = 0x400, scoped, tag = 'output window, operand 3, single buffered']
    #allocation8 [shape = 's32[1]{0}', space=sflag, size = 0x4, scoped, tag = 'scoped memory for encoder_forward.7']
    %21 = vsyncpa [#allocation3], 0
    %22 = vsyncpa [#allocation5], 0
    %23 = vsyncpa [#allocation8], 0
    // Predicated region
    $region2: #{encoder_forward.7} parent=1 // pred_check
      _
    $region3: #{encoder_forward.7} parent=1 // pred_check_branch
      %25 = sbr.rel (0) target = $region5
    $region4: #{encoder_forward.7} parent=1 // pred_region
      _
    $region5: #{encoder_forward.7} parent=1 // pred_fallthru
      _
    // Predicated region
    $region6: #{encoder_forward.7} parent=1 // pred_check
      _
    $region7: #{encoder_forward.7} parent=1 // pred_check_branch
      %27 = sbr.rel (0) target = $region9
    $region8: #{encoder_forward.7} parent=1 // pred_region
      _
    $region9: #{encoder_forward.7} parent=1 // pred_fallthru
      _
    // Predicated region
    $region10: #{encoder_forward.7} parent=1 // pred_check
      _
    $region11: #{encoder_forward.7} parent=1 // pred_check_branch
      %29 = sbr.rel (0) target = $region13
    $region12: #{encoder_forward.7} parent=1 // pred_region
      _
    $region13: #{encoder_forward.7} parent=1 // pred_fallthru
      _
    // Predicated region
    $region14: #{encoder_forward.7} parent=1 // pred_check
      _
    $region15: #{encoder_forward.7} parent=1 // pred_check_branch
      %31 = sbr.rel (0) target = $region17
    $region16: #{encoder_forward.7} parent=1 // pred_region
      _
    $region17: #{encoder_forward.7} parent=1 // pred_fallthru
      _
    // Predicated region
    $region18: #{encoder_forward.7} parent=1 // pred_check
      _
    $region19: #{encoder_forward.7} parent=1 // pred_check_branch
      %33 = sbr.rel (0) target = $region21
    $region20: #{encoder_forward.7} parent=1 // pred_region
      _
    $region21: #{encoder_forward.7} parent=1 // pred_fallthru
      _
    // Predicated region
    $region22: #{encoder_forward.7} parent=1 // pred_check
      _
    $region23: #{encoder_forward.7} parent=1 // pred_check_branch
      %35 = sbr.rel (0) target = $region25
    $region24: #{encoder_forward.7} parent=1 // pred_region
      _
    $region25: #{encoder_forward.7} parent=1 // pred_fallthru
      _
    // Predicated region
    $region26: #{encoder_forward.7} parent=1 // pred_check
      _
    $region27: #{encoder_forward.7} parent=1 // pred_check_branch
      %37 = sbr.rel (0) target = $region29
    $region28: #{encoder_forward.7} parent=1 // pred_region
      _
    $region29: #{encoder_forward.7} parent=1 // pred_fallthru
      _
    // Predicated region
    $region30: #{encoder_forward.7} parent=1 // pred_check
      _
    $region31: #{encoder_forward.7} parent=1 // pred_check_branch
      %39 = sbr.rel (0) target = $region33
    $region32: #{encoder_forward.7} parent=1 // pred_region
      _
    $region33: #{encoder_forward.7} parent=1 // pred_fallthru
      _
    // Predicated region
    $region34: #{encoder_forward.7} parent=1 // pred_check
      _
    $region35: #{encoder_forward.7} parent=1 // pred_check_branch
      %41 = sbr.rel (0) target = $region37
    $region36: #{encoder_forward.7} parent=1 // pred_region
      _
    $region37: #{encoder_forward.7} parent=1 // pred_fallthru
      _
    // Predicated region
    $region38: #{encoder_forward.7} parent=1 // pred_check
      _
    $region39: #{encoder_forward.7} parent=1 // pred_check_branch
      %43 = sbr.rel (0) target = $region41
    $region40: #{encoder_forward.7} parent=1 // pred_region
      _
    $region41: #{encoder_forward.7} parent=1 // pred_fallthru
      _
    // Predicated region
    $region42: #{encoder_forward.7} parent=1 // pred_check
      _
    $region43: #{encoder_forward.7} parent=1 // pred_check_branch
      %45 = sbr.rel (0) target = $region45
    $region44: #{encoder_forward.7} parent=1 // pred_region
      _
    $region45: #{encoder_forward.7} parent=1 // pred_fallthru
      _
    // Predicated region
    $region46: #{encoder_forward.7} parent=1 // pred_check
      _
    $region47: #{encoder_forward.7} parent=1 // pred_check_branch
      %47 = sbr.rel (0) target = $region49
    $region48: #{encoder_forward.7} parent=1 // pred_region
      _
    $region49: #{encoder_forward.7} parent=1 // pred_fallthru
      _
    %v49 = vld [vmem:[%s0] sm:$0xff]
    %v50 = vld [vmem:[%s2] sm:$0xf]
    %v51 = vld [vmem:[%s2 + $0x4] sm:$0xf]
    %v52 = vld [vmem:[%s2 + $0x8] sm:$0xf]
    %v53 = vld [vmem:[%s2 + $0xc] sm:$0xf]
    %v54 = vld [vmem:[%s2 + $0x10] sm:$0xf]
    %v55 = vld [vmem:[%s2 + $0x14] sm:$0xf]
    %v56 = vld [vmem:[%s2 + $0x18] sm:$0xf]
    %v57 = vld [vmem:[%s2 + $0x1c] sm:$0xf]
    %v58 = vld [vmem:[%s2 + $0x20] sm:$0xf]
    %v59 = vld [vmem:[%s2 + $0x24] sm:$0xf]
    %v60 = vld [vmem:[%s2 + $0x28] sm:$0xf]
    %v61 = vld [vmem:[%s2 + $0x2c] sm:$0xf]
    %v62 = vld [vmem:[%s2 + $0x30] sm:$0xf]
    %v63 = vld [vmem:[%s2 + $0x34] sm:$0xf]
    %v64 = vld [vmem:[%s2 + $0x38] sm:$0xf]
    %v65 = vld [vmem:[%s2 + $0x3c] sm:$0xf]
    %v66 = vld [vmem:[%s2 + $0x40] sm:$0xf]
    %v67 = vld [vmem:[%s2 + $0x44] sm:$0xf]
    %v68 = vld [vmem:[%s2 + $0x48] sm:$0xf]
    %v69 = vld [vmem:[%s2 + $0x4c] sm:$0xf]
    %v70 = vld [vmem:[%s2 + $0x50] sm:$0xf]
    %v71 = vld [vmem:[%s2 + $0x54] sm:$0xf]
    %v72 = vld [vmem:[%s2 + $0x58] sm:$0xf]
    %v73 = vld [vmem:[%s2 + $0x5c] sm:$0xf]
    %v74 = vld [vmem:[%s2 + $0x60] sm:$0xf]
    %v75 = vld [vmem:[%s2 + $0x64] sm:$0xf]
    %v76 = vld [vmem:[%s2 + $0x68] sm:$0xf]
    %v77 = vld [vmem:[%s2 + $0x6c] sm:$0xf]
    %v78 = vld [vmem:[%s2 + $0x70] sm:$0xf]
    %v79 = vld [vmem:[%s2 + $0x74] sm:$0xf]
    %v80 = vld [vmem:[%s2 + $0x78] sm:$0xf]
    %v81 = vld [vmem:[%s2 + $0x7c] sm:$0xf]
    %v82 = vld [vmem:[%s2 + $0x80] sm:$0xf]
    %v83 = vld [vmem:[%s2 + $0x84] sm:$0xf]
    %v84 = vld [vmem:[%s2 + $0x88] sm:$0xf]
    %v85 = vld [vmem:[%s2 + $0x8c] sm:$0xf]
    %v86 = vld [vmem:[%s2 + $0x90] sm:$0xf]
    %v87 = vld [vmem:[%s2 + $0x94] sm:$0xf]
    %v88 = vld [vmem:[%s2 + $0x98] sm:$0xf]
    %v89 = vld [vmem:[%s2 + $0x9c] sm:$0xf]
    %v90 = vld [vmem:[%s2 + $0xa0] sm:$0xf]
    %v91 = vld [vmem:[%s2 + $0xa4] sm:$0xf]
    %v92 = vld [vmem:[%s2 + $0xa8] sm:$0xf]
    %v93 = vld [vmem:[%s2 + $0xac] sm:$0xf]
    %v94 = vld [vmem:[%s2 + $0xb0] sm:$0xf]
    %v95 = vld [vmem:[%s2 + $0xb4] sm:$0xf]
    %v96 = vld [vmem:[%s2 + $0xb8] sm:$0xf]
    %v97 = vld [vmem:[%s2 + $0xbc] sm:$0xf]
    %v98 = vld [vmem:[%s2 + $0xc0] sm:$0xf]
    %v99 = vld [vmem:[%s2 + $0xc4] sm:$0xf]
    %v100 = vld [vmem:[%s2 + $0xc8] sm:$0xf]
    %v101 = vld [vmem:[%s2 + $0xcc] sm:$0xf]
    %v102 = vld [vmem:[%s2 + $0xd0] sm:$0xf]
    %v103 = vld [vmem:[%s2 + $0xd4] sm:$0xf]
    %v104 = vld [vmem:[%s2 + $0xd8] sm:$0xf]
    %v105 = vld [vmem:[%s2 + $0xdc] sm:$0xf]
    %v106 = vld [vmem:[%s2 + $0xe0] sm:$0xf]
    %v107 = vld [vmem:[%s2 + $0xe4] sm:$0xf]
    %v108 = vld [vmem:[%s2 + $0xe8] sm:$0xf]
    %v109 = vld [vmem:[%s2 + $0xec] sm:$0xf]
    %v110 = vld [vmem:[%s2 + $0xf0] sm:$0xf]
    %v111 = vld [vmem:[%s2 + $0xf4] sm:$0xf]
    %v112 = vld [vmem:[%s2 + $0xf8] sm:$0xf]
    %v113 = vld [vmem:[%s2 + $0xfc] sm:$0xf]
    %v114 = vld [vmem:[%s2 + $0x100] sm:$0xf]
    %v115 = vld [vmem:[%s2 + $0x104] sm:$0xf]
    %v116 = vld [vmem:[%s2 + $0x108] sm:$0xf]
    %v117 = vld [vmem:[%s2 + $0x10c] sm:$0xf]
    %v118 = vld [vmem:[%s2 + $0x110] sm:$0xf]
    %v119 = vld [vmem:[%s2 + $0x114] sm:$0xf]
    %v120 = vld [vmem:[%s2 + $0x118] sm:$0xf]
    %v121 = vld [vmem:[%s2 + $0x11c] sm:$0xf]
    %v122 = vld [vmem:[%s2 + $0x120] sm:$0xf]
    %v123 = vld [vmem:[%s2 + $0x124] sm:$0xf]
    %v124 = vld [vmem:[%s2 + $0x128] sm:$0xf]
    %v125 = vld [vmem:[%s2 + $0x12c] sm:$0xf]
    %v126 = vld [vmem:[%s2 + $0x130] sm:$0xf]
    %v127 = vld [vmem:[%s2 + $0x134] sm:$0xf]
    %v128 = vld [vmem:[%s2 + $0x138] sm:$0xf]
    %v129 = vld [vmem:[%s2 + $0x13c] sm:$0xf]
    %v130 = vld [vmem:[%s2 + $0x140] sm:$0xf]
    %v131 = vld [vmem:[%s2 + $0x144] sm:$0xf]
    %v132 = vld [vmem:[%s2 + $0x148] sm:$0xf]
    %v133 = vld [vmem:[%s2 + $0x14c] sm:$0xf]
    %v134 = vld [vmem:[%s2 + $0x150] sm:$0xf]
    %v135 = vld [vmem:[%s2 + $0x154] sm:$0xf]
    %v136 = vld [vmem:[%s2 + $0x158] sm:$0xf]
    %v137 = vld [vmem:[%s2 + $0x15c] sm:$0xf]
    %v138 = vld [vmem:[%s2 + $0x160] sm:$0xf]
    %v139 = vld [vmem:[%s2 + $0x164] sm:$0xf]
    %v140 = vld [vmem:[%s2 + $0x168] sm:$0xf]
    %v141 = vld [vmem:[%s2 + $0x16c] sm:$0xf]
    %v142 = vld [vmem:[%s2 + $0x170] sm:$0xf]
    %v143 = vld [vmem:[%s2 + $0x174] sm:$0xf]
    %v144 = vld [vmem:[%s2 + $0x178] sm:$0xf]
    %v145 = vld [vmem:[%s2 + $0x17c] sm:$0xf]
    %v146 = vld [vmem:[%s2 + $0x180] sm:$0xf]
    %v147 = vld [vmem:[%s2 + $0x184] sm:$0xf]
    %v148 = vld [vmem:[%s2 + $0x188] sm:$0xf]
    %v149 = vld [vmem:[%s2 + $0x18c] sm:$0xf]
    %v150 = vld [vmem:[%s2 + $0x190] sm:$0xf]
    %v151 = vld [vmem:[%s2 + $0x194] sm:$0xf]
    %v152 = vld [vmem:[%s2 + $0x198] sm:$0xf]
    %v153 = vld [vmem:[%s2 + $0x19c] sm:$0xf]
    %v154 = vld [vmem:[%s2 + $0x1a0] sm:$0xf]
    %v155 = vld [vmem:[%s2 + $0x1a4] sm:$0xf]
    %v156 = vld [vmem:[%s2 + $0x1a8] sm:$0xf]
    %v157 = vld [vmem:[%s2 + $0x1ac] sm:$0xf]
    %v158 = vld [vmem:[%s2 + $0x1b0] sm:$0xf]
    %v159 = vld [vmem:[%s2 + $0x1b4] sm:$0xf]
    %v160 = vld [vmem:[%s2 + $0x1b8] sm:$0xf]
    %v161 = vld [vmem:[%s2 + $0x1bc] sm:$0xf]
    %v162 = vld [vmem:[%s2 + $0x1c0] sm:$0xf]
    %v163 = vld [vmem:[%s2 + $0x1c4] sm:$0xf]
    %v164 = vld [vmem:[%s2 + $0x1c8] sm:$0xf]
    %v165 = vld [vmem:[%s2 + $0x1cc] sm:$0xf]
    %v166 = vld [vmem:[%s2 + $0x1d0] sm:$0xf]
    %v167 = vld [vmem:[%s2 + $0x1d4] sm:$0xf]
    %v168 = vld [vmem:[%s2 + $0x1d8] sm:$0xf]
    %v169 = vld [vmem:[%s2 + $0x1dc] sm:$0xf]
    %v170 = vld [vmem:[%s2 + $0x1e0] sm:$0xf]
    %v171 = vld [vmem:[%s2 + $0x1e4] sm:$0xf]
    %v172 = vld [vmem:[%s2 + $0x1e8] sm:$0xf]
    %v173 = vld [vmem:[%s2 + $0x1ec] sm:$0xf]
    %v174 = vld [vmem:[%s2 + $0x1f0] sm:$0xf]
    %v175 = vld [vmem:[%s2 + $0x1f4] sm:$0xf]
    %v176 = vld [vmem:[%s2 + $0x1f8] sm:$0xf]
    %v177 = vld [vmem:[%s2 + $0x1fc] sm:$0xf]
    %v178 = vld [vmem:[%s3] sm:$0x1]
    %v180 = vlaneseq
    %v181 = vshrl.u32 %v180, 7
    %v182 = vsub.s32 0, %v181
    %v183 = vrot.slane %v178, %v182
    %v186 = vcombine.high %v49, %v49
    %v188 = vunpack.c.l.s4 1966171168
    %v189 = vunpack.c.0.s8 %v188
    %v190 = vlaneseq
    %v191 = vshrl.u32 %v190, 7
    %v192 = vsub.s32 %v189, %v191
    %v193 = vrot.slane %v49, %v192
    %v195 = vunpack.c.l.s4 1966171168
    %v196 = vunpack.c.0.s8 %v195
    %v197 = vlaneseq
    %v198 = vshrl.u32 %v197, 7
    %v199 = vsub.s32 %v196, %v198
    %v200 = vrot.slane %v186, %v199
    %v201 = vcombine.high %v193, %v193
    %v202 = vcombine.high %v200, %v200
    %v204 = vunpack.c.l.s4 1966171168
    %v205 = vunpack.c.0.s8 %v204
    %v206 = vlaneseq
    %v207 = vshrl.u32 %v206, 7
    %v208 = vsub.s32 %v205, %v207
    %v209 = vrot.slane %v193, %v208
    %v211 = vunpack.c.l.s4 1966171168
    %v212 = vunpack.c.0.s8 %v211
    %v213 = vlaneseq
    %v214 = vshrl.u32 %v213, 7
    %v215 = vsub.s32 %v212, %v214
    %v216 = vrot.slane %v200, %v215
    %v218 = vunpack.c.l.s4 1966171168
    %v219 = vunpack.c.0.s8 %v218
    %v220 = vlaneseq
    %v221 = vshrl.u32 %v220, 7
    %v222 = vsub.s32 %v219, %v221
    %v223 = vrot.slane %v201, %v222
    %v225 = vunpack.c.l.s4 1966171168
    %v226 = vunpack.c.0.s8 %v225
    %v227 = vlaneseq
    %v228 = vshrl.u32 %v227, 7
    %v229 = vsub.s32 %v226, %v228
    %v230 = vrot.slane %v202, %v229
    %v231 = vcombine.high %v209, %v209
    %v232 = vcombine.high %v216, %v216
    %v233 = vcombine.high %v223, %v223
    %v234 = vcombine.high %v230, %v230
    %v371 = vunpack.c.l.b16 %v50
    %v372 = vunpack.c.l.b16 %v51
    %v373 = vunpack.c.l.b16 %v52
    %v374 = vunpack.c.l.b16 %v53
    %v375 = vunpack.c.l.b16 %v54
    %v376 = vunpack.c.l.b16 %v55
    %v377 = vunpack.c.l.b16 %v56
    %v378 = vunpack.c.l.b16 %v57
    %v379 = vunpack.c.l.b16 %v58
    %v380 = vunpack.c.l.b16 %v59
    %v381 = vunpack.c.l.b16 %v60
    %v382 = vunpack.c.l.b16 %v61
    %v383 = vunpack.c.l.b16 %v62
    %v384 = vunpack.c.l.b16 %v63
    %v385 = vunpack.c.l.b16 %v64
    %v386 = vunpack.c.l.b16 %v65
    %v387 = vunpack.c.l.b16 %v66
    %v388 = vunpack.c.l.b16 %v67
    %v389 = vunpack.c.l.b16 %v68
    %v390 = vunpack.c.l.b16 %v69
    %v391 = vunpack.c.l.b16 %v70
    %v392 = vunpack.c.l.b16 %v71
    %v393 = vunpack.c.l.b16 %v72
    %v394 = vunpack.c.l.b16 %v73
    %v395 = vunpack.c.l.b16 %v74
    %v396 = vunpack.c.l.b16 %v75
    %v397 = vunpack.c.l.b16 %v76
    %v398 = vunpack.c.l.b16 %v77
    %v399 = vunpack.c.l.b16 %v78
    %v400 = vunpack.c.l.b16 %v79
    %v401 = vunpack.c.l.b16 %v80
    %v402 = vunpack.c.l.b16 %v81
    %v403 = vunpack.c.l.b16 %v82
    %v404 = vunpack.c.l.b16 %v83
    %v405 = vunpack.c.l.b16 %v84
    %v406 = vunpack.c.l.b16 %v85
    %v407 = vunpack.c.l.b16 %v86
    %v408 = vunpack.c.l.b16 %v87
    %v409 = vunpack.c.l.b16 %v88
    %v410 = vunpack.c.l.b16 %v89
    %v411 = vunpack.c.l.b16 %v90
    %v412 = vunpack.c.l.b16 %v91
    %v413 = vunpack.c.l.b16 %v92
    %v414 = vunpack.c.l.b16 %v93
    %v415 = vunpack.c.l.b16 %v94
    %v416 = vunpack.c.l.b16 %v95
    %v417 = vunpack.c.l.b16 %v96
    %v418 = vunpack.c.l.b16 %v97
    %v419 = vunpack.c.l.b16 %v98
    %v420 = vunpack.c.l.b16 %v99
    %v421 = vunpack.c.l.b16 %v100
    %v422 = vunpack.c.l.b16 %v101
    %v423 = vunpack.c.l.b16 %v102
    %v424 = vunpack.c.l.b16 %v103
    %v425 = vunpack.c.l.b16 %v104
    %v426 = vunpack.c.l.b16 %v105
    %v427 = vunpack.c.l.b16 %v106
    %v428 = vunpack.c.l.b16 %v107
    %v429 = vunpack.c.l.b16 %v108
    %v430 = vunpack.c.l.b16 %v109
    %v431 = vunpack.c.l.b16 %v110
    %v432 = vunpack.c.l.b16 %v111
    %v433 = vunpack.c.l.b16 %v112
    %v434 = vunpack.c.l.b16 %v113
    %v435 = vunpack.c.l.b16 %v114
    %v436 = vunpack.c.l.b16 %v115
    %v437 = vunpack.c.l.b16 %v116
    %v438 = vunpack.c.l.b16 %v117
    %v439 = vunpack.c.l.b16 %v118
    %v440 = vunpack.c.l.b16 %v119
    %v441 = vunpack.c.l.b16 %v120
    %v442 = vunpack.c.l.b16 %v121
    %v443 = vunpack.c.l.b16 %v122
    %v444 = vunpack.c.l.b16 %v123
    %v445 = vunpack.c.l.b16 %v124
    %v446 = vunpack.c.l.b16 %v125
    %v447 = vunpack.c.l.b16 %v126
    %v448 = vunpack.c.l.b16 %v127
    %v449 = vunpack.c.l.b16 %v128
    %v450 = vunpack.c.l.b16 %v129
    %v451 = vunpack.c.l.b16 %v130
    %v452 = vunpack.c.l.b16 %v131
    %v453 = vunpack.c.l.b16 %v132
    %v454 = vunpack.c.l.b16 %v133
    %v455 = vunpack.c.l.b16 %v134
    %v456 = vunpack.c.l.b16 %v135
    %v457 = vunpack.c.l.b16 %v136
    %v458 = vunpack.c.l.b16 %v137
    %v459 = vunpack.c.l.b16 %v138
    %v460 = vunpack.c.l.b16 %v139
    %v461 = vunpack.c.l.b16 %v140
    %v462 = vunpack.c.l.b16 %v141
    %v463 = vunpack.c.l.b16 %v142
    %v464 = vunpack.c.l.b16 %v143
    %v465 = vunpack.c.l.b16 %v144
    %v466 = vunpack.c.l.b16 %v145
    %v467 = vunpack.c.l.b16 %v146
    %v468 = vunpack.c.l.b16 %v147
    %v469 = vunpack.c.l.b16 %v148
    %v470 = vunpack.c.l.b16 %v149
    %v471 = vunpack.c.l.b16 %v150
    %v472 = vunpack.c.l.b16 %v151
    %v473 = vunpack.c.l.b16 %v152
    %v474 = vunpack.c.l.b16 %v153
    %v475 = vunpack.c.l.b16 %v154
    %v476 = vunpack.c.l.b16 %v155
    %v477 = vunpack.c.l.b16 %v156
    %v478 = vunpack.c.l.b16 %v157
    %v479 = vunpack.c.l.b16 %v158
    %v480 = vunpack.c.l.b16 %v159
    %v481 = vunpack.c.l.b16 %v160
    %v482 = vunpack.c.l.b16 %v161
    %v483 = vunpack.c.l.b16 %v162
    %v484 = vunpack.c.l.b16 %v163
    %v485 = vunpack.c.l.b16 %v164
    %v486 = vunpack.c.l.b16 %v165
    %v487 = vunpack.c.l.b16 %v166
    %v488 = vunpack.c.l.b16 %v167
    %v489 = vunpack.c.l.b16 %v168
    %v490 = vunpack.c.l.b16 %v169
    %v491 = vunpack.c.l.b16 %v170
    %v492 = vunpack.c.l.b16 %v171
    %v493 = vunpack.c.l.b16 %v172
    %v494 = vunpack.c.l.b16 %v173
    %v495 = vunpack.c.l.b16 %v174
    %v496 = vunpack.c.l.b16 %v175
    %v497 = vunpack.c.l.b16 %v176
    %v498 = vunpack.c.l.b16 %v177
    %v499 = vpack.c.b16 %v372, %v371
    %v500 = vpack.c.b16 %v374, %v373
    %v501 = vpack.c.b16 %v376, %v375
    %v502 = vpack.c.b16 %v378, %v377
    %v503 = vpack.c.b16 %v380, %v379
    %v504 = vpack.c.b16 %v382, %v381
    %v505 = vpack.c.b16 %v384, %v383
    %v506 = vpack.c.b16 %v386, %v385
    %v507 = vpack.c.b16 %v388, %v387
    %v508 = vpack.c.b16 %v390, %v389
    %v509 = vpack.c.b16 %v392, %v391
    %v510 = vpack.c.b16 %v394, %v393
    %v511 = vpack.c.b16 %v396, %v395
    %v512 = vpack.c.b16 %v398, %v397
    %v513 = vpack.c.b16 %v400, %v399
    %v514 = vpack.c.b16 %v402, %v401
    %v515 = vpack.c.b16 %v404, %v403
    %v516 = vpack.c.b16 %v406, %v405
    %v517 = vpack.c.b16 %v408, %v407
    %v518 = vpack.c.b16 %v410, %v409
    %v519 = vpack.c.b16 %v412, %v411
    %v520 = vpack.c.b16 %v414, %v413
    %v521 = vpack.c.b16 %v416, %v415
    %v522 = vpack.c.b16 %v418, %v417
    %v523 = vpack.c.b16 %v420, %v419
    %v524 = vpack.c.b16 %v422, %v421
    %v525 = vpack.c.b16 %v424, %v423
    %v526 = vpack.c.b16 %v426, %v425
    %v527 = vpack.c.b16 %v428, %v427
    %v528 = vpack.c.b16 %v430, %v429
    %v529 = vpack.c.b16 %v432, %v431
    %v530 = vpack.c.b16 %v434, %v433
    %v531 = vpack.c.b16 %v436, %v435
    %v532 = vpack.c.b16 %v438, %v437
    %v533 = vpack.c.b16 %v440, %v439
    %v534 = vpack.c.b16 %v442, %v441
    %v535 = vpack.c.b16 %v444, %v443
    %v536 = vpack.c.b16 %v446, %v445
    %v537 = vpack.c.b16 %v448, %v447
    %v538 = vpack.c.b16 %v450, %v449
    %v539 = vpack.c.b16 %v452, %v451
    %v540 = vpack.c.b16 %v454, %v453
    %v541 = vpack.c.b16 %v456, %v455
    %v542 = vpack.c.b16 %v458, %v457
    %v543 = vpack.c.b16 %v460, %v459
    %v544 = vpack.c.b16 %v462, %v461
    %v545 = vpack.c.b16 %v464, %v463
    %v546 = vpack.c.b16 %v466, %v465
    %v547 = vpack.c.b16 %v468, %v467
    %v548 = vpack.c.b16 %v470, %v469
    %v549 = vpack.c.b16 %v472, %v471
    %v550 = vpack.c.b16 %v474, %v473
    %v551 = vpack.c.b16 %v476, %v475
    %v552 = vpack.c.b16 %v478, %v477
    %v553 = vpack.c.b16 %v480, %v479
    %v554 = vpack.c.b16 %v482, %v481
    %v555 = vpack.c.b16 %v484, %v483
    %v556 = vpack.c.b16 %v486, %v485
    %v557 = vpack.c.b16 %v488, %v487
    %v558 = vpack.c.b16 %v490, %v489
    %v559 = vpack.c.b16 %v492, %v491
    %v560 = vpack.c.b16 %v494, %v493
    %v561 = vpack.c.b16 %v496, %v495
    %v562 = vpack.c.b16 %v498, %v497
    %627 = vmatprep.subr.bf16.mxu0 0
    %628 = vmatpush1.bf16.msra.mxu0 %v506
    %629 = vmatprep.subr.bf16.mxu0 0
    %630 = vmatpush1.bf16.msra.mxu0 %v505
    %631 = vmatprep.subr.bf16.mxu0 0
    %632 = vmatpush1.bf16.msra.mxu0 %v504
    %633 = vmatprep.subr.bf16.mxu0 0
    %634 = vmatpush1.bf16.msra.mxu0 %v503
    %635 = vmatprep.subr.bf16.mxu0 0
    %636 = vmatpush1.bf16.msra.mxu0 %v502
    %637 = vmatprep.subr.bf16.mxu0 0
    %638 = vmatpush1.bf16.msra.mxu0 %v501
    %639 = vmatprep.subr.bf16.mxu0 0
    %640 = vmatpush1.bf16.msra.mxu0 %v500
    %641 = vmatprep.subr.bf16.mxu0 0
    %642 = vmatpush1.bf16.msra.mxu0 %v499
    %643 = vmatprep.subr.bf16.mxu0 0
    %644 = vmatpush2.bf16.msra.mxu0 %v514
    %645 = vmatprep.subr.bf16.mxu0 0
    %646 = vmatpush2.bf16.msra.mxu0 %v513
    %647 = vmatprep.subr.bf16.mxu0 0
    %648 = vmatpush2.bf16.msra.mxu0 %v512
    %649 = vmatprep.subr.bf16.mxu0 0
    %650 = vmatpush2.bf16.msra.mxu0 %v511
    %651 = vmatprep.subr.bf16.mxu0 0
    %652 = vmatpush2.bf16.msra.mxu0 %v510
    %653 = vmatprep.subr.bf16.mxu0 0
    %654 = vmatpush2.bf16.msra.mxu0 %v509
    %655 = vmatprep.subr.bf16.mxu0 0
    %656 = vmatpush2.bf16.msra.mxu0 %v508
    %657 = vmatprep.subr.bf16.mxu0 0
    %658 = vmatpush2.bf16.msra.mxu0 %v507
    %659 = vmatprep.mubr.bf16.mxu0 %v223
    %660 = vmatmul.mubr.bf16.gmra.mxu0 %v209
    %v661 = vpop.f32.mrf.mxu0
    %v662 = vadd.f32 %v183, %v661
    %v663 = vpop.f32.mrf.mxu0
    %v664 = vpop.f32.mrf.mxu0
    %v665 = vpop.f32.mrf.mxu0
    %666 = vdwg.mxu0
    %667 = vmatprep.subr.bf16.mxu0 0
    %668 = vmatpush1.bf16.msra.mxu0 %v522
    %669 = vmatprep.subr.bf16.mxu0 0
    %670 = vmatpush1.bf16.msra.mxu0 %v521
    %671 = vmatprep.subr.bf16.mxu0 0
    %672 = vmatpush1.bf16.msra.mxu0 %v520
    %673 = vmatprep.subr.bf16.mxu0 0
    %674 = vmatpush1.bf16.msra.mxu0 %v519
    %675 = vmatprep.subr.bf16.mxu0 0
    %676 = vmatpush1.bf16.msra.mxu0 %v518
    %677 = vmatprep.subr.bf16.mxu0 0
    %678 = vmatpush1.bf16.msra.mxu0 %v517
    %679 = vmatprep.subr.bf16.mxu0 0
    %680 = vmatpush1.bf16.msra.mxu0 %v516
    %681 = vmatprep.subr.bf16.mxu0 0
    %682 = vmatpush1.bf16.msra.mxu0 %v515
    %683 = vmatprep.subr.bf16.mxu0 0
    %684 = vmatpush2.bf16.msra.mxu0 %v530
    %685 = vmatprep.subr.bf16.mxu0 0
    %686 = vmatpush2.bf16.msra.mxu0 %v529
    %687 = vmatprep.subr.bf16.mxu0 0
    %688 = vmatpush2.bf16.msra.mxu0 %v528
    %689 = vmatprep.subr.bf16.mxu0 0
    %690 = vmatpush2.bf16.msra.mxu0 %v527
    %691 = vmatprep.subr.bf16.mxu0 0
    %692 = vmatpush2.bf16.msra.mxu0 %v526
    %693 = vmatprep.subr.bf16.mxu0 0
    %694 = vmatpush2.bf16.msra.mxu0 %v525
    %695 = vmatprep.subr.bf16.mxu0 0
    %696 = vmatpush2.bf16.msra.mxu0 %v524
    %697 = vmatprep.subr.bf16.mxu0 0
    %698 = vmatpush2.bf16.msra.mxu0 %v523
    %699 = vmatprep.mubr.bf16.mxu0 %v233
    %700 = vmatmul.mubr.bf16.gmra.mxu0 %v231
    %v701 = vpop.f32.mrf.mxu0
    %v702 = vadd.f32 %v662, %v701
    %v703 = vpop.f32.mrf.mxu0
    %v704 = vpop.f32.mrf.mxu0
    %v705 = vpop.f32.mrf.mxu0
    %706 = vdwg.mxu0
    %707 = vmatprep.subr.bf16.mxu0 0
    %708 = vmatpush1.bf16.msra.mxu0 %v538
    %709 = vmatprep.subr.bf16.mxu0 0
    %710 = vmatpush1.bf16.msra.mxu0 %v537
    %711 = vmatprep.subr.bf16.mxu0 0
    %712 = vmatpush1.bf16.msra.mxu0 %v536
    %713 = vmatprep.subr.bf16.mxu0 0
    %714 = vmatpush1.bf16.msra.mxu0 %v535
    %715 = vmatprep.subr.bf16.mxu0 0
    %716 = vmatpush1.bf16.msra.mxu0 %v534
    %717 = vmatprep.subr.bf16.mxu0 0
    %718 = vmatpush1.bf16.msra.mxu0 %v533
    %719 = vmatprep.subr.bf16.mxu0 0
    %720 = vmatpush1.bf16.msra.mxu0 %v532
    %721 = vmatprep.subr.bf16.mxu0 0
    %722 = vmatpush1.bf16.msra.mxu0 %v531
    %723 = vmatprep.subr.bf16.mxu0 0
    %724 = vmatpush2.bf16.msra.mxu0 %v546
    %725 = vmatprep.subr.bf16.mxu0 0
    %726 = vmatpush2.bf16.msra.mxu0 %v545
    %727 = vmatprep.subr.bf16.mxu0 0
    %728 = vmatpush2.bf16.msra.mxu0 %v544
    %729 = vmatprep.subr.bf16.mxu0 0
    %730 = vmatpush2.bf16.msra.mxu0 %v543
    %731 = vmatprep.subr.bf16.mxu0 0
    %732 = vmatpush2.bf16.msra.mxu0 %v542
    %733 = vmatprep.subr.bf16.mxu0 0
    %734 = vmatpush2.bf16.msra.mxu0 %v541
    %735 = vmatprep.subr.bf16.mxu0 0
    %736 = vmatpush2.bf16.msra.mxu0 %v540
    %737 = vmatprep.subr.bf16.mxu0 0
    %738 = vmatpush2.bf16.msra.mxu0 %v539
    %739 = vmatprep.mubr.bf16.mxu0 %v230
    %740 = vmatmul.mubr.bf16.gmra.mxu0 %v216
    %v741 = vpop.f32.mrf.mxu0
    %v742 = vadd.f32 %v702, %v741
    %v743 = vpop.f32.mrf.mxu0
    %v744 = vpop.f32.mrf.mxu0
    %v745 = vpop.f32.mrf.mxu0
    %746 = vdwg.mxu0
    %747 = vmatprep.subr.bf16.mxu0 0
    %748 = vmatpush1.bf16.msra.mxu0 %v554
    %749 = vmatprep.subr.bf16.mxu0 0
    %750 = vmatpush1.bf16.msra.mxu0 %v553
    %751 = vmatprep.subr.bf16.mxu0 0
    %752 = vmatpush1.bf16.msra.mxu0 %v552
    %753 = vmatprep.subr.bf16.mxu0 0
    %754 = vmatpush1.bf16.msra.mxu0 %v551
    %755 = vmatprep.subr.bf16.mxu0 0
    %756 = vmatpush1.bf16.msra.mxu0 %v550
    %757 = vmatprep.subr.bf16.mxu0 0
    %758 = vmatpush1.bf16.msra.mxu0 %v549
    %759 = vmatprep.subr.bf16.mxu0 0
    %760 = vmatpush1.bf16.msra.mxu0 %v548
    %761 = vmatprep.subr.bf16.mxu0 0
    %762 = vmatpush1.bf16.msra.mxu0 %v547
    %763 = vmatprep.subr.bf16.mxu0 0
    %764 = vmatpush2.bf16.msra.mxu0 %v562
    %765 = vmatprep.subr.bf16.mxu0 0
    %766 = vmatpush2.bf16.msra.mxu0 %v561
    %767 = vmatprep.subr.bf16.mxu0 0
    %768 = vmatpush2.bf16.msra.mxu0 %v560
    %769 = vmatprep.subr.bf16.mxu0 0
    %770 = vmatpush2.bf16.msra.mxu0 %v559
    %771 = vmatprep.subr.bf16.mxu0 0
    %772 = vmatpush2.bf16.msra.mxu0 %v558
    %773 = vmatprep.subr.bf16.mxu0 0
    %774 = vmatpush2.bf16.msra.mxu0 %v557
    %775 = vmatprep.subr.bf16.mxu0 0
    %776 = vmatpush2.bf16.msra.mxu0 %v556
    %777 = vmatprep.subr.bf16.mxu0 0
    %778 = vmatpush2.bf16.msra.mxu0 %v555
    %779 = vmatprep.mubr.bf16.mxu0 %v234
    %780 = vmatmul.mubr.bf16.gmra.mxu0 %v232
    %v781 = vpop.f32.mrf.mxu0
    %v782 = vadd.f32 %v742, %v781
    %v783 = vpop.f32.mrf.mxu0
    %v784 = vpop.f32.mrf.mxu0
    %v785 = vpop.f32.mrf.mxu0
    %786 = vdwg.mxu0
    %v787 = vmax.f32 %v782, 0.0
    %v788 = vpack.c.bf16 %v787, %v787
    %v789 = vld [vmem:[%s4] sm:$0xff]
    %v790 = vld [vmem:[%s4 + $0x8] sm:$0xff]
    %v791 = vld [vmem:[%s4 + $0x10] sm:$0xff]
    %v792 = vld [vmem:[%s4 + $0x18] sm:$0xff]
    %v793 = vld [vmem:[%s4 + $0x20] sm:$0xff]
    %v794 = vld [vmem:[%s4 + $0x28] sm:$0xff]
    %v795 = vld [vmem:[%s4 + $0x30] sm:$0xff]
    %v796 = vld [vmem:[%s4 + $0x38] sm:$0xff]
    %v797 = vld [vmem:[%s0 + $0x8] sm:$0xff]
    %v799 = vcombine.high %v797, %v797
    %v801 = vunpack.c.l.s4 1966171168
    %v802 = vunpack.c.0.s8 %v801
    %v803 = vlaneseq
    %v804 = vshrl.u32 %v803, 7
    %v805 = vsub.s32 %v802, %v804
    %v806 = vrot.slane %v797, %v805
    %v808 = vunpack.c.l.s4 1966171168
    %v809 = vunpack.c.0.s8 %v808
    %v810 = vlaneseq
    %v811 = vshrl.u32 %v810, 7
    %v812 = vsub.s32 %v809, %v811
    %v813 = vrot.slane %v799, %v812
    %v814 = vcombine.high %v806, %v806
    %v815 = vcombine.high %v813, %v813
    %v817 = vunpack.c.l.s4 1966171168
    %v818 = vunpack.c.0.s8 %v817
    %v819 = vlaneseq
    %v820 = vshrl.u32 %v819, 7
    %v821 = vsub.s32 %v818, %v820
    %v822 = vrot.slane %v806, %v821
    %v824 = vunpack.c.l.s4 1966171168
    %v825 = vunpack.c.0.s8 %v824
    %v826 = vlaneseq
    %v827 = vshrl.u32 %v826, 7
    %v828 = vsub.s32 %v825, %v827
    %v829 = vrot.slane %v813, %v828
    %v831 = vunpack.c.l.s4 1966171168
    %v832 = vunpack.c.0.s8 %v831
    %v833 = vlaneseq
    %v834 = vshrl.u32 %v833, 7
    %v835 = vsub.s32 %v832, %v834
    %v836 = vrot.slane %v814, %v835
    %v838 = vunpack.c.l.s4 1966171168
    %v839 = vunpack.c.0.s8 %v838
    %v840 = vlaneseq
    %v841 = vshrl.u32 %v840, 7
    %v842 = vsub.s32 %v839, %v841
    %v843 = vrot.slane %v815, %v842
    %v844 = vcombine.high %v822, %v822
    %v845 = vcombine.high %v829, %v829
    %v846 = vcombine.high %v836, %v836
    %v847 = vcombine.high %v843, %v843
    %856 = vmatprep.subr.bf16.mxu0 0
    %857 = vmatpush1.bf16.msra.mxu0 %v506
    %858 = vmatprep.subr.bf16.mxu0 0
    %859 = vmatpush1.bf16.msra.mxu0 %v505
    %860 = vmatprep.subr.bf16.mxu0 0
    %861 = vmatpush1.bf16.msra.mxu0 %v504
    %862 = vmatprep.subr.bf16.mxu0 0
    %863 = vmatpush1.bf16.msra.mxu0 %v503
    %864 = vmatprep.subr.bf16.mxu0 0
    %865 = vmatpush1.bf16.msra.mxu0 %v502
    %866 = vmatprep.subr.bf16.mxu0 0
    %867 = vmatpush1.bf16.msra.mxu0 %v501
    %868 = vmatprep.subr.bf16.mxu0 0
    %869 = vmatpush1.bf16.msra.mxu0 %v500
    %870 = vmatprep.subr.bf16.mxu0 0
    %871 = vmatpush1.bf16.msra.mxu0 %v499
    %872 = vmatprep.subr.bf16.mxu0 0
    %873 = vmatpush2.bf16.msra.mxu0 %v514
    %874 = vmatprep.subr.bf16.mxu0 0
    %875 = vmatpush2.bf16.msra.mxu0 %v513
    %876 = vmatprep.subr.bf16.mxu0 0
    %877 = vmatpush2.bf16.msra.mxu0 %v512
    %878 = vmatprep.subr.bf16.mxu0 0
    %879 = vmatpush2.bf16.msra.mxu0 %v511
    %880 = vmatprep.subr.bf16.mxu0 0
    %881 = vmatpush2.bf16.msra.mxu0 %v510
    %882 = vmatprep.subr.bf16.mxu0 0
    %883 = vmatpush2.bf16.msra.mxu0 %v509
    %884 = vmatprep.subr.bf16.mxu0 0
    %885 = vmatpush2.bf16.msra.mxu0 %v508
    %886 = vmatprep.subr.bf16.mxu0 0
    %887 = vmatpush2.bf16.msra.mxu0 %v507
    %888 = vmatprep.mubr.bf16.mxu0 %v836
    %889 = vmatmul.mubr.bf16.gmra.mxu0 %v822
    %v890 = vpop.f32.mrf.mxu0
    %v891 = vadd.f32 %v183, %v890
    %v892 = vpop.f32.mrf.mxu0
    %v893 = vpop.f32.mrf.mxu0
    %v894 = vpop.f32.mrf.mxu0
    %895 = vdwg.mxu0
    %896 = vmatprep.subr.bf16.mxu0 0
    %897 = vmatpush1.bf16.msra.mxu0 %v522
    %898 = vmatprep.subr.bf16.mxu0 0
    %899 = vmatpush1.bf16.msra.mxu0 %v521
    %900 = vmatprep.subr.bf16.mxu0 0
    %901 = vmatpush1.bf16.msra.mxu0 %v520
    %902 = vmatprep.subr.bf16.mxu0 0
    %903 = vmatpush1.bf16.msra.mxu0 %v519
    %904 = vmatprep.subr.bf16.mxu0 0
    %905 = vmatpush1.bf16.msra.mxu0 %v518
    %906 = vmatprep.subr.bf16.mxu0 0
    %907 = vmatpush1.bf16.msra.mxu0 %v517
    %908 = vmatprep.subr.bf16.mxu0 0
    %909 = vmatpush1.bf16.msra.mxu0 %v516
    %910 = vmatprep.subr.bf16.mxu0 0
    %911 = vmatpush1.bf16.msra.mxu0 %v515
    %912 = vmatprep.subr.bf16.mxu0 0
    %913 = vmatpush2.bf16.msra.mxu0 %v530
    %914 = vmatprep.subr.bf16.mxu0 0
    %915 = vmatpush2.bf16.msra.mxu0 %v529
    %916 = vmatprep.subr.bf16.mxu0 0
    %917 = vmatpush2.bf16.msra.mxu0 %v528
    %918 = vmatprep.subr.bf16.mxu0 0
    %919 = vmatpush2.bf16.msra.mxu0 %v527
    %920 = vmatprep.subr.bf16.mxu0 0
    %921 = vmatpush2.bf16.msra.mxu0 %v526
    %922 = vmatprep.subr.bf16.mxu0 0
    %923 = vmatpush2.bf16.msra.mxu0 %v525
    %924 = vmatprep.subr.bf16.mxu0 0
    %925 = vmatpush2.bf16.msra.mxu0 %v524
    %926 = vmatprep.subr.bf16.mxu0 0
    %927 = vmatpush2.bf16.msra.mxu0 %v523
    %928 = vmatprep.mubr.bf16.mxu0 %v846
    %929 = vmatmul.mubr.bf16.gmra.mxu0 %v844
    %v930 = vpop.f32.mrf.mxu0
    %v931 = vadd.f32 %v891, %v930
    %v932 = vpop.f32.mrf.mxu0
    %v933 = vpop.f32.mrf.mxu0
    %v934 = vpop.f32.mrf.mxu0
    %935 = vdwg.mxu0
    %936 = vmatprep.subr.bf16.mxu0 0
    %937 = vmatpush1.bf16.msra.mxu0 %v538
    %938 = vmatprep.subr.bf16.mxu0 0
    %939 = vmatpush1.bf16.msra.mxu0 %v537
    %940 = vmatprep.subr.bf16.mxu0 0
    %941 = vmatpush1.bf16.msra.mxu0 %v536
    %942 = vmatprep.subr.bf16.mxu0 0
    %943 = vmatpush1.bf16.msra.mxu0 %v535
    %944 = vmatprep.subr.bf16.mxu0 0
    %945 = vmatpush1.bf16.msra.mxu0 %v534
    %946 = vmatprep.subr.bf16.mxu0 0
    %947 = vmatpush1.bf16.msra.mxu0 %v533
    %948 = vmatprep.subr.bf16.mxu0 0
    %949 = vmatpush1.bf16.msra.mxu0 %v532
    %950 = vmatprep.subr.bf16.mxu0 0
    %951 = vmatpush1.bf16.msra.mxu0 %v531
    %952 = vmatprep.subr.bf16.mxu0 0
    %953 = vmatpush2.bf16.msra.mxu0 %v546
    %954 = vmatprep.subr.bf16.mxu0 0
    %955 = vmatpush2.bf16.msra.mxu0 %v545
    %956 = vmatprep.subr.bf16.mxu0 0
    %957 = vmatpush2.bf16.msra.mxu0 %v544
    %958 = vmatprep.subr.bf16.mxu0 0
    %959 = vmatpush2.bf16.msra.mxu0 %v543
    %960 = vmatprep.subr.bf16.mxu0 0
    %961 = vmatpush2.bf16.msra.mxu0 %v542
    %962 = vmatprep.subr.bf16.mxu0 0
    %963 = vmatpush2.bf16.msra.mxu0 %v541
    %964 = vmatprep.subr.bf16.mxu0 0
    %965 = vmatpush2.bf16.msra.mxu0 %v540
    %966 = vmatprep.subr.bf16.mxu0 0
    %967 = vmatpush2.bf16.msra.mxu0 %v539
    %968 = vmatprep.mubr.bf16.mxu0 %v843
    %969 = vmatmul.mubr.bf16.gmra.mxu0 %v829
    %v970 = vpop.f32.mrf.mxu0
    %v971 = vadd.f32 %v931, %v970
    %v972 = vpop.f32.mrf.mxu0
    %v973 = vpop.f32.mrf.mxu0
    %v974 = vpop.f32.mrf.mxu0
    %975 = vdwg.mxu0
    %976 = vmatprep.subr.bf16.mxu0 0
    %977 = vmatpush1.bf16.msra.mxu0 %v554
    %978 = vmatprep.subr.bf16.mxu0 0
    %979 = vmatpush1.bf16.msra.mxu0 %v553
    %980 = vmatprep.subr.bf16.mxu0 0
    %981 = vmatpush1.bf16.msra.mxu0 %v552
    %982 = vmatprep.subr.bf16.mxu0 0
    %983 = vmatpush1.bf16.msra.mxu0 %v551
    %984 = vmatprep.subr.bf16.mxu0 0
    %985 = vmatpush1.bf16.msra.mxu0 %v550
    %986 = vmatprep.subr.bf16.mxu0 0
    %987 = vmatpush1.bf16.msra.mxu0 %v549
    %988 = vmatprep.subr.bf16.mxu0 0
    %989 = vmatpush1.bf16.msra.mxu0 %v548
    %990 = vmatprep.subr.bf16.mxu0 0
    %991 = vmatpush1.bf16.msra.mxu0 %v547
    %992 = vmatprep.subr.bf16.mxu0 0
    %993 = vmatpush2.bf16.msra.mxu0 %v562
    %994 = vmatprep.subr.bf16.mxu0 0
    %995 = vmatpush2.bf16.msra.mxu0 %v561
    %996 = vmatprep.subr.bf16.mxu0 0
    %997 = vmatpush2.bf16.msra.mxu0 %v560
    %998 = vmatprep.subr.bf16.mxu0 0
    %999 = vmatpush2.bf16.msra.mxu0 %v559
    %1000 = vmatprep.subr.bf16.mxu0 0
    %1001 = vmatpush2.bf16.msra.mxu0 %v558
    %1002 = vmatprep.subr.bf16.mxu0 0
    %1003 = vmatpush2.bf16.msra.mxu0 %v557
    %1004 = vmatprep.subr.bf16.mxu0 0
    %1005 = vmatpush2.bf16.msra.mxu0 %v556
    %1006 = vmatprep.subr.bf16.mxu0 0
    %1007 = vmatpush2.bf16.msra.mxu0 %v555
    %1008 = vmatprep.mubr.bf16.mxu0 %v847
    %1009 = vmatmul.mubr.bf16.gmra.mxu0 %v845
    %v1010 = vpop.f32.mrf.mxu0
    %v1011 = vadd.f32 %v971, %v1010
    %v1012 = vpop.f32.mrf.mxu0
    %v1013 = vpop.f32.mrf.mxu0
    %v1014 = vpop.f32.mrf.mxu0
    %1015 = vdwg.mxu0
    %v1016 = vmax.f32 %v1011, 0.0
    %v1017 = vpack.c.bf16 %v1016, %v1016
    %v1018 = vld [vmem:[%s4 + $0x40] sm:$0xff]
    %v1019 = vld [vmem:[%s4 + $0x48] sm:$0xff]
    %v1020 = vld [vmem:[%s4 + $0x50] sm:$0xff]
    %v1021 = vld [vmem:[%s4 + $0x58] sm:$0xff]
    %v1022 = vld [vmem:[%s4 + $0x60] sm:$0xff]
    %v1023 = vld [vmem:[%s4 + $0x68] sm:$0xff]
    %v1024 = vld [vmem:[%s4 + $0x70] sm:$0xff]
    %v1025 = vld [vmem:[%s4 + $0x78] sm:$0xff]
    %v1034 = vunpack.c.l.b16 %v1018
    %v1035 = vunpack.c.h.b16 %v1018
    %v1036 = vunpack.c.l.b16 %v1019
    %v1037 = vunpack.c.h.b16 %v1019
    %v1038 = vunpack.c.l.b16 %v1020
    %v1039 = vunpack.c.h.b16 %v1020
    %v1040 = vunpack.c.l.b16 %v1021
    %v1041 = vunpack.c.h.b16 %v1021
    %v1042 = vunpack.c.l.b16 %v1022
    %v1043 = vunpack.c.h.b16 %v1022
    %v1044 = vunpack.c.l.b16 %v1023
    %v1045 = vunpack.c.h.b16 %v1023
    %v1046 = vunpack.c.l.b16 %v1024
    %v1047 = vunpack.c.h.b16 %v1024
    %v1048 = vunpack.c.l.b16 %v1025
    %v1049 = vunpack.c.h.b16 %v1025
    %v1050 = vpack.c.b16 %v1036, %v1034
    %v1051 = vpack.c.b16 %v1037, %v1035
    %v1052 = vpack.c.b16 %v1040, %v1038
    %v1053 = vpack.c.b16 %v1041, %v1039
    %v1054 = vpack.c.b16 %v1044, %v1042
    %v1055 = vpack.c.b16 %v1045, %v1043
    %v1056 = vpack.c.b16 %v1048, %v1046
    %v1057 = vpack.c.b16 %v1049, %v1047
    %vm1066 = vcmask 523264
    %v1068 = vsel %vm1066, %v1017, 0
    %1070 = vmatprep.subr.bf16.mxu0 0
    %1071 = vmatpush1.bf16.msra.mxu0 0
    %1072 = vmatprep.subr.bf16.mxu0 0
    %1073 = vmatpush1.bf16.msra.mxu0 0
    %1074 = vmatprep.subr.bf16.mxu0 0
    %1075 = vmatpush1.bf16.msra.mxu0 0
    %1076 = vmatprep.subr.bf16.mxu0 0
    %1077 = vmatpush1.bf16.msra.mxu0 0
    %1078 = vmatprep.subr.bf16.mxu0 %v1057
    %1079 = vmatpush1.bf16.msra.mxu0 %v1056
    %1080 = vmatprep.subr.bf16.mxu0 %v1055
    %1081 = vmatpush1.bf16.msra.mxu0 %v1054
    %1082 = vmatprep.subr.bf16.mxu0 %v1053
    %1083 = vmatpush1.bf16.msra.mxu0 %v1052
    %1084 = vmatprep.subr.bf16.mxu0 %v1051
    %1085 = vmatpush1.bf16.msra.mxu0 %v1050
    %1086 = vmatprep.subr.bf16.mxu0 0
    %1087 = vmatpush2.bf16.msra.mxu0 0
    %1088 = vmatprep.subr.bf16.mxu0 0
    %1089 = vmatpush2.bf16.msra.mxu0 0
    %1090 = vmatprep.subr.bf16.mxu0 0
    %1091 = vmatpush2.bf16.msra.mxu0 0
    %1092 = vmatprep.subr.bf16.mxu0 0
    %1093 = vmatpush2.bf16.msra.mxu0 0
    %1094 = vmatprep.subr.bf16.mxu0 0
    %1095 = vmatpush2.bf16.msra.mxu0 0
    %1096 = vmatprep.subr.bf16.mxu0 0
    %1097 = vmatpush2.bf16.msra.mxu0 0
    %1098 = vmatprep.subr.bf16.mxu0 0
    %1099 = vmatpush2.bf16.msra.mxu0 0
    %1100 = vmatprep.subr.bf16.mxu0 0
    %1101 = vmatpush2.bf16.msra.mxu0 0
    %1102 = vmatprep.mubr.bf16.mxu0 0
    %1103 = vmatmul.mubr.bf16.gmra.mxu0 %v1068
    %v1104 = vpop.f32.mrf.mxu0
    %v1105 = vadd.f32 0.0, %v1104
    %v1106 = vpop.f32.mrf.mxu0
    %v1107 = vadd.f32 0.0, %v1106
    %v1108 = vpop.f32.mrf.mxu0
    %v1109 = vpop.f32.mrf.mxu0
    %1110 = vdwg.mxu0
    %v1119 = vunpack.c.l.b16 %v789
    %v1120 = vunpack.c.h.b16 %v789
    %v1121 = vunpack.c.l.b16 %v790
    %v1122 = vunpack.c.h.b16 %v790
    %v1123 = vunpack.c.l.b16 %v791
    %v1124 = vunpack.c.h.b16 %v791
    %v1125 = vunpack.c.l.b16 %v792
    %v1126 = vunpack.c.h.b16 %v792
    %v1127 = vunpack.c.l.b16 %v793
    %v1128 = vunpack.c.h.b16 %v793
    %v1129 = vunpack.c.l.b16 %v794
    %v1130 = vunpack.c.h.b16 %v794
    %v1131 = vunpack.c.l.b16 %v795
    %v1132 = vunpack.c.h.b16 %v795
    %v1133 = vunpack.c.l.b16 %v796
    %v1134 = vunpack.c.h.b16 %v796
    %v1135 = vpack.c.b16 %v1121, %v1119
    %v1136 = vpack.c.b16 %v1122, %v1120
    %v1137 = vpack.c.b16 %v1125, %v1123
    %v1138 = vpack.c.b16 %v1126, %v1124
    %v1139 = vpack.c.b16 %v1129, %v1127
    %v1140 = vpack.c.b16 %v1130, %v1128
    %v1141 = vpack.c.b16 %v1133, %v1131
    %v1142 = vpack.c.b16 %v1134, %v1132
    %v1152 = vsel %vm1066, %v788, 0
    %1154 = vmatprep.subr.bf16.mxu0 0
    %1155 = vmatpush1.bf16.msra.mxu0 0
    %1156 = vmatprep.subr.bf16.mxu0 0
    %1157 = vmatpush1.bf16.msra.mxu0 0
    %1158 = vmatprep.subr.bf16.mxu0 0
    %1159 = vmatpush1.bf16.msra.mxu0 0
    %1160 = vmatprep.subr.bf16.mxu0 0
    %1161 = vmatpush1.bf16.msra.mxu0 0
    %1162 = vmatprep.subr.bf16.mxu0 %v1142
    %1163 = vmatpush1.bf16.msra.mxu0 %v1141
    %1164 = vmatprep.subr.bf16.mxu0 %v1140
    %1165 = vmatpush1.bf16.msra.mxu0 %v1139
    %1166 = vmatprep.subr.bf16.mxu0 %v1138
    %1167 = vmatpush1.bf16.msra.mxu0 %v1137
    %1168 = vmatprep.subr.bf16.mxu0 %v1136
    %1169 = vmatpush1.bf16.msra.mxu0 %v1135
    %1170 = vmatprep.subr.bf16.mxu0 0
    %1171 = vmatpush2.bf16.msra.mxu0 0
    %1172 = vmatprep.subr.bf16.mxu0 0
    %1173 = vmatpush2.bf16.msra.mxu0 0
    %1174 = vmatprep.subr.bf16.mxu0 0
    %1175 = vmatpush2.bf16.msra.mxu0 0
    %1176 = vmatprep.subr.bf16.mxu0 0
    %1177 = vmatpush2.bf16.msra.mxu0 0
    %1178 = vmatprep.subr.bf16.mxu0 0
    %1179 = vmatpush2.bf16.msra.mxu0 0
    %1180 = vmatprep.subr.bf16.mxu0 0
    %1181 = vmatpush2.bf16.msra.mxu0 0
    %1182 = vmatprep.subr.bf16.mxu0 0
    %1183 = vmatpush2.bf16.msra.mxu0 0
    %1184 = vmatprep.subr.bf16.mxu0 0
    %1185 = vmatpush2.bf16.msra.mxu0 0
    %1186 = vmatprep.mubr.bf16.mxu0 0
    %1187 = vmatmul.mubr.bf16.gmra.mxu0 %v1152
    %v1188 = vpop.f32.mrf.mxu0
    %v1189 = vadd.f32 %v1105, %v1188
    %v1190 = vpop.f32.mrf.mxu0
    %v1191 = vadd.f32 %v1107, %v1190
    %v1192 = vpop.f32.mrf.mxu0
    %v1193 = vpop.f32.mrf.mxu0
    %1194 = vdwg.mxu0
    %v1195 = vld [vmem:[%s0 + $0x10] sm:$0xff]
    %v1197 = vcombine.high %v1195, %v1195
    %v1199 = vunpack.c.l.s4 1966171168
    %v1200 = vunpack.c.0.s8 %v1199
    %v1201 = vlaneseq
    %v1202 = vshrl.u32 %v1201, 7
    %v1203 = vsub.s32 %v1200, %v1202
    %v1204 = vrot.slane %v1195, %v1203
    %v1206 = vunpack.c.l.s4 1966171168
    %v1207 = vunpack.c.0.s8 %v1206
    %v1208 = vlaneseq
    %v1209 = vshrl.u32 %v1208, 7
    %v1210 = vsub.s32 %v1207, %v1209
    %v1211 = vrot.slane %v1197, %v1210
    %v1212 = vcombine.high %v1204, %v1204
    %v1213 = vcombine.high %v1211, %v1211
    %v1215 = vunpack.c.l.s4 1966171168
    %v1216 = vunpack.c.0.s8 %v1215
    %v1217 = vlaneseq
    %v1218 = vshrl.u32 %v1217, 7
    %v1219 = vsub.s32 %v1216, %v1218
    %v1220 = vrot.slane %v1204, %v1219
    %v1222 = vunpack.c.l.s4 1966171168
    %v1223 = vunpack.c.0.s8 %v1222
    %v1224 = vlaneseq
    %v1225 = vshrl.u32 %v1224, 7
    %v1226 = vsub.s32 %v1223, %v1225
    %v1227 = vrot.slane %v1211, %v1226
    %v1229 = vunpack.c.l.s4 1966171168
    %v1230 = vunpack.c.0.s8 %v1229
    %v1231 = vlaneseq
    %v1232 = vshrl.u32 %v1231, 7
    %v1233 = vsub.s32 %v1230, %v1232
    %v1234 = vrot.slane %v1212, %v1233
    %v1236 = vunpack.c.l.s4 1966171168
    %v1237 = vunpack.c.0.s8 %v1236
    %v1238 = vlaneseq
    %v1239 = vshrl.u32 %v1238, 7
    %v1240 = vsub.s32 %v1237, %v1239
    %v1241 = vrot.slane %v1213, %v1240
    %v1242 = vcombine.high %v1220, %v1220
    %v1243 = vcombine.high %v1227, %v1227
    %v1244 = vcombine.high %v1234, %v1234
    %v1245 = vcombine.high %v1241, %v1241
    %1254 = vmatprep.subr.bf16.mxu0 0
    %1255 = vmatpush1.bf16.msra.mxu0 %v506
    %1256 = vmatprep.subr.bf16.mxu0 0
    %1257 = vmatpush1.bf16.msra.mxu0 %v505
    %1258 = vmatprep.subr.bf16.mxu0 0
    %1259 = vmatpush1.bf16.msra.mxu0 %v504
    %1260 = vmatprep.subr.bf16.mxu0 0
    %1261 = vmatpush1.bf16.msra.mxu0 %v503
    %1262 = vmatprep.subr.bf16.mxu0 0
    %1263 = vmatpush1.bf16.msra.mxu0 %v502
    %1264 = vmatprep.subr.bf16.mxu0 0
    %1265 = vmatpush1.bf16.msra.mxu0 %v501
    %1266 = vmatprep.subr.bf16.mxu0 0
    %1267 = vmatpush1.bf16.msra.mxu0 %v500
    %1268 = vmatprep.subr.bf16.mxu0 0
    %1269 = vmatpush1.bf16.msra.mxu0 %v499
    %1270 = vmatprep.subr.bf16.mxu0 0
    %1271 = vmatpush2.bf16.msra.mxu0 %v514
    %1272 = vmatprep.subr.bf16.mxu0 0
    %1273 = vmatpush2.bf16.msra.mxu0 %v513
    %1274 = vmatprep.subr.bf16.mxu0 0
    %1275 = vmatpush2.bf16.msra.mxu0 %v512
    %1276 = vmatprep.subr.bf16.mxu0 0
    %1277 = vmatpush2.bf16.msra.mxu0 %v511
    %1278 = vmatprep.subr.bf16.mxu0 0
    %1279 = vmatpush2.bf16.msra.mxu0 %v510
    %1280 = vmatprep.subr.bf16.mxu0 0
    %1281 = vmatpush2.bf16.msra.mxu0 %v509
    %1282 = vmatprep.subr.bf16.mxu0 0
    %1283 = vmatpush2.bf16.msra.mxu0 %v508
    %1284 = vmatprep.subr.bf16.mxu0 0
    %1285 = vmatpush2.bf16.msra.mxu0 %v507
    %1286 = vmatprep.mubr.bf16.mxu0 %v1234
    %1287 = vmatmul.mubr.bf16.gmra.mxu0 %v1220
    %v1288 = vpop.f32.mrf.mxu0
    %v1289 = vadd.f32 %v183, %v1288
    %v1290 = vpop.f32.mrf.mxu0
    %v1291 = vpop.f32.mrf.mxu0
    %v1292 = vpop.f32.mrf.mxu0
    %1293 = vdwg.mxu0
    %1294 = vmatprep.subr.bf16.mxu0 0
    %1295 = vmatpush1.bf16.msra.mxu0 %v522
    %1296 = vmatprep.subr.bf16.mxu0 0
    %1297 = vmatpush1.bf16.msra.mxu0 %v521
    %1298 = vmatprep.subr.bf16.mxu0 0
    %1299 = vmatpush1.bf16.msra.mxu0 %v520
    %1300 = vmatprep.subr.bf16.mxu0 0
    %1301 = vmatpush1.bf16.msra.mxu0 %v519
    %1302 = vmatprep.subr.bf16.mxu0 0
    %1303 = vmatpush1.bf16.msra.mxu0 %v518
    %1304 = vmatprep.subr.bf16.mxu0 0
    %1305 = vmatpush1.bf16.msra.mxu0 %v517
    %1306 = vmatprep.subr.bf16.mxu0 0
    %1307 = vmatpush1.bf16.msra.mxu0 %v516
    %1308 = vmatprep.subr.bf16.mxu0 0
    %1309 = vmatpush1.bf16.msra.mxu0 %v515
    %1310 = vmatprep.subr.bf16.mxu0 0
    %1311 = vmatpush2.bf16.msra.mxu0 %v530
    %1312 = vmatprep.subr.bf16.mxu0 0
    %1313 = vmatpush2.bf16.msra.mxu0 %v529
    %1314 = vmatprep.subr.bf16.mxu0 0
    %1315 = vmatpush2.bf16.msra.mxu0 %v528
    %1316 = vmatprep.subr.bf16.mxu0 0
    %1317 = vmatpush2.bf16.msra.mxu0 %v527
    %1318 = vmatprep.subr.bf16.mxu0 0
    %1319 = vmatpush2.bf16.msra.mxu0 %v526
    %1320 = vmatprep.subr.bf16.mxu0 0
    %1321 = vmatpush2.bf16.msra.mxu0 %v525
    %1322 = vmatprep.subr.bf16.mxu0 0
    %1323 = vmatpush2.bf16.msra.mxu0 %v524
    %1324 = vmatprep.subr.bf16.mxu0 0
    %1325 = vmatpush2.bf16.msra.mxu0 %v523
    %1326 = vmatprep.mubr.bf16.mxu0 %v1244
    %1327 = vmatmul.mubr.bf16.gmra.mxu0 %v1242
    %v1328 = vpop.f32.mrf.mxu0
    %v1329 = vadd.f32 %v1289, %v1328
    %v1330 = vpop.f32.mrf.mxu0
    %v1331 = vpop.f32.mrf.mxu0
    %v1332 = vpop.f32.mrf.mxu0
    %1333 = vdwg.mxu0
    %1334 = vmatprep.subr.bf16.mxu0 0
    %1335 = vmatpush1.bf16.msra.mxu0 %v538
    %1336 = vmatprep.subr.bf16.mxu0 0
    %1337 = vmatpush1.bf16.msra.mxu0 %v537
    %1338 = vmatprep.subr.bf16.mxu0 0
    %1339 = vmatpush1.bf16.msra.mxu0 %v536
    %1340 = vmatprep.subr.bf16.mxu0 0
    %1341 = vmatpush1.bf16.msra.mxu0 %v535
    %1342 = vmatprep.subr.bf16.mxu0 0
    %1343 = vmatpush1.bf16.msra.mxu0 %v534
    %1344 = vmatprep.subr.bf16.mxu0 0
    %1345 = vmatpush1.bf16.msra.mxu0 %v533
    %1346 = vmatprep.subr.bf16.mxu0 0
    %1347 = vmatpush1.bf16.msra.mxu0 %v532
    %1348 = vmatprep.subr.bf16.mxu0 0
    %1349 = vmatpush1.bf16.msra.mxu0 %v531
    %1350 = vmatprep.subr.bf16.mxu0 0
    %1351 = vmatpush2.bf16.msra.mxu0 %v546
    %1352 = vmatprep.subr.bf16.mxu0 0
    %1353 = vmatpush2.bf16.msra.mxu0 %v545
    %1354 = vmatprep.subr.bf16.mxu0 0
    %1355 = vmatpush2.bf16.msra.mxu0 %v544
    %1356 = vmatprep.subr.bf16.mxu0 0
    %1357 = vmatpush2.bf16.msra.mxu0 %v543
    %1358 = vmatprep.subr.bf16.mxu0 0
    %1359 = vmatpush2.bf16.msra.mxu0 %v542
    %1360 = vmatprep.subr.bf16.mxu0 0
    %1361 = vmatpush2.bf16.msra.mxu0 %v541
    %1362 = vmatprep.subr.bf16.mxu0 0
    %1363 = vmatpush2.bf16.msra.mxu0 %v540
    %1364 = vmatprep.subr.bf16.mxu0 0
    %1365 = vmatpush2.bf16.msra.mxu0 %v539
    %1366 = vmatprep.mubr.bf16.mxu0 %v1241
    %1367 = vmatmul.mubr.bf16.gmra.mxu0 %v1227
    %v1368 = vpop.f32.mrf.mxu0
    %v1369 = vadd.f32 %v1329, %v1368
    %v1370 = vpop.f32.mrf.mxu0
    %v1371 = vpop.f32.mrf.mxu0
    %v1372 = vpop.f32.mrf.mxu0
    %1373 = vdwg.mxu0
    %1374 = vmatprep.subr.bf16.mxu0 0
    %1375 = vmatpush1.bf16.msra.mxu0 %v554
    %1376 = vmatprep.subr.bf16.mxu0 0
    %1377 = vmatpush1.bf16.msra.mxu0 %v553
    %1378 = vmatprep.subr.bf16.mxu0 0
    %1379 = vmatpush1.bf16.msra.mxu0 %v552
    %1380 = vmatprep.subr.bf16.mxu0 0
    %1381 = vmatpush1.bf16.msra.mxu0 %v551
    %1382 = vmatprep.subr.bf16.mxu0 0
    %1383 = vmatpush1.bf16.msra.mxu0 %v550
    %1384 = vmatprep.subr.bf16.mxu0 0
    %1385 = vmatpush1.bf16.msra.mxu0 %v549
    %1386 = vmatprep.subr.bf16.mxu0 0
    %1387 = vmatpush1.bf16.msra.mxu0 %v548
    %1388 = vmatprep.subr.bf16.mxu0 0
    %1389 = vmatpush1.bf16.msra.mxu0 %v547
    %1390 = vmatprep.subr.bf16.mxu0 0
    %1391 = vmatpush2.bf16.msra.mxu0 %v562
    %1392 = vmatprep.subr.bf16.mxu0 0
    %1393 = vmatpush2.bf16.msra.mxu0 %v561
    %1394 = vmatprep.subr.bf16.mxu0 0
    %1395 = vmatpush2.bf16.msra.mxu0 %v560
    %1396 = vmatprep.subr.bf16.mxu0 0
    %1397 = vmatpush2.bf16.msra.mxu0 %v559
    %1398 = vmatprep.subr.bf16.mxu0 0
    %1399 = vmatpush2.bf16.msra.mxu0 %v558
    %1400 = vmatprep.subr.bf16.mxu0 0
    %1401 = vmatpush2.bf16.msra.mxu0 %v557
    %1402 = vmatprep.subr.bf16.mxu0 0
    %1403 = vmatpush2.bf16.msra.mxu0 %v556
    %1404 = vmatprep.subr.bf16.mxu0 0
    %1405 = vmatpush2.bf16.msra.mxu0 %v555
    %1406 = vmatprep.mubr.bf16.mxu0 %v1245
    %1407 = vmatmul.mubr.bf16.gmra.mxu0 %v1243
    %v1408 = vpop.f32.mrf.mxu0
    %v1409 = vadd.f32 %v1369, %v1408
    %v1410 = vpop.f32.mrf.mxu0
    %v1411 = vpop.f32.mrf.mxu0
    %v1412 = vpop.f32.mrf.mxu0
    %1413 = vdwg.mxu0
    %v1414 = vmax.f32 %v1409, 0.0
    %v1415 = vpack.c.bf16 %v1414, %v1414
    %v1416 = vld [vmem:[%s4 + $0x80] sm:$0xff]
    %v1417 = vld [vmem:[%s4 + $0x88] sm:$0xff]
    %v1418 = vld [vmem:[%s4 + $0x90] sm:$0xff]
    %v1419 = vld [vmem:[%s4 + $0x98] sm:$0xff]
    %v1420 = vld [vmem:[%s4 + $0xa0] sm:$0xff]
    %v1421 = vld [vmem:[%s4 + $0xa8] sm:$0xff]
    %v1422 = vld [vmem:[%s4 + $0xb0] sm:$0xff]
    %v1423 = vld [vmem:[%s4 + $0xb8] sm:$0xff]
    %v1432 = vunpack.c.l.b16 %v1416
    %v1433 = vunpack.c.h.b16 %v1416
    %v1434 = vunpack.c.l.b16 %v1417
    %v1435 = vunpack.c.h.b16 %v1417
    %v1436 = vunpack.c.l.b16 %v1418
    %v1437 = vunpack.c.h.b16 %v1418
    %v1438 = vunpack.c.l.b16 %v1419
    %v1439 = vunpack.c.h.b16 %v1419
    %v1440 = vunpack.c.l.b16 %v1420
    %v1441 = vunpack.c.h.b16 %v1420
    %v1442 = vunpack.c.l.b16 %v1421
    %v1443 = vunpack.c.h.b16 %v1421
    %v1444 = vunpack.c.l.b16 %v1422
    %v1445 = vunpack.c.h.b16 %v1422
    %v1446 = vunpack.c.l.b16 %v1423
    %v1447 = vunpack.c.h.b16 %v1423
    %v1448 = vpack.c.b16 %v1434, %v1432
    %v1449 = vpack.c.b16 %v1435, %v1433
    %v1450 = vpack.c.b16 %v1438, %v1436
    %v1451 = vpack.c.b16 %v1439, %v1437
    %v1452 = vpack.c.b16 %v1442, %v1440
    %v1453 = vpack.c.b16 %v1443, %v1441
    %v1454 = vpack.c.b16 %v1446, %v1444
    %v1455 = vpack.c.b16 %v1447, %v1445
    %v1465 = vsel %vm1066, %v1415, 0
    %1467 = vmatprep.subr.bf16.mxu0 0
    %1468 = vmatpush1.bf16.msra.mxu0 0
    %1469 = vmatprep.subr.bf16.mxu0 0
    %1470 = vmatpush1.bf16.msra.mxu0 0
    %1471 = vmatprep.subr.bf16.mxu0 0
    %1472 = vmatpush1.bf16.msra.mxu0 0
    %1473 = vmatprep.subr.bf16.mxu0 0
    %1474 = vmatpush1.bf16.msra.mxu0 0
    %1475 = vmatprep.subr.bf16.mxu0 %v1455
    %1476 = vmatpush1.bf16.msra.mxu0 %v1454
    %1477 = vmatprep.subr.bf16.mxu0 %v1453
    %1478 = vmatpush1.bf16.msra.mxu0 %v1452
    %1479 = vmatprep.subr.bf16.mxu0 %v1451
    %1480 = vmatpush1.bf16.msra.mxu0 %v1450
    %1481 = vmatprep.subr.bf16.mxu0 %v1449
    %1482 = vmatpush1.bf16.msra.mxu0 %v1448
    %1483 = vmatprep.subr.bf16.mxu0 0
    %1484 = vmatpush2.bf16.msra.mxu0 0
    %1485 = vmatprep.subr.bf16.mxu0 0
    %1486 = vmatpush2.bf16.msra.mxu0 0
    %1487 = vmatprep.subr.bf16.mxu0 0
    %1488 = vmatpush2.bf16.msra.mxu0 0
    %1489 = vmatprep.subr.bf16.mxu0 0
    %1490 = vmatpush2.bf16.msra.mxu0 0
    %1491 = vmatprep.subr.bf16.mxu0 0
    %1492 = vmatpush2.bf16.msra.mxu0 0
    %1493 = vmatprep.subr.bf16.mxu0 0
    %1494 = vmatpush2.bf16.msra.mxu0 0
    %1495 = vmatprep.subr.bf16.mxu0 0
    %1496 = vmatpush2.bf16.msra.mxu0 0
    %1497 = vmatprep.subr.bf16.mxu0 0
    %1498 = vmatpush2.bf16.msra.mxu0 0
    %1499 = vmatprep.mubr.bf16.mxu0 0
    %1500 = vmatmul.mubr.bf16.gmra.mxu0 %v1465
    %v1501 = vpop.f32.mrf.mxu0
    %v1502 = vadd.f32 0.0, %v1501
    %v1503 = vpop.f32.mrf.mxu0
    %v1504 = vadd.f32 0.0, %v1503
    %v1505 = vpop.f32.mrf.mxu0
    %v1506 = vpop.f32.mrf.mxu0
    %1507 = vdwg.mxu0
    %v1508 = vadd.f32 %v1189, %v1502
    %v1509 = vadd.f32 %v1191, %v1504
    %v1510 = vld [vmem:[%s0 + $0x18] sm:$0xff]
    %v1512 = vcombine.high %v1510, %v1510
    %v1514 = vunpack.c.l.s4 1966171168
    %v1515 = vunpack.c.0.s8 %v1514
    %v1516 = vlaneseq
    %v1517 = vshrl.u32 %v1516, 7
    %v1518 = vsub.s32 %v1515, %v1517
    %v1519 = vrot.slane %v1510, %v1518
    %v1521 = vunpack.c.l.s4 1966171168
    %v1522 = vunpack.c.0.s8 %v1521
    %v1523 = vlaneseq
    %v1524 = vshrl.u32 %v1523, 7
    %v1525 = vsub.s32 %v1522, %v1524
    %v1526 = vrot.slane %v1512, %v1525
    %v1527 = vcombine.high %v1519, %v1519
    %v1528 = vcombine.high %v1526, %v1526
    %v1530 = vunpack.c.l.s4 1966171168
    %v1531 = vunpack.c.0.s8 %v1530
    %v1532 = vlaneseq
    %v1533 = vshrl.u32 %v1532, 7
    %v1534 = vsub.s32 %v1531, %v1533
    %v1535 = vrot.slane %v1519, %v1534
    %v1537 = vunpack.c.l.s4 1966171168
    %v1538 = vunpack.c.0.s8 %v1537
    %v1539 = vlaneseq
    %v1540 = vshrl.u32 %v1539, 7
    %v1541 = vsub.s32 %v1538, %v1540
    %v1542 = vrot.slane %v1526, %v1541
    %v1544 = vunpack.c.l.s4 1966171168
    %v1545 = vunpack.c.0.s8 %v1544
    %v1546 = vlaneseq
    %v1547 = vshrl.u32 %v1546, 7
    %v1548 = vsub.s32 %v1545, %v1547
    %v1549 = vrot.slane %v1527, %v1548
    %v1551 = vunpack.c.l.s4 1966171168
    %v1552 = vunpack.c.0.s8 %v1551
    %v1553 = vlaneseq
    %v1554 = vshrl.u32 %v1553, 7
    %v1555 = vsub.s32 %v1552, %v1554
    %v1556 = vrot.slane %v1528, %v1555
    %v1557 = vcombine.high %v1535, %v1535
    %v1558 = vcombine.high %v1542, %v1542
    %v1559 = vcombine.high %v1549, %v1549
    %v1560 = vcombine.high %v1556, %v1556
    %1569 = vmatprep.subr.bf16.mxu0 0
    %1570 = vmatpush1.bf16.msra.mxu0 %v506
    %1571 = vmatprep.subr.bf16.mxu0 0
    %1572 = vmatpush1.bf16.msra.mxu0 %v505
    %1573 = vmatprep.subr.bf16.mxu0 0
    %1574 = vmatpush1.bf16.msra.mxu0 %v504
    %1575 = vmatprep.subr.bf16.mxu0 0
    %1576 = vmatpush1.bf16.msra.mxu0 %v503
    %1577 = vmatprep.subr.bf16.mxu0 0
    %1578 = vmatpush1.bf16.msra.mxu0 %v502
    %1579 = vmatprep.subr.bf16.mxu0 0
    %1580 = vmatpush1.bf16.msra.mxu0 %v501
    %1581 = vmatprep.subr.bf16.mxu0 0
    %1582 = vmatpush1.bf16.msra.mxu0 %v500
    %1583 = vmatprep.subr.bf16.mxu0 0
    %1584 = vmatpush1.bf16.msra.mxu0 %v499
    %1585 = vmatprep.subr.bf16.mxu0 0
    %1586 = vmatpush2.bf16.msra.mxu0 %v514
    %1587 = vmatprep.subr.bf16.mxu0 0
    %1588 = vmatpush2.bf16.msra.mxu0 %v513
    %1589 = vmatprep.subr.bf16.mxu0 0
    %1590 = vmatpush2.bf16.msra.mxu0 %v512
    %1591 = vmatprep.subr.bf16.mxu0 0
    %1592 = vmatpush2.bf16.msra.mxu0 %v511
    %1593 = vmatprep.subr.bf16.mxu0 0
    %1594 = vmatpush2.bf16.msra.mxu0 %v510
    %1595 = vmatprep.subr.bf16.mxu0 0
    %1596 = vmatpush2.bf16.msra.mxu0 %v509
    %1597 = vmatprep.subr.bf16.mxu0 0
    %1598 = vmatpush2.bf16.msra.mxu0 %v508
    %1599 = vmatprep.subr.bf16.mxu0 0
    %1600 = vmatpush2.bf16.msra.mxu0 %v507
    %1601 = vmatprep.mubr.bf16.mxu0 %v1549
    %1602 = vmatmul.mubr.bf16.gmra.mxu0 %v1535
    %v1603 = vpop.f32.mrf.mxu0
    %v1604 = vadd.f32 %v183, %v1603
    %v1605 = vpop.f32.mrf.mxu0
    %v1606 = vpop.f32.mrf.mxu0
    %v1607 = vpop.f32.mrf.mxu0
    %1608 = vdwg.mxu0
    %1609 = vmatprep.subr.bf16.mxu0 0
    %1610 = vmatpush1.bf16.msra.mxu0 %v522
    %1611 = vmatprep.subr.bf16.mxu0 0
    %1612 = vmatpush1.bf16.msra.mxu0 %v521
    %1613 = vmatprep.subr.bf16.mxu0 0
    %1614 = vmatpush1.bf16.msra.mxu0 %v520
    %1615 = vmatprep.subr.bf16.mxu0 0
    %1616 = vmatpush1.bf16.msra.mxu0 %v519
    %1617 = vmatprep.subr.bf16.mxu0 0
    %1618 = vmatpush1.bf16.msra.mxu0 %v518
    %1619 = vmatprep.subr.bf16.mxu0 0
    %1620 = vmatpush1.bf16.msra.mxu0 %v517
    %1621 = vmatprep.subr.bf16.mxu0 0
    %1622 = vmatpush1.bf16.msra.mxu0 %v516
    %1623 = vmatprep.subr.bf16.mxu0 0
    %1624 = vmatpush1.bf16.msra.mxu0 %v515
    %1625 = vmatprep.subr.bf16.mxu0 0
    %1626 = vmatpush2.bf16.msra.mxu0 %v530
    %1627 = vmatprep.subr.bf16.mxu0 0
    %1628 = vmatpush2.bf16.msra.mxu0 %v529
    %1629 = vmatprep.subr.bf16.mxu0 0
    %1630 = vmatpush2.bf16.msra.mxu0 %v528
    %1631 = vmatprep.subr.bf16.mxu0 0
    %1632 = vmatpush2.bf16.msra.mxu0 %v527
    %1633 = vmatprep.subr.bf16.mxu0 0
    %1634 = vmatpush2.bf16.msra.mxu0 %v526
    %1635 = vmatprep.subr.bf16.mxu0 0
    %1636 = vmatpush2.bf16.msra.mxu0 %v525
    %1637 = vmatprep.subr.bf16.mxu0 0
    %1638 = vmatpush2.bf16.msra.mxu0 %v524
    %1639 = vmatprep.subr.bf16.mxu0 0
    %1640 = vmatpush2.bf16.msra.mxu0 %v523
    %1641 = vmatprep.mubr.bf16.mxu0 %v1559
    %1642 = vmatmul.mubr.bf16.gmra.mxu0 %v1557
    %v1643 = vpop.f32.mrf.mxu0
    %v1644 = vadd.f32 %v1604, %v1643
    %v1645 = vpop.f32.mrf.mxu0
    %v1646 = vpop.f32.mrf.mxu0
    %v1647 = vpop.f32.mrf.mxu0
    %1648 = vdwg.mxu0
    %1649 = vmatprep.subr.bf16.mxu0 0
    %1650 = vmatpush1.bf16.msra.mxu0 %v538
    %1651 = vmatprep.subr.bf16.mxu0 0
    %1652 = vmatpush1.bf16.msra.mxu0 %v537
    %1653 = vmatprep.subr.bf16.mxu0 0
    %1654 = vmatpush1.bf16.msra.mxu0 %v536
    %1655 = vmatprep.subr.bf16.mxu0 0
    %1656 = vmatpush1.bf16.msra.mxu0 %v535
    %1657 = vmatprep.subr.bf16.mxu0 0
    %1658 = vmatpush1.bf16.msra.mxu0 %v534
    %1659 = vmatprep.subr.bf16.mxu0 0
    %1660 = vmatpush1.bf16.msra.mxu0 %v533
    %1661 = vmatprep.subr.bf16.mxu0 0
    %1662 = vmatpush1.bf16.msra.mxu0 %v532
    %1663 = vmatprep.subr.bf16.mxu0 0
    %1664 = vmatpush1.bf16.msra.mxu0 %v531
    %1665 = vmatprep.subr.bf16.mxu0 0
    %1666 = vmatpush2.bf16.msra.mxu0 %v546
    %1667 = vmatprep.subr.bf16.mxu0 0
    %1668 = vmatpush2.bf16.msra.mxu0 %v545
    %1669 = vmatprep.subr.bf16.mxu0 0
    %1670 = vmatpush2.bf16.msra.mxu0 %v544
    %1671 = vmatprep.subr.bf16.mxu0 0
    %1672 = vmatpush2.bf16.msra.mxu0 %v543
    %1673 = vmatprep.subr.bf16.mxu0 0
    %1674 = vmatpush2.bf16.msra.mxu0 %v542
    %1675 = vmatprep.subr.bf16.mxu0 0
    %1676 = vmatpush2.bf16.msra.mxu0 %v541
    %1677 = vmatprep.subr.bf16.mxu0 0
    %1678 = vmatpush2.bf16.msra.mxu0 %v540
    %1679 = vmatprep.subr.bf16.mxu0 0
    %1680 = vmatpush2.bf16.msra.mxu0 %v539
    %1681 = vmatprep.mubr.bf16.mxu0 %v1556
    %1682 = vmatmul.mubr.bf16.gmra.mxu0 %v1542
    %v1683 = vpop.f32.mrf.mxu0
    %v1684 = vadd.f32 %v1644, %v1683
    %v1685 = vpop.f32.mrf.mxu0
    %v1686 = vpop.f32.mrf.mxu0
    %v1687 = vpop.f32.mrf.mxu0
    %1688 = vdwg.mxu0
    %1689 = vmatprep.subr.bf16.mxu0 0
    %1690 = vmatpush1.bf16.msra.mxu0 %v554
    %1691 = vmatprep.subr.bf16.mxu0 0
    %1692 = vmatpush1.bf16.msra.mxu0 %v553
    %1693 = vmatprep.subr.bf16.mxu0 0
    %1694 = vmatpush1.bf16.msra.mxu0 %v552
    %1695 = vmatprep.subr.bf16.mxu0 0
    %1696 = vmatpush1.bf16.msra.mxu0 %v551
    %1697 = vmatprep.subr.bf16.mxu0 0
    %1698 = vmatpush1.bf16.msra.mxu0 %v550
    %1699 = vmatprep.subr.bf16.mxu0 0
    %1700 = vmatpush1.bf16.msra.mxu0 %v549
    %1701 = vmatprep.subr.bf16.mxu0 0
    %1702 = vmatpush1.bf16.msra.mxu0 %v548
    %1703 = vmatprep.subr.bf16.mxu0 0
    %1704 = vmatpush1.bf16.msra.mxu0 %v547
    %1705 = vmatprep.subr.bf16.mxu0 0
    %1706 = vmatpush2.bf16.msra.mxu0 %v562
    %1707 = vmatprep.subr.bf16.mxu0 0
    %1708 = vmatpush2.bf16.msra.mxu0 %v561
    %1709 = vmatprep.subr.bf16.mxu0 0
    %1710 = vmatpush2.bf16.msra.mxu0 %v560
    %1711 = vmatprep.subr.bf16.mxu0 0
    %1712 = vmatpush2.bf16.msra.mxu0 %v559
    %1713 = vmatprep.subr.bf16.mxu0 0
    %1714 = vmatpush2.bf16.msra.mxu0 %v558
    %1715 = vmatprep.subr.bf16.mxu0 0
    %1716 = vmatpush2.bf16.msra.mxu0 %v557
    %1717 = vmatprep.subr.bf16.mxu0 0
    %1718 = vmatpush2.bf16.msra.mxu0 %v556
    %1719 = vmatprep.subr.bf16.mxu0 0
    %1720 = vmatpush2.bf16.msra.mxu0 %v555
    %1721 = vmatprep.mubr.bf16.mxu0 %v1560
    %1722 = vmatmul.mubr.bf16.gmra.mxu0 %v1558
    %v1723 = vpop.f32.mrf.mxu0
    %v1724 = vadd.f32 %v1684, %v1723
    %v1725 = vpop.f32.mrf.mxu0
    %v1726 = vpop.f32.mrf.mxu0
    %v1727 = vpop.f32.mrf.mxu0
    %1728 = vdwg.mxu0
    %v1729 = vmax.f32 %v1724, 0.0
    %v1730 = vpack.c.bf16 %v1729, %v1729
    %v1731 = vld [vmem:[%s4 + $0xc0] sm:$0xff]
    %v1732 = vld [vmem:[%s4 + $0xc8] sm:$0xff]
    %v1733 = vld [vmem:[%s4 + $0xd0] sm:$0xff]
    %v1734 = vld [vmem:[%s4 + $0xd8] sm:$0xff]
    %v1735 = vld [vmem:[%s4 + $0xe0] sm:$0xff]
    %v1736 = vld [vmem:[%s4 + $0xe8] sm:$0xff]
    %v1737 = vld [vmem:[%s4 + $0xf0] sm:$0xff]
    %v1738 = vld [vmem:[%s4 + $0xf8] sm:$0xff]
    %v1747 = vunpack.c.l.b16 %v1731
    %v1748 = vunpack.c.h.b16 %v1731
    %v1749 = vunpack.c.l.b16 %v1732
    %v1750 = vunpack.c.h.b16 %v1732
    %v1751 = vunpack.c.l.b16 %v1733
    %v1752 = vunpack.c.h.b16 %v1733
    %v1753 = vunpack.c.l.b16 %v1734
    %v1754 = vunpack.c.h.b16 %v1734
    %v1755 = vunpack.c.l.b16 %v1735
    %v1756 = vunpack.c.h.b16 %v1735
    %v1757 = vunpack.c.l.b16 %v1736
    %v1758 = vunpack.c.h.b16 %v1736
    %v1759 = vunpack.c.l.b16 %v1737
    %v1760 = vunpack.c.h.b16 %v1737
    %v1761 = vunpack.c.l.b16 %v1738
    %v1762 = vunpack.c.h.b16 %v1738
    %v1763 = vpack.c.b16 %v1749, %v1747
    %v1764 = vpack.c.b16 %v1750, %v1748
    %v1765 = vpack.c.b16 %v1753, %v1751
    %v1766 = vpack.c.b16 %v1754, %v1752
    %v1767 = vpack.c.b16 %v1757, %v1755
    %v1768 = vpack.c.b16 %v1758, %v1756
    %v1769 = vpack.c.b16 %v1761, %v1759
    %v1770 = vpack.c.b16 %v1762, %v1760
    %v1780 = vsel %vm1066, %v1730, 0
    %1782 = vmatprep.subr.bf16.mxu0 0
    %1783 = vmatpush1.bf16.msra.mxu0 0
    %1784 = vmatprep.subr.bf16.mxu0 0
    %1785 = vmatpush1.bf16.msra.mxu0 0
    %1786 = vmatprep.subr.bf16.mxu0 0
    %1787 = vmatpush1.bf16.msra.mxu0 0
    %1788 = vmatprep.subr.bf16.mxu0 0
    %1789 = vmatpush1.bf16.msra.mxu0 0
    %1790 = vmatprep.subr.bf16.mxu0 %v1770
    %1791 = vmatpush1.bf16.msra.mxu0 %v1769
    %1792 = vmatprep.subr.bf16.mxu0 %v1768
    %1793 = vmatpush1.bf16.msra.mxu0 %v1767
    %1794 = vmatprep.subr.bf16.mxu0 %v1766
    %1795 = vmatpush1.bf16.msra.mxu0 %v1765
    %1796 = vmatprep.subr.bf16.mxu0 %v1764
    %1797 = vmatpush1.bf16.msra.mxu0 %v1763
    %1798 = vmatprep.subr.bf16.mxu0 0
    %1799 = vmatpush2.bf16.msra.mxu0 0
    %1800 = vmatprep.subr.bf16.mxu0 0
    %1801 = vmatpush2.bf16.msra.mxu0 0
    %1802 = vmatprep.subr.bf16.mxu0 0
    %1803 = vmatpush2.bf16.msra.mxu0 0
    %1804 = vmatprep.subr.bf16.mxu0 0
    %1805 = vmatpush2.bf16.msra.mxu0 0
    %1806 = vmatprep.subr.bf16.mxu0 0
    %1807 = vmatpush2.bf16.msra.mxu0 0
    %1808 = vmatprep.subr.bf16.mxu0 0
    %1809 = vmatpush2.bf16.msra.mxu0 0
    %1810 = vmatprep.subr.bf16.mxu0 0
    %1811 = vmatpush2.bf16.msra.mxu0 0
    %1812 = vmatprep.subr.bf16.mxu0 0
    %1813 = vmatpush2.bf16.msra.mxu0 0
    %1814 = vmatprep.mubr.bf16.mxu0 0
    %1815 = vmatmul.mubr.bf16.gmra.mxu0 %v1780
    %v1816 = vpop.f32.mrf.mxu0
    %v1817 = vadd.f32 0.0, %v1816
    %v1818 = vpop.f32.mrf.mxu0
    %v1819 = vadd.f32 0.0, %v1818
    %v1820 = vpop.f32.mrf.mxu0
    %v1821 = vpop.f32.mrf.mxu0
    %1822 = vdwg.mxu0
    %v1823 = vadd.f32 %v1508, %v1817
    %v1824 = vadd.f32 %v1509, %v1819
    %v1825 = vld [vmem:[%s0 + $0x20] sm:$0xff]
    %v1827 = vcombine.high %v1825, %v1825
    %v1829 = vunpack.c.l.s4 1966171168
    %v1830 = vunpack.c.0.s8 %v1829
    %v1831 = vlaneseq
    %v1832 = vshrl.u32 %v1831, 7
    %v1833 = vsub.s32 %v1830, %v1832
    %v1834 = vrot.slane %v1825, %v1833
    %v1836 = vunpack.c.l.s4 1966171168
    %v1837 = vunpack.c.0.s8 %v1836
    %v1838 = vlaneseq
    %v1839 = vshrl.u32 %v1838, 7
    %v1840 = vsub.s32 %v1837, %v1839
    %v1841 = vrot.slane %v1827, %v1840
    %v1842 = vcombine.high %v1834, %v1834
    %v1843 = vcombine.high %v1841, %v1841
    %v1845 = vunpack.c.l.s4 1966171168
    %v1846 = vunpack.c.0.s8 %v1845
    %v1847 = vlaneseq
    %v1848 = vshrl.u32 %v1847, 7
    %v1849 = vsub.s32 %v1846, %v1848
    %v1850 = vrot.slane %v1834, %v1849
    %v1852 = vunpack.c.l.s4 1966171168
    %v1853 = vunpack.c.0.s8 %v1852
    %v1854 = vlaneseq
    %v1855 = vshrl.u32 %v1854, 7
    %v1856 = vsub.s32 %v1853, %v1855
    %v1857 = vrot.slane %v1841, %v1856
    %v1859 = vunpack.c.l.s4 1966171168
    %v1860 = vunpack.c.0.s8 %v1859
    %v1861 = vlaneseq
    %v1862 = vshrl.u32 %v1861, 7
    %v1863 = vsub.s32 %v1860, %v1862
    %v1864 = vrot.slane %v1842, %v1863
    %v1866 = vunpack.c.l.s4 1966171168
    %v1867 = vunpack.c.0.s8 %v1866
    %v1868 = vlaneseq
    %v1869 = vshrl.u32 %v1868, 7
    %v1870 = vsub.s32 %v1867, %v1869
    %v1871 = vrot.slane %v1843, %v1870
    %v1872 = vcombine.high %v1850, %v1850
    %v1873 = vcombine.high %v1857, %v1857
    %v1874 = vcombine.high %v1864, %v1864
    %v1875 = vcombine.high %v1871, %v1871
    %1884 = vmatprep.subr.bf16.mxu0 0
    %1885 = vmatpush1.bf16.msra.mxu0 %v506
    %1886 = vmatprep.subr.bf16.mxu0 0
    %1887 = vmatpush1.bf16.msra.mxu0 %v505
    %1888 = vmatprep.subr.bf16.mxu0 0
    %1889 = vmatpush1.bf16.msra.mxu0 %v504
    %1890 = vmatprep.subr.bf16.mxu0 0
    %1891 = vmatpush1.bf16.msra.mxu0 %v503
    %1892 = vmatprep.subr.bf16.mxu0 0
    %1893 = vmatpush1.bf16.msra.mxu0 %v502
    %1894 = vmatprep.subr.bf16.mxu0 0
    %1895 = vmatpush1.bf16.msra.mxu0 %v501
    %1896 = vmatprep.subr.bf16.mxu0 0
    %1897 = vmatpush1.bf16.msra.mxu0 %v500
    %1898 = vmatprep.subr.bf16.mxu0 0
    %1899 = vmatpush1.bf16.msra.mxu0 %v499
    %1900 = vmatprep.subr.bf16.mxu0 0
    %1901 = vmatpush2.bf16.msra.mxu0 %v514
    %1902 = vmatprep.subr.bf16.mxu0 0
    %1903 = vmatpush2.bf16.msra.mxu0 %v513
    %1904 = vmatprep.subr.bf16.mxu0 0
    %1905 = vmatpush2.bf16.msra.mxu0 %v512
    %1906 = vmatprep.subr.bf16.mxu0 0
    %1907 = vmatpush2.bf16.msra.mxu0 %v511
    %1908 = vmatprep.subr.bf16.mxu0 0
    %1909 = vmatpush2.bf16.msra.mxu0 %v510
    %1910 = vmatprep.subr.bf16.mxu0 0
    %1911 = vmatpush2.bf16.msra.mxu0 %v509
    %1912 = vmatprep.subr.bf16.mxu0 0
    %1913 = vmatpush2.bf16.msra.mxu0 %v508
    %1914 = vmatprep.subr.bf16.mxu0 0
    %1915 = vmatpush2.bf16.msra.mxu0 %v507
    %1916 = vmatprep.mubr.bf16.mxu0 %v1864
    %1917 = vmatmul.mubr.bf16.gmra.mxu0 %v1850
    %v1918 = vpop.f32.mrf.mxu0
    %v1919 = vadd.f32 %v183, %v1918
    %v1920 = vpop.f32.mrf.mxu0
    %v1921 = vpop.f32.mrf.mxu0
    %v1922 = vpop.f32.mrf.mxu0
    %1923 = vdwg.mxu0
    %1924 = vmatprep.subr.bf16.mxu0 0
    %1925 = vmatpush1.bf16.msra.mxu0 %v522
    %1926 = vmatprep.subr.bf16.mxu0 0
    %1927 = vmatpush1.bf16.msra.mxu0 %v521
    %1928 = vmatprep.subr.bf16.mxu0 0
    %1929 = vmatpush1.bf16.msra.mxu0 %v520
    %1930 = vmatprep.subr.bf16.mxu0 0
    %1931 = vmatpush1.bf16.msra.mxu0 %v519
    %1932 = vmatprep.subr.bf16.mxu0 0
    %1933 = vmatpush1.bf16.msra.mxu0 %v518
    %1934 = vmatprep.subr.bf16.mxu0 0
    %1935 = vmatpush1.bf16.msra.mxu0 %v517
    %1936 = vmatprep.subr.bf16.mxu0 0
    %1937 = vmatpush1.bf16.msra.mxu0 %v516
    %1938 = vmatprep.subr.bf16.mxu0 0
    %1939 = vmatpush1.bf16.msra.mxu0 %v515
    %1940 = vmatprep.subr.bf16.mxu0 0
    %1941 = vmatpush2.bf16.msra.mxu0 %v530
    %1942 = vmatprep.subr.bf16.mxu0 0
    %1943 = vmatpush2.bf16.msra.mxu0 %v529
    %1944 = vmatprep.subr.bf16.mxu0 0
    %1945 = vmatpush2.bf16.msra.mxu0 %v528
    %1946 = vmatprep.subr.bf16.mxu0 0
    %1947 = vmatpush2.bf16.msra.mxu0 %v527
    %1948 = vmatprep.subr.bf16.mxu0 0
    %1949 = vmatpush2.bf16.msra.mxu0 %v526
    %1950 = vmatprep.subr.bf16.mxu0 0
    %1951 = vmatpush2.bf16.msra.mxu0 %v525
    %1952 = vmatprep.subr.bf16.mxu0 0
    %1953 = vmatpush2.bf16.msra.mxu0 %v524
    %1954 = vmatprep.subr.bf16.mxu0 0
    %1955 = vmatpush2.bf16.msra.mxu0 %v523
    %1956 = vmatprep.mubr.bf16.mxu0 %v1874
    %1957 = vmatmul.mubr.bf16.gmra.mxu0 %v1872
    %v1958 = vpop.f32.mrf.mxu0
    %v1959 = vadd.f32 %v1919, %v1958
    %v1960 = vpop.f32.mrf.mxu0
    %v1961 = vpop.f32.mrf.mxu0
    %v1962 = vpop.f32.mrf.mxu0
    %1963 = vdwg.mxu0
    %1964 = vmatprep.subr.bf16.mxu0 0
    %1965 = vmatpush1.bf16.msra.mxu0 %v538
    %1966 = vmatprep.subr.bf16.mxu0 0
    %1967 = vmatpush1.bf16.msra.mxu0 %v537
    %1968 = vmatprep.subr.bf16.mxu0 0
    %1969 = vmatpush1.bf16.msra.mxu0 %v536
    %1970 = vmatprep.subr.bf16.mxu0 0
    %1971 = vmatpush1.bf16.msra.mxu0 %v535
    %1972 = vmatprep.subr.bf16.mxu0 0
    %1973 = vmatpush1.bf16.msra.mxu0 %v534
    %1974 = vmatprep.subr.bf16.mxu0 0
    %1975 = vmatpush1.bf16.msra.mxu0 %v533
    %1976 = vmatprep.subr.bf16.mxu0 0
    %1977 = vmatpush1.bf16.msra.mxu0 %v532
    %1978 = vmatprep.subr.bf16.mxu0 0
    %1979 = vmatpush1.bf16.msra.mxu0 %v531
    %1980 = vmatprep.subr.bf16.mxu0 0
    %1981 = vmatpush2.bf16.msra.mxu0 %v546
    %1982 = vmatprep.subr.bf16.mxu0 0
    %1983 = vmatpush2.bf16.msra.mxu0 %v545
    %1984 = vmatprep.subr.bf16.mxu0 0
    %1985 = vmatpush2.bf16.msra.mxu0 %v544
    %1986 = vmatprep.subr.bf16.mxu0 0
    %1987 = vmatpush2.bf16.msra.mxu0 %v543
    %1988 = vmatprep.subr.bf16.mxu0 0
    %1989 = vmatpush2.bf16.msra.mxu0 %v542
    %1990 = vmatprep.subr.bf16.mxu0 0
    %1991 = vmatpush2.bf16.msra.mxu0 %v541
    %1992 = vmatprep.subr.bf16.mxu0 0
    %1993 = vmatpush2.bf16.msra.mxu0 %v540
    %1994 = vmatprep.subr.bf16.mxu0 0
    %1995 = vmatpush2.bf16.msra.mxu0 %v539
    %1996 = vmatprep.mubr.bf16.mxu0 %v1871
    %1997 = vmatmul.mubr.bf16.gmra.mxu0 %v1857
    %v1998 = vpop.f32.mrf.mxu0
    %v1999 = vadd.f32 %v1959, %v1998
    %v2000 = vpop.f32.mrf.mxu0
    %v2001 = vpop.f32.mrf.mxu0
    %v2002 = vpop.f32.mrf.mxu0
    %2003 = vdwg.mxu0
    %2004 = vmatprep.subr.bf16.mxu0 0
    %2005 = vmatpush1.bf16.msra.mxu0 %v554
    %2006 = vmatprep.subr.bf16.mxu0 0
    %2007 = vmatpush1.bf16.msra.mxu0 %v553
    %2008 = vmatprep.subr.bf16.mxu0 0
    %2009 = vmatpush1.bf16.msra.mxu0 %v552
    %2010 = vmatprep.subr.bf16.mxu0 0
    %2011 = vmatpush1.bf16.msra.mxu0 %v551
    %2012 = vmatprep.subr.bf16.mxu0 0
    %2013 = vmatpush1.bf16.msra.mxu0 %v550
    %2014 = vmatprep.subr.bf16.mxu0 0
    %2015 = vmatpush1.bf16.msra.mxu0 %v549
    %2016 = vmatprep.subr.bf16.mxu0 0
    %2017 = vmatpush1.bf16.msra.mxu0 %v548
    %2018 = vmatprep.subr.bf16.mxu0 0
    %2019 = vmatpush1.bf16.msra.mxu0 %v547
    %2020 = vmatprep.subr.bf16.mxu0 0
    %2021 = vmatpush2.bf16.msra.mxu0 %v562
    %2022 = vmatprep.subr.bf16.mxu0 0
    %2023 = vmatpush2.bf16.msra.mxu0 %v561
    %2024 = vmatprep.subr.bf16.mxu0 0
    %2025 = vmatpush2.bf16.msra.mxu0 %v560
    %2026 = vmatprep.subr.bf16.mxu0 0
    %2027 = vmatpush2.bf16.msra.mxu0 %v559
    %2028 = vmatprep.subr.bf16.mxu0 0
    %2029 = vmatpush2.bf16.msra.mxu0 %v558
    %2030 = vmatprep.subr.bf16.mxu0 0
    %2031 = vmatpush2.bf16.msra.mxu0 %v557
    %2032 = vmatprep.subr.bf16.mxu0 0
    %2033 = vmatpush2.bf16.msra.mxu0 %v556
    %2034 = vmatprep.subr.bf16.mxu0 0
    %2035 = vmatpush2.bf16.msra.mxu0 %v555
    %2036 = vmatprep.mubr.bf16.mxu0 %v1875
    %2037 = vmatmul.mubr.bf16.gmra.mxu0 %v1873
    %v2038 = vpop.f32.mrf.mxu0
    %v2039 = vadd.f32 %v1999, %v2038
    %v2040 = vpop.f32.mrf.mxu0
    %v2041 = vpop.f32.mrf.mxu0
    %v2042 = vpop.f32.mrf.mxu0
    %2043 = vdwg.mxu0
    %v2044 = vmax.f32 %v2039, 0.0
    %v2045 = vpack.c.bf16 %v2044, %v2044
    %v2046 = vld [vmem:[%s4 + $0x100] sm:$0xff]
    %v2047 = vld [vmem:[%s4 + $0x108] sm:$0xff]
    %v2048 = vld [vmem:[%s4 + $0x110] sm:$0xff]
    %v2049 = vld [vmem:[%s4 + $0x118] sm:$0xff]
    %v2050 = vld [vmem:[%s4 + $0x120] sm:$0xff]
    %v2051 = vld [vmem:[%s4 + $0x128] sm:$0xff]
    %v2052 = vld [vmem:[%s4 + $0x130] sm:$0xff]
    %v2053 = vld [vmem:[%s4 + $0x138] sm:$0xff]
    %v2062 = vunpack.c.l.b16 %v2046
    %v2063 = vunpack.c.h.b16 %v2046
    %v2064 = vunpack.c.l.b16 %v2047
    %v2065 = vunpack.c.h.b16 %v2047
    %v2066 = vunpack.c.l.b16 %v2048
    %v2067 = vunpack.c.h.b16 %v2048
    %v2068 = vunpack.c.l.b16 %v2049
    %v2069 = vunpack.c.h.b16 %v2049
    %v2070 = vunpack.c.l.b16 %v2050
    %v2071 = vunpack.c.h.b16 %v2050
    %v2072 = vunpack.c.l.b16 %v2051
    %v2073 = vunpack.c.h.b16 %v2051
    %v2074 = vunpack.c.l.b16 %v2052
    %v2075 = vunpack.c.h.b16 %v2052
    %v2076 = vunpack.c.l.b16 %v2053
    %v2077 = vunpack.c.h.b16 %v2053
    %v2078 = vpack.c.b16 %v2064, %v2062
    %v2079 = vpack.c.b16 %v2065, %v2063
    %v2080 = vpack.c.b16 %v2068, %v2066
    %v2081 = vpack.c.b16 %v2069, %v2067
    %v2082 = vpack.c.b16 %v2072, %v2070
    %v2083 = vpack.c.b16 %v2073, %v2071
    %v2084 = vpack.c.b16 %v2076, %v2074
    %v2085 = vpack.c.b16 %v2077, %v2075
    %v2095 = vsel %vm1066, %v2045, 0
    %2097 = vmatprep.subr.bf16.mxu0 0
    %2098 = vmatpush1.bf16.msra.mxu0 0
    %2099 = vmatprep.subr.bf16.mxu0 0
    %2100 = vmatpush1.bf16.msra.mxu0 0
    %2101 = vmatprep.subr.bf16.mxu0 0
    %2102 = vmatpush1.bf16.msra.mxu0 0
    %2103 = vmatprep.subr.bf16.mxu0 0
    %2104 = vmatpush1.bf16.msra.mxu0 0
    %2105 = vmatprep.subr.bf16.mxu0 %v2085
    %2106 = vmatpush1.bf16.msra.mxu0 %v2084
    %2107 = vmatprep.subr.bf16.mxu0 %v2083
    %2108 = vmatpush1.bf16.msra.mxu0 %v2082
    %2109 = vmatprep.subr.bf16.mxu0 %v2081
    %2110 = vmatpush1.bf16.msra.mxu0 %v2080
    %2111 = vmatprep.subr.bf16.mxu0 %v2079
    %2112 = vmatpush1.bf16.msra.mxu0 %v2078
    %2113 = vmatprep.subr.bf16.mxu0 0
    %2114 = vmatpush2.bf16.msra.mxu0 0
    %2115 = vmatprep.subr.bf16.mxu0 0
    %2116 = vmatpush2.bf16.msra.mxu0 0
    %2117 = vmatprep.subr.bf16.mxu0 0
    %2118 = vmatpush2.bf16.msra.mxu0 0
    %2119 = vmatprep.subr.bf16.mxu0 0
    %2120 = vmatpush2.bf16.msra.mxu0 0
    %2121 = vmatprep.subr.bf16.mxu0 0
    %2122 = vmatpush2.bf16.msra.mxu0 0
    %2123 = vmatprep.subr.bf16.mxu0 0
    %2124 = vmatpush2.bf16.msra.mxu0 0
    %2125 = vmatprep.subr.bf16.mxu0 0
    %2126 = vmatpush2.bf16.msra.mxu0 0
    %2127 = vmatprep.subr.bf16.mxu0 0
    %2128 = vmatpush2.bf16.msra.mxu0 0
    %2129 = vmatprep.mubr.bf16.mxu0 0
    %2130 = vmatmul.mubr.bf16.gmra.mxu0 %v2095
    %v2131 = vpop.f32.mrf.mxu0
    %v2132 = vadd.f32 0.0, %v2131
    %v2133 = vpop.f32.mrf.mxu0
    %v2134 = vadd.f32 0.0, %v2133
    %v2135 = vpop.f32.mrf.mxu0
    %v2136 = vpop.f32.mrf.mxu0
    %2137 = vdwg.mxu0
    %v2138 = vadd.f32 %v1823, %v2132
    %v2139 = vadd.f32 %v1824, %v2134
    %v2140 = vld [vmem:[%s0 + $0x28] sm:$0xff]
    %v2142 = vcombine.high %v2140, %v2140
    %v2144 = vunpack.c.l.s4 1966171168
    %v2145 = vunpack.c.0.s8 %v2144
    %v2146 = vlaneseq
    %v2147 = vshrl.u32 %v2146, 7
    %v2148 = vsub.s32 %v2145, %v2147
    %v2149 = vrot.slane %v2140, %v2148
    %v2151 = vunpack.c.l.s4 1966171168
    %v2152 = vunpack.c.0.s8 %v2151
    %v2153 = vlaneseq
    %v2154 = vshrl.u32 %v2153, 7
    %v2155 = vsub.s32 %v2152, %v2154
    %v2156 = vrot.slane %v2142, %v2155
    %v2157 = vcombine.high %v2149, %v2149
    %v2158 = vcombine.high %v2156, %v2156
    %v2160 = vunpack.c.l.s4 1966171168
    %v2161 = vunpack.c.0.s8 %v2160
    %v2162 = vlaneseq
    %v2163 = vshrl.u32 %v2162, 7
    %v2164 = vsub.s32 %v2161, %v2163
    %v2165 = vrot.slane %v2149, %v2164
    %v2167 = vunpack.c.l.s4 1966171168
    %v2168 = vunpack.c.0.s8 %v2167
    %v2169 = vlaneseq
    %v2170 = vshrl.u32 %v2169, 7
    %v2171 = vsub.s32 %v2168, %v2170
    %v2172 = vrot.slane %v2156, %v2171
    %v2174 = vunpack.c.l.s4 1966171168
    %v2175 = vunpack.c.0.s8 %v2174
    %v2176 = vlaneseq
    %v2177 = vshrl.u32 %v2176, 7
    %v2178 = vsub.s32 %v2175, %v2177
    %v2179 = vrot.slane %v2157, %v2178
    %v2181 = vunpack.c.l.s4 1966171168
    %v2182 = vunpack.c.0.s8 %v2181
    %v2183 = vlaneseq
    %v2184 = vshrl.u32 %v2183, 7
    %v2185 = vsub.s32 %v2182, %v2184
    %v2186 = vrot.slane %v2158, %v2185
    %v2187 = vcombine.high %v2165, %v2165
    %v2188 = vcombine.high %v2172, %v2172
    %v2189 = vcombine.high %v2179, %v2179
    %v2190 = vcombine.high %v2186, %v2186
    %2199 = vmatprep.subr.bf16.mxu0 0
    %2200 = vmatpush1.bf16.msra.mxu0 %v506
    %2201 = vmatprep.subr.bf16.mxu0 0
    %2202 = vmatpush1.bf16.msra.mxu0 %v505
    %2203 = vmatprep.subr.bf16.mxu0 0
    %2204 = vmatpush1.bf16.msra.mxu0 %v504
    %2205 = vmatprep.subr.bf16.mxu0 0
    %2206 = vmatpush1.bf16.msra.mxu0 %v503
    %2207 = vmatprep.subr.bf16.mxu0 0
    %2208 = vmatpush1.bf16.msra.mxu0 %v502
    %2209 = vmatprep.subr.bf16.mxu0 0
    %2210 = vmatpush1.bf16.msra.mxu0 %v501
    %2211 = vmatprep.subr.bf16.mxu0 0
    %2212 = vmatpush1.bf16.msra.mxu0 %v500
    %2213 = vmatprep.subr.bf16.mxu0 0
    %2214 = vmatpush1.bf16.msra.mxu0 %v499
    %2215 = vmatprep.subr.bf16.mxu0 0
    %2216 = vmatpush2.bf16.msra.mxu0 %v514
    %2217 = vmatprep.subr.bf16.mxu0 0
    %2218 = vmatpush2.bf16.msra.mxu0 %v513
    %2219 = vmatprep.subr.bf16.mxu0 0
    %2220 = vmatpush2.bf16.msra.mxu0 %v512
    %2221 = vmatprep.subr.bf16.mxu0 0
    %2222 = vmatpush2.bf16.msra.mxu0 %v511
    %2223 = vmatprep.subr.bf16.mxu0 0
    %2224 = vmatpush2.bf16.msra.mxu0 %v510
    %2225 = vmatprep.subr.bf16.mxu0 0
    %2226 = vmatpush2.bf16.msra.mxu0 %v509
    %2227 = vmatprep.subr.bf16.mxu0 0
    %2228 = vmatpush2.bf16.msra.mxu0 %v508
    %2229 = vmatprep.subr.bf16.mxu0 0
    %2230 = vmatpush2.bf16.msra.mxu0 %v507
    %2231 = vmatprep.mubr.bf16.mxu0 %v2179
    %2232 = vmatmul.mubr.bf16.gmra.mxu0 %v2165
    %v2233 = vpop.f32.mrf.mxu0
    %v2234 = vadd.f32 %v183, %v2233
    %v2235 = vpop.f32.mrf.mxu0
    %v2236 = vpop.f32.mrf.mxu0
    %v2237 = vpop.f32.mrf.mxu0
    %2238 = vdwg.mxu0
    %2239 = vmatprep.subr.bf16.mxu0 0
    %2240 = vmatpush1.bf16.msra.mxu0 %v522
    %2241 = vmatprep.subr.bf16.mxu0 0
    %2242 = vmatpush1.bf16.msra.mxu0 %v521
    %2243 = vmatprep.subr.bf16.mxu0 0
    %2244 = vmatpush1.bf16.msra.mxu0 %v520
    %2245 = vmatprep.subr.bf16.mxu0 0
    %2246 = vmatpush1.bf16.msra.mxu0 %v519
    %2247 = vmatprep.subr.bf16.mxu0 0
    %2248 = vmatpush1.bf16.msra.mxu0 %v518
    %2249 = vmatprep.subr.bf16.mxu0 0
    %2250 = vmatpush1.bf16.msra.mxu0 %v517
    %2251 = vmatprep.subr.bf16.mxu0 0
    %2252 = vmatpush1.bf16.msra.mxu0 %v516
    %2253 = vmatprep.subr.bf16.mxu0 0
    %2254 = vmatpush1.bf16.msra.mxu0 %v515
    %2255 = vmatprep.subr.bf16.mxu0 0
    %2256 = vmatpush2.bf16.msra.mxu0 %v530
    %2257 = vmatprep.subr.bf16.mxu0 0
    %2258 = vmatpush2.bf16.msra.mxu0 %v529
    %2259 = vmatprep.subr.bf16.mxu0 0
    %2260 = vmatpush2.bf16.msra.mxu0 %v528
    %2261 = vmatprep.subr.bf16.mxu0 0
    %2262 = vmatpush2.bf16.msra.mxu0 %v527
    %2263 = vmatprep.subr.bf16.mxu0 0
    %2264 = vmatpush2.bf16.msra.mxu0 %v526
    %2265 = vmatprep.subr.bf16.mxu0 0
    %2266 = vmatpush2.bf16.msra.mxu0 %v525
    %2267 = vmatprep.subr.bf16.mxu0 0
    %2268 = vmatpush2.bf16.msra.mxu0 %v524
    %2269 = vmatprep.subr.bf16.mxu0 0
    %2270 = vmatpush2.bf16.msra.mxu0 %v523
    %2271 = vmatprep.mubr.bf16.mxu0 %v2189
    %2272 = vmatmul.mubr.bf16.gmra.mxu0 %v2187
    %v2273 = vpop.f32.mrf.mxu0
    %v2274 = vadd.f32 %v2234, %v2273
    %v2275 = vpop.f32.mrf.mxu0
    %v2276 = vpop.f32.mrf.mxu0
    %v2277 = vpop.f32.mrf.mxu0
    %2278 = vdwg.mxu0
    %2279 = vmatprep.subr.bf16.mxu0 0
    %2280 = vmatpush1.bf16.msra.mxu0 %v538
    %2281 = vmatprep.subr.bf16.mxu0 0
    %2282 = vmatpush1.bf16.msra.mxu0 %v537
    %2283 = vmatprep.subr.bf16.mxu0 0
    %2284 = vmatpush1.bf16.msra.mxu0 %v536
    %2285 = vmatprep.subr.bf16.mxu0 0
    %2286 = vmatpush1.bf16.msra.mxu0 %v535
    %2287 = vmatprep.subr.bf16.mxu0 0
    %2288 = vmatpush1.bf16.msra.mxu0 %v534
    %2289 = vmatprep.subr.bf16.mxu0 0
    %2290 = vmatpush1.bf16.msra.mxu0 %v533
    %2291 = vmatprep.subr.bf16.mxu0 0
    %2292 = vmatpush1.bf16.msra.mxu0 %v532
    %2293 = vmatprep.subr.bf16.mxu0 0
    %2294 = vmatpush1.bf16.msra.mxu0 %v531
    %2295 = vmatprep.subr.bf16.mxu0 0
    %2296 = vmatpush2.bf16.msra.mxu0 %v546
    %2297 = vmatprep.subr.bf16.mxu0 0
    %2298 = vmatpush2.bf16.msra.mxu0 %v545
    %2299 = vmatprep.subr.bf16.mxu0 0
    %2300 = vmatpush2.bf16.msra.mxu0 %v544
    %2301 = vmatprep.subr.bf16.mxu0 0
    %2302 = vmatpush2.bf16.msra.mxu0 %v543
    %2303 = vmatprep.subr.bf16.mxu0 0
    %2304 = vmatpush2.bf16.msra.mxu0 %v542
    %2305 = vmatprep.subr.bf16.mxu0 0
    %2306 = vmatpush2.bf16.msra.mxu0 %v541
    %2307 = vmatprep.subr.bf16.mxu0 0
    %2308 = vmatpush2.bf16.msra.mxu0 %v540
    %2309 = vmatprep.subr.bf16.mxu0 0
    %2310 = vmatpush2.bf16.msra.mxu0 %v539
    %2311 = vmatprep.mubr.bf16.mxu0 %v2186
    %2312 = vmatmul.mubr.bf16.gmra.mxu0 %v2172
    %v2313 = vpop.f32.mrf.mxu0
    %v2314 = vadd.f32 %v2274, %v2313
    %v2315 = vpop.f32.mrf.mxu0
    %v2316 = vpop.f32.mrf.mxu0
    %v2317 = vpop.f32.mrf.mxu0
    %2318 = vdwg.mxu0
    %2319 = vmatprep.subr.bf16.mxu0 0
    %2320 = vmatpush1.bf16.msra.mxu0 %v554
    %2321 = vmatprep.subr.bf16.mxu0 0
    %2322 = vmatpush1.bf16.msra.mxu0 %v553
    %2323 = vmatprep.subr.bf16.mxu0 0
    %2324 = vmatpush1.bf16.msra.mxu0 %v552
    %2325 = vmatprep.subr.bf16.mxu0 0
    %2326 = vmatpush1.bf16.msra.mxu0 %v551
    %2327 = vmatprep.subr.bf16.mxu0 0
    %2328 = vmatpush1.bf16.msra.mxu0 %v550
    %2329 = vmatprep.subr.bf16.mxu0 0
    %2330 = vmatpush1.bf16.msra.mxu0 %v549
    %2331 = vmatprep.subr.bf16.mxu0 0
    %2332 = vmatpush1.bf16.msra.mxu0 %v548
    %2333 = vmatprep.subr.bf16.mxu0 0
    %2334 = vmatpush1.bf16.msra.mxu0 %v547
    %2335 = vmatprep.subr.bf16.mxu0 0
    %2336 = vmatpush2.bf16.msra.mxu0 %v562
    %2337 = vmatprep.subr.bf16.mxu0 0
    %2338 = vmatpush2.bf16.msra.mxu0 %v561
    %2339 = vmatprep.subr.bf16.mxu0 0
    %2340 = vmatpush2.bf16.msra.mxu0 %v560
    %2341 = vmatprep.subr.bf16.mxu0 0
    %2342 = vmatpush2.bf16.msra.mxu0 %v559
    %2343 = vmatprep.subr.bf16.mxu0 0
    %2344 = vmatpush2.bf16.msra.mxu0 %v558
    %2345 = vmatprep.subr.bf16.mxu0 0
    %2346 = vmatpush2.bf16.msra.mxu0 %v557
    %2347 = vmatprep.subr.bf16.mxu0 0
    %2348 = vmatpush2.bf16.msra.mxu0 %v556
    %2349 = vmatprep.subr.bf16.mxu0 0
    %2350 = vmatpush2.bf16.msra.mxu0 %v555
    %2351 = vmatprep.mubr.bf16.mxu0 %v2190
    %2352 = vmatmul.mubr.bf16.gmra.mxu0 %v2188
    %v2353 = vpop.f32.mrf.mxu0
    %v2354 = vadd.f32 %v2314, %v2353
    %v2355 = vpop.f32.mrf.mxu0
    %v2356 = vpop.f32.mrf.mxu0
    %v2357 = vpop.f32.mrf.mxu0
    %2358 = vdwg.mxu0
    %v2359 = vmax.f32 %v2354, 0.0
    %v2360 = vpack.c.bf16 %v2359, %v2359
    %v2361 = vld [vmem:[%s4 + $0x140] sm:$0xff]
    %v2362 = vld [vmem:[%s4 + $0x148] sm:$0xff]
    %v2363 = vld [vmem:[%s4 + $0x150] sm:$0xff]
    %v2364 = vld [vmem:[%s4 + $0x158] sm:$0xff]
    %v2365 = vld [vmem:[%s4 + $0x160] sm:$0xff]
    %v2366 = vld [vmem:[%s4 + $0x168] sm:$0xff]
    %v2367 = vld [vmem:[%s4 + $0x170] sm:$0xff]
    %v2368 = vld [vmem:[%s4 + $0x178] sm:$0xff]
    %v2377 = vunpack.c.l.b16 %v2361
    %v2378 = vunpack.c.h.b16 %v2361
    %v2379 = vunpack.c.l.b16 %v2362
    %v2380 = vunpack.c.h.b16 %v2362
    %v2381 = vunpack.c.l.b16 %v2363
    %v2382 = vunpack.c.h.b16 %v2363
    %v2383 = vunpack.c.l.b16 %v2364
    %v2384 = vunpack.c.h.b16 %v2364
    %v2385 = vunpack.c.l.b16 %v2365
    %v2386 = vunpack.c.h.b16 %v2365
    %v2387 = vunpack.c.l.b16 %v2366
    %v2388 = vunpack.c.h.b16 %v2366
    %v2389 = vunpack.c.l.b16 %v2367
    %v2390 = vunpack.c.h.b16 %v2367
    %v2391 = vunpack.c.l.b16 %v2368
    %v2392 = vunpack.c.h.b16 %v2368
    %v2393 = vpack.c.b16 %v2379, %v2377
    %v2394 = vpack.c.b16 %v2380, %v2378
    %v2395 = vpack.c.b16 %v2383, %v2381
    %v2396 = vpack.c.b16 %v2384, %v2382
    %v2397 = vpack.c.b16 %v2387, %v2385
    %v2398 = vpack.c.b16 %v2388, %v2386
    %v2399 = vpack.c.b16 %v2391, %v2389
    %v2400 = vpack.c.b16 %v2392, %v2390
    %v2410 = vsel %vm1066, %v2360, 0
    %2412 = vmatprep.subr.bf16.mxu0 0
    %2413 = vmatpush1.bf16.msra.mxu0 0
    %2414 = vmatprep.subr.bf16.mxu0 0
    %2415 = vmatpush1.bf16.msra.mxu0 0
    %2416 = vmatprep.subr.bf16.mxu0 0
    %2417 = vmatpush1.bf16.msra.mxu0 0
    %2418 = vmatprep.subr.bf16.mxu0 0
    %2419 = vmatpush1.bf16.msra.mxu0 0
    %2420 = vmatprep.subr.bf16.mxu0 %v2400
    %2421 = vmatpush1.bf16.msra.mxu0 %v2399
    %2422 = vmatprep.subr.bf16.mxu0 %v2398
    %2423 = vmatpush1.bf16.msra.mxu0 %v2397
    %2424 = vmatprep.subr.bf16.mxu0 %v2396
    %2425 = vmatpush1.bf16.msra.mxu0 %v2395
    %2426 = vmatprep.subr.bf16.mxu0 %v2394
    %2427 = vmatpush1.bf16.msra.mxu0 %v2393
    %2428 = vmatprep.subr.bf16.mxu0 0
    %2429 = vmatpush2.bf16.msra.mxu0 0
    %2430 = vmatprep.subr.bf16.mxu0 0
    %2431 = vmatpush2.bf16.msra.mxu0 0
    %2432 = vmatprep.subr.bf16.mxu0 0
    %2433 = vmatpush2.bf16.msra.mxu0 0
    %2434 = vmatprep.subr.bf16.mxu0 0
    %2435 = vmatpush2.bf16.msra.mxu0 0
    %2436 = vmatprep.subr.bf16.mxu0 0
    %2437 = vmatpush2.bf16.msra.mxu0 0
    %2438 = vmatprep.subr.bf16.mxu0 0
    %2439 = vmatpush2.bf16.msra.mxu0 0
    %2440 = vmatprep.subr.bf16.mxu0 0
    %2441 = vmatpush2.bf16.msra.mxu0 0
    %2442 = vmatprep.subr.bf16.mxu0 0
    %2443 = vmatpush2.bf16.msra.mxu0 0
    %2444 = vmatprep.mubr.bf16.mxu0 0
    %2445 = vmatmul.mubr.bf16.gmra.mxu0 %v2410
    %v2446 = vpop.f32.mrf.mxu0
    %v2447 = vadd.f32 0.0, %v2446
    %v2448 = vpop.f32.mrf.mxu0
    %v2449 = vadd.f32 0.0, %v2448
    %v2450 = vpop.f32.mrf.mxu0
    %v2451 = vpop.f32.mrf.mxu0
    %2452 = vdwg.mxu0
    %v2453 = vadd.f32 %v2138, %v2447
    %v2454 = vadd.f32 %v2139, %v2449
    %v2455 = vld [vmem:[%s0 + $0x30] sm:$0xff]
    %v2457 = vcombine.high %v2455, %v2455
    %v2459 = vunpack.c.l.s4 1966171168
    %v2460 = vunpack.c.0.s8 %v2459
    %v2461 = vlaneseq
    %v2462 = vshrl.u32 %v2461, 7
    %v2463 = vsub.s32 %v2460, %v2462
    %v2464 = vrot.slane %v2455, %v2463
    %v2466 = vunpack.c.l.s4 1966171168
    %v2467 = vunpack.c.0.s8 %v2466
    %v2468 = vlaneseq
    %v2469 = vshrl.u32 %v2468, 7
    %v2470 = vsub.s32 %v2467, %v2469
    %v2471 = vrot.slane %v2457, %v2470
    %v2472 = vcombine.high %v2464, %v2464
    %v2473 = vcombine.high %v2471, %v2471
    %v2475 = vunpack.c.l.s4 1966171168
    %v2476 = vunpack.c.0.s8 %v2475
    %v2477 = vlaneseq
    %v2478 = vshrl.u32 %v2477, 7
    %v2479 = vsub.s32 %v2476, %v2478
    %v2480 = vrot.slane %v2464, %v2479
    %v2482 = vunpack.c.l.s4 1966171168
    %v2483 = vunpack.c.0.s8 %v2482
    %v2484 = vlaneseq
    %v2485 = vshrl.u32 %v2484, 7
    %v2486 = vsub.s32 %v2483, %v2485
    %v2487 = vrot.slane %v2471, %v2486
    %v2489 = vunpack.c.l.s4 1966171168
    %v2490 = vunpack.c.0.s8 %v2489
    %v2491 = vlaneseq
    %v2492 = vshrl.u32 %v2491, 7
    %v2493 = vsub.s32 %v2490, %v2492
    %v2494 = vrot.slane %v2472, %v2493
    %v2496 = vunpack.c.l.s4 1966171168
    %v2497 = vunpack.c.0.s8 %v2496
    %v2498 = vlaneseq
    %v2499 = vshrl.u32 %v2498, 7
    %v2500 = vsub.s32 %v2497, %v2499
    %v2501 = vrot.slane %v2473, %v2500
    %v2502 = vcombine.high %v2480, %v2480
    %v2503 = vcombine.high %v2487, %v2487
    %v2504 = vcombine.high %v2494, %v2494
    %v2505 = vcombine.high %v2501, %v2501
    %2514 = vmatprep.subr.bf16.mxu0 0
    %2515 = vmatpush1.bf16.msra.mxu0 %v506
    %2516 = vmatprep.subr.bf16.mxu0 0
    %2517 = vmatpush1.bf16.msra.mxu0 %v505
    %2518 = vmatprep.subr.bf16.mxu0 0
    %2519 = vmatpush1.bf16.msra.mxu0 %v504
    %2520 = vmatprep.subr.bf16.mxu0 0
    %2521 = vmatpush1.bf16.msra.mxu0 %v503
    %2522 = vmatprep.subr.bf16.mxu0 0
    %2523 = vmatpush1.bf16.msra.mxu0 %v502
    %2524 = vmatprep.subr.bf16.mxu0 0
    %2525 = vmatpush1.bf16.msra.mxu0 %v501
    %2526 = vmatprep.subr.bf16.mxu0 0
    %2527 = vmatpush1.bf16.msra.mxu0 %v500
    %2528 = vmatprep.subr.bf16.mxu0 0
    %2529 = vmatpush1.bf16.msra.mxu0 %v499
    %2530 = vmatprep.subr.bf16.mxu0 0
    %2531 = vmatpush2.bf16.msra.mxu0 %v514
    %2532 = vmatprep.subr.bf16.mxu0 0
    %2533 = vmatpush2.bf16.msra.mxu0 %v513
    %2534 = vmatprep.subr.bf16.mxu0 0
    %2535 = vmatpush2.bf16.msra.mxu0 %v512
    %2536 = vmatprep.subr.bf16.mxu0 0
    %2537 = vmatpush2.bf16.msra.mxu0 %v511
    %2538 = vmatprep.subr.bf16.mxu0 0
    %2539 = vmatpush2.bf16.msra.mxu0 %v510
    %2540 = vmatprep.subr.bf16.mxu0 0
    %2541 = vmatpush2.bf16.msra.mxu0 %v509
    %2542 = vmatprep.subr.bf16.mxu0 0
    %2543 = vmatpush2.bf16.msra.mxu0 %v508
    %2544 = vmatprep.subr.bf16.mxu0 0
    %2545 = vmatpush2.bf16.msra.mxu0 %v507
    %2546 = vmatprep.mubr.bf16.mxu0 %v2494
    %2547 = vmatmul.mubr.bf16.gmra.mxu0 %v2480
    %v2548 = vpop.f32.mrf.mxu0
    %v2549 = vadd.f32 %v183, %v2548
    %v2550 = vpop.f32.mrf.mxu0
    %v2551 = vpop.f32.mrf.mxu0
    %v2552 = vpop.f32.mrf.mxu0
    %2553 = vdwg.mxu0
    %2554 = vmatprep.subr.bf16.mxu0 0
    %2555 = vmatpush1.bf16.msra.mxu0 %v522
    %2556 = vmatprep.subr.bf16.mxu0 0
    %2557 = vmatpush1.bf16.msra.mxu0 %v521
    %2558 = vmatprep.subr.bf16.mxu0 0
    %2559 = vmatpush1.bf16.msra.mxu0 %v520
    %2560 = vmatprep.subr.bf16.mxu0 0
    %2561 = vmatpush1.bf16.msra.mxu0 %v519
    %2562 = vmatprep.subr.bf16.mxu0 0
    %2563 = vmatpush1.bf16.msra.mxu0 %v518
    %2564 = vmatprep.subr.bf16.mxu0 0
    %2565 = vmatpush1.bf16.msra.mxu0 %v517
    %2566 = vmatprep.subr.bf16.mxu0 0
    %2567 = vmatpush1.bf16.msra.mxu0 %v516
    %2568 = vmatprep.subr.bf16.mxu0 0
    %2569 = vmatpush1.bf16.msra.mxu0 %v515
    %2570 = vmatprep.subr.bf16.mxu0 0
    %2571 = vmatpush2.bf16.msra.mxu0 %v530
    %2572 = vmatprep.subr.bf16.mxu0 0
    %2573 = vmatpush2.bf16.msra.mxu0 %v529
    %2574 = vmatprep.subr.bf16.mxu0 0
    %2575 = vmatpush2.bf16.msra.mxu0 %v528
    %2576 = vmatprep.subr.bf16.mxu0 0
    %2577 = vmatpush2.bf16.msra.mxu0 %v527
    %2578 = vmatprep.subr.bf16.mxu0 0
    %2579 = vmatpush2.bf16.msra.mxu0 %v526
    %2580 = vmatprep.subr.bf16.mxu0 0
    %2581 = vmatpush2.bf16.msra.mxu0 %v525
    %2582 = vmatprep.subr.bf16.mxu0 0
    %2583 = vmatpush2.bf16.msra.mxu0 %v524
    %2584 = vmatprep.subr.bf16.mxu0 0
    %2585 = vmatpush2.bf16.msra.mxu0 %v523
    %2586 = vmatprep.mubr.bf16.mxu0 %v2504
    %2587 = vmatmul.mubr.bf16.gmra.mxu0 %v2502
    %v2588 = vpop.f32.mrf.mxu0
    %v2589 = vadd.f32 %v2549, %v2588
    %v2590 = vpop.f32.mrf.mxu0
    %v2591 = vpop.f32.mrf.mxu0
    %v2592 = vpop.f32.mrf.mxu0
    %2593 = vdwg.mxu0
    %2594 = vmatprep.subr.bf16.mxu0 0
    %2595 = vmatpush1.bf16.msra.mxu0 %v538
    %2596 = vmatprep.subr.bf16.mxu0 0
    %2597 = vmatpush1.bf16.msra.mxu0 %v537
    %2598 = vmatprep.subr.bf16.mxu0 0
    %2599 = vmatpush1.bf16.msra.mxu0 %v536
    %2600 = vmatprep.subr.bf16.mxu0 0
    %2601 = vmatpush1.bf16.msra.mxu0 %v535
    %2602 = vmatprep.subr.bf16.mxu0 0
    %2603 = vmatpush1.bf16.msra.mxu0 %v534
    %2604 = vmatprep.subr.bf16.mxu0 0
    %2605 = vmatpush1.bf16.msra.mxu0 %v533
    %2606 = vmatprep.subr.bf16.mxu0 0
    %2607 = vmatpush1.bf16.msra.mxu0 %v532
    %2608 = vmatprep.subr.bf16.mxu0 0
    %2609 = vmatpush1.bf16.msra.mxu0 %v531
    %2610 = vmatprep.subr.bf16.mxu0 0
    %2611 = vmatpush2.bf16.msra.mxu0 %v546
    %2612 = vmatprep.subr.bf16.mxu0 0
    %2613 = vmatpush2.bf16.msra.mxu0 %v545
    %2614 = vmatprep.subr.bf16.mxu0 0
    %2615 = vmatpush2.bf16.msra.mxu0 %v544
    %2616 = vmatprep.subr.bf16.mxu0 0
    %2617 = vmatpush2.bf16.msra.mxu0 %v543
    %2618 = vmatprep.subr.bf16.mxu0 0
    %2619 = vmatpush2.bf16.msra.mxu0 %v542
    %2620 = vmatprep.subr.bf16.mxu0 0
    %2621 = vmatpush2.bf16.msra.mxu0 %v541
    %2622 = vmatprep.subr.bf16.mxu0 0
    %2623 = vmatpush2.bf16.msra.mxu0 %v540
    %2624 = vmatprep.subr.bf16.mxu0 0
    %2625 = vmatpush2.bf16.msra.mxu0 %v539
    %2626 = vmatprep.mubr.bf16.mxu0 %v2501
    %2627 = vmatmul.mubr.bf16.gmra.mxu0 %v2487
    %v2628 = vpop.f32.mrf.mxu0
    %v2629 = vadd.f32 %v2589, %v2628
    %v2630 = vpop.f32.mrf.mxu0
    %v2631 = vpop.f32.mrf.mxu0
    %v2632 = vpop.f32.mrf.mxu0
    %2633 = vdwg.mxu0
    %2634 = vmatprep.subr.bf16.mxu0 0
    %2635 = vmatpush1.bf16.msra.mxu0 %v554
    %2636 = vmatprep.subr.bf16.mxu0 0
    %2637 = vmatpush1.bf16.msra.mxu0 %v553
    %2638 = vmatprep.subr.bf16.mxu0 0
    %2639 = vmatpush1.bf16.msra.mxu0 %v552
    %2640 = vmatprep.subr.bf16.mxu0 0
    %2641 = vmatpush1.bf16.msra.mxu0 %v551
    %2642 = vmatprep.subr.bf16.mxu0 0
    %2643 = vmatpush1.bf16.msra.mxu0 %v550
    %2644 = vmatprep.subr.bf16.mxu0 0
    %2645 = vmatpush1.bf16.msra.mxu0 %v549
    %2646 = vmatprep.subr.bf16.mxu0 0
    %2647 = vmatpush1.bf16.msra.mxu0 %v548
    %2648 = vmatprep.subr.bf16.mxu0 0
    %2649 = vmatpush1.bf16.msra.mxu0 %v547
    %2650 = vmatprep.subr.bf16.mxu0 0
    %2651 = vmatpush2.bf16.msra.mxu0 %v562
    %2652 = vmatprep.subr.bf16.mxu0 0
    %2653 = vmatpush2.bf16.msra.mxu0 %v561
    %2654 = vmatprep.subr.bf16.mxu0 0
    %2655 = vmatpush2.bf16.msra.mxu0 %v560
    %2656 = vmatprep.subr.bf16.mxu0 0
    %2657 = vmatpush2.bf16.msra.mxu0 %v559
    %2658 = vmatprep.subr.bf16.mxu0 0
    %2659 = vmatpush2.bf16.msra.mxu0 %v558
    %2660 = vmatprep.subr.bf16.mxu0 0
    %2661 = vmatpush2.bf16.msra.mxu0 %v557
    %2662 = vmatprep.subr.bf16.mxu0 0
    %2663 = vmatpush2.bf16.msra.mxu0 %v556
    %2664 = vmatprep.subr.bf16.mxu0 0
    %2665 = vmatpush2.bf16.msra.mxu0 %v555
    %2666 = vmatprep.mubr.bf16.mxu0 %v2505
    %2667 = vmatmul.mubr.bf16.gmra.mxu0 %v2503
    %v2668 = vpop.f32.mrf.mxu0
    %v2669 = vadd.f32 %v2629, %v2668
    %v2670 = vpop.f32.mrf.mxu0
    %v2671 = vpop.f32.mrf.mxu0
    %v2672 = vpop.f32.mrf.mxu0
    %2673 = vdwg.mxu0
    %v2674 = vmax.f32 %v2669, 0.0
    %v2675 = vpack.c.bf16 %v2674, %v2674
    %v2676 = vld [vmem:[%s4 + $0x180] sm:$0xff]
    %v2677 = vld [vmem:[%s4 + $0x188] sm:$0xff]
    %v2678 = vld [vmem:[%s4 + $0x190] sm:$0xff]
    %v2679 = vld [vmem:[%s4 + $0x198] sm:$0xff]
    %v2680 = vld [vmem:[%s4 + $0x1a0] sm:$0xff]
    %v2681 = vld [vmem:[%s4 + $0x1a8] sm:$0xff]
    %v2682 = vld [vmem:[%s4 + $0x1b0] sm:$0xff]
    %v2683 = vld [vmem:[%s4 + $0x1b8] sm:$0xff]
    %v2692 = vunpack.c.l.b16 %v2676
    %v2693 = vunpack.c.h.b16 %v2676
    %v2694 = vunpack.c.l.b16 %v2677
    %v2695 = vunpack.c.h.b16 %v2677
    %v2696 = vunpack.c.l.b16 %v2678
    %v2697 = vunpack.c.h.b16 %v2678
    %v2698 = vunpack.c.l.b16 %v2679
    %v2699 = vunpack.c.h.b16 %v2679
    %v2700 = vunpack.c.l.b16 %v2680
    %v2701 = vunpack.c.h.b16 %v2680
    %v2702 = vunpack.c.l.b16 %v2681
    %v2703 = vunpack.c.h.b16 %v2681
    %v2704 = vunpack.c.l.b16 %v2682
    %v2705 = vunpack.c.h.b16 %v2682
    %v2706 = vunpack.c.l.b16 %v2683
    %v2707 = vunpack.c.h.b16 %v2683
    %v2708 = vpack.c.b16 %v2694, %v2692
    %v2709 = vpack.c.b16 %v2695, %v2693
    %v2710 = vpack.c.b16 %v2698, %v2696
    %v2711 = vpack.c.b16 %v2699, %v2697
    %v2712 = vpack.c.b16 %v2702, %v2700
    %v2713 = vpack.c.b16 %v2703, %v2701
    %v2714 = vpack.c.b16 %v2706, %v2704
    %v2715 = vpack.c.b16 %v2707, %v2705
    %v2725 = vsel %vm1066, %v2675, 0
    %2727 = vmatprep.subr.bf16.mxu0 0
    %2728 = vmatpush1.bf16.msra.mxu0 0
    %2729 = vmatprep.subr.bf16.mxu0 0
    %2730 = vmatpush1.bf16.msra.mxu0 0
    %2731 = vmatprep.subr.bf16.mxu0 0
    %2732 = vmatpush1.bf16.msra.mxu0 0
    %2733 = vmatprep.subr.bf16.mxu0 0
    %2734 = vmatpush1.bf16.msra.mxu0 0
    %2735 = vmatprep.subr.bf16.mxu0 %v2715
    %2736 = vmatpush1.bf16.msra.mxu0 %v2714
    %2737 = vmatprep.subr.bf16.mxu0 %v2713
    %2738 = vmatpush1.bf16.msra.mxu0 %v2712
    %2739 = vmatprep.subr.bf16.mxu0 %v2711
    %2740 = vmatpush1.bf16.msra.mxu0 %v2710
    %2741 = vmatprep.subr.bf16.mxu0 %v2709
    %2742 = vmatpush1.bf16.msra.mxu0 %v2708
    %2743 = vmatprep.subr.bf16.mxu0 0
    %2744 = vmatpush2.bf16.msra.mxu0 0
    %2745 = vmatprep.subr.bf16.mxu0 0
    %2746 = vmatpush2.bf16.msra.mxu0 0
    %2747 = vmatprep.subr.bf16.mxu0 0
    %2748 = vmatpush2.bf16.msra.mxu0 0
    %2749 = vmatprep.subr.bf16.mxu0 0
    %2750 = vmatpush2.bf16.msra.mxu0 0
    %2751 = vmatprep.subr.bf16.mxu0 0
    %2752 = vmatpush2.bf16.msra.mxu0 0
    %2753 = vmatprep.subr.bf16.mxu0 0
    %2754 = vmatpush2.bf16.msra.mxu0 0
    %2755 = vmatprep.subr.bf16.mxu0 0
    %2756 = vmatpush2.bf16.msra.mxu0 0
    %2757 = vmatprep.subr.bf16.mxu0 0
    %2758 = vmatpush2.bf16.msra.mxu0 0
    %2759 = vmatprep.mubr.bf16.mxu0 0
    %2760 = vmatmul.mubr.bf16.gmra.mxu0 %v2725
    %v2761 = vpop.f32.mrf.mxu0
    %v2762 = vadd.f32 0.0, %v2761
    %v2763 = vpop.f32.mrf.mxu0
    %v2764 = vadd.f32 0.0, %v2763
    %v2765 = vpop.f32.mrf.mxu0
    %v2766 = vpop.f32.mrf.mxu0
    %2767 = vdwg.mxu0
    %v2768 = vadd.f32 %v2453, %v2762
    %v2769 = vadd.f32 %v2454, %v2764
    %v2770 = vld [vmem:[%s0 + $0x38] sm:$0xff]
    %v2772 = vcombine.high %v2770, %v2770
    %v2774 = vunpack.c.l.s4 1966171168
    %v2775 = vunpack.c.0.s8 %v2774
    %v2776 = vlaneseq
    %v2777 = vshrl.u32 %v2776, 7
    %v2778 = vsub.s32 %v2775, %v2777
    %v2779 = vrot.slane %v2770, %v2778
    %v2781 = vunpack.c.l.s4 1966171168
    %v2782 = vunpack.c.0.s8 %v2781
    %v2783 = vlaneseq
    %v2784 = vshrl.u32 %v2783, 7
    %v2785 = vsub.s32 %v2782, %v2784
    %v2786 = vrot.slane %v2772, %v2785
    %v2787 = vcombine.high %v2779, %v2779
    %v2788 = vcombine.high %v2786, %v2786
    %v2790 = vunpack.c.l.s4 1966171168
    %v2791 = vunpack.c.0.s8 %v2790
    %v2792 = vlaneseq
    %v2793 = vshrl.u32 %v2792, 7
    %v2794 = vsub.s32 %v2791, %v2793
    %v2795 = vrot.slane %v2779, %v2794
    %v2797 = vunpack.c.l.s4 1966171168
    %v2798 = vunpack.c.0.s8 %v2797
    %v2799 = vlaneseq
    %v2800 = vshrl.u32 %v2799, 7
    %v2801 = vsub.s32 %v2798, %v2800
    %v2802 = vrot.slane %v2786, %v2801
    %v2804 = vunpack.c.l.s4 1966171168
    %v2805 = vunpack.c.0.s8 %v2804
    %v2806 = vlaneseq
    %v2807 = vshrl.u32 %v2806, 7
    %v2808 = vsub.s32 %v2805, %v2807
    %v2809 = vrot.slane %v2787, %v2808
    %v2811 = vunpack.c.l.s4 1966171168
    %v2812 = vunpack.c.0.s8 %v2811
    %v2813 = vlaneseq
    %v2814 = vshrl.u32 %v2813, 7
    %v2815 = vsub.s32 %v2812, %v2814
    %v2816 = vrot.slane %v2788, %v2815
    %v2817 = vcombine.high %v2795, %v2795
    %v2818 = vcombine.high %v2802, %v2802
    %v2819 = vcombine.high %v2809, %v2809
    %v2820 = vcombine.high %v2816, %v2816
    %2829 = vmatprep.subr.bf16.mxu0 0
    %2830 = vmatpush1.bf16.msra.mxu0 %v506
    %2831 = vmatprep.subr.bf16.mxu0 0
    %2832 = vmatpush1.bf16.msra.mxu0 %v505
    %2833 = vmatprep.subr.bf16.mxu0 0
    %2834 = vmatpush1.bf16.msra.mxu0 %v504
    %2835 = vmatprep.subr.bf16.mxu0 0
    %2836 = vmatpush1.bf16.msra.mxu0 %v503
    %2837 = vmatprep.subr.bf16.mxu0 0
    %2838 = vmatpush1.bf16.msra.mxu0 %v502
    %2839 = vmatprep.subr.bf16.mxu0 0
    %2840 = vmatpush1.bf16.msra.mxu0 %v501
    %2841 = vmatprep.subr.bf16.mxu0 0
    %2842 = vmatpush1.bf16.msra.mxu0 %v500
    %2843 = vmatprep.subr.bf16.mxu0 0
    %2844 = vmatpush1.bf16.msra.mxu0 %v499
    %2845 = vmatprep.subr.bf16.mxu0 0
    %2846 = vmatpush2.bf16.msra.mxu0 %v514
    %2847 = vmatprep.subr.bf16.mxu0 0
    %2848 = vmatpush2.bf16.msra.mxu0 %v513
    %2849 = vmatprep.subr.bf16.mxu0 0
    %2850 = vmatpush2.bf16.msra.mxu0 %v512
    %2851 = vmatprep.subr.bf16.mxu0 0
    %2852 = vmatpush2.bf16.msra.mxu0 %v511
    %2853 = vmatprep.subr.bf16.mxu0 0
    %2854 = vmatpush2.bf16.msra.mxu0 %v510
    %2855 = vmatprep.subr.bf16.mxu0 0
    %2856 = vmatpush2.bf16.msra.mxu0 %v509
    %2857 = vmatprep.subr.bf16.mxu0 0
    %2858 = vmatpush2.bf16.msra.mxu0 %v508
    %2859 = vmatprep.subr.bf16.mxu0 0
    %2860 = vmatpush2.bf16.msra.mxu0 %v507
    %2861 = vmatprep.mubr.bf16.mxu0 %v2809
    %2862 = vmatmul.mubr.bf16.gmra.mxu0 %v2795
    %v2863 = vpop.f32.mrf.mxu0
    %v2864 = vadd.f32 %v183, %v2863
    %v2865 = vpop.f32.mrf.mxu0
    %v2866 = vpop.f32.mrf.mxu0
    %v2867 = vpop.f32.mrf.mxu0
    %2868 = vdwg.mxu0
    %2869 = vmatprep.subr.bf16.mxu0 0
    %2870 = vmatpush1.bf16.msra.mxu0 %v522
    %2871 = vmatprep.subr.bf16.mxu0 0
    %2872 = vmatpush1.bf16.msra.mxu0 %v521
    %2873 = vmatprep.subr.bf16.mxu0 0
    %2874 = vmatpush1.bf16.msra.mxu0 %v520
    %2875 = vmatprep.subr.bf16.mxu0 0
    %2876 = vmatpush1.bf16.msra.mxu0 %v519
    %2877 = vmatprep.subr.bf16.mxu0 0
    %2878 = vmatpush1.bf16.msra.mxu0 %v518
    %2879 = vmatprep.subr.bf16.mxu0 0
    %2880 = vmatpush1.bf16.msra.mxu0 %v517
    %2881 = vmatprep.subr.bf16.mxu0 0
    %2882 = vmatpush1.bf16.msra.mxu0 %v516
    %2883 = vmatprep.subr.bf16.mxu0 0
    %2884 = vmatpush1.bf16.msra.mxu0 %v515
    %2885 = vmatprep.subr.bf16.mxu0 0
    %2886 = vmatpush2.bf16.msra.mxu0 %v530
    %2887 = vmatprep.subr.bf16.mxu0 0
    %2888 = vmatpush2.bf16.msra.mxu0 %v529
    %2889 = vmatprep.subr.bf16.mxu0 0
    %2890 = vmatpush2.bf16.msra.mxu0 %v528
    %2891 = vmatprep.subr.bf16.mxu0 0
    %2892 = vmatpush2.bf16.msra.mxu0 %v527
    %2893 = vmatprep.subr.bf16.mxu0 0
    %2894 = vmatpush2.bf16.msra.mxu0 %v526
    %2895 = vmatprep.subr.bf16.mxu0 0
    %2896 = vmatpush2.bf16.msra.mxu0 %v525
    %2897 = vmatprep.subr.bf16.mxu0 0
    %2898 = vmatpush2.bf16.msra.mxu0 %v524
    %2899 = vmatprep.subr.bf16.mxu0 0
    %2900 = vmatpush2.bf16.msra.mxu0 %v523
    %2901 = vmatprep.mubr.bf16.mxu0 %v2819
    %2902 = vmatmul.mubr.bf16.gmra.mxu0 %v2817
    %v2903 = vpop.f32.mrf.mxu0
    %v2904 = vadd.f32 %v2864, %v2903
    %v2905 = vpop.f32.mrf.mxu0
    %v2906 = vpop.f32.mrf.mxu0
    %v2907 = vpop.f32.mrf.mxu0
    %2908 = vdwg.mxu0
    %2909 = vmatprep.subr.bf16.mxu0 0
    %2910 = vmatpush1.bf16.msra.mxu0 %v538
    %2911 = vmatprep.subr.bf16.mxu0 0
    %2912 = vmatpush1.bf16.msra.mxu0 %v537
    %2913 = vmatprep.subr.bf16.mxu0 0
    %2914 = vmatpush1.bf16.msra.mxu0 %v536
    %2915 = vmatprep.subr.bf16.mxu0 0
    %2916 = vmatpush1.bf16.msra.mxu0 %v535
    %2917 = vmatprep.subr.bf16.mxu0 0
    %2918 = vmatpush1.bf16.msra.mxu0 %v534
    %2919 = vmatprep.subr.bf16.mxu0 0
    %2920 = vmatpush1.bf16.msra.mxu0 %v533
    %2921 = vmatprep.subr.bf16.mxu0 0
    %2922 = vmatpush1.bf16.msra.mxu0 %v532
    %2923 = vmatprep.subr.bf16.mxu0 0
    %2924 = vmatpush1.bf16.msra.mxu0 %v531
    %2925 = vmatprep.subr.bf16.mxu0 0
    %2926 = vmatpush2.bf16.msra.mxu0 %v546
    %2927 = vmatprep.subr.bf16.mxu0 0
    %2928 = vmatpush2.bf16.msra.mxu0 %v545
    %2929 = vmatprep.subr.bf16.mxu0 0
    %2930 = vmatpush2.bf16.msra.mxu0 %v544
    %2931 = vmatprep.subr.bf16.mxu0 0
    %2932 = vmatpush2.bf16.msra.mxu0 %v543
    %2933 = vmatprep.subr.bf16.mxu0 0
    %2934 = vmatpush2.bf16.msra.mxu0 %v542
    %2935 = vmatprep.subr.bf16.mxu0 0
    %2936 = vmatpush2.bf16.msra.mxu0 %v541
    %2937 = vmatprep.subr.bf16.mxu0 0
    %2938 = vmatpush2.bf16.msra.mxu0 %v540
    %2939 = vmatprep.subr.bf16.mxu0 0
    %2940 = vmatpush2.bf16.msra.mxu0 %v539
    %2941 = vmatprep.mubr.bf16.mxu0 %v2816
    %2942 = vmatmul.mubr.bf16.gmra.mxu0 %v2802
    %v2943 = vpop.f32.mrf.mxu0
    %v2944 = vadd.f32 %v2904, %v2943
    %v2945 = vpop.f32.mrf.mxu0
    %v2946 = vpop.f32.mrf.mxu0
    %v2947 = vpop.f32.mrf.mxu0
    %2948 = vdwg.mxu0
    %2949 = vmatprep.subr.bf16.mxu0 0
    %2950 = vmatpush1.bf16.msra.mxu0 %v554
    %2951 = vmatprep.subr.bf16.mxu0 0
    %2952 = vmatpush1.bf16.msra.mxu0 %v553
    %2953 = vmatprep.subr.bf16.mxu0 0
    %2954 = vmatpush1.bf16.msra.mxu0 %v552
    %2955 = vmatprep.subr.bf16.mxu0 0
    %2956 = vmatpush1.bf16.msra.mxu0 %v551
    %2957 = vmatprep.subr.bf16.mxu0 0
    %2958 = vmatpush1.bf16.msra.mxu0 %v550
    %2959 = vmatprep.subr.bf16.mxu0 0
    %2960 = vmatpush1.bf16.msra.mxu0 %v549
    %2961 = vmatprep.subr.bf16.mxu0 0
    %2962 = vmatpush1.bf16.msra.mxu0 %v548
    %2963 = vmatprep.subr.bf16.mxu0 0
    %2964 = vmatpush1.bf16.msra.mxu0 %v547
    %2965 = vmatprep.subr.bf16.mxu0 0
    %2966 = vmatpush2.bf16.msra.mxu0 %v562
    %2967 = vmatprep.subr.bf16.mxu0 0
    %2968 = vmatpush2.bf16.msra.mxu0 %v561
    %2969 = vmatprep.subr.bf16.mxu0 0
    %2970 = vmatpush2.bf16.msra.mxu0 %v560
    %2971 = vmatprep.subr.bf16.mxu0 0
    %2972 = vmatpush2.bf16.msra.mxu0 %v559
    %2973 = vmatprep.subr.bf16.mxu0 0
    %2974 = vmatpush2.bf16.msra.mxu0 %v558
    %2975 = vmatprep.subr.bf16.mxu0 0
    %2976 = vmatpush2.bf16.msra.mxu0 %v557
    %2977 = vmatprep.subr.bf16.mxu0 0
    %2978 = vmatpush2.bf16.msra.mxu0 %v556
    %2979 = vmatprep.subr.bf16.mxu0 0
    %2980 = vmatpush2.bf16.msra.mxu0 %v555
    %2981 = vmatprep.mubr.bf16.mxu0 %v2820
    %2982 = vmatmul.mubr.bf16.gmra.mxu0 %v2818
    %v2983 = vpop.f32.mrf.mxu0
    %v2984 = vadd.f32 %v2944, %v2983
    %v2985 = vpop.f32.mrf.mxu0
    %v2986 = vpop.f32.mrf.mxu0
    %v2987 = vpop.f32.mrf.mxu0
    %2988 = vdwg.mxu0
    %v2989 = vmax.f32 %v2984, 0.0
    %v2990 = vpack.c.bf16 %v2989, %v2989
    %v2991 = vld [vmem:[%s4 + $0x1c0] sm:$0xff]
    %v2992 = vld [vmem:[%s4 + $0x1c8] sm:$0xff]
    %v2993 = vld [vmem:[%s4 + $0x1d0] sm:$0xff]
    %v2994 = vld [vmem:[%s4 + $0x1d8] sm:$0xff]
    %v2995 = vld [vmem:[%s4 + $0x1e0] sm:$0xff]
    %v2996 = vld [vmem:[%s4 + $0x1e8] sm:$0xff]
    %v2997 = vld [vmem:[%s4 + $0x1f0] sm:$0xff]
    %v2998 = vld [vmem:[%s4 + $0x1f8] sm:$0xff]
    %v3007 = vunpack.c.l.b16 %v2991
    %v3008 = vunpack.c.h.b16 %v2991
    %v3009 = vunpack.c.l.b16 %v2992
    %v3010 = vunpack.c.h.b16 %v2992
    %v3011 = vunpack.c.l.b16 %v2993
    %v3012 = vunpack.c.h.b16 %v2993
    %v3013 = vunpack.c.l.b16 %v2994
    %v3014 = vunpack.c.h.b16 %v2994
    %v3015 = vunpack.c.l.b16 %v2995
    %v3016 = vunpack.c.h.b16 %v2995
    %v3017 = vunpack.c.l.b16 %v2996
    %v3018 = vunpack.c.h.b16 %v2996
    %v3019 = vunpack.c.l.b16 %v2997
    %v3020 = vunpack.c.h.b16 %v2997
    %v3021 = vunpack.c.l.b16 %v2998
    %v3022 = vunpack.c.h.b16 %v2998
    %v3023 = vpack.c.b16 %v3009, %v3007
    %v3024 = vpack.c.b16 %v3010, %v3008
    %v3025 = vpack.c.b16 %v3013, %v3011
    %v3026 = vpack.c.b16 %v3014, %v3012
    %v3027 = vpack.c.b16 %v3017, %v3015
    %v3028 = vpack.c.b16 %v3018, %v3016
    %v3029 = vpack.c.b16 %v3021, %v3019
    %v3030 = vpack.c.b16 %v3022, %v3020
    %v3040 = vsel %vm1066, %v2990, 0
    %3042 = vmatprep.subr.bf16.mxu0 0
    %3043 = vmatpush1.bf16.msra.mxu0 0
    %3044 = vmatprep.subr.bf16.mxu0 0
    %3045 = vmatpush1.bf16.msra.mxu0 0
    %3046 = vmatprep.subr.bf16.mxu0 0
    %3047 = vmatpush1.bf16.msra.mxu0 0
    %3048 = vmatprep.subr.bf16.mxu0 0
    %3049 = vmatpush1.bf16.msra.mxu0 0
    %3050 = vmatprep.subr.bf16.mxu0 %v3030
    %3051 = vmatpush1.bf16.msra.mxu0 %v3029
    %3052 = vmatprep.subr.bf16.mxu0 %v3028
    %3053 = vmatpush1.bf16.msra.mxu0 %v3027
    %3054 = vmatprep.subr.bf16.mxu0 %v3026
    %3055 = vmatpush1.bf16.msra.mxu0 %v3025
    %3056 = vmatprep.subr.bf16.mxu0 %v3024
    %3057 = vmatpush1.bf16.msra.mxu0 %v3023
    %3058 = vmatprep.subr.bf16.mxu0 0
    %3059 = vmatpush2.bf16.msra.mxu0 0
    %3060 = vmatprep.subr.bf16.mxu0 0
    %3061 = vmatpush2.bf16.msra.mxu0 0
    %3062 = vmatprep.subr.bf16.mxu0 0
    %3063 = vmatpush2.bf16.msra.mxu0 0
    %3064 = vmatprep.subr.bf16.mxu0 0
    %3065 = vmatpush2.bf16.msra.mxu0 0
    %3066 = vmatprep.subr.bf16.mxu0 0
    %3067 = vmatpush2.bf16.msra.mxu0 0
    %3068 = vmatprep.subr.bf16.mxu0 0
    %3069 = vmatpush2.bf16.msra.mxu0 0
    %3070 = vmatprep.subr.bf16.mxu0 0
    %3071 = vmatpush2.bf16.msra.mxu0 0
    %3072 = vmatprep.subr.bf16.mxu0 0
    %3073 = vmatpush2.bf16.msra.mxu0 0
    %3074 = vmatprep.mubr.bf16.mxu0 0
    %3075 = vmatmul.mubr.bf16.gmra.mxu0 %v3040
    %v3076 = vpop.f32.mrf.mxu0
    %v3077 = vadd.f32 0.0, %v3076
    %v3078 = vpop.f32.mrf.mxu0
    %v3079 = vadd.f32 0.0, %v3078
    %v3080 = vpop.f32.mrf.mxu0
    %v3081 = vpop.f32.mrf.mxu0
    %3082 = vdwg.mxu0
    %v3083 = vadd.f32 %v2768, %v3077
    %v3084 = vadd.f32 %v2769, %v3079
    %v3085 = vld [vmem:[%s0 + $0x40] sm:$0xff]
    %v3087 = vcombine.high %v3085, %v3085
    %v3089 = vunpack.c.l.s4 1966171168
    %v3090 = vunpack.c.0.s8 %v3089
    %v3091 = vlaneseq
    %v3092 = vshrl.u32 %v3091, 7
    %v3093 = vsub.s32 %v3090, %v3092
    %v3094 = vrot.slane %v3085, %v3093
    %v3096 = vunpack.c.l.s4 1966171168
    %v3097 = vunpack.c.0.s8 %v3096
    %v3098 = vlaneseq
    %v3099 = vshrl.u32 %v3098, 7
    %v3100 = vsub.s32 %v3097, %v3099
    %v3101 = vrot.slane %v3087, %v3100
    %v3102 = vcombine.high %v3094, %v3094
    %v3103 = vcombine.high %v3101, %v3101
    %v3105 = vunpack.c.l.s4 1966171168
    %v3106 = vunpack.c.0.s8 %v3105
    %v3107 = vlaneseq
    %v3108 = vshrl.u32 %v3107, 7
    %v3109 = vsub.s32 %v3106, %v3108
    %v3110 = vrot.slane %v3094, %v3109
    %v3112 = vunpack.c.l.s4 1966171168
    %v3113 = vunpack.c.0.s8 %v3112
    %v3114 = vlaneseq
    %v3115 = vshrl.u32 %v3114, 7
    %v3116 = vsub.s32 %v3113, %v3115
    %v3117 = vrot.slane %v3101, %v3116
    %v3119 = vunpack.c.l.s4 1966171168
    %v3120 = vunpack.c.0.s8 %v3119
    %v3121 = vlaneseq
    %v3122 = vshrl.u32 %v3121, 7
    %v3123 = vsub.s32 %v3120, %v3122
    %v3124 = vrot.slane %v3102, %v3123
    %v3126 = vunpack.c.l.s4 1966171168
    %v3127 = vunpack.c.0.s8 %v3126
    %v3128 = vlaneseq
    %v3129 = vshrl.u32 %v3128, 7
    %v3130 = vsub.s32 %v3127, %v3129
    %v3131 = vrot.slane %v3103, %v3130
    %v3132 = vcombine.high %v3110, %v3110
    %v3133 = vcombine.high %v3117, %v3117
    %v3134 = vcombine.high %v3124, %v3124
    %v3135 = vcombine.high %v3131, %v3131
    %3144 = vmatprep.subr.bf16.mxu0 0
    %3145 = vmatpush1.bf16.msra.mxu0 %v506
    %3146 = vmatprep.subr.bf16.mxu0 0
    %3147 = vmatpush1.bf16.msra.mxu0 %v505
    %3148 = vmatprep.subr.bf16.mxu0 0
    %3149 = vmatpush1.bf16.msra.mxu0 %v504
    %3150 = vmatprep.subr.bf16.mxu0 0
    %3151 = vmatpush1.bf16.msra.mxu0 %v503
    %3152 = vmatprep.subr.bf16.mxu0 0
    %3153 = vmatpush1.bf16.msra.mxu0 %v502
    %3154 = vmatprep.subr.bf16.mxu0 0
    %3155 = vmatpush1.bf16.msra.mxu0 %v501
    %3156 = vmatprep.subr.bf16.mxu0 0
    %3157 = vmatpush1.bf16.msra.mxu0 %v500
    %3158 = vmatprep.subr.bf16.mxu0 0
    %3159 = vmatpush1.bf16.msra.mxu0 %v499
    %3160 = vmatprep.subr.bf16.mxu0 0
    %3161 = vmatpush2.bf16.msra.mxu0 %v514
    %3162 = vmatprep.subr.bf16.mxu0 0
    %3163 = vmatpush2.bf16.msra.mxu0 %v513
    %3164 = vmatprep.subr.bf16.mxu0 0
    %3165 = vmatpush2.bf16.msra.mxu0 %v512
    %3166 = vmatprep.subr.bf16.mxu0 0
    %3167 = vmatpush2.bf16.msra.mxu0 %v511
    %3168 = vmatprep.subr.bf16.mxu0 0
    %3169 = vmatpush2.bf16.msra.mxu0 %v510
    %3170 = vmatprep.subr.bf16.mxu0 0
    %3171 = vmatpush2.bf16.msra.mxu0 %v509
    %3172 = vmatprep.subr.bf16.mxu0 0
    %3173 = vmatpush2.bf16.msra.mxu0 %v508
    %3174 = vmatprep.subr.bf16.mxu0 0
    %3175 = vmatpush2.bf16.msra.mxu0 %v507
    %3176 = vmatprep.mubr.bf16.mxu0 %v3124
    %3177 = vmatmul.mubr.bf16.gmra.mxu0 %v3110
    %v3178 = vpop.f32.mrf.mxu0
    %v3179 = vadd.f32 %v183, %v3178
    %v3180 = vpop.f32.mrf.mxu0
    %v3181 = vpop.f32.mrf.mxu0
    %v3182 = vpop.f32.mrf.mxu0
    %3183 = vdwg.mxu0
    %3184 = vmatprep.subr.bf16.mxu0 0
    %3185 = vmatpush1.bf16.msra.mxu0 %v522
    %3186 = vmatprep.subr.bf16.mxu0 0
    %3187 = vmatpush1.bf16.msra.mxu0 %v521
    %3188 = vmatprep.subr.bf16.mxu0 0
    %3189 = vmatpush1.bf16.msra.mxu0 %v520
    %3190 = vmatprep.subr.bf16.mxu0 0
    %3191 = vmatpush1.bf16.msra.mxu0 %v519
    %3192 = vmatprep.subr.bf16.mxu0 0
    %3193 = vmatpush1.bf16.msra.mxu0 %v518
    %3194 = vmatprep.subr.bf16.mxu0 0
    %3195 = vmatpush1.bf16.msra.mxu0 %v517
    %3196 = vmatprep.subr.bf16.mxu0 0
    %3197 = vmatpush1.bf16.msra.mxu0 %v516
    %3198 = vmatprep.subr.bf16.mxu0 0
    %3199 = vmatpush1.bf16.msra.mxu0 %v515
    %3200 = vmatprep.subr.bf16.mxu0 0
    %3201 = vmatpush2.bf16.msra.mxu0 %v530
    %3202 = vmatprep.subr.bf16.mxu0 0
    %3203 = vmatpush2.bf16.msra.mxu0 %v529
    %3204 = vmatprep.subr.bf16.mxu0 0
    %3205 = vmatpush2.bf16.msra.mxu0 %v528
    %3206 = vmatprep.subr.bf16.mxu0 0
    %3207 = vmatpush2.bf16.msra.mxu0 %v527
    %3208 = vmatprep.subr.bf16.mxu0 0
    %3209 = vmatpush2.bf16.msra.mxu0 %v526
    %3210 = vmatprep.subr.bf16.mxu0 0
    %3211 = vmatpush2.bf16.msra.mxu0 %v525
    %3212 = vmatprep.subr.bf16.mxu0 0
    %3213 = vmatpush2.bf16.msra.mxu0 %v524
    %3214 = vmatprep.subr.bf16.mxu0 0
    %3215 = vmatpush2.bf16.msra.mxu0 %v523
    %3216 = vmatprep.mubr.bf16.mxu0 %v3134
    %3217 = vmatmul.mubr.bf16.gmra.mxu0 %v3132
    %v3218 = vpop.f32.mrf.mxu0
    %v3219 = vadd.f32 %v3179, %v3218
    %v3220 = vpop.f32.mrf.mxu0
    %v3221 = vpop.f32.mrf.mxu0
    %v3222 = vpop.f32.mrf.mxu0
    %3223 = vdwg.mxu0
    %3224 = vmatprep.subr.bf16.mxu0 0
    %3225 = vmatpush1.bf16.msra.mxu0 %v538
    %3226 = vmatprep.subr.bf16.mxu0 0
    %3227 = vmatpush1.bf16.msra.mxu0 %v537
    %3228 = vmatprep.subr.bf16.mxu0 0
    %3229 = vmatpush1.bf16.msra.mxu0 %v536
    %3230 = vmatprep.subr.bf16.mxu0 0
    %3231 = vmatpush1.bf16.msra.mxu0 %v535
    %3232 = vmatprep.subr.bf16.mxu0 0
    %3233 = vmatpush1.bf16.msra.mxu0 %v534
    %3234 = vmatprep.subr.bf16.mxu0 0
    %3235 = vmatpush1.bf16.msra.mxu0 %v533
    %3236 = vmatprep.subr.bf16.mxu0 0
    %3237 = vmatpush1.bf16.msra.mxu0 %v532
    %3238 = vmatprep.subr.bf16.mxu0 0
    %3239 = vmatpush1.bf16.msra.mxu0 %v531
    %3240 = vmatprep.subr.bf16.mxu0 0
    %3241 = vmatpush2.bf16.msra.mxu0 %v546
    %3242 = vmatprep.subr.bf16.mxu0 0
    %3243 = vmatpush2.bf16.msra.mxu0 %v545
    %3244 = vmatprep.subr.bf16.mxu0 0
    %3245 = vmatpush2.bf16.msra.mxu0 %v544
    %3246 = vmatprep.subr.bf16.mxu0 0
    %3247 = vmatpush2.bf16.msra.mxu0 %v543
    %3248 = vmatprep.subr.bf16.mxu0 0
    %3249 = vmatpush2.bf16.msra.mxu0 %v542
    %3250 = vmatprep.subr.bf16.mxu0 0
    %3251 = vmatpush2.bf16.msra.mxu0 %v541
    %3252 = vmatprep.subr.bf16.mxu0 0
    %3253 = vmatpush2.bf16.msra.mxu0 %v540
    %3254 = vmatprep.subr.bf16.mxu0 0
    %3255 = vmatpush2.bf16.msra.mxu0 %v539
    %3256 = vmatprep.mubr.bf16.mxu0 %v3131
    %3257 = vmatmul.mubr.bf16.gmra.mxu0 %v3117
    %v3258 = vpop.f32.mrf.mxu0
    %v3259 = vadd.f32 %v3219, %v3258
    %v3260 = vpop.f32.mrf.mxu0
    %v3261 = vpop.f32.mrf.mxu0
    %v3262 = vpop.f32.mrf.mxu0
    %3263 = vdwg.mxu0
    %3264 = vmatprep.subr.bf16.mxu0 0
    %3265 = vmatpush1.bf16.msra.mxu0 %v554
    %3266 = vmatprep.subr.bf16.mxu0 0
    %3267 = vmatpush1.bf16.msra.mxu0 %v553
    %3268 = vmatprep.subr.bf16.mxu0 0
    %3269 = vmatpush1.bf16.msra.mxu0 %v552
    %3270 = vmatprep.subr.bf16.mxu0 0
    %3271 = vmatpush1.bf16.msra.mxu0 %v551
    %3272 = vmatprep.subr.bf16.mxu0 0
    %3273 = vmatpush1.bf16.msra.mxu0 %v550
    %3274 = vmatprep.subr.bf16.mxu0 0
    %3275 = vmatpush1.bf16.msra.mxu0 %v549
    %3276 = vmatprep.subr.bf16.mxu0 0
    %3277 = vmatpush1.bf16.msra.mxu0 %v548
    %3278 = vmatprep.subr.bf16.mxu0 0
    %3279 = vmatpush1.bf16.msra.mxu0 %v547
    %3280 = vmatprep.subr.bf16.mxu0 0
    %3281 = vmatpush2.bf16.msra.mxu0 %v562
    %3282 = vmatprep.subr.bf16.mxu0 0
    %3283 = vmatpush2.bf16.msra.mxu0 %v561
    %3284 = vmatprep.subr.bf16.mxu0 0
    %3285 = vmatpush2.bf16.msra.mxu0 %v560
    %3286 = vmatprep.subr.bf16.mxu0 0
    %3287 = vmatpush2.bf16.msra.mxu0 %v559
    %3288 = vmatprep.subr.bf16.mxu0 0
    %3289 = vmatpush2.bf16.msra.mxu0 %v558
    %3290 = vmatprep.subr.bf16.mxu0 0
    %3291 = vmatpush2.bf16.msra.mxu0 %v557
    %3292 = vmatprep.subr.bf16.mxu0 0
    %3293 = vmatpush2.bf16.msra.mxu0 %v556
    %3294 = vmatprep.subr.bf16.mxu0 0
    %3295 = vmatpush2.bf16.msra.mxu0 %v555
    %3296 = vmatprep.mubr.bf16.mxu0 %v3135
    %3297 = vmatmul.mubr.bf16.gmra.mxu0 %v3133
    %v3298 = vpop.f32.mrf.mxu0
    %v3299 = vadd.f32 %v3259, %v3298
    %v3300 = vpop.f32.mrf.mxu0
    %v3301 = vpop.f32.mrf.mxu0
    %v3302 = vpop.f32.mrf.mxu0
    %3303 = vdwg.mxu0
    %v3304 = vmax.f32 %v3299, 0.0
    %v3305 = vpack.c.bf16 %v3304, %v3304
    %v3306 = vld [vmem:[%s4 + $0x200] sm:$0xff]
    %v3307 = vld [vmem:[%s4 + $0x208] sm:$0xff]
    %v3308 = vld [vmem:[%s4 + $0x210] sm:$0xff]
    %v3309 = vld [vmem:[%s4 + $0x218] sm:$0xff]
    %v3310 = vld [vmem:[%s4 + $0x220] sm:$0xff]
    %v3311 = vld [vmem:[%s4 + $0x228] sm:$0xff]
    %v3312 = vld [vmem:[%s4 + $0x230] sm:$0xff]
    %v3313 = vld [vmem:[%s4 + $0x238] sm:$0xff]
    %v3322 = vunpack.c.l.b16 %v3306
    %v3323 = vunpack.c.h.b16 %v3306
    %v3324 = vunpack.c.l.b16 %v3307
    %v3325 = vunpack.c.h.b16 %v3307
    %v3326 = vunpack.c.l.b16 %v3308
    %v3327 = vunpack.c.h.b16 %v3308
    %v3328 = vunpack.c.l.b16 %v3309
    %v3329 = vunpack.c.h.b16 %v3309
    %v3330 = vunpack.c.l.b16 %v3310
    %v3331 = vunpack.c.h.b16 %v3310
    %v3332 = vunpack.c.l.b16 %v3311
    %v3333 = vunpack.c.h.b16 %v3311
    %v3334 = vunpack.c.l.b16 %v3312
    %v3335 = vunpack.c.h.b16 %v3312
    %v3336 = vunpack.c.l.b16 %v3313
    %v3337 = vunpack.c.h.b16 %v3313
    %v3338 = vpack.c.b16 %v3324, %v3322
    %v3339 = vpack.c.b16 %v3325, %v3323
    %v3340 = vpack.c.b16 %v3328, %v3326
    %v3341 = vpack.c.b16 %v3329, %v3327
    %v3342 = vpack.c.b16 %v3332, %v3330
    %v3343 = vpack.c.b16 %v3333, %v3331
    %v3344 = vpack.c.b16 %v3336, %v3334
    %v3345 = vpack.c.b16 %v3337, %v3335
    %v3355 = vsel %vm1066, %v3305, 0
    %3357 = vmatprep.subr.bf16.mxu0 0
    %3358 = vmatpush1.bf16.msra.mxu0 0
    %3359 = vmatprep.subr.bf16.mxu0 0
    %3360 = vmatpush1.bf16.msra.mxu0 0
    %3361 = vmatprep.subr.bf16.mxu0 0
    %3362 = vmatpush1.bf16.msra.mxu0 0
    %3363 = vmatprep.subr.bf16.mxu0 0
    %3364 = vmatpush1.bf16.msra.mxu0 0
    %3365 = vmatprep.subr.bf16.mxu0 %v3345
    %3366 = vmatpush1.bf16.msra.mxu0 %v3344
    %3367 = vmatprep.subr.bf16.mxu0 %v3343
    %3368 = vmatpush1.bf16.msra.mxu0 %v3342
    %3369 = vmatprep.subr.bf16.mxu0 %v3341
    %3370 = vmatpush1.bf16.msra.mxu0 %v3340
    %3371 = vmatprep.subr.bf16.mxu0 %v3339
    %3372 = vmatpush1.bf16.msra.mxu0 %v3338
    %3373 = vmatprep.subr.bf16.mxu0 0
    %3374 = vmatpush2.bf16.msra.mxu0 0
    %3375 = vmatprep.subr.bf16.mxu0 0
    %3376 = vmatpush2.bf16.msra.mxu0 0
    %3377 = vmatprep.subr.bf16.mxu0 0
    %3378 = vmatpush2.bf16.msra.mxu0 0
    %3379 = vmatprep.subr.bf16.mxu0 0
    %3380 = vmatpush2.bf16.msra.mxu0 0
    %3381 = vmatprep.subr.bf16.mxu0 0
    %3382 = vmatpush2.bf16.msra.mxu0 0
    %3383 = vmatprep.subr.bf16.mxu0 0
    %3384 = vmatpush2.bf16.msra.mxu0 0
    %3385 = vmatprep.subr.bf16.mxu0 0
    %3386 = vmatpush2.bf16.msra.mxu0 0
    %3387 = vmatprep.subr.bf16.mxu0 0
    %3388 = vmatpush2.bf16.msra.mxu0 0
    %3389 = vmatprep.mubr.bf16.mxu0 0
    %3390 = vmatmul.mubr.bf16.gmra.mxu0 %v3355
    %v3391 = vpop.f32.mrf.mxu0
    %v3392 = vadd.f32 0.0, %v3391
    %v3393 = vpop.f32.mrf.mxu0
    %v3394 = vadd.f32 0.0, %v3393
    %v3395 = vpop.f32.mrf.mxu0
    %v3396 = vpop.f32.mrf.mxu0
    %3397 = vdwg.mxu0
    %v3398 = vadd.f32 %v3083, %v3392
    %v3399 = vadd.f32 %v3084, %v3394
    %v3400 = vld [vmem:[%s0 + $0x48] sm:$0xff]
    %v3402 = vcombine.high %v3400, %v3400
    %v3404 = vunpack.c.l.s4 1966171168
    %v3405 = vunpack.c.0.s8 %v3404
    %v3406 = vlaneseq
    %v3407 = vshrl.u32 %v3406, 7
    %v3408 = vsub.s32 %v3405, %v3407
    %v3409 = vrot.slane %v3400, %v3408
    %v3411 = vunpack.c.l.s4 1966171168
    %v3412 = vunpack.c.0.s8 %v3411
    %v3413 = vlaneseq
    %v3414 = vshrl.u32 %v3413, 7
    %v3415 = vsub.s32 %v3412, %v3414
    %v3416 = vrot.slane %v3402, %v3415
    %v3417 = vcombine.high %v3409, %v3409
    %v3418 = vcombine.high %v3416, %v3416
    %v3420 = vunpack.c.l.s4 1966171168
    %v3421 = vunpack.c.0.s8 %v3420
    %v3422 = vlaneseq
    %v3423 = vshrl.u32 %v3422, 7
    %v3424 = vsub.s32 %v3421, %v3423
    %v3425 = vrot.slane %v3409, %v3424
    %v3427 = vunpack.c.l.s4 1966171168
    %v3428 = vunpack.c.0.s8 %v3427
    %v3429 = vlaneseq
    %v3430 = vshrl.u32 %v3429, 7
    %v3431 = vsub.s32 %v3428, %v3430
    %v3432 = vrot.slane %v3416, %v3431
    %v3434 = vunpack.c.l.s4 1966171168
    %v3435 = vunpack.c.0.s8 %v3434
    %v3436 = vlaneseq
    %v3437 = vshrl.u32 %v3436, 7
    %v3438 = vsub.s32 %v3435, %v3437
    %v3439 = vrot.slane %v3417, %v3438
    %v3441 = vunpack.c.l.s4 1966171168
    %v3442 = vunpack.c.0.s8 %v3441
    %v3443 = vlaneseq
    %v3444 = vshrl.u32 %v3443, 7
    %v3445 = vsub.s32 %v3442, %v3444
    %v3446 = vrot.slane %v3418, %v3445
    %v3447 = vcombine.high %v3425, %v3425
    %v3448 = vcombine.high %v3432, %v3432
    %v3449 = vcombine.high %v3439, %v3439
    %v3450 = vcombine.high %v3446, %v3446
    %3459 = vmatprep.subr.bf16.mxu0 0
    %3460 = vmatpush1.bf16.msra.mxu0 %v506
    %3461 = vmatprep.subr.bf16.mxu0 0
    %3462 = vmatpush1.bf16.msra.mxu0 %v505
    %3463 = vmatprep.subr.bf16.mxu0 0
    %3464 = vmatpush1.bf16.msra.mxu0 %v504
    %3465 = vmatprep.subr.bf16.mxu0 0
    %3466 = vmatpush1.bf16.msra.mxu0 %v503
    %3467 = vmatprep.subr.bf16.mxu0 0
    %3468 = vmatpush1.bf16.msra.mxu0 %v502
    %3469 = vmatprep.subr.bf16.mxu0 0
    %3470 = vmatpush1.bf16.msra.mxu0 %v501
    %3471 = vmatprep.subr.bf16.mxu0 0
    %3472 = vmatpush1.bf16.msra.mxu0 %v500
    %3473 = vmatprep.subr.bf16.mxu0 0
    %3474 = vmatpush1.bf16.msra.mxu0 %v499
    %3475 = vmatprep.subr.bf16.mxu0 0
    %3476 = vmatpush2.bf16.msra.mxu0 %v514
    %3477 = vmatprep.subr.bf16.mxu0 0
    %3478 = vmatpush2.bf16.msra.mxu0 %v513
    %3479 = vmatprep.subr.bf16.mxu0 0
    %3480 = vmatpush2.bf16.msra.mxu0 %v512
    %3481 = vmatprep.subr.bf16.mxu0 0
    %3482 = vmatpush2.bf16.msra.mxu0 %v511
    %3483 = vmatprep.subr.bf16.mxu0 0
    %3484 = vmatpush2.bf16.msra.mxu0 %v510
    %3485 = vmatprep.subr.bf16.mxu0 0
    %3486 = vmatpush2.bf16.msra.mxu0 %v509
    %3487 = vmatprep.subr.bf16.mxu0 0
    %3488 = vmatpush2.bf16.msra.mxu0 %v508
    %3489 = vmatprep.subr.bf16.mxu0 0
    %3490 = vmatpush2.bf16.msra.mxu0 %v507
    %3491 = vmatprep.mubr.bf16.mxu0 %v3439
    %3492 = vmatmul.mubr.bf16.gmra.mxu0 %v3425
    %v3493 = vpop.f32.mrf.mxu0
    %v3494 = vadd.f32 %v183, %v3493
    %v3495 = vpop.f32.mrf.mxu0
    %v3496 = vpop.f32.mrf.mxu0
    %v3497 = vpop.f32.mrf.mxu0
    %3498 = vdwg.mxu0
    %3499 = vmatprep.subr.bf16.mxu0 0
    %3500 = vmatpush1.bf16.msra.mxu0 %v522
    %3501 = vmatprep.subr.bf16.mxu0 0
    %3502 = vmatpush1.bf16.msra.mxu0 %v521
    %3503 = vmatprep.subr.bf16.mxu0 0
    %3504 = vmatpush1.bf16.msra.mxu0 %v520
    %3505 = vmatprep.subr.bf16.mxu0 0
    %3506 = vmatpush1.bf16.msra.mxu0 %v519
    %3507 = vmatprep.subr.bf16.mxu0 0
    %3508 = vmatpush1.bf16.msra.mxu0 %v518
    %3509 = vmatprep.subr.bf16.mxu0 0
    %3510 = vmatpush1.bf16.msra.mxu0 %v517
    %3511 = vmatprep.subr.bf16.mxu0 0
    %3512 = vmatpush1.bf16.msra.mxu0 %v516
    %3513 = vmatprep.subr.bf16.mxu0 0
    %3514 = vmatpush1.bf16.msra.mxu0 %v515
    %3515 = vmatprep.subr.bf16.mxu0 0
    %3516 = vmatpush2.bf16.msra.mxu0 %v530
    %3517 = vmatprep.subr.bf16.mxu0 0
    %3518 = vmatpush2.bf16.msra.mxu0 %v529
    %3519 = vmatprep.subr.bf16.mxu0 0
    %3520 = vmatpush2.bf16.msra.mxu0 %v528
    %3521 = vmatprep.subr.bf16.mxu0 0
    %3522 = vmatpush2.bf16.msra.mxu0 %v527
    %3523 = vmatprep.subr.bf16.mxu0 0
    %3524 = vmatpush2.bf16.msra.mxu0 %v526
    %3525 = vmatprep.subr.bf16.mxu0 0
    %3526 = vmatpush2.bf16.msra.mxu0 %v525
    %3527 = vmatprep.subr.bf16.mxu0 0
    %3528 = vmatpush2.bf16.msra.mxu0 %v524
    %3529 = vmatprep.subr.bf16.mxu0 0
    %3530 = vmatpush2.bf16.msra.mxu0 %v523
    %3531 = vmatprep.mubr.bf16.mxu0 %v3449
    %3532 = vmatmul.mubr.bf16.gmra.mxu0 %v3447
    %v3533 = vpop.f32.mrf.mxu0
    %v3534 = vadd.f32 %v3494, %v3533
    %v3535 = vpop.f32.mrf.mxu0
    %v3536 = vpop.f32.mrf.mxu0
    %v3537 = vpop.f32.mrf.mxu0
    %3538 = vdwg.mxu0
    %3539 = vmatprep.subr.bf16.mxu0 0
    %3540 = vmatpush1.bf16.msra.mxu0 %v538
    %3541 = vmatprep.subr.bf16.mxu0 0
    %3542 = vmatpush1.bf16.msra.mxu0 %v537
    %3543 = vmatprep.subr.bf16.mxu0 0
    %3544 = vmatpush1.bf16.msra.mxu0 %v536
    %3545 = vmatprep.subr.bf16.mxu0 0
    %3546 = vmatpush1.bf16.msra.mxu0 %v535
    %3547 = vmatprep.subr.bf16.mxu0 0
    %3548 = vmatpush1.bf16.msra.mxu0 %v534
    %3549 = vmatprep.subr.bf16.mxu0 0
    %3550 = vmatpush1.bf16.msra.mxu0 %v533
    %3551 = vmatprep.subr.bf16.mxu0 0
    %3552 = vmatpush1.bf16.msra.mxu0 %v532
    %3553 = vmatprep.subr.bf16.mxu0 0
    %3554 = vmatpush1.bf16.msra.mxu0 %v531
    %3555 = vmatprep.subr.bf16.mxu0 0
    %3556 = vmatpush2.bf16.msra.mxu0 %v546
    %3557 = vmatprep.subr.bf16.mxu0 0
    %3558 = vmatpush2.bf16.msra.mxu0 %v545
    %3559 = vmatprep.subr.bf16.mxu0 0
    %3560 = vmatpush2.bf16.msra.mxu0 %v544
    %3561 = vmatprep.subr.bf16.mxu0 0
    %3562 = vmatpush2.bf16.msra.mxu0 %v543
    %3563 = vmatprep.subr.bf16.mxu0 0
    %3564 = vmatpush2.bf16.msra.mxu0 %v542
    %3565 = vmatprep.subr.bf16.mxu0 0
    %3566 = vmatpush2.bf16.msra.mxu0 %v541
    %3567 = vmatprep.subr.bf16.mxu0 0
    %3568 = vmatpush2.bf16.msra.mxu0 %v540
    %3569 = vmatprep.subr.bf16.mxu0 0
    %3570 = vmatpush2.bf16.msra.mxu0 %v539
    %3571 = vmatprep.mubr.bf16.mxu0 %v3446
    %3572 = vmatmul.mubr.bf16.gmra.mxu0 %v3432
    %v3573 = vpop.f32.mrf.mxu0
    %v3574 = vadd.f32 %v3534, %v3573
    %v3575 = vpop.f32.mrf.mxu0
    %v3576 = vpop.f32.mrf.mxu0
    %v3577 = vpop.f32.mrf.mxu0
    %3578 = vdwg.mxu0
    %3579 = vmatprep.subr.bf16.mxu0 0
    %3580 = vmatpush1.bf16.msra.mxu0 %v554
    %3581 = vmatprep.subr.bf16.mxu0 0
    %3582 = vmatpush1.bf16.msra.mxu0 %v553
    %3583 = vmatprep.subr.bf16.mxu0 0
    %3584 = vmatpush1.bf16.msra.mxu0 %v552
    %3585 = vmatprep.subr.bf16.mxu0 0
    %3586 = vmatpush1.bf16.msra.mxu0 %v551
    %3587 = vmatprep.subr.bf16.mxu0 0
    %3588 = vmatpush1.bf16.msra.mxu0 %v550
    %3589 = vmatprep.subr.bf16.mxu0 0
    %3590 = vmatpush1.bf16.msra.mxu0 %v549
    %3591 = vmatprep.subr.bf16.mxu0 0
    %3592 = vmatpush1.bf16.msra.mxu0 %v548
    %3593 = vmatprep.subr.bf16.mxu0 0
    %3594 = vmatpush1.bf16.msra.mxu0 %v547
    %3595 = vmatprep.subr.bf16.mxu0 0
    %3596 = vmatpush2.bf16.msra.mxu0 %v562
    %3597 = vmatprep.subr.bf16.mxu0 0
    %3598 = vmatpush2.bf16.msra.mxu0 %v561
    %3599 = vmatprep.subr.bf16.mxu0 0
    %3600 = vmatpush2.bf16.msra.mxu0 %v560
    %3601 = vmatprep.subr.bf16.mxu0 0
    %3602 = vmatpush2.bf16.msra.mxu0 %v559
    %3603 = vmatprep.subr.bf16.mxu0 0
    %3604 = vmatpush2.bf16.msra.mxu0 %v558
    %3605 = vmatprep.subr.bf16.mxu0 0
    %3606 = vmatpush2.bf16.msra.mxu0 %v557
    %3607 = vmatprep.subr.bf16.mxu0 0
    %3608 = vmatpush2.bf16.msra.mxu0 %v556
    %3609 = vmatprep.subr.bf16.mxu0 0
    %3610 = vmatpush2.bf16.msra.mxu0 %v555
    %3611 = vmatprep.mubr.bf16.mxu0 %v3450
    %3612 = vmatmul.mubr.bf16.gmra.mxu0 %v3448
    %v3613 = vpop.f32.mrf.mxu0
    %v3614 = vadd.f32 %v3574, %v3613
    %v3615 = vpop.f32.mrf.mxu0
    %v3616 = vpop.f32.mrf.mxu0
    %v3617 = vpop.f32.mrf.mxu0
    %3618 = vdwg.mxu0
    %v3619 = vmax.f32 %v3614, 0.0
    %v3620 = vpack.c.bf16 %v3619, %v3619
    %v3621 = vld [vmem:[%s4 + $0x240] sm:$0xff]
    %v3622 = vld [vmem:[%s4 + $0x248] sm:$0xff]
    %v3623 = vld [vmem:[%s4 + $0x250] sm:$0xff]
    %v3624 = vld [vmem:[%s4 + $0x258] sm:$0xff]
    %v3625 = vld [vmem:[%s4 + $0x260] sm:$0xff]
    %v3626 = vld [vmem:[%s4 + $0x268] sm:$0xff]
    %v3627 = vld [vmem:[%s4 + $0x270] sm:$0xff]
    %v3628 = vld [vmem:[%s4 + $0x278] sm:$0xff]
    %v3637 = vunpack.c.l.b16 %v3621
    %v3638 = vunpack.c.h.b16 %v3621
    %v3639 = vunpack.c.l.b16 %v3622
    %v3640 = vunpack.c.h.b16 %v3622
    %v3641 = vunpack.c.l.b16 %v3623
    %v3642 = vunpack.c.h.b16 %v3623
    %v3643 = vunpack.c.l.b16 %v3624
    %v3644 = vunpack.c.h.b16 %v3624
    %v3645 = vunpack.c.l.b16 %v3625
    %v3646 = vunpack.c.h.b16 %v3625
    %v3647 = vunpack.c.l.b16 %v3626
    %v3648 = vunpack.c.h.b16 %v3626
    %v3649 = vunpack.c.l.b16 %v3627
    %v3650 = vunpack.c.h.b16 %v3627
    %v3651 = vunpack.c.l.b16 %v3628
    %v3652 = vunpack.c.h.b16 %v3628
    %v3653 = vpack.c.b16 %v3639, %v3637
    %v3654 = vpack.c.b16 %v3640, %v3638
    %v3655 = vpack.c.b16 %v3643, %v3641
    %v3656 = vpack.c.b16 %v3644, %v3642
    %v3657 = vpack.c.b16 %v3647, %v3645
    %v3658 = vpack.c.b16 %v3648, %v3646
    %v3659 = vpack.c.b16 %v3651, %v3649
    %v3660 = vpack.c.b16 %v3652, %v3650
    %v3670 = vsel %vm1066, %v3620, 0
    %3672 = vmatprep.subr.bf16.mxu0 0
    %3673 = vmatpush1.bf16.msra.mxu0 0
    %3674 = vmatprep.subr.bf16.mxu0 0
    %3675 = vmatpush1.bf16.msra.mxu0 0
    %3676 = vmatprep.subr.bf16.mxu0 0
    %3677 = vmatpush1.bf16.msra.mxu0 0
    %3678 = vmatprep.subr.bf16.mxu0 0
    %3679 = vmatpush1.bf16.msra.mxu0 0
    %3680 = vmatprep.subr.bf16.mxu0 %v3660
    %3681 = vmatpush1.bf16.msra.mxu0 %v3659
    %3682 = vmatprep.subr.bf16.mxu0 %v3658
    %3683 = vmatpush1.bf16.msra.mxu0 %v3657
    %3684 = vmatprep.subr.bf16.mxu0 %v3656
    %3685 = vmatpush1.bf16.msra.mxu0 %v3655
    %3686 = vmatprep.subr.bf16.mxu0 %v3654
    %3687 = vmatpush1.bf16.msra.mxu0 %v3653
    %3688 = vmatprep.subr.bf16.mxu0 0
    %3689 = vmatpush2.bf16.msra.mxu0 0
    %3690 = vmatprep.subr.bf16.mxu0 0
    %3691 = vmatpush2.bf16.msra.mxu0 0
    %3692 = vmatprep.subr.bf16.mxu0 0
    %3693 = vmatpush2.bf16.msra.mxu0 0
    %3694 = vmatprep.subr.bf16.mxu0 0
    %3695 = vmatpush2.bf16.msra.mxu0 0
    %3696 = vmatprep.subr.bf16.mxu0 0
    %3697 = vmatpush2.bf16.msra.mxu0 0
    %3698 = vmatprep.subr.bf16.mxu0 0
    %3699 = vmatpush2.bf16.msra.mxu0 0
    %3700 = vmatprep.subr.bf16.mxu0 0
    %3701 = vmatpush2.bf16.msra.mxu0 0
    %3702 = vmatprep.subr.bf16.mxu0 0
    %3703 = vmatpush2.bf16.msra.mxu0 0
    %3704 = vmatprep.mubr.bf16.mxu0 0
    %3705 = vmatmul.mubr.bf16.gmra.mxu0 %v3670
    %v3706 = vpop.f32.mrf.mxu0
    %v3707 = vadd.f32 0.0, %v3706
    %v3708 = vpop.f32.mrf.mxu0
    %v3709 = vadd.f32 0.0, %v3708
    %v3710 = vpop.f32.mrf.mxu0
    %v3711 = vpop.f32.mrf.mxu0
    %3712 = vdwg.mxu0
    %v3713 = vadd.f32 %v3398, %v3707
    %v3714 = vadd.f32 %v3399, %v3709
    %v3715 = vld [vmem:[%s0 + $0x50] sm:$0xff]
    %v3717 = vcombine.high %v3715, %v3715
    %v3719 = vunpack.c.l.s4 1966171168
    %v3720 = vunpack.c.0.s8 %v3719
    %v3721 = vlaneseq
    %v3722 = vshrl.u32 %v3721, 7
    %v3723 = vsub.s32 %v3720, %v3722
    %v3724 = vrot.slane %v3715, %v3723
    %v3726 = vunpack.c.l.s4 1966171168
    %v3727 = vunpack.c.0.s8 %v3726
    %v3728 = vlaneseq
    %v3729 = vshrl.u32 %v3728, 7
    %v3730 = vsub.s32 %v3727, %v3729
    %v3731 = vrot.slane %v3717, %v3730
    %v3732 = vcombine.high %v3724, %v3724
    %v3733 = vcombine.high %v3731, %v3731
    %v3735 = vunpack.c.l.s4 1966171168
    %v3736 = vunpack.c.0.s8 %v3735
    %v3737 = vlaneseq
    %v3738 = vshrl.u32 %v3737, 7
    %v3739 = vsub.s32 %v3736, %v3738
    %v3740 = vrot.slane %v3724, %v3739
    %v3742 = vunpack.c.l.s4 1966171168
    %v3743 = vunpack.c.0.s8 %v3742
    %v3744 = vlaneseq
    %v3745 = vshrl.u32 %v3744, 7
    %v3746 = vsub.s32 %v3743, %v3745
    %v3747 = vrot.slane %v3731, %v3746
    %v3749 = vunpack.c.l.s4 1966171168
    %v3750 = vunpack.c.0.s8 %v3749
    %v3751 = vlaneseq
    %v3752 = vshrl.u32 %v3751, 7
    %v3753 = vsub.s32 %v3750, %v3752
    %v3754 = vrot.slane %v3732, %v3753
    %v3756 = vunpack.c.l.s4 1966171168
    %v3757 = vunpack.c.0.s8 %v3756
    %v3758 = vlaneseq
    %v3759 = vshrl.u32 %v3758, 7
    %v3760 = vsub.s32 %v3757, %v3759
    %v3761 = vrot.slane %v3733, %v3760
    %v3762 = vcombine.high %v3740, %v3740
    %v3763 = vcombine.high %v3747, %v3747
    %v3764 = vcombine.high %v3754, %v3754
    %v3765 = vcombine.high %v3761, %v3761
    %3774 = vmatprep.subr.bf16.mxu0 0
    %3775 = vmatpush1.bf16.msra.mxu0 %v506
    %3776 = vmatprep.subr.bf16.mxu0 0
    %3777 = vmatpush1.bf16.msra.mxu0 %v505
    %3778 = vmatprep.subr.bf16.mxu0 0
    %3779 = vmatpush1.bf16.msra.mxu0 %v504
    %3780 = vmatprep.subr.bf16.mxu0 0
    %3781 = vmatpush1.bf16.msra.mxu0 %v503
    %3782 = vmatprep.subr.bf16.mxu0 0
    %3783 = vmatpush1.bf16.msra.mxu0 %v502
    %3784 = vmatprep.subr.bf16.mxu0 0
    %3785 = vmatpush1.bf16.msra.mxu0 %v501
    %3786 = vmatprep.subr.bf16.mxu0 0
    %3787 = vmatpush1.bf16.msra.mxu0 %v500
    %3788 = vmatprep.subr.bf16.mxu0 0
    %3789 = vmatpush1.bf16.msra.mxu0 %v499
    %3790 = vmatprep.subr.bf16.mxu0 0
    %3791 = vmatpush2.bf16.msra.mxu0 %v514
    %3792 = vmatprep.subr.bf16.mxu0 0
    %3793 = vmatpush2.bf16.msra.mxu0 %v513
    %3794 = vmatprep.subr.bf16.mxu0 0
    %3795 = vmatpush2.bf16.msra.mxu0 %v512
    %3796 = vmatprep.subr.bf16.mxu0 0
    %3797 = vmatpush2.bf16.msra.mxu0 %v511
    %3798 = vmatprep.subr.bf16.mxu0 0
    %3799 = vmatpush2.bf16.msra.mxu0 %v510
    %3800 = vmatprep.subr.bf16.mxu0 0
    %3801 = vmatpush2.bf16.msra.mxu0 %v509
    %3802 = vmatprep.subr.bf16.mxu0 0
    %3803 = vmatpush2.bf16.msra.mxu0 %v508
    %3804 = vmatprep.subr.bf16.mxu0 0
    %3805 = vmatpush2.bf16.msra.mxu0 %v507
    %3806 = vmatprep.mubr.bf16.mxu0 %v3754
    %3807 = vmatmul.mubr.bf16.gmra.mxu0 %v3740
    %v3808 = vpop.f32.mrf.mxu0
    %v3809 = vadd.f32 %v183, %v3808
    %v3810 = vpop.f32.mrf.mxu0
    %v3811 = vpop.f32.mrf.mxu0
    %v3812 = vpop.f32.mrf.mxu0
    %3813 = vdwg.mxu0
    %3814 = vmatprep.subr.bf16.mxu0 0
    %3815 = vmatpush1.bf16.msra.mxu0 %v522
    %3816 = vmatprep.subr.bf16.mxu0 0
    %3817 = vmatpush1.bf16.msra.mxu0 %v521
    %3818 = vmatprep.subr.bf16.mxu0 0
    %3819 = vmatpush1.bf16.msra.mxu0 %v520
    %3820 = vmatprep.subr.bf16.mxu0 0
    %3821 = vmatpush1.bf16.msra.mxu0 %v519
    %3822 = vmatprep.subr.bf16.mxu0 0
    %3823 = vmatpush1.bf16.msra.mxu0 %v518
    %3824 = vmatprep.subr.bf16.mxu0 0
    %3825 = vmatpush1.bf16.msra.mxu0 %v517
    %3826 = vmatprep.subr.bf16.mxu0 0
    %3827 = vmatpush1.bf16.msra.mxu0 %v516
    %3828 = vmatprep.subr.bf16.mxu0 0
    %3829 = vmatpush1.bf16.msra.mxu0 %v515
    %3830 = vmatprep.subr.bf16.mxu0 0
    %3831 = vmatpush2.bf16.msra.mxu0 %v530
    %3832 = vmatprep.subr.bf16.mxu0 0
    %3833 = vmatpush2.bf16.msra.mxu0 %v529
    %3834 = vmatprep.subr.bf16.mxu0 0
    %3835 = vmatpush2.bf16.msra.mxu0 %v528
    %3836 = vmatprep.subr.bf16.mxu0 0
    %3837 = vmatpush2.bf16.msra.mxu0 %v527
    %3838 = vmatprep.subr.bf16.mxu0 0
    %3839 = vmatpush2.bf16.msra.mxu0 %v526
    %3840 = vmatprep.subr.bf16.mxu0 0
    %3841 = vmatpush2.bf16.msra.mxu0 %v525
    %3842 = vmatprep.subr.bf16.mxu0 0
    %3843 = vmatpush2.bf16.msra.mxu0 %v524
    %3844 = vmatprep.subr.bf16.mxu0 0
    %3845 = vmatpush2.bf16.msra.mxu0 %v523
    %3846 = vmatprep.mubr.bf16.mxu0 %v3764
    %3847 = vmatmul.mubr.bf16.gmra.mxu0 %v3762
    %v3848 = vpop.f32.mrf.mxu0
    %v3849 = vadd.f32 %v3809, %v3848
    %v3850 = vpop.f32.mrf.mxu0
    %v3851 = vpop.f32.mrf.mxu0
    %v3852 = vpop.f32.mrf.mxu0
    %3853 = vdwg.mxu0
    %3854 = vmatprep.subr.bf16.mxu0 0
    %3855 = vmatpush1.bf16.msra.mxu0 %v538
    %3856 = vmatprep.subr.bf16.mxu0 0
    %3857 = vmatpush1.bf16.msra.mxu0 %v537
    %3858 = vmatprep.subr.bf16.mxu0 0
    %3859 = vmatpush1.bf16.msra.mxu0 %v536
    %3860 = vmatprep.subr.bf16.mxu0 0
    %3861 = vmatpush1.bf16.msra.mxu0 %v535
    %3862 = vmatprep.subr.bf16.mxu0 0
    %3863 = vmatpush1.bf16.msra.mxu0 %v534
    %3864 = vmatprep.subr.bf16.mxu0 0
    %3865 = vmatpush1.bf16.msra.mxu0 %v533
    %3866 = vmatprep.subr.bf16.mxu0 0
    %3867 = vmatpush1.bf16.msra.mxu0 %v532
    %3868 = vmatprep.subr.bf16.mxu0 0
    %3869 = vmatpush1.bf16.msra.mxu0 %v531
    %3870 = vmatprep.subr.bf16.mxu0 0
    %3871 = vmatpush2.bf16.msra.mxu0 %v546
    %3872 = vmatprep.subr.bf16.mxu0 0
    %3873 = vmatpush2.bf16.msra.mxu0 %v545
    %3874 = vmatprep.subr.bf16.mxu0 0
    %3875 = vmatpush2.bf16.msra.mxu0 %v544
    %3876 = vmatprep.subr.bf16.mxu0 0
    %3877 = vmatpush2.bf16.msra.mxu0 %v543
    %3878 = vmatprep.subr.bf16.mxu0 0
    %3879 = vmatpush2.bf16.msra.mxu0 %v542
    %3880 = vmatprep.subr.bf16.mxu0 0
    %3881 = vmatpush2.bf16.msra.mxu0 %v541
    %3882 = vmatprep.subr.bf16.mxu0 0
    %3883 = vmatpush2.bf16.msra.mxu0 %v540
    %3884 = vmatprep.subr.bf16.mxu0 0
    %3885 = vmatpush2.bf16.msra.mxu0 %v539
    %3886 = vmatprep.mubr.bf16.mxu0 %v3761
    %3887 = vmatmul.mubr.bf16.gmra.mxu0 %v3747
    %v3888 = vpop.f32.mrf.mxu0
    %v3889 = vadd.f32 %v3849, %v3888
    %v3890 = vpop.f32.mrf.mxu0
    %v3891 = vpop.f32.mrf.mxu0
    %v3892 = vpop.f32.mrf.mxu0
    %3893 = vdwg.mxu0
    %3894 = vmatprep.subr.bf16.mxu0 0
    %3895 = vmatpush1.bf16.msra.mxu0 %v554
    %3896 = vmatprep.subr.bf16.mxu0 0
    %3897 = vmatpush1.bf16.msra.mxu0 %v553
    %3898 = vmatprep.subr.bf16.mxu0 0
    %3899 = vmatpush1.bf16.msra.mxu0 %v552
    %3900 = vmatprep.subr.bf16.mxu0 0
    %3901 = vmatpush1.bf16.msra.mxu0 %v551
    %3902 = vmatprep.subr.bf16.mxu0 0
    %3903 = vmatpush1.bf16.msra.mxu0 %v550
    %3904 = vmatprep.subr.bf16.mxu0 0
    %3905 = vmatpush1.bf16.msra.mxu0 %v549
    %3906 = vmatprep.subr.bf16.mxu0 0
    %3907 = vmatpush1.bf16.msra.mxu0 %v548
    %3908 = vmatprep.subr.bf16.mxu0 0
    %3909 = vmatpush1.bf16.msra.mxu0 %v547
    %3910 = vmatprep.subr.bf16.mxu0 0
    %3911 = vmatpush2.bf16.msra.mxu0 %v562
    %3912 = vmatprep.subr.bf16.mxu0 0
    %3913 = vmatpush2.bf16.msra.mxu0 %v561
    %3914 = vmatprep.subr.bf16.mxu0 0
    %3915 = vmatpush2.bf16.msra.mxu0 %v560
    %3916 = vmatprep.subr.bf16.mxu0 0
    %3917 = vmatpush2.bf16.msra.mxu0 %v559
    %3918 = vmatprep.subr.bf16.mxu0 0
    %3919 = vmatpush2.bf16.msra.mxu0 %v558
    %3920 = vmatprep.subr.bf16.mxu0 0
    %3921 = vmatpush2.bf16.msra.mxu0 %v557
    %3922 = vmatprep.subr.bf16.mxu0 0
    %3923 = vmatpush2.bf16.msra.mxu0 %v556
    %3924 = vmatprep.subr.bf16.mxu0 0
    %3925 = vmatpush2.bf16.msra.mxu0 %v555
    %3926 = vmatprep.mubr.bf16.mxu0 %v3765
    %3927 = vmatmul.mubr.bf16.gmra.mxu0 %v3763
    %v3928 = vpop.f32.mrf.mxu0
    %v3929 = vadd.f32 %v3889, %v3928
    %v3930 = vpop.f32.mrf.mxu0
    %v3931 = vpop.f32.mrf.mxu0
    %v3932 = vpop.f32.mrf.mxu0
    %3933 = vdwg.mxu0
    %v3934 = vmax.f32 %v3929, 0.0
    %v3935 = vpack.c.bf16 %v3934, %v3934
    %v3936 = vld [vmem:[%s4 + $0x280] sm:$0xff]
    %v3937 = vld [vmem:[%s4 + $0x288] sm:$0xff]
    %v3938 = vld [vmem:[%s4 + $0x290] sm:$0xff]
    %v3939 = vld [vmem:[%s4 + $0x298] sm:$0xff]
    %v3940 = vld [vmem:[%s4 + $0x2a0] sm:$0xff]
    %v3941 = vld [vmem:[%s4 + $0x2a8] sm:$0xff]
    %v3942 = vld [vmem:[%s4 + $0x2b0] sm:$0xff]
    %v3943 = vld [vmem:[%s4 + $0x2b8] sm:$0xff]
    %v3952 = vunpack.c.l.b16 %v3936
    %v3953 = vunpack.c.h.b16 %v3936
    %v3954 = vunpack.c.l.b16 %v3937
    %v3955 = vunpack.c.h.b16 %v3937
    %v3956 = vunpack.c.l.b16 %v3938
    %v3957 = vunpack.c.h.b16 %v3938
    %v3958 = vunpack.c.l.b16 %v3939
    %v3959 = vunpack.c.h.b16 %v3939
    %v3960 = vunpack.c.l.b16 %v3940
    %v3961 = vunpack.c.h.b16 %v3940
    %v3962 = vunpack.c.l.b16 %v3941
    %v3963 = vunpack.c.h.b16 %v3941
    %v3964 = vunpack.c.l.b16 %v3942
    %v3965 = vunpack.c.h.b16 %v3942
    %v3966 = vunpack.c.l.b16 %v3943
    %v3967 = vunpack.c.h.b16 %v3943
    %v3968 = vpack.c.b16 %v3954, %v3952
    %v3969 = vpack.c.b16 %v3955, %v3953
    %v3970 = vpack.c.b16 %v3958, %v3956
    %v3971 = vpack.c.b16 %v3959, %v3957
    %v3972 = vpack.c.b16 %v3962, %v3960
    %v3973 = vpack.c.b16 %v3963, %v3961
    %v3974 = vpack.c.b16 %v3966, %v3964
    %v3975 = vpack.c.b16 %v3967, %v3965
    %v3985 = vsel %vm1066, %v3935, 0
    %3987 = vmatprep.subr.bf16.mxu0 0
    %3988 = vmatpush1.bf16.msra.mxu0 0
    %3989 = vmatprep.subr.bf16.mxu0 0
    %3990 = vmatpush1.bf16.msra.mxu0 0
    %3991 = vmatprep.subr.bf16.mxu0 0
    %3992 = vmatpush1.bf16.msra.mxu0 0
    %3993 = vmatprep.subr.bf16.mxu0 0
    %3994 = vmatpush1.bf16.msra.mxu0 0
    %3995 = vmatprep.subr.bf16.mxu0 %v3975
    %3996 = vmatpush1.bf16.msra.mxu0 %v3974
    %3997 = vmatprep.subr.bf16.mxu0 %v3973
    %3998 = vmatpush1.bf16.msra.mxu0 %v3972
    %3999 = vmatprep.subr.bf16.mxu0 %v3971
    %4000 = vmatpush1.bf16.msra.mxu0 %v3970
    %4001 = vmatprep.subr.bf16.mxu0 %v3969
    %4002 = vmatpush1.bf16.msra.mxu0 %v3968
    %4003 = vmatprep.subr.bf16.mxu0 0
    %4004 = vmatpush2.bf16.msra.mxu0 0
    %4005 = vmatprep.subr.bf16.mxu0 0
    %4006 = vmatpush2.bf16.msra.mxu0 0
    %4007 = vmatprep.subr.bf16.mxu0 0
    %4008 = vmatpush2.bf16.msra.mxu0 0
    %4009 = vmatprep.subr.bf16.mxu0 0
    %4010 = vmatpush2.bf16.msra.mxu0 0
    %4011 = vmatprep.subr.bf16.mxu0 0
    %4012 = vmatpush2.bf16.msra.mxu0 0
    %4013 = vmatprep.subr.bf16.mxu0 0
    %4014 = vmatpush2.bf16.msra.mxu0 0
    %4015 = vmatprep.subr.bf16.mxu0 0
    %4016 = vmatpush2.bf16.msra.mxu0 0
    %4017 = vmatprep.subr.bf16.mxu0 0
    %4018 = vmatpush2.bf16.msra.mxu0 0
    %4019 = vmatprep.mubr.bf16.mxu0 0
    %4020 = vmatmul.mubr.bf16.gmra.mxu0 %v3985
    %v4021 = vpop.f32.mrf.mxu0
    %v4022 = vadd.f32 0.0, %v4021
    %v4023 = vpop.f32.mrf.mxu0
    %v4024 = vadd.f32 0.0, %v4023
    %v4025 = vpop.f32.mrf.mxu0
    %v4026 = vpop.f32.mrf.mxu0
    %4027 = vdwg.mxu0
    %v4028 = vadd.f32 %v3713, %v4022
    %v4029 = vadd.f32 %v3714, %v4024
    %v4030 = vld [vmem:[%s0 + $0x58] sm:$0xff]
    %v4032 = vcombine.high %v4030, %v4030
    %v4034 = vunpack.c.l.s4 1966171168
    %v4035 = vunpack.c.0.s8 %v4034
    %v4036 = vlaneseq
    %v4037 = vshrl.u32 %v4036, 7
    %v4038 = vsub.s32 %v4035, %v4037
    %v4039 = vrot.slane %v4030, %v4038
    %v4041 = vunpack.c.l.s4 1966171168
    %v4042 = vunpack.c.0.s8 %v4041
    %v4043 = vlaneseq
    %v4044 = vshrl.u32 %v4043, 7
    %v4045 = vsub.s32 %v4042, %v4044
    %v4046 = vrot.slane %v4032, %v4045
    %v4047 = vcombine.high %v4039, %v4039
    %v4048 = vcombine.high %v4046, %v4046
    %v4050 = vunpack.c.l.s4 1966171168
    %v4051 = vunpack.c.0.s8 %v4050
    %v4052 = vlaneseq
    %v4053 = vshrl.u32 %v4052, 7
    %v4054 = vsub.s32 %v4051, %v4053
    %v4055 = vrot.slane %v4039, %v4054
    %v4057 = vunpack.c.l.s4 1966171168
    %v4058 = vunpack.c.0.s8 %v4057
    %v4059 = vlaneseq
    %v4060 = vshrl.u32 %v4059, 7
    %v4061 = vsub.s32 %v4058, %v4060
    %v4062 = vrot.slane %v4046, %v4061
    %v4064 = vunpack.c.l.s4 1966171168
    %v4065 = vunpack.c.0.s8 %v4064
    %v4066 = vlaneseq
    %v4067 = vshrl.u32 %v4066, 7
    %v4068 = vsub.s32 %v4065, %v4067
    %v4069 = vrot.slane %v4047, %v4068
    %v4071 = vunpack.c.l.s4 1966171168
    %v4072 = vunpack.c.0.s8 %v4071
    %v4073 = vlaneseq
    %v4074 = vshrl.u32 %v4073, 7
    %v4075 = vsub.s32 %v4072, %v4074
    %v4076 = vrot.slane %v4048, %v4075
    %v4077 = vcombine.high %v4055, %v4055
    %v4078 = vcombine.high %v4062, %v4062
    %v4079 = vcombine.high %v4069, %v4069
    %v4080 = vcombine.high %v4076, %v4076
    %4089 = vmatprep.subr.bf16.mxu0 0
    %4090 = vmatpush1.bf16.msra.mxu0 %v506
    %4091 = vmatprep.subr.bf16.mxu0 0
    %4092 = vmatpush1.bf16.msra.mxu0 %v505
    %4093 = vmatprep.subr.bf16.mxu0 0
    %4094 = vmatpush1.bf16.msra.mxu0 %v504
    %4095 = vmatprep.subr.bf16.mxu0 0
    %4096 = vmatpush1.bf16.msra.mxu0 %v503
    %4097 = vmatprep.subr.bf16.mxu0 0
    %4098 = vmatpush1.bf16.msra.mxu0 %v502
    %4099 = vmatprep.subr.bf16.mxu0 0
    %4100 = vmatpush1.bf16.msra.mxu0 %v501
    %4101 = vmatprep.subr.bf16.mxu0 0
    %4102 = vmatpush1.bf16.msra.mxu0 %v500
    %4103 = vmatprep.subr.bf16.mxu0 0
    %4104 = vmatpush1.bf16.msra.mxu0 %v499
    %4105 = vmatprep.subr.bf16.mxu0 0
    %4106 = vmatpush2.bf16.msra.mxu0 %v514
    %4107 = vmatprep.subr.bf16.mxu0 0
    %4108 = vmatpush2.bf16.msra.mxu0 %v513
    %4109 = vmatprep.subr.bf16.mxu0 0
    %4110 = vmatpush2.bf16.msra.mxu0 %v512
    %4111 = vmatprep.subr.bf16.mxu0 0
    %4112 = vmatpush2.bf16.msra.mxu0 %v511
    %4113 = vmatprep.subr.bf16.mxu0 0
    %4114 = vmatpush2.bf16.msra.mxu0 %v510
    %4115 = vmatprep.subr.bf16.mxu0 0
    %4116 = vmatpush2.bf16.msra.mxu0 %v509
    %4117 = vmatprep.subr.bf16.mxu0 0
    %4118 = vmatpush2.bf16.msra.mxu0 %v508
    %4119 = vmatprep.subr.bf16.mxu0 0
    %4120 = vmatpush2.bf16.msra.mxu0 %v507
    %4121 = vmatprep.mubr.bf16.mxu0 %v4069
    %4122 = vmatmul.mubr.bf16.gmra.mxu0 %v4055
    %v4123 = vpop.f32.mrf.mxu0
    %v4124 = vadd.f32 %v183, %v4123
    %v4125 = vpop.f32.mrf.mxu0
    %v4126 = vpop.f32.mrf.mxu0
    %v4127 = vpop.f32.mrf.mxu0
    %4128 = vdwg.mxu0
    %4129 = vmatprep.subr.bf16.mxu0 0
    %4130 = vmatpush1.bf16.msra.mxu0 %v522
    %4131 = vmatprep.subr.bf16.mxu0 0
    %4132 = vmatpush1.bf16.msra.mxu0 %v521
    %4133 = vmatprep.subr.bf16.mxu0 0
    %4134 = vmatpush1.bf16.msra.mxu0 %v520
    %4135 = vmatprep.subr.bf16.mxu0 0
    %4136 = vmatpush1.bf16.msra.mxu0 %v519
    %4137 = vmatprep.subr.bf16.mxu0 0
    %4138 = vmatpush1.bf16.msra.mxu0 %v518
    %4139 = vmatprep.subr.bf16.mxu0 0
    %4140 = vmatpush1.bf16.msra.mxu0 %v517
    %4141 = vmatprep.subr.bf16.mxu0 0
    %4142 = vmatpush1.bf16.msra.mxu0 %v516
    %4143 = vmatprep.subr.bf16.mxu0 0
    %4144 = vmatpush1.bf16.msra.mxu0 %v515
    %4145 = vmatprep.subr.bf16.mxu0 0
    %4146 = vmatpush2.bf16.msra.mxu0 %v530
    %4147 = vmatprep.subr.bf16.mxu0 0
    %4148 = vmatpush2.bf16.msra.mxu0 %v529
    %4149 = vmatprep.subr.bf16.mxu0 0
    %4150 = vmatpush2.bf16.msra.mxu0 %v528
    %4151 = vmatprep.subr.bf16.mxu0 0
    %4152 = vmatpush2.bf16.msra.mxu0 %v527
    %4153 = vmatprep.subr.bf16.mxu0 0
    %4154 = vmatpush2.bf16.msra.mxu0 %v526
    %4155 = vmatprep.subr.bf16.mxu0 0
    %4156 = vmatpush2.bf16.msra.mxu0 %v525
    %4157 = vmatprep.subr.bf16.mxu0 0
    %4158 = vmatpush2.bf16.msra.mxu0 %v524
    %4159 = vmatprep.subr.bf16.mxu0 0
    %4160 = vmatpush2.bf16.msra.mxu0 %v523
    %4161 = vmatprep.mubr.bf16.mxu0 %v4079
    %4162 = vmatmul.mubr.bf16.gmra.mxu0 %v4077
    %v4163 = vpop.f32.mrf.mxu0
    %v4164 = vadd.f32 %v4124, %v4163
    %v4165 = vpop.f32.mrf.mxu0
    %v4166 = vpop.f32.mrf.mxu0
    %v4167 = vpop.f32.mrf.mxu0
    %4168 = vdwg.mxu0
    %4169 = vmatprep.subr.bf16.mxu0 0
    %4170 = vmatpush1.bf16.msra.mxu0 %v538
    %4171 = vmatprep.subr.bf16.mxu0 0
    %4172 = vmatpush1.bf16.msra.mxu0 %v537
    %4173 = vmatprep.subr.bf16.mxu0 0
    %4174 = vmatpush1.bf16.msra.mxu0 %v536
    %4175 = vmatprep.subr.bf16.mxu0 0
    %4176 = vmatpush1.bf16.msra.mxu0 %v535
    %4177 = vmatprep.subr.bf16.mxu0 0
    %4178 = vmatpush1.bf16.msra.mxu0 %v534
    %4179 = vmatprep.subr.bf16.mxu0 0
    %4180 = vmatpush1.bf16.msra.mxu0 %v533
    %4181 = vmatprep.subr.bf16.mxu0 0
    %4182 = vmatpush1.bf16.msra.mxu0 %v532
    %4183 = vmatprep.subr.bf16.mxu0 0
    %4184 = vmatpush1.bf16.msra.mxu0 %v531
    %4185 = vmatprep.subr.bf16.mxu0 0
    %4186 = vmatpush2.bf16.msra.mxu0 %v546
    %4187 = vmatprep.subr.bf16.mxu0 0
    %4188 = vmatpush2.bf16.msra.mxu0 %v545
    %4189 = vmatprep.subr.bf16.mxu0 0
    %4190 = vmatpush2.bf16.msra.mxu0 %v544
    %4191 = vmatprep.subr.bf16.mxu0 0
    %4192 = vmatpush2.bf16.msra.mxu0 %v543
    %4193 = vmatprep.subr.bf16.mxu0 0
    %4194 = vmatpush2.bf16.msra.mxu0 %v542
    %4195 = vmatprep.subr.bf16.mxu0 0
    %4196 = vmatpush2.bf16.msra.mxu0 %v541
    %4197 = vmatprep.subr.bf16.mxu0 0
    %4198 = vmatpush2.bf16.msra.mxu0 %v540
    %4199 = vmatprep.subr.bf16.mxu0 0
    %4200 = vmatpush2.bf16.msra.mxu0 %v539
    %4201 = vmatprep.mubr.bf16.mxu0 %v4076
    %4202 = vmatmul.mubr.bf16.gmra.mxu0 %v4062
    %v4203 = vpop.f32.mrf.mxu0
    %v4204 = vadd.f32 %v4164, %v4203
    %v4205 = vpop.f32.mrf.mxu0
    %v4206 = vpop.f32.mrf.mxu0
    %v4207 = vpop.f32.mrf.mxu0
    %4208 = vdwg.mxu0
    %4209 = vmatprep.subr.bf16.mxu0 0
    %4210 = vmatpush1.bf16.msra.mxu0 %v554
    %4211 = vmatprep.subr.bf16.mxu0 0
    %4212 = vmatpush1.bf16.msra.mxu0 %v553
    %4213 = vmatprep.subr.bf16.mxu0 0
    %4214 = vmatpush1.bf16.msra.mxu0 %v552
    %4215 = vmatprep.subr.bf16.mxu0 0
    %4216 = vmatpush1.bf16.msra.mxu0 %v551
    %4217 = vmatprep.subr.bf16.mxu0 0
    %4218 = vmatpush1.bf16.msra.mxu0 %v550
    %4219 = vmatprep.subr.bf16.mxu0 0
    %4220 = vmatpush1.bf16.msra.mxu0 %v549
    %4221 = vmatprep.subr.bf16.mxu0 0
    %4222 = vmatpush1.bf16.msra.mxu0 %v548
    %4223 = vmatprep.subr.bf16.mxu0 0
    %4224 = vmatpush1.bf16.msra.mxu0 %v547
    %4225 = vmatprep.subr.bf16.mxu0 0
    %4226 = vmatpush2.bf16.msra.mxu0 %v562
    %4227 = vmatprep.subr.bf16.mxu0 0
    %4228 = vmatpush2.bf16.msra.mxu0 %v561
    %4229 = vmatprep.subr.bf16.mxu0 0
    %4230 = vmatpush2.bf16.msra.mxu0 %v560
    %4231 = vmatprep.subr.bf16.mxu0 0
    %4232 = vmatpush2.bf16.msra.mxu0 %v559
    %4233 = vmatprep.subr.bf16.mxu0 0
    %4234 = vmatpush2.bf16.msra.mxu0 %v558
    %4235 = vmatprep.subr.bf16.mxu0 0
    %4236 = vmatpush2.bf16.msra.mxu0 %v557
    %4237 = vmatprep.subr.bf16.mxu0 0
    %4238 = vmatpush2.bf16.msra.mxu0 %v556
    %4239 = vmatprep.subr.bf16.mxu0 0
    %4240 = vmatpush2.bf16.msra.mxu0 %v555
    %4241 = vmatprep.mubr.bf16.mxu0 %v4080
    %4242 = vmatmul.mubr.bf16.gmra.mxu0 %v4078
    %v4243 = vpop.f32.mrf.mxu0
    %v4244 = vadd.f32 %v4204, %v4243
    %v4245 = vpop.f32.mrf.mxu0
    %v4246 = vpop.f32.mrf.mxu0
    %v4247 = vpop.f32.mrf.mxu0
    %4248 = vdwg.mxu0
    %v4249 = vmax.f32 %v4244, 0.0
    %v4250 = vpack.c.bf16 %v4249, %v4249
    %v4251 = vld [vmem:[%s4 + $0x2c0] sm:$0xff]
    %v4252 = vld [vmem:[%s4 + $0x2c8] sm:$0xff]
    %v4253 = vld [vmem:[%s4 + $0x2d0] sm:$0xff]
    %v4254 = vld [vmem:[%s4 + $0x2d8] sm:$0xff]
    %v4255 = vld [vmem:[%s4 + $0x2e0] sm:$0xff]
    %v4256 = vld [vmem:[%s4 + $0x2e8] sm:$0xff]
    %v4257 = vld [vmem:[%s4 + $0x2f0] sm:$0xff]
    %v4258 = vld [vmem:[%s4 + $0x2f8] sm:$0xff]
    %v4267 = vunpack.c.l.b16 %v4251
    %v4268 = vunpack.c.h.b16 %v4251
    %v4269 = vunpack.c.l.b16 %v4252
    %v4270 = vunpack.c.h.b16 %v4252
    %v4271 = vunpack.c.l.b16 %v4253
    %v4272 = vunpack.c.h.b16 %v4253
    %v4273 = vunpack.c.l.b16 %v4254
    %v4274 = vunpack.c.h.b16 %v4254
    %v4275 = vunpack.c.l.b16 %v4255
    %v4276 = vunpack.c.h.b16 %v4255
    %v4277 = vunpack.c.l.b16 %v4256
    %v4278 = vunpack.c.h.b16 %v4256
    %v4279 = vunpack.c.l.b16 %v4257
    %v4280 = vunpack.c.h.b16 %v4257
    %v4281 = vunpack.c.l.b16 %v4258
    %v4282 = vunpack.c.h.b16 %v4258
    %v4283 = vpack.c.b16 %v4269, %v4267
    %v4284 = vpack.c.b16 %v4270, %v4268
    %v4285 = vpack.c.b16 %v4273, %v4271
    %v4286 = vpack.c.b16 %v4274, %v4272
    %v4287 = vpack.c.b16 %v4277, %v4275
    %v4288 = vpack.c.b16 %v4278, %v4276
    %v4289 = vpack.c.b16 %v4281, %v4279
    %v4290 = vpack.c.b16 %v4282, %v4280
    %v4300 = vsel %vm1066, %v4250, 0
    %4302 = vmatprep.subr.bf16.mxu0 0
    %4303 = vmatpush1.bf16.msra.mxu0 0
    %4304 = vmatprep.subr.bf16.mxu0 0
    %4305 = vmatpush1.bf16.msra.mxu0 0
    %4306 = vmatprep.subr.bf16.mxu0 0
    %4307 = vmatpush1.bf16.msra.mxu0 0
    %4308 = vmatprep.subr.bf16.mxu0 0
    %4309 = vmatpush1.bf16.msra.mxu0 0
    %4310 = vmatprep.subr.bf16.mxu0 %v4290
    %4311 = vmatpush1.bf16.msra.mxu0 %v4289
    %4312 = vmatprep.subr.bf16.mxu0 %v4288
    %4313 = vmatpush1.bf16.msra.mxu0 %v4287
    %4314 = vmatprep.subr.bf16.mxu0 %v4286
    %4315 = vmatpush1.bf16.msra.mxu0 %v4285
    %4316 = vmatprep.subr.bf16.mxu0 %v4284
    %4317 = vmatpush1.bf16.msra.mxu0 %v4283
    %4318 = vmatprep.subr.bf16.mxu0 0
    %4319 = vmatpush2.bf16.msra.mxu0 0
    %4320 = vmatprep.subr.bf16.mxu0 0
    %4321 = vmatpush2.bf16.msra.mxu0 0
    %4322 = vmatprep.subr.bf16.mxu0 0
    %4323 = vmatpush2.bf16.msra.mxu0 0
    %4324 = vmatprep.subr.bf16.mxu0 0
    %4325 = vmatpush2.bf16.msra.mxu0 0
    %4326 = vmatprep.subr.bf16.mxu0 0
    %4327 = vmatpush2.bf16.msra.mxu0 0
    %4328 = vmatprep.subr.bf16.mxu0 0
    %4329 = vmatpush2.bf16.msra.mxu0 0
    %4330 = vmatprep.subr.bf16.mxu0 0
    %4331 = vmatpush2.bf16.msra.mxu0 0
    %4332 = vmatprep.subr.bf16.mxu0 0
    %4333 = vmatpush2.bf16.msra.mxu0 0
    %4334 = vmatprep.mubr.bf16.mxu0 0
    %4335 = vmatmul.mubr.bf16.gmra.mxu0 %v4300
    %v4336 = vpop.f32.mrf.mxu0
    %v4337 = vadd.f32 0.0, %v4336
    %v4338 = vpop.f32.mrf.mxu0
    %v4339 = vadd.f32 0.0, %v4338
    %v4340 = vpop.f32.mrf.mxu0
    %v4341 = vpop.f32.mrf.mxu0
    %4342 = vdwg.mxu0
    %v4343 = vadd.f32 %v4028, %v4337
    %v4344 = vadd.f32 %v4029, %v4339
    %v4345 = vld [vmem:[%s0 + $0x60] sm:$0xff]
    %v4347 = vcombine.high %v4345, %v4345
    %v4349 = vunpack.c.l.s4 1966171168
    %v4350 = vunpack.c.0.s8 %v4349
    %v4351 = vlaneseq
    %v4352 = vshrl.u32 %v4351, 7
    %v4353 = vsub.s32 %v4350, %v4352
    %v4354 = vrot.slane %v4345, %v4353
    %v4356 = vunpack.c.l.s4 1966171168
    %v4357 = vunpack.c.0.s8 %v4356
    %v4358 = vlaneseq
    %v4359 = vshrl.u32 %v4358, 7
    %v4360 = vsub.s32 %v4357, %v4359
    %v4361 = vrot.slane %v4347, %v4360
    %v4362 = vcombine.high %v4354, %v4354
    %v4363 = vcombine.high %v4361, %v4361
    %v4365 = vunpack.c.l.s4 1966171168
    %v4366 = vunpack.c.0.s8 %v4365
    %v4367 = vlaneseq
    %v4368 = vshrl.u32 %v4367, 7
    %v4369 = vsub.s32 %v4366, %v4368
    %v4370 = vrot.slane %v4354, %v4369
    %v4372 = vunpack.c.l.s4 1966171168
    %v4373 = vunpack.c.0.s8 %v4372
    %v4374 = vlaneseq
    %v4375 = vshrl.u32 %v4374, 7
    %v4376 = vsub.s32 %v4373, %v4375
    %v4377 = vrot.slane %v4361, %v4376
    %v4379 = vunpack.c.l.s4 1966171168
    %v4380 = vunpack.c.0.s8 %v4379
    %v4381 = vlaneseq
    %v4382 = vshrl.u32 %v4381, 7
    %v4383 = vsub.s32 %v4380, %v4382
    %v4384 = vrot.slane %v4362, %v4383
    %v4386 = vunpack.c.l.s4 1966171168
    %v4387 = vunpack.c.0.s8 %v4386
    %v4388 = vlaneseq
    %v4389 = vshrl.u32 %v4388, 7
    %v4390 = vsub.s32 %v4387, %v4389
    %v4391 = vrot.slane %v4363, %v4390
    %v4392 = vcombine.high %v4370, %v4370
    %v4393 = vcombine.high %v4377, %v4377
    %v4394 = vcombine.high %v4384, %v4384
    %v4395 = vcombine.high %v4391, %v4391
    %4404 = vmatprep.subr.bf16.mxu0 0
    %4405 = vmatpush1.bf16.msra.mxu0 %v506
    %4406 = vmatprep.subr.bf16.mxu0 0
    %4407 = vmatpush1.bf16.msra.mxu0 %v505
    %4408 = vmatprep.subr.bf16.mxu0 0
    %4409 = vmatpush1.bf16.msra.mxu0 %v504
    %4410 = vmatprep.subr.bf16.mxu0 0
    %4411 = vmatpush1.bf16.msra.mxu0 %v503
    %4412 = vmatprep.subr.bf16.mxu0 0
    %4413 = vmatpush1.bf16.msra.mxu0 %v502
    %4414 = vmatprep.subr.bf16.mxu0 0
    %4415 = vmatpush1.bf16.msra.mxu0 %v501
    %4416 = vmatprep.subr.bf16.mxu0 0
    %4417 = vmatpush1.bf16.msra.mxu0 %v500
    %4418 = vmatprep.subr.bf16.mxu0 0
    %4419 = vmatpush1.bf16.msra.mxu0 %v499
    %4420 = vmatprep.subr.bf16.mxu0 0
    %4421 = vmatpush2.bf16.msra.mxu0 %v514
    %4422 = vmatprep.subr.bf16.mxu0 0
    %4423 = vmatpush2.bf16.msra.mxu0 %v513
    %4424 = vmatprep.subr.bf16.mxu0 0
    %4425 = vmatpush2.bf16.msra.mxu0 %v512
    %4426 = vmatprep.subr.bf16.mxu0 0
    %4427 = vmatpush2.bf16.msra.mxu0 %v511
    %4428 = vmatprep.subr.bf16.mxu0 0
    %4429 = vmatpush2.bf16.msra.mxu0 %v510
    %4430 = vmatprep.subr.bf16.mxu0 0
    %4431 = vmatpush2.bf16.msra.mxu0 %v509
    %4432 = vmatprep.subr.bf16.mxu0 0
    %4433 = vmatpush2.bf16.msra.mxu0 %v508
    %4434 = vmatprep.subr.bf16.mxu0 0
    %4435 = vmatpush2.bf16.msra.mxu0 %v507
    %4436 = vmatprep.mubr.bf16.mxu0 %v4384
    %4437 = vmatmul.mubr.bf16.gmra.mxu0 %v4370
    %v4438 = vpop.f32.mrf.mxu0
    %v4439 = vadd.f32 %v183, %v4438
    %v4440 = vpop.f32.mrf.mxu0
    %v4441 = vpop.f32.mrf.mxu0
    %v4442 = vpop.f32.mrf.mxu0
    %4443 = vdwg.mxu0
    %4444 = vmatprep.subr.bf16.mxu0 0
    %4445 = vmatpush1.bf16.msra.mxu0 %v522
    %4446 = vmatprep.subr.bf16.mxu0 0
    %4447 = vmatpush1.bf16.msra.mxu0 %v521
    %4448 = vmatprep.subr.bf16.mxu0 0
    %4449 = vmatpush1.bf16.msra.mxu0 %v520
    %4450 = vmatprep.subr.bf16.mxu0 0
    %4451 = vmatpush1.bf16.msra.mxu0 %v519
    %4452 = vmatprep.subr.bf16.mxu0 0
    %4453 = vmatpush1.bf16.msra.mxu0 %v518
    %4454 = vmatprep.subr.bf16.mxu0 0
    %4455 = vmatpush1.bf16.msra.mxu0 %v517
    %4456 = vmatprep.subr.bf16.mxu0 0
    %4457 = vmatpush1.bf16.msra.mxu0 %v516
    %4458 = vmatprep.subr.bf16.mxu0 0
    %4459 = vmatpush1.bf16.msra.mxu0 %v515
    %4460 = vmatprep.subr.bf16.mxu0 0
    %4461 = vmatpush2.bf16.msra.mxu0 %v530
    %4462 = vmatprep.subr.bf16.mxu0 0
    %4463 = vmatpush2.bf16.msra.mxu0 %v529
    %4464 = vmatprep.subr.bf16.mxu0 0
    %4465 = vmatpush2.bf16.msra.mxu0 %v528
    %4466 = vmatprep.subr.bf16.mxu0 0
    %4467 = vmatpush2.bf16.msra.mxu0 %v527
    %4468 = vmatprep.subr.bf16.mxu0 0
    %4469 = vmatpush2.bf16.msra.mxu0 %v526
    %4470 = vmatprep.subr.bf16.mxu0 0
    %4471 = vmatpush2.bf16.msra.mxu0 %v525
    %4472 = vmatprep.subr.bf16.mxu0 0
    %4473 = vmatpush2.bf16.msra.mxu0 %v524
    %4474 = vmatprep.subr.bf16.mxu0 0
    %4475 = vmatpush2.bf16.msra.mxu0 %v523
    %4476 = vmatprep.mubr.bf16.mxu0 %v4394
    %4477 = vmatmul.mubr.bf16.gmra.mxu0 %v4392
    %v4478 = vpop.f32.mrf.mxu0
    %v4479 = vadd.f32 %v4439, %v4478
    %v4480 = vpop.f32.mrf.mxu0
    %v4481 = vpop.f32.mrf.mxu0
    %v4482 = vpop.f32.mrf.mxu0
    %4483 = vdwg.mxu0
    %4484 = vmatprep.subr.bf16.mxu0 0
    %4485 = vmatpush1.bf16.msra.mxu0 %v538
    %4486 = vmatprep.subr.bf16.mxu0 0
    %4487 = vmatpush1.bf16.msra.mxu0 %v537
    %4488 = vmatprep.subr.bf16.mxu0 0
    %4489 = vmatpush1.bf16.msra.mxu0 %v536
    %4490 = vmatprep.subr.bf16.mxu0 0
    %4491 = vmatpush1.bf16.msra.mxu0 %v535
    %4492 = vmatprep.subr.bf16.mxu0 0
    %4493 = vmatpush1.bf16.msra.mxu0 %v534
    %4494 = vmatprep.subr.bf16.mxu0 0
    %4495 = vmatpush1.bf16.msra.mxu0 %v533
    %4496 = vmatprep.subr.bf16.mxu0 0
    %4497 = vmatpush1.bf16.msra.mxu0 %v532
    %4498 = vmatprep.subr.bf16.mxu0 0
    %4499 = vmatpush1.bf16.msra.mxu0 %v531
    %4500 = vmatprep.subr.bf16.mxu0 0
    %4501 = vmatpush2.bf16.msra.mxu0 %v546
    %4502 = vmatprep.subr.bf16.mxu0 0
    %4503 = vmatpush2.bf16.msra.mxu0 %v545
    %4504 = vmatprep.subr.bf16.mxu0 0
    %4505 = vmatpush2.bf16.msra.mxu0 %v544
    %4506 = vmatprep.subr.bf16.mxu0 0
    %4507 = vmatpush2.bf16.msra.mxu0 %v543
    %4508 = vmatprep.subr.bf16.mxu0 0
    %4509 = vmatpush2.bf16.msra.mxu0 %v542
    %4510 = vmatprep.subr.bf16.mxu0 0
    %4511 = vmatpush2.bf16.msra.mxu0 %v541
    %4512 = vmatprep.subr.bf16.mxu0 0
    %4513 = vmatpush2.bf16.msra.mxu0 %v540
    %4514 = vmatprep.subr.bf16.mxu0 0
    %4515 = vmatpush2.bf16.msra.mxu0 %v539
    %4516 = vmatprep.mubr.bf16.mxu0 %v4391
    %4517 = vmatmul.mubr.bf16.gmra.mxu0 %v4377
    %v4518 = vpop.f32.mrf.mxu0
    %v4519 = vadd.f32 %v4479, %v4518
    %v4520 = vpop.f32.mrf.mxu0
    %v4521 = vpop.f32.mrf.mxu0
    %v4522 = vpop.f32.mrf.mxu0
    %4523 = vdwg.mxu0
    %4524 = vmatprep.subr.bf16.mxu0 0
    %4525 = vmatpush1.bf16.msra.mxu0 %v554
    %4526 = vmatprep.subr.bf16.mxu0 0
    %4527 = vmatpush1.bf16.msra.mxu0 %v553
    %4528 = vmatprep.subr.bf16.mxu0 0
    %4529 = vmatpush1.bf16.msra.mxu0 %v552
    %4530 = vmatprep.subr.bf16.mxu0 0
    %4531 = vmatpush1.bf16.msra.mxu0 %v551
    %4532 = vmatprep.subr.bf16.mxu0 0
    %4533 = vmatpush1.bf16.msra.mxu0 %v550
    %4534 = vmatprep.subr.bf16.mxu0 0
    %4535 = vmatpush1.bf16.msra.mxu0 %v549
    %4536 = vmatprep.subr.bf16.mxu0 0
    %4537 = vmatpush1.bf16.msra.mxu0 %v548
    %4538 = vmatprep.subr.bf16.mxu0 0
    %4539 = vmatpush1.bf16.msra.mxu0 %v547
    %4540 = vmatprep.subr.bf16.mxu0 0
    %4541 = vmatpush2.bf16.msra.mxu0 %v562
    %4542 = vmatprep.subr.bf16.mxu0 0
    %4543 = vmatpush2.bf16.msra.mxu0 %v561
    %4544 = vmatprep.subr.bf16.mxu0 0
    %4545 = vmatpush2.bf16.msra.mxu0 %v560
    %4546 = vmatprep.subr.bf16.mxu0 0
    %4547 = vmatpush2.bf16.msra.mxu0 %v559
    %4548 = vmatprep.subr.bf16.mxu0 0
    %4549 = vmatpush2.bf16.msra.mxu0 %v558
    %4550 = vmatprep.subr.bf16.mxu0 0
    %4551 = vmatpush2.bf16.msra.mxu0 %v557
    %4552 = vmatprep.subr.bf16.mxu0 0
    %4553 = vmatpush2.bf16.msra.mxu0 %v556
    %4554 = vmatprep.subr.bf16.mxu0 0
    %4555 = vmatpush2.bf16.msra.mxu0 %v555
    %4556 = vmatprep.mubr.bf16.mxu0 %v4395
    %4557 = vmatmul.mubr.bf16.gmra.mxu0 %v4393
    %v4558 = vpop.f32.mrf.mxu0
    %v4559 = vadd.f32 %v4519, %v4558
    %v4560 = vpop.f32.mrf.mxu0
    %v4561 = vpop.f32.mrf.mxu0
    %v4562 = vpop.f32.mrf.mxu0
    %4563 = vdwg.mxu0
    %v4564 = vmax.f32 %v4559, 0.0
    %v4565 = vpack.c.bf16 %v4564, %v4564
    %v4566 = vld [vmem:[%s4 + $0x300] sm:$0xff]
    %v4567 = vld [vmem:[%s4 + $0x308] sm:$0xff]
    %v4568 = vld [vmem:[%s4 + $0x310] sm:$0xff]
    %v4569 = vld [vmem:[%s4 + $0x318] sm:$0xff]
    %v4570 = vld [vmem:[%s4 + $0x320] sm:$0xff]
    %v4571 = vld [vmem:[%s4 + $0x328] sm:$0xff]
    %v4572 = vld [vmem:[%s4 + $0x330] sm:$0xff]
    %v4573 = vld [vmem:[%s4 + $0x338] sm:$0xff]
    %v4582 = vunpack.c.l.b16 %v4566
    %v4583 = vunpack.c.h.b16 %v4566
    %v4584 = vunpack.c.l.b16 %v4567
    %v4585 = vunpack.c.h.b16 %v4567
    %v4586 = vunpack.c.l.b16 %v4568
    %v4587 = vunpack.c.h.b16 %v4568
    %v4588 = vunpack.c.l.b16 %v4569
    %v4589 = vunpack.c.h.b16 %v4569
    %v4590 = vunpack.c.l.b16 %v4570
    %v4591 = vunpack.c.h.b16 %v4570
    %v4592 = vunpack.c.l.b16 %v4571
    %v4593 = vunpack.c.h.b16 %v4571
    %v4594 = vunpack.c.l.b16 %v4572
    %v4595 = vunpack.c.h.b16 %v4572
    %v4596 = vunpack.c.l.b16 %v4573
    %v4597 = vunpack.c.h.b16 %v4573
    %v4598 = vpack.c.b16 %v4584, %v4582
    %v4599 = vpack.c.b16 %v4585, %v4583
    %v4600 = vpack.c.b16 %v4588, %v4586
    %v4601 = vpack.c.b16 %v4589, %v4587
    %v4602 = vpack.c.b16 %v4592, %v4590
    %v4603 = vpack.c.b16 %v4593, %v4591
    %v4604 = vpack.c.b16 %v4596, %v4594
    %v4605 = vpack.c.b16 %v4597, %v4595
    %v4615 = vsel %vm1066, %v4565, 0
    %4617 = vmatprep.subr.bf16.mxu0 0
    %4618 = vmatpush1.bf16.msra.mxu0 0
    %4619 = vmatprep.subr.bf16.mxu0 0
    %4620 = vmatpush1.bf16.msra.mxu0 0
    %4621 = vmatprep.subr.bf16.mxu0 0
    %4622 = vmatpush1.bf16.msra.mxu0 0
    %4623 = vmatprep.subr.bf16.mxu0 0
    %4624 = vmatpush1.bf16.msra.mxu0 0
    %4625 = vmatprep.subr.bf16.mxu0 %v4605
    %4626 = vmatpush1.bf16.msra.mxu0 %v4604
    %4627 = vmatprep.subr.bf16.mxu0 %v4603
    %4628 = vmatpush1.bf16.msra.mxu0 %v4602
    %4629 = vmatprep.subr.bf16.mxu0 %v4601
    %4630 = vmatpush1.bf16.msra.mxu0 %v4600
    %4631 = vmatprep.subr.bf16.mxu0 %v4599
    %4632 = vmatpush1.bf16.msra.mxu0 %v4598
    %4633 = vmatprep.subr.bf16.mxu0 0
    %4634 = vmatpush2.bf16.msra.mxu0 0
    %4635 = vmatprep.subr.bf16.mxu0 0
    %4636 = vmatpush2.bf16.msra.mxu0 0
    %4637 = vmatprep.subr.bf16.mxu0 0
    %4638 = vmatpush2.bf16.msra.mxu0 0
    %4639 = vmatprep.subr.bf16.mxu0 0
    %4640 = vmatpush2.bf16.msra.mxu0 0
    %4641 = vmatprep.subr.bf16.mxu0 0
    %4642 = vmatpush2.bf16.msra.mxu0 0
    %4643 = vmatprep.subr.bf16.mxu0 0
    %4644 = vmatpush2.bf16.msra.mxu0 0
    %4645 = vmatprep.subr.bf16.mxu0 0
    %4646 = vmatpush2.bf16.msra.mxu0 0
    %4647 = vmatprep.subr.bf16.mxu0 0
    %4648 = vmatpush2.bf16.msra.mxu0 0
    %4649 = vmatprep.mubr.bf16.mxu0 0
    %4650 = vmatmul.mubr.bf16.gmra.mxu0 %v4615
    %v4651 = vpop.f32.mrf.mxu0
    %v4652 = vadd.f32 0.0, %v4651
    %v4653 = vpop.f32.mrf.mxu0
    %v4654 = vadd.f32 0.0, %v4653
    %v4655 = vpop.f32.mrf.mxu0
    %v4656 = vpop.f32.mrf.mxu0
    %4657 = vdwg.mxu0
    %v4658 = vadd.f32 %v4343, %v4652
    %v4659 = vadd.f32 %v4344, %v4654
    %v4660 = vld [vmem:[%s0 + $0x68] sm:$0xff]
    %v4662 = vcombine.high %v4660, %v4660
    %v4664 = vunpack.c.l.s4 1966171168
    %v4665 = vunpack.c.0.s8 %v4664
    %v4666 = vlaneseq
    %v4667 = vshrl.u32 %v4666, 7
    %v4668 = vsub.s32 %v4665, %v4667
    %v4669 = vrot.slane %v4660, %v4668
    %v4671 = vunpack.c.l.s4 1966171168
    %v4672 = vunpack.c.0.s8 %v4671
    %v4673 = vlaneseq
    %v4674 = vshrl.u32 %v4673, 7
    %v4675 = vsub.s32 %v4672, %v4674
    %v4676 = vrot.slane %v4662, %v4675
    %v4677 = vcombine.high %v4669, %v4669
    %v4678 = vcombine.high %v4676, %v4676
    %v4680 = vunpack.c.l.s4 1966171168
    %v4681 = vunpack.c.0.s8 %v4680
    %v4682 = vlaneseq
    %v4683 = vshrl.u32 %v4682, 7
    %v4684 = vsub.s32 %v4681, %v4683
    %v4685 = vrot.slane %v4669, %v4684
    %v4687 = vunpack.c.l.s4 1966171168
    %v4688 = vunpack.c.0.s8 %v4687
    %v4689 = vlaneseq
    %v4690 = vshrl.u32 %v4689, 7
    %v4691 = vsub.s32 %v4688, %v4690
    %v4692 = vrot.slane %v4676, %v4691
    %v4694 = vunpack.c.l.s4 1966171168
    %v4695 = vunpack.c.0.s8 %v4694
    %v4696 = vlaneseq
    %v4697 = vshrl.u32 %v4696, 7
    %v4698 = vsub.s32 %v4695, %v4697
    %v4699 = vrot.slane %v4677, %v4698
    %v4701 = vunpack.c.l.s4 1966171168
    %v4702 = vunpack.c.0.s8 %v4701
    %v4703 = vlaneseq
    %v4704 = vshrl.u32 %v4703, 7
    %v4705 = vsub.s32 %v4702, %v4704
    %v4706 = vrot.slane %v4678, %v4705
    %v4707 = vcombine.high %v4685, %v4685
    %v4708 = vcombine.high %v4692, %v4692
    %v4709 = vcombine.high %v4699, %v4699
    %v4710 = vcombine.high %v4706, %v4706
    %4719 = vmatprep.subr.bf16.mxu0 0
    %4720 = vmatpush1.bf16.msra.mxu0 %v506
    %4721 = vmatprep.subr.bf16.mxu0 0
    %4722 = vmatpush1.bf16.msra.mxu0 %v505
    %4723 = vmatprep.subr.bf16.mxu0 0
    %4724 = vmatpush1.bf16.msra.mxu0 %v504
    %4725 = vmatprep.subr.bf16.mxu0 0
    %4726 = vmatpush1.bf16.msra.mxu0 %v503
    %4727 = vmatprep.subr.bf16.mxu0 0
    %4728 = vmatpush1.bf16.msra.mxu0 %v502
    %4729 = vmatprep.subr.bf16.mxu0 0
    %4730 = vmatpush1.bf16.msra.mxu0 %v501
    %4731 = vmatprep.subr.bf16.mxu0 0
    %4732 = vmatpush1.bf16.msra.mxu0 %v500
    %4733 = vmatprep.subr.bf16.mxu0 0
    %4734 = vmatpush1.bf16.msra.mxu0 %v499
    %4735 = vmatprep.subr.bf16.mxu0 0
    %4736 = vmatpush2.bf16.msra.mxu0 %v514
    %4737 = vmatprep.subr.bf16.mxu0 0
    %4738 = vmatpush2.bf16.msra.mxu0 %v513
    %4739 = vmatprep.subr.bf16.mxu0 0
    %4740 = vmatpush2.bf16.msra.mxu0 %v512
    %4741 = vmatprep.subr.bf16.mxu0 0
    %4742 = vmatpush2.bf16.msra.mxu0 %v511
    %4743 = vmatprep.subr.bf16.mxu0 0
    %4744 = vmatpush2.bf16.msra.mxu0 %v510
    %4745 = vmatprep.subr.bf16.mxu0 0
    %4746 = vmatpush2.bf16.msra.mxu0 %v509
    %4747 = vmatprep.subr.bf16.mxu0 0
    %4748 = vmatpush2.bf16.msra.mxu0 %v508
    %4749 = vmatprep.subr.bf16.mxu0 0
    %4750 = vmatpush2.bf16.msra.mxu0 %v507
    %4751 = vmatprep.mubr.bf16.mxu0 %v4699
    %4752 = vmatmul.mubr.bf16.gmra.mxu0 %v4685
    %v4753 = vpop.f32.mrf.mxu0
    %v4754 = vadd.f32 %v183, %v4753
    %v4755 = vpop.f32.mrf.mxu0
    %v4756 = vpop.f32.mrf.mxu0
    %v4757 = vpop.f32.mrf.mxu0
    %4758 = vdwg.mxu0
    %4759 = vmatprep.subr.bf16.mxu0 0
    %4760 = vmatpush1.bf16.msra.mxu0 %v522
    %4761 = vmatprep.subr.bf16.mxu0 0
    %4762 = vmatpush1.bf16.msra.mxu0 %v521
    %4763 = vmatprep.subr.bf16.mxu0 0
    %4764 = vmatpush1.bf16.msra.mxu0 %v520
    %4765 = vmatprep.subr.bf16.mxu0 0
    %4766 = vmatpush1.bf16.msra.mxu0 %v519
    %4767 = vmatprep.subr.bf16.mxu0 0
    %4768 = vmatpush1.bf16.msra.mxu0 %v518
    %4769 = vmatprep.subr.bf16.mxu0 0
    %4770 = vmatpush1.bf16.msra.mxu0 %v517
    %4771 = vmatprep.subr.bf16.mxu0 0
    %4772 = vmatpush1.bf16.msra.mxu0 %v516
    %4773 = vmatprep.subr.bf16.mxu0 0
    %4774 = vmatpush1.bf16.msra.mxu0 %v515
    %4775 = vmatprep.subr.bf16.mxu0 0
    %4776 = vmatpush2.bf16.msra.mxu0 %v530
    %4777 = vmatprep.subr.bf16.mxu0 0
    %4778 = vmatpush2.bf16.msra.mxu0 %v529
    %4779 = vmatprep.subr.bf16.mxu0 0
    %4780 = vmatpush2.bf16.msra.mxu0 %v528
    %4781 = vmatprep.subr.bf16.mxu0 0
    %4782 = vmatpush2.bf16.msra.mxu0 %v527
    %4783 = vmatprep.subr.bf16.mxu0 0
    %4784 = vmatpush2.bf16.msra.mxu0 %v526
    %4785 = vmatprep.subr.bf16.mxu0 0
    %4786 = vmatpush2.bf16.msra.mxu0 %v525
    %4787 = vmatprep.subr.bf16.mxu0 0
    %4788 = vmatpush2.bf16.msra.mxu0 %v524
    %4789 = vmatprep.subr.bf16.mxu0 0
    %4790 = vmatpush2.bf16.msra.mxu0 %v523
    %4791 = vmatprep.mubr.bf16.mxu0 %v4709
    %4792 = vmatmul.mubr.bf16.gmra.mxu0 %v4707
    %v4793 = vpop.f32.mrf.mxu0
    %v4794 = vadd.f32 %v4754, %v4793
    %v4795 = vpop.f32.mrf.mxu0
    %v4796 = vpop.f32.mrf.mxu0
    %v4797 = vpop.f32.mrf.mxu0
    %4798 = vdwg.mxu0
    %4799 = vmatprep.subr.bf16.mxu0 0
    %4800 = vmatpush1.bf16.msra.mxu0 %v538
    %4801 = vmatprep.subr.bf16.mxu0 0
    %4802 = vmatpush1.bf16.msra.mxu0 %v537
    %4803 = vmatprep.subr.bf16.mxu0 0
    %4804 = vmatpush1.bf16.msra.mxu0 %v536
    %4805 = vmatprep.subr.bf16.mxu0 0
    %4806 = vmatpush1.bf16.msra.mxu0 %v535
    %4807 = vmatprep.subr.bf16.mxu0 0
    %4808 = vmatpush1.bf16.msra.mxu0 %v534
    %4809 = vmatprep.subr.bf16.mxu0 0
    %4810 = vmatpush1.bf16.msra.mxu0 %v533
    %4811 = vmatprep.subr.bf16.mxu0 0
    %4812 = vmatpush1.bf16.msra.mxu0 %v532
    %4813 = vmatprep.subr.bf16.mxu0 0
    %4814 = vmatpush1.bf16.msra.mxu0 %v531
    %4815 = vmatprep.subr.bf16.mxu0 0
    %4816 = vmatpush2.bf16.msra.mxu0 %v546
    %4817 = vmatprep.subr.bf16.mxu0 0
    %4818 = vmatpush2.bf16.msra.mxu0 %v545
    %4819 = vmatprep.subr.bf16.mxu0 0
    %4820 = vmatpush2.bf16.msra.mxu0 %v544
    %4821 = vmatprep.subr.bf16.mxu0 0
    %4822 = vmatpush2.bf16.msra.mxu0 %v543
    %4823 = vmatprep.subr.bf16.mxu0 0
    %4824 = vmatpush2.bf16.msra.mxu0 %v542
    %4825 = vmatprep.subr.bf16.mxu0 0
    %4826 = vmatpush2.bf16.msra.mxu0 %v541
    %4827 = vmatprep.subr.bf16.mxu0 0
    %4828 = vmatpush2.bf16.msra.mxu0 %v540
    %4829 = vmatprep.subr.bf16.mxu0 0
    %4830 = vmatpush2.bf16.msra.mxu0 %v539
    %4831 = vmatprep.mubr.bf16.mxu0 %v4706
    %4832 = vmatmul.mubr.bf16.gmra.mxu0 %v4692
    %v4833 = vpop.f32.mrf.mxu0
    %v4834 = vadd.f32 %v4794, %v4833
    %v4835 = vpop.f32.mrf.mxu0
    %v4836 = vpop.f32.mrf.mxu0
    %v4837 = vpop.f32.mrf.mxu0
    %4838 = vdwg.mxu0
    %4839 = vmatprep.subr.bf16.mxu0 0
    %4840 = vmatpush1.bf16.msra.mxu0 %v554
    %4841 = vmatprep.subr.bf16.mxu0 0
    %4842 = vmatpush1.bf16.msra.mxu0 %v553
    %4843 = vmatprep.subr.bf16.mxu0 0
    %4844 = vmatpush1.bf16.msra.mxu0 %v552
    %4845 = vmatprep.subr.bf16.mxu0 0
    %4846 = vmatpush1.bf16.msra.mxu0 %v551
    %4847 = vmatprep.subr.bf16.mxu0 0
    %4848 = vmatpush1.bf16.msra.mxu0 %v550
    %4849 = vmatprep.subr.bf16.mxu0 0
    %4850 = vmatpush1.bf16.msra.mxu0 %v549
    %4851 = vmatprep.subr.bf16.mxu0 0
    %4852 = vmatpush1.bf16.msra.mxu0 %v548
    %4853 = vmatprep.subr.bf16.mxu0 0
    %4854 = vmatpush1.bf16.msra.mxu0 %v547
    %4855 = vmatprep.subr.bf16.mxu0 0
    %4856 = vmatpush2.bf16.msra.mxu0 %v562
    %4857 = vmatprep.subr.bf16.mxu0 0
    %4858 = vmatpush2.bf16.msra.mxu0 %v561
    %4859 = vmatprep.subr.bf16.mxu0 0
    %4860 = vmatpush2.bf16.msra.mxu0 %v560
    %4861 = vmatprep.subr.bf16.mxu0 0
    %4862 = vmatpush2.bf16.msra.mxu0 %v559
    %4863 = vmatprep.subr.bf16.mxu0 0
    %4864 = vmatpush2.bf16.msra.mxu0 %v558
    %4865 = vmatprep.subr.bf16.mxu0 0
    %4866 = vmatpush2.bf16.msra.mxu0 %v557
    %4867 = vmatprep.subr.bf16.mxu0 0
    %4868 = vmatpush2.bf16.msra.mxu0 %v556
    %4869 = vmatprep.subr.bf16.mxu0 0
    %4870 = vmatpush2.bf16.msra.mxu0 %v555
    %4871 = vmatprep.mubr.bf16.mxu0 %v4710
    %4872 = vmatmul.mubr.bf16.gmra.mxu0 %v4708
    %v4873 = vpop.f32.mrf.mxu0
    %v4874 = vadd.f32 %v4834, %v4873
    %v4875 = vpop.f32.mrf.mxu0
    %v4876 = vpop.f32.mrf.mxu0
    %v4877 = vpop.f32.mrf.mxu0
    %4878 = vdwg.mxu0
    %v4879 = vmax.f32 %v4874, 0.0
    %v4880 = vpack.c.bf16 %v4879, %v4879
    %v4881 = vld [vmem:[%s4 + $0x340] sm:$0xff]
    %v4882 = vld [vmem:[%s4 + $0x348] sm:$0xff]
    %v4883 = vld [vmem:[%s4 + $0x350] sm:$0xff]
    %v4884 = vld [vmem:[%s4 + $0x358] sm:$0xff]
    %v4885 = vld [vmem:[%s4 + $0x360] sm:$0xff]
    %v4886 = vld [vmem:[%s4 + $0x368] sm:$0xff]
    %v4887 = vld [vmem:[%s4 + $0x370] sm:$0xff]
    %v4888 = vld [vmem:[%s4 + $0x378] sm:$0xff]
    %v4897 = vunpack.c.l.b16 %v4881
    %v4898 = vunpack.c.h.b16 %v4881
    %v4899 = vunpack.c.l.b16 %v4882
    %v4900 = vunpack.c.h.b16 %v4882
    %v4901 = vunpack.c.l.b16 %v4883
    %v4902 = vunpack.c.h.b16 %v4883
    %v4903 = vunpack.c.l.b16 %v4884
    %v4904 = vunpack.c.h.b16 %v4884
    %v4905 = vunpack.c.l.b16 %v4885
    %v4906 = vunpack.c.h.b16 %v4885
    %v4907 = vunpack.c.l.b16 %v4886
    %v4908 = vunpack.c.h.b16 %v4886
    %v4909 = vunpack.c.l.b16 %v4887
    %v4910 = vunpack.c.h.b16 %v4887
    %v4911 = vunpack.c.l.b16 %v4888
    %v4912 = vunpack.c.h.b16 %v4888
    %v4913 = vpack.c.b16 %v4899, %v4897
    %v4914 = vpack.c.b16 %v4900, %v4898
    %v4915 = vpack.c.b16 %v4903, %v4901
    %v4916 = vpack.c.b16 %v4904, %v4902
    %v4917 = vpack.c.b16 %v4907, %v4905
    %v4918 = vpack.c.b16 %v4908, %v4906
    %v4919 = vpack.c.b16 %v4911, %v4909
    %v4920 = vpack.c.b16 %v4912, %v4910
    %v4930 = vsel %vm1066, %v4880, 0
    %4932 = vmatprep.subr.bf16.mxu0 0
    %4933 = vmatpush1.bf16.msra.mxu0 0
    %4934 = vmatprep.subr.bf16.mxu0 0
    %4935 = vmatpush1.bf16.msra.mxu0 0
    %4936 = vmatprep.subr.bf16.mxu0 0
    %4937 = vmatpush1.bf16.msra.mxu0 0
    %4938 = vmatprep.subr.bf16.mxu0 0
    %4939 = vmatpush1.bf16.msra.mxu0 0
    %4940 = vmatprep.subr.bf16.mxu0 %v4920
    %4941 = vmatpush1.bf16.msra.mxu0 %v4919
    %4942 = vmatprep.subr.bf16.mxu0 %v4918
    %4943 = vmatpush1.bf16.msra.mxu0 %v4917
    %4944 = vmatprep.subr.bf16.mxu0 %v4916
    %4945 = vmatpush1.bf16.msra.mxu0 %v4915
    %4946 = vmatprep.subr.bf16.mxu0 %v4914
    %4947 = vmatpush1.bf16.msra.mxu0 %v4913
    %4948 = vmatprep.subr.bf16.mxu0 0
    %4949 = vmatpush2.bf16.msra.mxu0 0
    %4950 = vmatprep.subr.bf16.mxu0 0
    %4951 = vmatpush2.bf16.msra.mxu0 0
    %4952 = vmatprep.subr.bf16.mxu0 0
    %4953 = vmatpush2.bf16.msra.mxu0 0
    %4954 = vmatprep.subr.bf16.mxu0 0
    %4955 = vmatpush2.bf16.msra.mxu0 0
    %4956 = vmatprep.subr.bf16.mxu0 0
    %4957 = vmatpush2.bf16.msra.mxu0 0
    %4958 = vmatprep.subr.bf16.mxu0 0
    %4959 = vmatpush2.bf16.msra.mxu0 0
    %4960 = vmatprep.subr.bf16.mxu0 0
    %4961 = vmatpush2.bf16.msra.mxu0 0
    %4962 = vmatprep.subr.bf16.mxu0 0
    %4963 = vmatpush2.bf16.msra.mxu0 0
    %4964 = vmatprep.mubr.bf16.mxu0 0
    %4965 = vmatmul.mubr.bf16.gmra.mxu0 %v4930
    %v4966 = vpop.f32.mrf.mxu0
    %v4967 = vadd.f32 0.0, %v4966
    %v4968 = vpop.f32.mrf.mxu0
    %v4969 = vadd.f32 0.0, %v4968
    %v4970 = vpop.f32.mrf.mxu0
    %v4971 = vpop.f32.mrf.mxu0
    %4972 = vdwg.mxu0
    %v4973 = vadd.f32 %v4658, %v4967
    %v4974 = vadd.f32 %v4659, %v4969
    %v4975 = vld [vmem:[%s0 + $0x70] sm:$0xff]
    %v4977 = vcombine.high %v4975, %v4975
    %v4979 = vunpack.c.l.s4 1966171168
    %v4980 = vunpack.c.0.s8 %v4979
    %v4981 = vlaneseq
    %v4982 = vshrl.u32 %v4981, 7
    %v4983 = vsub.s32 %v4980, %v4982
    %v4984 = vrot.slane %v4975, %v4983
    %v4986 = vunpack.c.l.s4 1966171168
    %v4987 = vunpack.c.0.s8 %v4986
    %v4988 = vlaneseq
    %v4989 = vshrl.u32 %v4988, 7
    %v4990 = vsub.s32 %v4987, %v4989
    %v4991 = vrot.slane %v4977, %v4990
    %v4992 = vcombine.high %v4984, %v4984
    %v4993 = vcombine.high %v4991, %v4991
    %v4995 = vunpack.c.l.s4 1966171168
    %v4996 = vunpack.c.0.s8 %v4995
    %v4997 = vlaneseq
    %v4998 = vshrl.u32 %v4997, 7
    %v4999 = vsub.s32 %v4996, %v4998
    %v5000 = vrot.slane %v4984, %v4999
    %v5002 = vunpack.c.l.s4 1966171168
    %v5003 = vunpack.c.0.s8 %v5002
    %v5004 = vlaneseq
    %v5005 = vshrl.u32 %v5004, 7
    %v5006 = vsub.s32 %v5003, %v5005
    %v5007 = vrot.slane %v4991, %v5006
    %v5009 = vunpack.c.l.s4 1966171168
    %v5010 = vunpack.c.0.s8 %v5009
    %v5011 = vlaneseq
    %v5012 = vshrl.u32 %v5011, 7
    %v5013 = vsub.s32 %v5010, %v5012
    %v5014 = vrot.slane %v4992, %v5013
    %v5016 = vunpack.c.l.s4 1966171168
    %v5017 = vunpack.c.0.s8 %v5016
    %v5018 = vlaneseq
    %v5019 = vshrl.u32 %v5018, 7
    %v5020 = vsub.s32 %v5017, %v5019
    %v5021 = vrot.slane %v4993, %v5020
    %v5022 = vcombine.high %v5000, %v5000
    %v5023 = vcombine.high %v5007, %v5007
    %v5024 = vcombine.high %v5014, %v5014
    %v5025 = vcombine.high %v5021, %v5021
    %5034 = vmatprep.subr.bf16.mxu0 0
    %5035 = vmatpush1.bf16.msra.mxu0 %v506
    %5036 = vmatprep.subr.bf16.mxu0 0
    %5037 = vmatpush1.bf16.msra.mxu0 %v505
    %5038 = vmatprep.subr.bf16.mxu0 0
    %5039 = vmatpush1.bf16.msra.mxu0 %v504
    %5040 = vmatprep.subr.bf16.mxu0 0
    %5041 = vmatpush1.bf16.msra.mxu0 %v503
    %5042 = vmatprep.subr.bf16.mxu0 0
    %5043 = vmatpush1.bf16.msra.mxu0 %v502
    %5044 = vmatprep.subr.bf16.mxu0 0
    %5045 = vmatpush1.bf16.msra.mxu0 %v501
    %5046 = vmatprep.subr.bf16.mxu0 0
    %5047 = vmatpush1.bf16.msra.mxu0 %v500
    %5048 = vmatprep.subr.bf16.mxu0 0
    %5049 = vmatpush1.bf16.msra.mxu0 %v499
    %5050 = vmatprep.subr.bf16.mxu0 0
    %5051 = vmatpush2.bf16.msra.mxu0 %v514
    %5052 = vmatprep.subr.bf16.mxu0 0
    %5053 = vmatpush2.bf16.msra.mxu0 %v513
    %5054 = vmatprep.subr.bf16.mxu0 0
    %5055 = vmatpush2.bf16.msra.mxu0 %v512
    %5056 = vmatprep.subr.bf16.mxu0 0
    %5057 = vmatpush2.bf16.msra.mxu0 %v511
    %5058 = vmatprep.subr.bf16.mxu0 0
    %5059 = vmatpush2.bf16.msra.mxu0 %v510
    %5060 = vmatprep.subr.bf16.mxu0 0
    %5061 = vmatpush2.bf16.msra.mxu0 %v509
    %5062 = vmatprep.subr.bf16.mxu0 0
    %5063 = vmatpush2.bf16.msra.mxu0 %v508
    %5064 = vmatprep.subr.bf16.mxu0 0
    %5065 = vmatpush2.bf16.msra.mxu0 %v507
    %5066 = vmatprep.mubr.bf16.mxu0 %v5014
    %5067 = vmatmul.mubr.bf16.gmra.mxu0 %v5000
    %v5068 = vpop.f32.mrf.mxu0
    %v5069 = vadd.f32 %v183, %v5068
    %v5070 = vpop.f32.mrf.mxu0
    %v5071 = vpop.f32.mrf.mxu0
    %v5072 = vpop.f32.mrf.mxu0
    %5073 = vdwg.mxu0
    %5074 = vmatprep.subr.bf16.mxu0 0
    %5075 = vmatpush1.bf16.msra.mxu0 %v522
    %5076 = vmatprep.subr.bf16.mxu0 0
    %5077 = vmatpush1.bf16.msra.mxu0 %v521
    %5078 = vmatprep.subr.bf16.mxu0 0
    %5079 = vmatpush1.bf16.msra.mxu0 %v520
    %5080 = vmatprep.subr.bf16.mxu0 0
    %5081 = vmatpush1.bf16.msra.mxu0 %v519
    %5082 = vmatprep.subr.bf16.mxu0 0
    %5083 = vmatpush1.bf16.msra.mxu0 %v518
    %5084 = vmatprep.subr.bf16.mxu0 0
    %5085 = vmatpush1.bf16.msra.mxu0 %v517
    %5086 = vmatprep.subr.bf16.mxu0 0
    %5087 = vmatpush1.bf16.msra.mxu0 %v516
    %5088 = vmatprep.subr.bf16.mxu0 0
    %5089 = vmatpush1.bf16.msra.mxu0 %v515
    %5090 = vmatprep.subr.bf16.mxu0 0
    %5091 = vmatpush2.bf16.msra.mxu0 %v530
    %5092 = vmatprep.subr.bf16.mxu0 0
    %5093 = vmatpush2.bf16.msra.mxu0 %v529
    %5094 = vmatprep.subr.bf16.mxu0 0
    %5095 = vmatpush2.bf16.msra.mxu0 %v528
    %5096 = vmatprep.subr.bf16.mxu0 0
    %5097 = vmatpush2.bf16.msra.mxu0 %v527
    %5098 = vmatprep.subr.bf16.mxu0 0
    %5099 = vmatpush2.bf16.msra.mxu0 %v526
    %5100 = vmatprep.subr.bf16.mxu0 0
    %5101 = vmatpush2.bf16.msra.mxu0 %v525
    %5102 = vmatprep.subr.bf16.mxu0 0
    %5103 = vmatpush2.bf16.msra.mxu0 %v524
    %5104 = vmatprep.subr.bf16.mxu0 0
    %5105 = vmatpush2.bf16.msra.mxu0 %v523
    %5106 = vmatprep.mubr.bf16.mxu0 %v5024
    %5107 = vmatmul.mubr.bf16.gmra.mxu0 %v5022
    %v5108 = vpop.f32.mrf.mxu0
    %v5109 = vadd.f32 %v5069, %v5108
    %v5110 = vpop.f32.mrf.mxu0
    %v5111 = vpop.f32.mrf.mxu0
    %v5112 = vpop.f32.mrf.mxu0
    %5113 = vdwg.mxu0
    %5114 = vmatprep.subr.bf16.mxu0 0
    %5115 = vmatpush1.bf16.msra.mxu0 %v538
    %5116 = vmatprep.subr.bf16.mxu0 0
    %5117 = vmatpush1.bf16.msra.mxu0 %v537
    %5118 = vmatprep.subr.bf16.mxu0 0
    %5119 = vmatpush1.bf16.msra.mxu0 %v536
    %5120 = vmatprep.subr.bf16.mxu0 0
    %5121 = vmatpush1.bf16.msra.mxu0 %v535
    %5122 = vmatprep.subr.bf16.mxu0 0
    %5123 = vmatpush1.bf16.msra.mxu0 %v534
    %5124 = vmatprep.subr.bf16.mxu0 0
    %5125 = vmatpush1.bf16.msra.mxu0 %v533
    %5126 = vmatprep.subr.bf16.mxu0 0
    %5127 = vmatpush1.bf16.msra.mxu0 %v532
    %5128 = vmatprep.subr.bf16.mxu0 0
    %5129 = vmatpush1.bf16.msra.mxu0 %v531
    %5130 = vmatprep.subr.bf16.mxu0 0
    %5131 = vmatpush2.bf16.msra.mxu0 %v546
    %5132 = vmatprep.subr.bf16.mxu0 0
    %5133 = vmatpush2.bf16.msra.mxu0 %v545
    %5134 = vmatprep.subr.bf16.mxu0 0
    %5135 = vmatpush2.bf16.msra.mxu0 %v544
    %5136 = vmatprep.subr.bf16.mxu0 0
    %5137 = vmatpush2.bf16.msra.mxu0 %v543
    %5138 = vmatprep.subr.bf16.mxu0 0
    %5139 = vmatpush2.bf16.msra.mxu0 %v542
    %5140 = vmatprep.subr.bf16.mxu0 0
    %5141 = vmatpush2.bf16.msra.mxu0 %v541
    %5142 = vmatprep.subr.bf16.mxu0 0
    %5143 = vmatpush2.bf16.msra.mxu0 %v540
    %5144 = vmatprep.subr.bf16.mxu0 0
    %5145 = vmatpush2.bf16.msra.mxu0 %v539
    %5146 = vmatprep.mubr.bf16.mxu0 %v5021
    %5147 = vmatmul.mubr.bf16.gmra.mxu0 %v5007
    %v5148 = vpop.f32.mrf.mxu0
    %v5149 = vadd.f32 %v5109, %v5148
    %v5150 = vpop.f32.mrf.mxu0
    %v5151 = vpop.f32.mrf.mxu0
    %v5152 = vpop.f32.mrf.mxu0
    %5153 = vdwg.mxu0
    %5154 = vmatprep.subr.bf16.mxu0 0
    %5155 = vmatpush1.bf16.msra.mxu0 %v554
    %5156 = vmatprep.subr.bf16.mxu0 0
    %5157 = vmatpush1.bf16.msra.mxu0 %v553
    %5158 = vmatprep.subr.bf16.mxu0 0
    %5159 = vmatpush1.bf16.msra.mxu0 %v552
    %5160 = vmatprep.subr.bf16.mxu0 0
    %5161 = vmatpush1.bf16.msra.mxu0 %v551
    %5162 = vmatprep.subr.bf16.mxu0 0
    %5163 = vmatpush1.bf16.msra.mxu0 %v550
    %5164 = vmatprep.subr.bf16.mxu0 0
    %5165 = vmatpush1.bf16.msra.mxu0 %v549
    %5166 = vmatprep.subr.bf16.mxu0 0
    %5167 = vmatpush1.bf16.msra.mxu0 %v548
    %5168 = vmatprep.subr.bf16.mxu0 0
    %5169 = vmatpush1.bf16.msra.mxu0 %v547
    %5170 = vmatprep.subr.bf16.mxu0 0
    %5171 = vmatpush2.bf16.msra.mxu0 %v562
    %5172 = vmatprep.subr.bf16.mxu0 0
    %5173 = vmatpush2.bf16.msra.mxu0 %v561
    %5174 = vmatprep.subr.bf16.mxu0 0
    %5175 = vmatpush2.bf16.msra.mxu0 %v560
    %5176 = vmatprep.subr.bf16.mxu0 0
    %5177 = vmatpush2.bf16.msra.mxu0 %v559
    %5178 = vmatprep.subr.bf16.mxu0 0
    %5179 = vmatpush2.bf16.msra.mxu0 %v558
    %5180 = vmatprep.subr.bf16.mxu0 0
    %5181 = vmatpush2.bf16.msra.mxu0 %v557
    %5182 = vmatprep.subr.bf16.mxu0 0
    %5183 = vmatpush2.bf16.msra.mxu0 %v556
    %5184 = vmatprep.subr.bf16.mxu0 0
    %5185 = vmatpush2.bf16.msra.mxu0 %v555
    %5186 = vmatprep.mubr.bf16.mxu0 %v5025
    %5187 = vmatmul.mubr.bf16.gmra.mxu0 %v5023
    %v5188 = vpop.f32.mrf.mxu0
    %v5189 = vadd.f32 %v5149, %v5188
    %v5190 = vpop.f32.mrf.mxu0
    %v5191 = vpop.f32.mrf.mxu0
    %v5192 = vpop.f32.mrf.mxu0
    %5193 = vdwg.mxu0
    %v5194 = vmax.f32 %v5189, 0.0
    %v5195 = vpack.c.bf16 %v5194, %v5194
    %v5196 = vld [vmem:[%s4 + $0x380] sm:$0xff]
    %v5197 = vld [vmem:[%s4 + $0x388] sm:$0xff]
    %v5198 = vld [vmem:[%s4 + $0x390] sm:$0xff]
    %v5199 = vld [vmem:[%s4 + $0x398] sm:$0xff]
    %v5200 = vld [vmem:[%s4 + $0x3a0] sm:$0xff]
    %v5201 = vld [vmem:[%s4 + $0x3a8] sm:$0xff]
    %v5202 = vld [vmem:[%s4 + $0x3b0] sm:$0xff]
    %v5203 = vld [vmem:[%s4 + $0x3b8] sm:$0xff]
    %v5212 = vunpack.c.l.b16 %v5196
    %v5213 = vunpack.c.h.b16 %v5196
    %v5214 = vunpack.c.l.b16 %v5197
    %v5215 = vunpack.c.h.b16 %v5197
    %v5216 = vunpack.c.l.b16 %v5198
    %v5217 = vunpack.c.h.b16 %v5198
    %v5218 = vunpack.c.l.b16 %v5199
    %v5219 = vunpack.c.h.b16 %v5199
    %v5220 = vunpack.c.l.b16 %v5200
    %v5221 = vunpack.c.h.b16 %v5200
    %v5222 = vunpack.c.l.b16 %v5201
    %v5223 = vunpack.c.h.b16 %v5201
    %v5224 = vunpack.c.l.b16 %v5202
    %v5225 = vunpack.c.h.b16 %v5202
    %v5226 = vunpack.c.l.b16 %v5203
    %v5227 = vunpack.c.h.b16 %v5203
    %v5228 = vpack.c.b16 %v5214, %v5212
    %v5229 = vpack.c.b16 %v5215, %v5213
    %v5230 = vpack.c.b16 %v5218, %v5216
    %v5231 = vpack.c.b16 %v5219, %v5217
    %v5232 = vpack.c.b16 %v5222, %v5220
    %v5233 = vpack.c.b16 %v5223, %v5221
    %v5234 = vpack.c.b16 %v5226, %v5224
    %v5235 = vpack.c.b16 %v5227, %v5225
    %v5245 = vsel %vm1066, %v5195, 0
    %5247 = vmatprep.subr.bf16.mxu0 0
    %5248 = vmatpush1.bf16.msra.mxu0 0
    %5249 = vmatprep.subr.bf16.mxu0 0
    %5250 = vmatpush1.bf16.msra.mxu0 0
    %5251 = vmatprep.subr.bf16.mxu0 0
    %5252 = vmatpush1.bf16.msra.mxu0 0
    %5253 = vmatprep.subr.bf16.mxu0 0
    %5254 = vmatpush1.bf16.msra.mxu0 0
    %5255 = vmatprep.subr.bf16.mxu0 %v5235
    %5256 = vmatpush1.bf16.msra.mxu0 %v5234
    %5257 = vmatprep.subr.bf16.mxu0 %v5233
    %5258 = vmatpush1.bf16.msra.mxu0 %v5232
    %5259 = vmatprep.subr.bf16.mxu0 %v5231
    %5260 = vmatpush1.bf16.msra.mxu0 %v5230
    %5261 = vmatprep.subr.bf16.mxu0 %v5229
    %5262 = vmatpush1.bf16.msra.mxu0 %v5228
    %5263 = vmatprep.subr.bf16.mxu0 0
    %5264 = vmatpush2.bf16.msra.mxu0 0
    %5265 = vmatprep.subr.bf16.mxu0 0
    %5266 = vmatpush2.bf16.msra.mxu0 0
    %5267 = vmatprep.subr.bf16.mxu0 0
    %5268 = vmatpush2.bf16.msra.mxu0 0
    %5269 = vmatprep.subr.bf16.mxu0 0
    %5270 = vmatpush2.bf16.msra.mxu0 0
    %5271 = vmatprep.subr.bf16.mxu0 0
    %5272 = vmatpush2.bf16.msra.mxu0 0
    %5273 = vmatprep.subr.bf16.mxu0 0
    %5274 = vmatpush2.bf16.msra.mxu0 0
    %5275 = vmatprep.subr.bf16.mxu0 0
    %5276 = vmatpush2.bf16.msra.mxu0 0
    %5277 = vmatprep.subr.bf16.mxu0 0
    %5278 = vmatpush2.bf16.msra.mxu0 0
    %5279 = vmatprep.mubr.bf16.mxu0 0
    %5280 = vmatmul.mubr.bf16.gmra.mxu0 %v5245
    %v5281 = vpop.f32.mrf.mxu0
    %v5282 = vadd.f32 0.0, %v5281
    %v5283 = vpop.f32.mrf.mxu0
    %v5284 = vadd.f32 0.0, %v5283
    %v5285 = vpop.f32.mrf.mxu0
    %v5286 = vpop.f32.mrf.mxu0
    %5287 = vdwg.mxu0
    %v5288 = vadd.f32 %v4973, %v5282
    %v5289 = vadd.f32 %v4974, %v5284
    %v5290 = vld [vmem:[%s0 + $0x78] sm:$0xff]
    %v5292 = vcombine.high %v5290, %v5290
    %v5294 = vunpack.c.l.s4 1966171168
    %v5295 = vunpack.c.0.s8 %v5294
    %v5296 = vlaneseq
    %v5297 = vshrl.u32 %v5296, 7
    %v5298 = vsub.s32 %v5295, %v5297
    %v5299 = vrot.slane %v5290, %v5298
    %v5301 = vunpack.c.l.s4 1966171168
    %v5302 = vunpack.c.0.s8 %v5301
    %v5303 = vlaneseq
    %v5304 = vshrl.u32 %v5303, 7
    %v5305 = vsub.s32 %v5302, %v5304
    %v5306 = vrot.slane %v5292, %v5305
    %v5307 = vcombine.high %v5299, %v5299
    %v5308 = vcombine.high %v5306, %v5306
    %v5310 = vunpack.c.l.s4 1966171168
    %v5311 = vunpack.c.0.s8 %v5310
    %v5312 = vlaneseq
    %v5313 = vshrl.u32 %v5312, 7
    %v5314 = vsub.s32 %v5311, %v5313
    %v5315 = vrot.slane %v5299, %v5314
    %v5317 = vunpack.c.l.s4 1966171168
    %v5318 = vunpack.c.0.s8 %v5317
    %v5319 = vlaneseq
    %v5320 = vshrl.u32 %v5319, 7
    %v5321 = vsub.s32 %v5318, %v5320
    %v5322 = vrot.slane %v5306, %v5321
    %v5324 = vunpack.c.l.s4 1966171168
    %v5325 = vunpack.c.0.s8 %v5324
    %v5326 = vlaneseq
    %v5327 = vshrl.u32 %v5326, 7
    %v5328 = vsub.s32 %v5325, %v5327
    %v5329 = vrot.slane %v5307, %v5328
    %v5331 = vunpack.c.l.s4 1966171168
    %v5332 = vunpack.c.0.s8 %v5331
    %v5333 = vlaneseq
    %v5334 = vshrl.u32 %v5333, 7
    %v5335 = vsub.s32 %v5332, %v5334
    %v5336 = vrot.slane %v5308, %v5335
    %v5337 = vcombine.high %v5315, %v5315
    %v5338 = vcombine.high %v5322, %v5322
    %v5339 = vcombine.high %v5329, %v5329
    %v5340 = vcombine.high %v5336, %v5336
    %5349 = vmatprep.subr.bf16.mxu0 0
    %5350 = vmatpush1.bf16.msra.mxu0 %v506
    %5351 = vmatprep.subr.bf16.mxu0 0
    %5352 = vmatpush1.bf16.msra.mxu0 %v505
    %5353 = vmatprep.subr.bf16.mxu0 0
    %5354 = vmatpush1.bf16.msra.mxu0 %v504
    %5355 = vmatprep.subr.bf16.mxu0 0
    %5356 = vmatpush1.bf16.msra.mxu0 %v503
    %5357 = vmatprep.subr.bf16.mxu0 0
    %5358 = vmatpush1.bf16.msra.mxu0 %v502
    %5359 = vmatprep.subr.bf16.mxu0 0
    %5360 = vmatpush1.bf16.msra.mxu0 %v501
    %5361 = vmatprep.subr.bf16.mxu0 0
    %5362 = vmatpush1.bf16.msra.mxu0 %v500
    %5363 = vmatprep.subr.bf16.mxu0 0
    %5364 = vmatpush1.bf16.msra.mxu0 %v499
    %5365 = vmatprep.subr.bf16.mxu0 0
    %5366 = vmatpush2.bf16.msra.mxu0 %v514
    %5367 = vmatprep.subr.bf16.mxu0 0
    %5368 = vmatpush2.bf16.msra.mxu0 %v513
    %5369 = vmatprep.subr.bf16.mxu0 0
    %5370 = vmatpush2.bf16.msra.mxu0 %v512
    %5371 = vmatprep.subr.bf16.mxu0 0
    %5372 = vmatpush2.bf16.msra.mxu0 %v511
    %5373 = vmatprep.subr.bf16.mxu0 0
    %5374 = vmatpush2.bf16.msra.mxu0 %v510
    %5375 = vmatprep.subr.bf16.mxu0 0
    %5376 = vmatpush2.bf16.msra.mxu0 %v509
    %5377 = vmatprep.subr.bf16.mxu0 0
    %5378 = vmatpush2.bf16.msra.mxu0 %v508
    %5379 = vmatprep.subr.bf16.mxu0 0
    %5380 = vmatpush2.bf16.msra.mxu0 %v507
    %5381 = vmatprep.mubr.bf16.mxu0 %v5329
    %5382 = vmatmul.mubr.bf16.gmra.mxu0 %v5315
    %v5383 = vpop.f32.mrf.mxu0
    %v5384 = vadd.f32 %v183, %v5383
    %v5385 = vpop.f32.mrf.mxu0
    %v5386 = vpop.f32.mrf.mxu0
    %v5387 = vpop.f32.mrf.mxu0
    %5388 = vdwg.mxu0
    %5389 = vmatprep.subr.bf16.mxu0 0
    %5390 = vmatpush1.bf16.msra.mxu0 %v522
    %5391 = vmatprep.subr.bf16.mxu0 0
    %5392 = vmatpush1.bf16.msra.mxu0 %v521
    %5393 = vmatprep.subr.bf16.mxu0 0
    %5394 = vmatpush1.bf16.msra.mxu0 %v520
    %5395 = vmatprep.subr.bf16.mxu0 0
    %5396 = vmatpush1.bf16.msra.mxu0 %v519
    %5397 = vmatprep.subr.bf16.mxu0 0
    %5398 = vmatpush1.bf16.msra.mxu0 %v518
    %5399 = vmatprep.subr.bf16.mxu0 0
    %5400 = vmatpush1.bf16.msra.mxu0 %v517
    %5401 = vmatprep.subr.bf16.mxu0 0
    %5402 = vmatpush1.bf16.msra.mxu0 %v516
    %5403 = vmatprep.subr.bf16.mxu0 0
    %5404 = vmatpush1.bf16.msra.mxu0 %v515
    %5405 = vmatprep.subr.bf16.mxu0 0
    %5406 = vmatpush2.bf16.msra.mxu0 %v530
    %5407 = vmatprep.subr.bf16.mxu0 0
    %5408 = vmatpush2.bf16.msra.mxu0 %v529
    %5409 = vmatprep.subr.bf16.mxu0 0
    %5410 = vmatpush2.bf16.msra.mxu0 %v528
    %5411 = vmatprep.subr.bf16.mxu0 0
    %5412 = vmatpush2.bf16.msra.mxu0 %v527
    %5413 = vmatprep.subr.bf16.mxu0 0
    %5414 = vmatpush2.bf16.msra.mxu0 %v526
    %5415 = vmatprep.subr.bf16.mxu0 0
    %5416 = vmatpush2.bf16.msra.mxu0 %v525
    %5417 = vmatprep.subr.bf16.mxu0 0
    %5418 = vmatpush2.bf16.msra.mxu0 %v524
    %5419 = vmatprep.subr.bf16.mxu0 0
    %5420 = vmatpush2.bf16.msra.mxu0 %v523
    %5421 = vmatprep.mubr.bf16.mxu0 %v5339
    %5422 = vmatmul.mubr.bf16.gmra.mxu0 %v5337
    %v5423 = vpop.f32.mrf.mxu0
    %v5424 = vadd.f32 %v5384, %v5423
    %v5425 = vpop.f32.mrf.mxu0
    %v5426 = vpop.f32.mrf.mxu0
    %v5427 = vpop.f32.mrf.mxu0
    %5428 = vdwg.mxu0
    %5429 = vmatprep.subr.bf16.mxu0 0
    %5430 = vmatpush1.bf16.msra.mxu0 %v538
    %5431 = vmatprep.subr.bf16.mxu0 0
    %5432 = vmatpush1.bf16.msra.mxu0 %v537
    %5433 = vmatprep.subr.bf16.mxu0 0
    %5434 = vmatpush1.bf16.msra.mxu0 %v536
    %5435 = vmatprep.subr.bf16.mxu0 0
    %5436 = vmatpush1.bf16.msra.mxu0 %v535
    %5437 = vmatprep.subr.bf16.mxu0 0
    %5438 = vmatpush1.bf16.msra.mxu0 %v534
    %5439 = vmatprep.subr.bf16.mxu0 0
    %5440 = vmatpush1.bf16.msra.mxu0 %v533
    %5441 = vmatprep.subr.bf16.mxu0 0
    %5442 = vmatpush1.bf16.msra.mxu0 %v532
    %5443 = vmatprep.subr.bf16.mxu0 0
    %5444 = vmatpush1.bf16.msra.mxu0 %v531
    %5445 = vmatprep.subr.bf16.mxu0 0
    %5446 = vmatpush2.bf16.msra.mxu0 %v546
    %5447 = vmatprep.subr.bf16.mxu0 0
    %5448 = vmatpush2.bf16.msra.mxu0 %v545
    %5449 = vmatprep.subr.bf16.mxu0 0
    %5450 = vmatpush2.bf16.msra.mxu0 %v544
    %5451 = vmatprep.subr.bf16.mxu0 0
    %5452 = vmatpush2.bf16.msra.mxu0 %v543
    %5453 = vmatprep.subr.bf16.mxu0 0
    %5454 = vmatpush2.bf16.msra.mxu0 %v542
    %5455 = vmatprep.subr.bf16.mxu0 0
    %5456 = vmatpush2.bf16.msra.mxu0 %v541
    %5457 = vmatprep.subr.bf16.mxu0 0
    %5458 = vmatpush2.bf16.msra.mxu0 %v540
    %5459 = vmatprep.subr.bf16.mxu0 0
    %5460 = vmatpush2.bf16.msra.mxu0 %v539
    %5461 = vmatprep.mubr.bf16.mxu0 %v5336
    %5462 = vmatmul.mubr.bf16.gmra.mxu0 %v5322
    %v5463 = vpop.f32.mrf.mxu0
    %v5464 = vadd.f32 %v5424, %v5463
    %v5465 = vpop.f32.mrf.mxu0
    %v5466 = vpop.f32.mrf.mxu0
    %v5467 = vpop.f32.mrf.mxu0
    %5468 = vdwg.mxu0
    %5469 = vmatprep.subr.bf16.mxu0 0
    %5470 = vmatpush1.bf16.msra.mxu0 %v554
    %5471 = vmatprep.subr.bf16.mxu0 0
    %5472 = vmatpush1.bf16.msra.mxu0 %v553
    %5473 = vmatprep.subr.bf16.mxu0 0
    %5474 = vmatpush1.bf16.msra.mxu0 %v552
    %5475 = vmatprep.subr.bf16.mxu0 0
    %5476 = vmatpush1.bf16.msra.mxu0 %v551
    %5477 = vmatprep.subr.bf16.mxu0 0
    %5478 = vmatpush1.bf16.msra.mxu0 %v550
    %5479 = vmatprep.subr.bf16.mxu0 0
    %5480 = vmatpush1.bf16.msra.mxu0 %v549
    %5481 = vmatprep.subr.bf16.mxu0 0
    %5482 = vmatpush1.bf16.msra.mxu0 %v548
    %5483 = vmatprep.subr.bf16.mxu0 0
    %5484 = vmatpush1.bf16.msra.mxu0 %v547
    %5485 = vmatprep.subr.bf16.mxu0 0
    %5486 = vmatpush2.bf16.msra.mxu0 %v562
    %5487 = vmatprep.subr.bf16.mxu0 0
    %5488 = vmatpush2.bf16.msra.mxu0 %v561
    %5489 = vmatprep.subr.bf16.mxu0 0
    %5490 = vmatpush2.bf16.msra.mxu0 %v560
    %5491 = vmatprep.subr.bf16.mxu0 0
    %5492 = vmatpush2.bf16.msra.mxu0 %v559
    %5493 = vmatprep.subr.bf16.mxu0 0
    %5494 = vmatpush2.bf16.msra.mxu0 %v558
    %5495 = vmatprep.subr.bf16.mxu0 0
    %5496 = vmatpush2.bf16.msra.mxu0 %v557
    %5497 = vmatprep.subr.bf16.mxu0 0
    %5498 = vmatpush2.bf16.msra.mxu0 %v556
    %5499 = vmatprep.subr.bf16.mxu0 0
    %5500 = vmatpush2.bf16.msra.mxu0 %v555
    %5501 = vmatprep.mubr.bf16.mxu0 %v5340
    %5502 = vmatmul.mubr.bf16.gmra.mxu0 %v5338
    %v5503 = vpop.f32.mrf.mxu0
    %v5504 = vadd.f32 %v5464, %v5503
    %v5505 = vpop.f32.mrf.mxu0
    %v5506 = vpop.f32.mrf.mxu0
    %v5507 = vpop.f32.mrf.mxu0
    %5508 = vdwg.mxu0
    %v5509 = vmax.f32 %v5504, 0.0
    %v5510 = vpack.c.bf16 %v5509, %v5509
    %v5511 = vld [vmem:[%s4 + $0x3c0] sm:$0xff]
    %v5512 = vld [vmem:[%s4 + $0x3c8] sm:$0xff]
    %v5513 = vld [vmem:[%s4 + $0x3d0] sm:$0xff]
    %v5514 = vld [vmem:[%s4 + $0x3d8] sm:$0xff]
    %v5515 = vld [vmem:[%s4 + $0x3e0] sm:$0xff]
    %v5516 = vld [vmem:[%s4 + $0x3e8] sm:$0xff]
    %v5517 = vld [vmem:[%s4 + $0x3f0] sm:$0xff]
    %v5518 = vld [vmem:[%s4 + $0x3f8] sm:$0xff]
    %v5527 = vunpack.c.l.b16 %v5511
    %v5528 = vunpack.c.h.b16 %v5511
    %v5529 = vunpack.c.l.b16 %v5512
    %v5530 = vunpack.c.h.b16 %v5512
    %v5531 = vunpack.c.l.b16 %v5513
    %v5532 = vunpack.c.h.b16 %v5513
    %v5533 = vunpack.c.l.b16 %v5514
    %v5534 = vunpack.c.h.b16 %v5514
    %v5535 = vunpack.c.l.b16 %v5515
    %v5536 = vunpack.c.h.b16 %v5515
    %v5537 = vunpack.c.l.b16 %v5516
    %v5538 = vunpack.c.h.b16 %v5516
    %v5539 = vunpack.c.l.b16 %v5517
    %v5540 = vunpack.c.h.b16 %v5517
    %v5541 = vunpack.c.l.b16 %v5518
    %v5542 = vunpack.c.h.b16 %v5518
    %v5543 = vpack.c.b16 %v5529, %v5527
    %v5544 = vpack.c.b16 %v5530, %v5528
    %v5545 = vpack.c.b16 %v5533, %v5531
    %v5546 = vpack.c.b16 %v5534, %v5532
    %v5547 = vpack.c.b16 %v5537, %v5535
    %v5548 = vpack.c.b16 %v5538, %v5536
    %v5549 = vpack.c.b16 %v5541, %v5539
    %v5550 = vpack.c.b16 %v5542, %v5540
    %v5560 = vsel %vm1066, %v5510, 0
    %5562 = vmatprep.subr.bf16.mxu0 0
    %5563 = vmatpush1.bf16.msra.mxu0 0
    %5564 = vmatprep.subr.bf16.mxu0 0
    %5565 = vmatpush1.bf16.msra.mxu0 0
    %5566 = vmatprep.subr.bf16.mxu0 0
    %5567 = vmatpush1.bf16.msra.mxu0 0
    %5568 = vmatprep.subr.bf16.mxu0 0
    %5569 = vmatpush1.bf16.msra.mxu0 0
    %5570 = vmatprep.subr.bf16.mxu0 %v5550
    %5571 = vmatpush1.bf16.msra.mxu0 %v5549
    %5572 = vmatprep.subr.bf16.mxu0 %v5548
    %5573 = vmatpush1.bf16.msra.mxu0 %v5547
    %5574 = vmatprep.subr.bf16.mxu0 %v5546
    %5575 = vmatpush1.bf16.msra.mxu0 %v5545
    %5576 = vmatprep.subr.bf16.mxu0 %v5544
    %5577 = vmatpush1.bf16.msra.mxu0 %v5543
    %5578 = vmatprep.subr.bf16.mxu0 0
    %5579 = vmatpush2.bf16.msra.mxu0 0
    %5580 = vmatprep.subr.bf16.mxu0 0
    %5581 = vmatpush2.bf16.msra.mxu0 0
    %5582 = vmatprep.subr.bf16.mxu0 0
    %5583 = vmatpush2.bf16.msra.mxu0 0
    %5584 = vmatprep.subr.bf16.mxu0 0
    %5585 = vmatpush2.bf16.msra.mxu0 0
    %5586 = vmatprep.subr.bf16.mxu0 0
    %5587 = vmatpush2.bf16.msra.mxu0 0
    %5588 = vmatprep.subr.bf16.mxu0 0
    %5589 = vmatpush2.bf16.msra.mxu0 0
    %5590 = vmatprep.subr.bf16.mxu0 0
    %5591 = vmatpush2.bf16.msra.mxu0 0
    %5592 = vmatprep.subr.bf16.mxu0 0
    %5593 = vmatpush2.bf16.msra.mxu0 0
    %5594 = vmatprep.mubr.bf16.mxu0 0
    %5595 = vmatmul.mubr.bf16.gmra.mxu0 %v5560
    %v5596 = vpop.f32.mrf.mxu0
    %v5597 = vadd.f32 0.0, %v5596
    %v5598 = vpop.f32.mrf.mxu0
    %v5599 = vadd.f32 0.0, %v5598
    %v5600 = vpop.f32.mrf.mxu0
    %v5601 = vpop.f32.mrf.mxu0
    %5602 = vdwg.mxu0
    %v5603 = vadd.f32 %v5288, %v5597
    %v5604 = vadd.f32 %v5289, %v5599
    %v5605 = vld [vmem:[%s5] sm:$0x3]
    %v5607 = vlaneseq
    %v5608 = vshrl.u32 %v5607, 7
    %v5609 = vsub.s32 0, %v5608
    %v5610 = vrot.slane %v5605, %v5609
    %v5611 = vlaneseq
    %v5612 = vshrl.u32 %v5611, 7
    %v5613 = vsub.s32 1, %v5612
    %v5614 = vrot.slane %v5605, %v5613
    %v5617 = vadd.f32 %v5603, %v5610
    %v5618 = vadd.f32 %v5604, %v5614
    %v5619 = vmax.f32 %v5617, 0.0
    %v5620 = vmax.f32 %v5618, 0.0
    %v5621 = vpack.c.bf16 %v5619, %v5619
    %v5622 = vpack.c.bf16 %v5620, %v5620
    %v5623 = vld [vmem:[%s6] sm:$0xf]
    %v5624 = vld [vmem:[%s6 + $0x4] sm:$0xf]
    %v5625 = vld [vmem:[%s6 + $0x8] sm:$0xf]
    %v5626 = vld [vmem:[%s6 + $0xc] sm:$0xf]
    %v5627 = vld [vmem:[%s6 + $0x10] sm:$0xf]
    %v5628 = vld [vmem:[%s6 + $0x14] sm:$0xf]
    %v5629 = vld [vmem:[%s6 + $0x18] sm:$0xf]
    %v5630 = vld [vmem:[%s6 + $0x1c] sm:$0xf]
    %v5631 = vld [vmem:[%s6 + $0x20] sm:$0xf]
    %v5632 = vld [vmem:[%s6 + $0x24] sm:$0xf]
    %v5633 = vld [vmem:[%s6 + $0x28] sm:$0xf]
    %v5634 = vld [vmem:[%s6 + $0x2c] sm:$0xf]
    %v5635 = vld [vmem:[%s6 + $0x30] sm:$0xf]
    %v5636 = vld [vmem:[%s6 + $0x34] sm:$0xf]
    %v5637 = vld [vmem:[%s6 + $0x38] sm:$0xf]
    %v5638 = vld [vmem:[%s6 + $0x3c] sm:$0xf]
    %v5639 = vld [vmem:[%s6 + $0x40] sm:$0xf]
    %v5640 = vld [vmem:[%s6 + $0x44] sm:$0xf]
    %v5641 = vld [vmem:[%s6 + $0x48] sm:$0xf]
    %v5642 = vld [vmem:[%s6 + $0x4c] sm:$0xf]
    %v5643 = vld [vmem:[%s6 + $0x50] sm:$0xf]
    %v5644 = vld [vmem:[%s6 + $0x54] sm:$0xf]
    %v5645 = vld [vmem:[%s6 + $0x58] sm:$0xf]
    %v5646 = vld [vmem:[%s6 + $0x5c] sm:$0xf]
    %v5647 = vld [vmem:[%s6 + $0x60] sm:$0xf]
    %v5648 = vld [vmem:[%s6 + $0x64] sm:$0xf]
    %v5649 = vld [vmem:[%s6 + $0x68] sm:$0xf]
    %v5650 = vld [vmem:[%s6 + $0x6c] sm:$0xf]
    %v5651 = vld [vmem:[%s6 + $0x70] sm:$0xf]
    %v5652 = vld [vmem:[%s6 + $0x74] sm:$0xf]
    %v5653 = vld [vmem:[%s6 + $0x78] sm:$0xf]
    %v5654 = vld [vmem:[%s6 + $0x7c] sm:$0xf]
    %v5655 = vld [vmem:[%s7] sm:$0x1]
    %v5657 = vlaneseq
    %v5658 = vshrl.u32 %v5657, 7
    %v5659 = vsub.s32 0, %v5658
    %v5660 = vrot.slane %v5655, %v5659
    %v5694 = vunpack.c.l.b16 %v5623
    %v5695 = vunpack.c.l.b16 %v5624
    %v5696 = vunpack.c.l.b16 %v5625
    %v5697 = vunpack.c.l.b16 %v5626
    %v5698 = vunpack.c.l.b16 %v5627
    %v5699 = vunpack.c.l.b16 %v5628
    %v5700 = vunpack.c.l.b16 %v5629
    %v5701 = vunpack.c.l.b16 %v5630
    %v5702 = vunpack.c.l.b16 %v5631
    %v5703 = vunpack.c.l.b16 %v5632
    %v5704 = vunpack.c.l.b16 %v5633
    %v5705 = vunpack.c.l.b16 %v5634
    %v5706 = vunpack.c.l.b16 %v5635
    %v5707 = vunpack.c.l.b16 %v5636
    %v5708 = vunpack.c.l.b16 %v5637
    %v5709 = vunpack.c.l.b16 %v5638
    %v5710 = vunpack.c.l.b16 %v5639
    %v5711 = vunpack.c.l.b16 %v5640
    %v5712 = vunpack.c.l.b16 %v5641
    %v5713 = vunpack.c.l.b16 %v5642
    %v5714 = vunpack.c.l.b16 %v5643
    %v5715 = vunpack.c.l.b16 %v5644
    %v5716 = vunpack.c.l.b16 %v5645
    %v5717 = vunpack.c.l.b16 %v5646
    %v5718 = vunpack.c.l.b16 %v5647
    %v5719 = vunpack.c.l.b16 %v5648
    %v5720 = vunpack.c.l.b16 %v5649
    %v5721 = vunpack.c.l.b16 %v5650
    %v5722 = vunpack.c.l.b16 %v5651
    %v5723 = vunpack.c.l.b16 %v5652
    %v5724 = vunpack.c.l.b16 %v5653
    %v5725 = vunpack.c.l.b16 %v5654
    %v5726 = vpack.c.b16 %v5695, %v5694
    %v5727 = vpack.c.b16 %v5697, %v5696
    %v5728 = vpack.c.b16 %v5699, %v5698
    %v5729 = vpack.c.b16 %v5701, %v5700
    %v5730 = vpack.c.b16 %v5703, %v5702
    %v5731 = vpack.c.b16 %v5705, %v5704
    %v5732 = vpack.c.b16 %v5707, %v5706
    %v5733 = vpack.c.b16 %v5709, %v5708
    %v5734 = vpack.c.b16 %v5711, %v5710
    %v5735 = vpack.c.b16 %v5713, %v5712
    %v5736 = vpack.c.b16 %v5715, %v5714
    %v5737 = vpack.c.b16 %v5717, %v5716
    %v5738 = vpack.c.b16 %v5719, %v5718
    %v5739 = vpack.c.b16 %v5721, %v5720
    %v5740 = vpack.c.b16 %v5723, %v5722
    %v5741 = vpack.c.b16 %v5725, %v5724
    %5758 = vmatprep.subr.bf16.mxu0 0
    %5759 = vmatpush1.bf16.msra.mxu0 %v5733
    %5760 = vmatprep.subr.bf16.mxu0 0
    %5761 = vmatpush1.bf16.msra.mxu0 %v5732
    %5762 = vmatprep.subr.bf16.mxu0 0
    %5763 = vmatpush1.bf16.msra.mxu0 %v5731
    %5764 = vmatprep.subr.bf16.mxu0 0
    %5765 = vmatpush1.bf16.msra.mxu0 %v5730
    %5766 = vmatprep.subr.bf16.mxu0 0
    %5767 = vmatpush1.bf16.msra.mxu0 %v5729
    %5768 = vmatprep.subr.bf16.mxu0 0
    %5769 = vmatpush1.bf16.msra.mxu0 %v5728
    %5770 = vmatprep.subr.bf16.mxu0 0
    %5771 = vmatpush1.bf16.msra.mxu0 %v5727
    %5772 = vmatprep.subr.bf16.mxu0 0
    %5773 = vmatpush1.bf16.msra.mxu0 %v5726
    %5774 = vmatprep.subr.bf16.mxu0 0
    %5775 = vmatpush2.bf16.msra.mxu0 %v5741
    %5776 = vmatprep.subr.bf16.mxu0 0
    %5777 = vmatpush2.bf16.msra.mxu0 %v5740
    %5778 = vmatprep.subr.bf16.mxu0 0
    %5779 = vmatpush2.bf16.msra.mxu0 %v5739
    %5780 = vmatprep.subr.bf16.mxu0 0
    %5781 = vmatpush2.bf16.msra.mxu0 %v5738
    %5782 = vmatprep.subr.bf16.mxu0 0
    %5783 = vmatpush2.bf16.msra.mxu0 %v5737
    %5784 = vmatprep.subr.bf16.mxu0 0
    %5785 = vmatpush2.bf16.msra.mxu0 %v5736
    %5786 = vmatprep.subr.bf16.mxu0 0
    %5787 = vmatpush2.bf16.msra.mxu0 %v5735
    %5788 = vmatprep.subr.bf16.mxu0 0
    %5789 = vmatpush2.bf16.msra.mxu0 %v5734
    %5790 = vmatprep.mubr.bf16.mxu0 %v5622
    %5791 = vmatmul.mubr.bf16.gmra.mxu0 %v5621
    %v5792 = vpop.f32.mrf.mxu0
    %v5793 = vadd.f32 %v5660, %v5792
    %v5794 = vpop.f32.mrf.mxu0
    %v5795 = vpop.f32.mrf.mxu0
    %v5796 = vpop.f32.mrf.mxu0
    %5797 = vdwg.mxu0
    %v5798 = vxor.u32 %v5793, 2147483648
    %v5799 = vmul.f32 %v5798, 1.442695
    %v5800 = vpow.pop %v5799
    %v5801 = vadd.f32 %v5800, 1.0
    %v5802 = vrcp.pop %v5801
    %v5803 = vmul.f32 1.0, %v5802
    %vm5804 = vcmask 517120
    %5805 = vst.msk [vmem:[#allocation2] sm:$0x3] %vm5804, %v5803
    %v5806 = vpack.c.bf16 %v5803, %v5803
    %v5807 = vld [vmem:[%s8] sm:$0xff]
    %v5808 = vld [vmem:[%s8 + $0x8] sm:$0xff]
    %v5809 = vld [vmem:[%s8 + $0x10] sm:$0xff]
    %v5810 = vld [vmem:[%s8 + $0x18] sm:$0xff]
    %v5811 = vld [vmem:[%s8 + $0x20] sm:$0xff]
    %v5812 = vld [vmem:[%s8 + $0x28] sm:$0xff]
    %v5813 = vld [vmem:[%s8 + $0x30] sm:$0xff]
    %v5814 = vld [vmem:[%s8 + $0x38] sm:$0xff]
    %v5815 = vld [vmem:[%s8 + $0x40] sm:$0xff]
    %v5816 = vld [vmem:[%s8 + $0x48] sm:$0xff]
    %v5817 = vld [vmem:[%s8 + $0x50] sm:$0xff]
    %v5818 = vld [vmem:[%s8 + $0x58] sm:$0xff]
    %v5819 = vld [vmem:[%s8 + $0x60] sm:$0xff]
    %v5820 = vld [vmem:[%s8 + $0x68] sm:$0xff]
    %v5821 = vld [vmem:[%s8 + $0x70] sm:$0xff]
    %v5822 = vld [vmem:[%s8 + $0x78] sm:$0xff]
    %v5823 = vld [vmem:[%s9] sm:$0xf]
    %v5825 = vlaneseq
    %v5826 = vshrl.u32 %v5825, 7
    %v5827 = vsub.s32 0, %v5826
    %v5828 = vrot.slane %v5823, %v5827
    %v5829 = vlaneseq
    %v5830 = vshrl.u32 %v5829, 7
    %v5831 = vsub.s32 1, %v5830
    %v5832 = vrot.slane %v5823, %v5831
    %v5833 = vlaneseq
    %v5834 = vshrl.u32 %v5833, 7
    %v5835 = vsub.s32 2, %v5834
    %v5836 = vrot.slane %v5823, %v5835
    %v5837 = vlaneseq
    %v5838 = vshrl.u32 %v5837, 7
    %v5839 = vsub.s32 3, %v5838
    %v5840 = vrot.slane %v5823, %v5839
    %v5861 = vunpack.c.l.b16 %v5807
    %v5862 = vunpack.c.h.b16 %v5807
    %v5863 = vunpack.c.l.b16 %v5808
    %v5864 = vunpack.c.h.b16 %v5808
    %v5865 = vunpack.c.l.b16 %v5809
    %v5866 = vunpack.c.h.b16 %v5809
    %v5867 = vunpack.c.l.b16 %v5810
    %v5868 = vunpack.c.h.b16 %v5810
    %v5869 = vunpack.c.l.b16 %v5811
    %v5870 = vunpack.c.h.b16 %v5811
    %v5871 = vunpack.c.l.b16 %v5812
    %v5872 = vunpack.c.h.b16 %v5812
    %v5873 = vunpack.c.l.b16 %v5813
    %v5874 = vunpack.c.h.b16 %v5813
    %v5875 = vunpack.c.l.b16 %v5814
    %v5876 = vunpack.c.h.b16 %v5814
    %v5877 = vunpack.c.l.b16 %v5815
    %v5878 = vunpack.c.h.b16 %v5815
    %v5879 = vunpack.c.l.b16 %v5816
    %v5880 = vunpack.c.h.b16 %v5816
    %v5881 = vunpack.c.l.b16 %v5817
    %v5882 = vunpack.c.h.b16 %v5817
    %v5883 = vunpack.c.l.b16 %v5818
    %v5884 = vunpack.c.h.b16 %v5818
    %v5885 = vunpack.c.l.b16 %v5819
    %v5886 = vunpack.c.h.b16 %v5819
    %v5887 = vunpack.c.l.b16 %v5820
    %v5888 = vunpack.c.h.b16 %v5820
    %v5889 = vunpack.c.l.b16 %v5821
    %v5890 = vunpack.c.h.b16 %v5821
    %v5891 = vunpack.c.l.b16 %v5822
    %v5892 = vunpack.c.h.b16 %v5822
    %v5893 = vpack.c.b16 %v5865, %v5861
    %v5894 = vpack.c.b16 %v5866, %v5862
    %v5895 = vpack.c.b16 %v5867, %v5863
    %v5896 = vpack.c.b16 %v5868, %v5864
    %v5897 = vpack.c.b16 %v5873, %v5869
    %v5898 = vpack.c.b16 %v5874, %v5870
    %v5899 = vpack.c.b16 %v5875, %v5871
    %v5900 = vpack.c.b16 %v5876, %v5872
    %v5901 = vpack.c.b16 %v5881, %v5877
    %v5902 = vpack.c.b16 %v5882, %v5878
    %v5903 = vpack.c.b16 %v5883, %v5879
    %v5904 = vpack.c.b16 %v5884, %v5880
    %v5905 = vpack.c.b16 %v5889, %v5885
    %v5906 = vpack.c.b16 %v5890, %v5886
    %v5907 = vpack.c.b16 %v5891, %v5887
    %v5908 = vpack.c.b16 %v5892, %v5888
    %v5926 = vsel %vm1066, %v5806, 0
    %5928 = vmatprep.subr.bf16.mxu0 0
    %5929 = vmatpush1.bf16.msra.mxu0 0
    %5930 = vmatprep.subr.bf16.mxu0 0
    %5931 = vmatpush1.bf16.msra.mxu0 0
    %5932 = vmatprep.subr.bf16.mxu0 0
    %5933 = vmatpush1.bf16.msra.mxu0 0
    %5934 = vmatprep.subr.bf16.mxu0 0
    %5935 = vmatpush1.bf16.msra.mxu0 0
    %5936 = vmatprep.subr.bf16.mxu0 %v5906
    %5937 = vmatpush1.bf16.msra.mxu0 %v5905
    %5938 = vmatprep.subr.bf16.mxu0 %v5902
    %5939 = vmatpush1.bf16.msra.mxu0 %v5901
    %5940 = vmatprep.subr.bf16.mxu0 %v5898
    %5941 = vmatpush1.bf16.msra.mxu0 %v5897
    %5942 = vmatprep.subr.bf16.mxu0 %v5894
    %5943 = vmatpush1.bf16.msra.mxu0 %v5893
    %5944 = vmatprep.subr.bf16.mxu0 0
    %5945 = vmatpush2.bf16.msra.mxu0 0
    %5946 = vmatprep.subr.bf16.mxu0 0
    %5947 = vmatpush2.bf16.msra.mxu0 0
    %5948 = vmatprep.subr.bf16.mxu0 0
    %5949 = vmatpush2.bf16.msra.mxu0 0
    %5950 = vmatprep.subr.bf16.mxu0 0
    %5951 = vmatpush2.bf16.msra.mxu0 0
    %5952 = vmatprep.subr.bf16.mxu0 0
    %5953 = vmatpush2.bf16.msra.mxu0 0
    %5954 = vmatprep.subr.bf16.mxu0 0
    %5955 = vmatpush2.bf16.msra.mxu0 0
    %5956 = vmatprep.subr.bf16.mxu0 0
    %5957 = vmatpush2.bf16.msra.mxu0 0
    %5958 = vmatprep.subr.bf16.mxu0 0
    %5959 = vmatpush2.bf16.msra.mxu0 0
    %5960 = vmatprep.mubr.bf16.mxu0 0
    %5961 = vmatmul.mubr.bf16.gmra.mxu0 %v5926
    %v5962 = vpop.f32.mrf.mxu0
    %v5963 = vadd.f32 %v5828, %v5962
    %v5964 = vpop.f32.mrf.mxu0
    %v5965 = vadd.f32 %v5832, %v5964
    %v5966 = vpop.f32.mrf.mxu0
    %v5967 = vpop.f32.mrf.mxu0
    %5968 = vdwg.mxu0
    %5969 = vmatprep.subr.bf16.mxu0 0
    %5970 = vmatpush1.bf16.msra.mxu0 0
    %5971 = vmatprep.subr.bf16.mxu0 0
    %5972 = vmatpush1.bf16.msra.mxu0 0
    %5973 = vmatprep.subr.bf16.mxu0 0
    %5974 = vmatpush1.bf16.msra.mxu0 0
    %5975 = vmatprep.subr.bf16.mxu0 0
    %5976 = vmatpush1.bf16.msra.mxu0 0
    %5977 = vmatprep.subr.bf16.mxu0 %v5908
    %5978 = vmatpush1.bf16.msra.mxu0 %v5907
    %5979 = vmatprep.subr.bf16.mxu0 %v5904
    %5980 = vmatpush1.bf16.msra.mxu0 %v5903
    %5981 = vmatprep.subr.bf16.mxu0 %v5900
    %5982 = vmatpush1.bf16.msra.mxu0 %v5899
    %5983 = vmatprep.subr.bf16.mxu0 %v5896
    %5984 = vmatpush1.bf16.msra.mxu0 %v5895
    %5985 = vmatprep.subr.bf16.mxu0 0
    %5986 = vmatpush2.bf16.msra.mxu0 0
    %5987 = vmatprep.subr.bf16.mxu0 0
    %5988 = vmatpush2.bf16.msra.mxu0 0
    %5989 = vmatprep.subr.bf16.mxu0 0
    %5990 = vmatpush2.bf16.msra.mxu0 0
    %5991 = vmatprep.subr.bf16.mxu0 0
    %5992 = vmatpush2.bf16.msra.mxu0 0
    %5993 = vmatprep.subr.bf16.mxu0 0
    %5994 = vmatpush2.bf16.msra.mxu0 0
    %5995 = vmatprep.subr.bf16.mxu0 0
    %5996 = vmatpush2.bf16.msra.mxu0 0
    %5997 = vmatprep.subr.bf16.mxu0 0
    %5998 = vmatpush2.bf16.msra.mxu0 0
    %5999 = vmatprep.subr.bf16.mxu0 0
    %6000 = vmatpush2.bf16.msra.mxu0 0
    %6001 = vmatprep.mubr.bf16.mxu0 0
    %6002 = vmatmul.mubr.bf16.gmra.mxu0 %v5926
    %v6003 = vpop.f32.mrf.mxu0
    %v6004 = vadd.f32 %v5836, %v6003
    %v6005 = vpop.f32.mrf.mxu0
    %v6006 = vadd.f32 %v5840, %v6005
    %v6007 = vpop.f32.mrf.mxu0
    %v6008 = vpop.f32.mrf.mxu0
    %6009 = vdwg.mxu0
    %v6010 = vmax.f32 %v5963, 0.0
    %v6011 = vmax.f32 %v5965, 0.0
    %v6012 = vmax.f32 %v6004, 0.0
    %v6013 = vmax.f32 %v6006, 0.0
    %v6014 = vpack.c.bf16 %v6010, %v6010
    %v6015 = vpack.c.bf16 %v6011, %v6011
    %v6016 = vpack.c.bf16 %v6012, %v6012
    %v6017 = vpack.c.bf16 %v6013, %v6013
    %v6018 = vld [vmem:[%s10] sm:$0xf]
    %v6019 = vld [vmem:[%s10 + $0x4] sm:$0xf]
    %v6020 = vld [vmem:[%s10 + $0x8] sm:$0xf]
    %v6021 = vld [vmem:[%s10 + $0xc] sm:$0xf]
    %v6022 = vld [vmem:[%s10 + $0x10] sm:$0xf]
    %v6023 = vld [vmem:[%s10 + $0x14] sm:$0xf]
    %v6024 = vld [vmem:[%s10 + $0x18] sm:$0xf]
    %v6025 = vld [vmem:[%s10 + $0x1c] sm:$0xf]
    %v6026 = vld [vmem:[%s10 + $0x20] sm:$0xf]
    %v6027 = vld [vmem:[%s10 + $0x24] sm:$0xf]
    %v6028 = vld [vmem:[%s10 + $0x28] sm:$0xf]
    %v6029 = vld [vmem:[%s10 + $0x2c] sm:$0xf]
    %v6030 = vld [vmem:[%s10 + $0x30] sm:$0xf]
    %v6031 = vld [vmem:[%s10 + $0x34] sm:$0xf]
    %v6032 = vld [vmem:[%s10 + $0x38] sm:$0xf]
    %v6033 = vld [vmem:[%s10 + $0x3c] sm:$0xf]
    %v6034 = vld [vmem:[%s10 + $0x40] sm:$0xf]
    %v6035 = vld [vmem:[%s10 + $0x44] sm:$0xf]
    %v6036 = vld [vmem:[%s10 + $0x48] sm:$0xf]
    %v6037 = vld [vmem:[%s10 + $0x4c] sm:$0xf]
    %v6038 = vld [vmem:[%s10 + $0x50] sm:$0xf]
    %v6039 = vld [vmem:[%s10 + $0x54] sm:$0xf]
    %v6040 = vld [vmem:[%s10 + $0x58] sm:$0xf]
    %v6041 = vld [vmem:[%s10 + $0x5c] sm:$0xf]
    %v6042 = vld [vmem:[%s10 + $0x60] sm:$0xf]
    %v6043 = vld [vmem:[%s10 + $0x64] sm:$0xf]
    %v6044 = vld [vmem:[%s10 + $0x68] sm:$0xf]
    %v6045 = vld [vmem:[%s10 + $0x6c] sm:$0xf]
    %v6046 = vld [vmem:[%s10 + $0x70] sm:$0xf]
    %v6047 = vld [vmem:[%s10 + $0x74] sm:$0xf]
    %v6048 = vld [vmem:[%s10 + $0x78] sm:$0xf]
    %v6049 = vld [vmem:[%s10 + $0x7c] sm:$0xf]
    %v6050 = vld [vmem:[%s10 + $0x80] sm:$0xf]
    %v6051 = vld [vmem:[%s10 + $0x84] sm:$0xf]
    %v6052 = vld [vmem:[%s10 + $0x88] sm:$0xf]
    %v6053 = vld [vmem:[%s10 + $0x8c] sm:$0xf]
    %v6054 = vld [vmem:[%s10 + $0x90] sm:$0xf]
    %v6055 = vld [vmem:[%s10 + $0x94] sm:$0xf]
    %v6056 = vld [vmem:[%s10 + $0x98] sm:$0xf]
    %v6057 = vld [vmem:[%s10 + $0x9c] sm:$0xf]
    %v6058 = vld [vmem:[%s10 + $0xa0] sm:$0xf]
    %v6059 = vld [vmem:[%s10 + $0xa4] sm:$0xf]
    %v6060 = vld [vmem:[%s10 + $0xa8] sm:$0xf]
    %v6061 = vld [vmem:[%s10 + $0xac] sm:$0xf]
    %v6062 = vld [vmem:[%s10 + $0xb0] sm:$0xf]
    %v6063 = vld [vmem:[%s10 + $0xb4] sm:$0xf]
    %v6064 = vld [vmem:[%s10 + $0xb8] sm:$0xf]
    %v6065 = vld [vmem:[%s10 + $0xbc] sm:$0xf]
    %v6066 = vld [vmem:[%s10 + $0xc0] sm:$0xf]
    %v6067 = vld [vmem:[%s10 + $0xc4] sm:$0xf]
    %v6068 = vld [vmem:[%s10 + $0xc8] sm:$0xf]
    %v6069 = vld [vmem:[%s10 + $0xcc] sm:$0xf]
    %v6070 = vld [vmem:[%s10 + $0xd0] sm:$0xf]
    %v6071 = vld [vmem:[%s10 + $0xd4] sm:$0xf]
    %v6072 = vld [vmem:[%s10 + $0xd8] sm:$0xf]
    %v6073 = vld [vmem:[%s10 + $0xdc] sm:$0xf]
    %v6074 = vld [vmem:[%s10 + $0xe0] sm:$0xf]
    %v6075 = vld [vmem:[%s10 + $0xe4] sm:$0xf]
    %v6076 = vld [vmem:[%s10 + $0xe8] sm:$0xf]
    %v6077 = vld [vmem:[%s10 + $0xec] sm:$0xf]
    %v6078 = vld [vmem:[%s10 + $0xf0] sm:$0xf]
    %v6079 = vld [vmem:[%s10 + $0xf4] sm:$0xf]
    %v6080 = vld [vmem:[%s10 + $0xf8] sm:$0xf]
    %v6081 = vld [vmem:[%s10 + $0xfc] sm:$0xf]
    %v6082 = vld [vmem:[%s11] sm:$0x1]
    %v6084 = vlaneseq
    %v6085 = vshrl.u32 %v6084, 7
    %v6086 = vsub.s32 0, %v6085
    %v6087 = vrot.slane %v6082, %v6086
    %v6153 = vunpack.c.l.b16 %v6018
    %v6154 = vunpack.c.l.b16 %v6019
    %v6155 = vunpack.c.l.b16 %v6020
    %v6156 = vunpack.c.l.b16 %v6021
    %v6157 = vunpack.c.l.b16 %v6022
    %v6158 = vunpack.c.l.b16 %v6023
    %v6159 = vunpack.c.l.b16 %v6024
    %v6160 = vunpack.c.l.b16 %v6025
    %v6161 = vunpack.c.l.b16 %v6026
    %v6162 = vunpack.c.l.b16 %v6027
    %v6163 = vunpack.c.l.b16 %v6028
    %v6164 = vunpack.c.l.b16 %v6029
    %v6165 = vunpack.c.l.b16 %v6030
    %v6166 = vunpack.c.l.b16 %v6031
    %v6167 = vunpack.c.l.b16 %v6032
    %v6168 = vunpack.c.l.b16 %v6033
    %v6169 = vunpack.c.l.b16 %v6034
    %v6170 = vunpack.c.l.b16 %v6035
    %v6171 = vunpack.c.l.b16 %v6036
    %v6172 = vunpack.c.l.b16 %v6037
    %v6173 = vunpack.c.l.b16 %v6038
    %v6174 = vunpack.c.l.b16 %v6039
    %v6175 = vunpack.c.l.b16 %v6040
    %v6176 = vunpack.c.l.b16 %v6041
    %v6177 = vunpack.c.l.b16 %v6042
    %v6178 = vunpack.c.l.b16 %v6043
    %v6179 = vunpack.c.l.b16 %v6044
    %v6180 = vunpack.c.l.b16 %v6045
    %v6181 = vunpack.c.l.b16 %v6046
    %v6182 = vunpack.c.l.b16 %v6047
    %v6183 = vunpack.c.l.b16 %v6048
    %v6184 = vunpack.c.l.b16 %v6049
    %v6185 = vunpack.c.l.b16 %v6050
    %v6186 = vunpack.c.l.b16 %v6051
    %v6187 = vunpack.c.l.b16 %v6052
    %v6188 = vunpack.c.l.b16 %v6053
    %v6189 = vunpack.c.l.b16 %v6054
    %v6190 = vunpack.c.l.b16 %v6055
    %v6191 = vunpack.c.l.b16 %v6056
    %v6192 = vunpack.c.l.b16 %v6057
    %v6193 = vunpack.c.l.b16 %v6058
    %v6194 = vunpack.c.l.b16 %v6059
    %v6195 = vunpack.c.l.b16 %v6060
    %v6196 = vunpack.c.l.b16 %v6061
    %v6197 = vunpack.c.l.b16 %v6062
    %v6198 = vunpack.c.l.b16 %v6063
    %v6199 = vunpack.c.l.b16 %v6064
    %v6200 = vunpack.c.l.b16 %v6065
    %v6201 = vunpack.c.l.b16 %v6066
    %v6202 = vunpack.c.l.b16 %v6067
    %v6203 = vunpack.c.l.b16 %v6068
    %v6204 = vunpack.c.l.b16 %v6069
    %v6205 = vunpack.c.l.b16 %v6070
    %v6206 = vunpack.c.l.b16 %v6071
    %v6207 = vunpack.c.l.b16 %v6072
    %v6208 = vunpack.c.l.b16 %v6073
    %v6209 = vunpack.c.l.b16 %v6074
    %v6210 = vunpack.c.l.b16 %v6075
    %v6211 = vunpack.c.l.b16 %v6076
    %v6212 = vunpack.c.l.b16 %v6077
    %v6213 = vunpack.c.l.b16 %v6078
    %v6214 = vunpack.c.l.b16 %v6079
    %v6215 = vunpack.c.l.b16 %v6080
    %v6216 = vunpack.c.l.b16 %v6081
    %v6217 = vpack.c.b16 %v6154, %v6153
    %v6218 = vpack.c.b16 %v6156, %v6155
    %v6219 = vpack.c.b16 %v6158, %v6157
    %v6220 = vpack.c.b16 %v6160, %v6159
    %v6221 = vpack.c.b16 %v6162, %v6161
    %v6222 = vpack.c.b16 %v6164, %v6163
    %v6223 = vpack.c.b16 %v6166, %v6165
    %v6224 = vpack.c.b16 %v6168, %v6167
    %v6225 = vpack.c.b16 %v6170, %v6169
    %v6226 = vpack.c.b16 %v6172, %v6171
    %v6227 = vpack.c.b16 %v6174, %v6173
    %v6228 = vpack.c.b16 %v6176, %v6175
    %v6229 = vpack.c.b16 %v6178, %v6177
    %v6230 = vpack.c.b16 %v6180, %v6179
    %v6231 = vpack.c.b16 %v6182, %v6181
    %v6232 = vpack.c.b16 %v6184, %v6183
    %v6233 = vpack.c.b16 %v6186, %v6185
    %v6234 = vpack.c.b16 %v6188, %v6187
    %v6235 = vpack.c.b16 %v6190, %v6189
    %v6236 = vpack.c.b16 %v6192, %v6191
    %v6237 = vpack.c.b16 %v6194, %v6193
    %v6238 = vpack.c.b16 %v6196, %v6195
    %v6239 = vpack.c.b16 %v6198, %v6197
    %v6240 = vpack.c.b16 %v6200, %v6199
    %v6241 = vpack.c.b16 %v6202, %v6201
    %v6242 = vpack.c.b16 %v6204, %v6203
    %v6243 = vpack.c.b16 %v6206, %v6205
    %v6244 = vpack.c.b16 %v6208, %v6207
    %v6245 = vpack.c.b16 %v6210, %v6209
    %v6246 = vpack.c.b16 %v6212, %v6211
    %v6247 = vpack.c.b16 %v6214, %v6213
    %v6248 = vpack.c.b16 %v6216, %v6215
    %6281 = vmatprep.subr.bf16.mxu0 0
    %6282 = vmatpush1.bf16.msra.mxu0 %v6224
    %6283 = vmatprep.subr.bf16.mxu0 0
    %6284 = vmatpush1.bf16.msra.mxu0 %v6223
    %6285 = vmatprep.subr.bf16.mxu0 0
    %6286 = vmatpush1.bf16.msra.mxu0 %v6222
    %6287 = vmatprep.subr.bf16.mxu0 0
    %6288 = vmatpush1.bf16.msra.mxu0 %v6221
    %6289 = vmatprep.subr.bf16.mxu0 0
    %6290 = vmatpush1.bf16.msra.mxu0 %v6220
    %6291 = vmatprep.subr.bf16.mxu0 0
    %6292 = vmatpush1.bf16.msra.mxu0 %v6219
    %6293 = vmatprep.subr.bf16.mxu0 0
    %6294 = vmatpush1.bf16.msra.mxu0 %v6218
    %6295 = vmatprep.subr.bf16.mxu0 0
    %6296 = vmatpush1.bf16.msra.mxu0 %v6217
    %6297 = vmatprep.subr.bf16.mxu0 0
    %6298 = vmatpush2.bf16.msra.mxu0 %v6232
    %6299 = vmatprep.subr.bf16.mxu0 0
    %6300 = vmatpush2.bf16.msra.mxu0 %v6231
    %6301 = vmatprep.subr.bf16.mxu0 0
    %6302 = vmatpush2.bf16.msra.mxu0 %v6230
    %6303 = vmatprep.subr.bf16.mxu0 0
    %6304 = vmatpush2.bf16.msra.mxu0 %v6229
    %6305 = vmatprep.subr.bf16.mxu0 0
    %6306 = vmatpush2.bf16.msra.mxu0 %v6228
    %6307 = vmatprep.subr.bf16.mxu0 0
    %6308 = vmatpush2.bf16.msra.mxu0 %v6227
    %6309 = vmatprep.subr.bf16.mxu0 0
    %6310 = vmatpush2.bf16.msra.mxu0 %v6226
    %6311 = vmatprep.subr.bf16.mxu0 0
    %6312 = vmatpush2.bf16.msra.mxu0 %v6225
    %6313 = vmatprep.mubr.bf16.mxu0 %v6015
    %6314 = vmatmul.mubr.bf16.gmra.mxu0 %v6014
    %v6315 = vpop.f32.mrf.mxu0
    %v6316 = vadd.f32 %v6087, %v6315
    %v6317 = vpop.f32.mrf.mxu0
    %v6318 = vpop.f32.mrf.mxu0
    %v6319 = vpop.f32.mrf.mxu0
    %6320 = vdwg.mxu0
    %6321 = vmatprep.subr.bf16.mxu0 0
    %6322 = vmatpush1.bf16.msra.mxu0 %v6240
    %6323 = vmatprep.subr.bf16.mxu0 0
    %6324 = vmatpush1.bf16.msra.mxu0 %v6239
    %6325 = vmatprep.subr.bf16.mxu0 0
    %6326 = vmatpush1.bf16.msra.mxu0 %v6238
    %6327 = vmatprep.subr.bf16.mxu0 0
    %6328 = vmatpush1.bf16.msra.mxu0 %v6237
    %6329 = vmatprep.subr.bf16.mxu0 0
    %6330 = vmatpush1.bf16.msra.mxu0 %v6236
    %6331 = vmatprep.subr.bf16.mxu0 0
    %6332 = vmatpush1.bf16.msra.mxu0 %v6235
    %6333 = vmatprep.subr.bf16.mxu0 0
    %6334 = vmatpush1.bf16.msra.mxu0 %v6234
    %6335 = vmatprep.subr.bf16.mxu0 0
    %6336 = vmatpush1.bf16.msra.mxu0 %v6233
    %6337 = vmatprep.subr.bf16.mxu0 0
    %6338 = vmatpush2.bf16.msra.mxu0 %v6248
    %6339 = vmatprep.subr.bf16.mxu0 0
    %6340 = vmatpush2.bf16.msra.mxu0 %v6247
    %6341 = vmatprep.subr.bf16.mxu0 0
    %6342 = vmatpush2.bf16.msra.mxu0 %v6246
    %6343 = vmatprep.subr.bf16.mxu0 0
    %6344 = vmatpush2.bf16.msra.mxu0 %v6245
    %6345 = vmatprep.subr.bf16.mxu0 0
    %6346 = vmatpush2.bf16.msra.mxu0 %v6244
    %6347 = vmatprep.subr.bf16.mxu0 0
    %6348 = vmatpush2.bf16.msra.mxu0 %v6243
    %6349 = vmatprep.subr.bf16.mxu0 0
    %6350 = vmatpush2.bf16.msra.mxu0 %v6242
    %6351 = vmatprep.subr.bf16.mxu0 0
    %6352 = vmatpush2.bf16.msra.mxu0 %v6241
    %6353 = vmatprep.mubr.bf16.mxu0 %v6017
    %6354 = vmatmul.mubr.bf16.gmra.mxu0 %v6016
    %v6355 = vpop.f32.mrf.mxu0
    %v6356 = vadd.f32 %v6316, %v6355
    %v6357 = vpop.f32.mrf.mxu0
    %v6358 = vpop.f32.mrf.mxu0
    %v6359 = vpop.f32.mrf.mxu0
    %6360 = vdwg.mxu0
    %vm6361 = vcmask 74752
    %6362 = vst.msk [vmem:[#allocation6] sm:$0x3] %vm6361, %v6356
    %6364 = vrot.lane.b32.xlu0 %v6356, 118
    %v6365 = vpop.permute.xlu0 %6364
    %6367 = vst.msk [vmem:[#allocation7] sm:$0x3] %vm6361, %v6365
    %v6368 = vmul.f32 %v6356, 0.5
    %v6369 = vmul.f32 %v6368, 1.442695
    %v6370 = vpow.pop %v6369
    %v6371 = vld [vmem:[%s1] sm:$0x3]
    %6373 = vrot.lane.b32.xlu0 %v6371, 10
    %v6374 = vpop.permute.xlu0 %6373
    %v6376 = vmul.f32 %v6370, %v6374
    %6378 = vrot.lane.b32.xlu0 %v6376, 118
    %v6379 = vpop.permute.xlu0 %6378
    %v6381 = vadd.f32 %v6356, %v6379
    %6382 = vst.msk [vmem:[#allocation4] sm:$0x3] %vm6361, %v6381
    // Predicated region
    $region50: #{encoder_forward.7} parent=1 // pred_check
      _
    $region51: #{encoder_forward.7} parent=1 // pred_check_branch
      %6384 = sbr.rel (0) target = $region53
    $region52: #{encoder_forward.7} parent=1 // pred_region
      %s6386 = ssub.s32 32, 32
      %6387 = vsyncadd [#allocation3], %s6386
      %s6389 = sshll.u32 [#allocation2], 4
      %s6390 = int_to_ptr.vmem [resolvable:$true] %s6389
      %6392 = dma.vmem_to_hbm [thread:$0]  %s6390, 32, %s12, [#allocation3]
    $region53: #{encoder_forward.7} parent=1 // pred_fallthru
      _
    // Predicated region
    $region54: #{encoder_forward.7} parent=1 // pred_check
      _
    $region55: #{encoder_forward.7} parent=1 // pred_check_branch
      %6394 = sbr.rel (0) target = $region57
    $region56: #{encoder_forward.7} parent=1 // pred_region
      %s6396 = ssub.s32 32, 32
      %6397 = vsyncadd [#allocation5], %s6396
      %s6399 = sshll.u32 [#allocation4], 4
      %s6400 = int_to_ptr.vmem [resolvable:$true] %s6399
      %6402 = dma.vmem_to_hbm [thread:$0]  %s6400, 32, %s13, [#allocation5]
    $region57: #{encoder_forward.7} parent=1 // pred_fallthru
      _
    // Predicated region
    $region58: #{encoder_forward.7} parent=1 // pred_check
      _
    $region59: #{encoder_forward.7} parent=1 // pred_check_branch
      %6404 = sbr.rel (0) target = $region61
    $region60: #{encoder_forward.7} parent=1 // pred_region
      %s6406 = ssub.s32 32, 32
      %6407 = vsyncadd [#allocation5], %s6406
      %s6409 = sshll.u32 [#allocation6], 4
      %s6410 = int_to_ptr.vmem [resolvable:$true] %s6409
      %6412 = dma.vmem_to_hbm [thread:$0]  %s6410, 32, %s14, [#allocation5]
    $region61: #{encoder_forward.7} parent=1 // pred_fallthru
      _
    // Predicated region
    $region62: #{encoder_forward.7} parent=1 // pred_check
      _
    $region63: #{encoder_forward.7} parent=1 // pred_check_branch
      %6414 = sbr.rel (0) target = $region65
    $region64: #{encoder_forward.7} parent=1 // pred_region
      %s6416 = ssub.s32 32, 32
      %6417 = vsyncadd [#allocation8], %s6416
      %s6419 = sshll.u32 [#allocation7], 4
      %s6420 = int_to_ptr.vmem [resolvable:$true] %s6419
      %6422 = dma.vmem_to_hbm [thread:$0]  %s6420, 32, %s15, [#allocation8]
    $region65: #{encoder_forward.7} parent=1 // pred_fallthru
      _
    // Predicated region
    $region66: #{encoder_forward.7} parent=1 // pred_check
      _
    $region67: #{encoder_forward.7} parent=1 // pred_check_branch
      %6424 = sbr.rel (0) target = $region69
    $region68: #{encoder_forward.7} parent=1 // pred_region
      %6425 = dma.done [#allocation3], 32
    $region69: #{encoder_forward.7} parent=1 // pred_fallthru
      _
    // Predicated region
    $region70: #{encoder_forward.7} parent=1 // pred_check
      _
    $region71: #{encoder_forward.7} parent=1 // pred_check_branch
      %6427 = sbr.rel (0) target = $region73
    $region72: #{encoder_forward.7} parent=1 // pred_region
      %6428 = dma.done [#allocation5], 32
    $region73: #{encoder_forward.7} parent=1 // pred_fallthru
      _
    // Predicated region
    $region74: #{encoder_forward.7} parent=1 // pred_check
      _
    $region75: #{encoder_forward.7} parent=1 // pred_check_branch
      %6430 = sbr.rel (0) target = $region77
    $region76: #{encoder_forward.7} parent=1 // pred_region
      %6431 = dma.done [#allocation5], 32
    $region77: #{encoder_forward.7} parent=1 // pred_fallthru
      _
    // Predicated region
    $region78: #{encoder_forward.7} parent=1 // pred_check
      _
    $region79: #{encoder_forward.7} parent=1 // pred_check_branch
      %6433 = sbr.rel (0) target = $region81
    $region80: #{encoder_forward.7} parent=1 // pred_region
      %6434 = dma.done [#allocation8], 32
    $region81: #{encoder_forward.7} parent=1 // pred_fallthru
      _
    %6435 = vsyncpa [#allocation3], 1
    %6436 = vsyncpa [#allocation5], 1
    %6437 = vsyncpa [#allocation8], 1

</llo_original>
